<compile_context>
chip_gen: v7x
topology: tpu7x:2x2x1
jax: 0.10.0
libtpu: 0.0.40
codegen_flags: <defaults>
</compile_context>

<pallas_src>
import jax
import jax.numpy as jnp
from jax import lax
from jax.experimental import pallas as pl
from jax.experimental.pallas import tpu as pltpu

CLASS_NUM = 10
LANES = 128                       # matmul output dims padded to 128 lanes
COMPUTE_DTYPE = jnp.bfloat16      # MXU operand dtype; accumulation stays f32

# conv1: 32x32x3 --5x5--> 28x28x6 --pool--> 14x14  (S=196 -> 200, K=75  -> 128)
# conv2: 14x14x6 --5x5--> 10x10x16 --pool--> 5x5   (S=25  -> 32,  K=150 -> 256)
S1_PAD, K1_PAD = 200, 128
S2_PAD, K2_PAD = 32, 256

# Batch tiles: sized so (patch block x2 buffers + f32 matmul temp + pooled temp
# + output x2) stays under ~20 MiB -> safe on v5e (16 MiB default scoped VMEM,
# raised below), v7x (64 MiB physical, 2 TCs split the "parallel" grid) and
# v6e (128 MiB physical; could take 2-4x larger tiles).
B_TILE_CONV1 = 16     # conv1 patch block 16 x 800 x 128 bf16 ~= 3.3 MiB
B_TILE_CONV2 = 64     # conv2 patch block 64 x 128 x 256 bf16 ~= 4.2 MiB
TM_MLP = 256          # MLP rows per grid step (x block ~= 2 MiB bf16)
VMEM_LIMIT_BYTES = 32 * 1024 * 1024


def _round_up(x, m):
    return ((x + m - 1) // m) * m


# ----------------------------------------------------------------------------
# Pallas kernels
# ----------------------------------------------------------------------------
def _conv_relu_pool_kernel(p_ref, w_ref, b_ref, o_ref):
    """Fused [conv-as-matmul + bias + ReLU + 2x2 max-pool] for one batch tile.

    p_ref: (B, 4*S_pad, K_pad) bf16 im2col patches; the 4 positions of each
           2x2 pooling window are stacked along the row axis in S_pad-row
           segments (S_pad % 8 == 0, so every reshape below is tile-aligned).
    w_ref: (K_pad, 128) bf16 conv weight (Cout zero-padded to 128 lanes).
    b_ref: (1, 128) f32 bias (zero-padded).
    o_ref: (B, S_pad, 128) bf16 pooled activation.
    """
    B, M4, Kp = p_ref.shape
    s_pad = M4 // 4
    # ONE MXU matmul for the whole tile (B*4*S_pad rows), f32 accumulation.
    y = jnp.dot(p_ref[...].reshape(B * M4, Kp), w_ref[...],
                preferred_element_type=jnp.float32)
    y = y.reshape(B, 4, s_pad, LANES)                    # tile-aligned split
    # 2x2 max-pool == elementwise max over the 4 window positions (bias is
    # per-channel and ReLU is monotone, so pooling commutes with both).
    y = jnp.maximum(jnp.maximum(y[:, 0], y[:, 1]),
                    jnp.maximum(y[:, 2], y[:, 3]))
    y = jnp.maximum(y + b_ref[...], 0.0)                 # bias + ReLU in f32
    o_ref[...] = y.astype(o_ref.dtype)


def _mlp_kernel(x_ref, w1_ref, b1_ref, w2_ref, b2_ref, w3_ref, b3_ref, o_ref):
    """Fused fc1+ReLU -> fc2+ReLU -> fc3 for one M-tile of rows.

    All three weight matrices stay resident in VMEM (constant index_maps); the
    (TM,120)/(TM,84) intermediates never touch HBM."""
    h = jnp.dot(x_ref[...], w1_ref[...], preferred_element_type=jnp.float32)
    h = jnp.maximum(h + b1_ref[...], 0.0)
    h = jnp.dot(h.astype(COMPUTE_DTYPE), w2_ref[...],
                preferred_element_type=jnp.float32)
    h = jnp.maximum(h + b2_ref[...], 0.0)
    h = jnp.dot(h.astype(COMPUTE_DTYPE), w3_ref[...],
                preferred_element_type=jnp.float32)
    o_ref[...] = (h + b3_ref[...]).astype(o_ref.dtype)


# ----------------------------------------------------------------------------
# Pallas wrappers
# ----------------------------------------------------------------------------
def conv_relu_pool(patches, w, b, s_pad, b_tile_cap):
    """patches: (N, 4*s_pad, K_pad) bf16 -> (N, s_pad, 128) bf16."""
    N, M4, Kp = patches.shape
    b_tile = min(N, b_tile_cap)
    n_pad = _round_up(N, b_tile)
    if n_pad != N:
        patches = jnp.pad(patches, ((0, n_pad - N), (0, 0), (0, 0)))
    cost = pl.CostEstimate(
        flops=2 * n_pad * M4 * Kp * LANES,
        transcendentals=0,
        bytes_accessed=(n_pad * M4 * Kp * 2 + Kp * LANES * 2 + LANES * 4
                        + n_pad * s_pad * LANES * 2))
    out = pl.pallas_call(
        _conv_relu_pool_kernel,
        out_shape=jax.ShapeDtypeStruct((n_pad, s_pad, LANES), COMPUTE_DTYPE),
        grid=(n_pad // b_tile,),
        in_specs=[
            pl.BlockSpec((b_tile, M4, Kp), lambda i: (i, 0, 0)),
            pl.BlockSpec((Kp, LANES), lambda i: (0, 0)),   # weight: resident
            pl.BlockSpec((1, LANES), lambda i: (0, 0)),    # bias: resident
        ],
        out_specs=pl.BlockSpec((b_tile, s_pad, LANES), lambda i: (i, 0, 0)),
        compiler_params=pltpu.CompilerParams(
            dimension_semantics=("parallel",),             # v7x: 2 TCs split batch
            vmem_limit_bytes=VMEM_LIMIT_BYTES),
        cost_estimate=cost,
    )(patches, w, b)
    return out[:N] if n_pad != N else out


def mlp_fused(x, w1, b1, w2, b2, w3, b3, tm_cap=TM_MLP):
    """x: (N, K) bf16 -> (N, 128) f32 logits (class dim padded to 128)."""
    N, K = x.shape
    if N <= tm_cap:
        tm, m_pad = N, N                 # single block == full dims (legal)
    else:
        tm = tm_cap
        m_pad = _round_up(N, tm)
    if m_pad != N:
        x = jnp.pad(x, ((0, m_pad - N), (0, 0)))
    cost = pl.CostEstimate(
        flops=2 * m_pad * (K * LANES + 2 * LANES * LANES),
        transcendentals=0,
        bytes_accessed=(m_pad * K * 2 + (K + 2 * LANES) * LANES * 2
                        + 3 * LANES * 4 + m_pad * LANES * 4))
    out = pl.pallas_call(
        _mlp_kernel,
        out_shape=jax.ShapeDtypeStruct((m_pad, LANES), jnp.float32),
        grid=(m_pad // tm,),
        in_specs=[
            pl.BlockSpec((tm, K), lambda i: (i, 0)),
            pl.BlockSpec((K, LANES), lambda i: (0, 0)),
            pl.BlockSpec((1, LANES), lambda i: (0, 0)),
            pl.BlockSpec((LANES, LANES), lambda i: (0, 0)),
            pl.BlockSpec((1, LANES), lambda i: (0, 0)),
            pl.BlockSpec((LANES, LANES), lambda i: (0, 0)),
            pl.BlockSpec((1, LANES), lambda i: (0, 0)),
        ],
        out_specs=pl.BlockSpec((tm, LANES), lambda i: (i, 0)),
        compiler_params=pltpu.CompilerParams(
            dimension_semantics=("parallel",),
            vmem_limit_bytes=VMEM_LIMIT_BYTES),
        cost_estimate=cost,
    )(x, w1, b1, w2, b2, w3, b3)
    return out[:N] if m_pad != N else out


# ----------------------------------------------------------------------------
# Patch extraction glue (one XLA patch op per pool-window position)
# ----------------------------------------------------------------------------
def _pool_window_patches(x_nhwc, ksize, s_pad, k_pad):
    """5x5 'VALID' im2col for the 4 positions of the following 2x2 max-pool.

    x_nhwc: (N, H, W, C).  Returns (N, 4*s_pad, k_pad): the 4 pool positions
    stacked in s_pad-row segments along axis 1; feature ordering is (c, ki, kj)
    -- identical to PyTorch weight.reshape(Cout, -1).  Spatial/feature padding
    is zero and fused into the concat."""
    groups = []
    for di in (0, 1):
        for dj in (0, 1):
            p = lax.conv_general_dilated_patches(
                x_nhwc[:, di:, dj:, :],
                filter_shape=(ksize, ksize),
                window_strides=(2, 2),
                padding="VALID",
                dimension_numbers=("NHWC", "HWIO", "NHWC"),
            )                                           # (N, Sh, Sw, C*k*k)
            n, sh, sw, k = p.shape
            p = p.reshape(n, sh * sw, k)
            p = jnp.pad(p, ((0, 0), (0, s_pad - sh * sw), (0, k_pad - k)))
            groups.append(p)
    return jnp.concatenate(groups, axis=1)              # (N, 4*s_pad, k_pad)


# ----------------------------------------------------------------------------
# Parameter init (PyTorch layouts) and one-time repack for the kernels
# ----------------------------------------------------------------------------
def init_params(key):
    def uni(k, shape, fan_in):
        bound = 1.0 / jnp.sqrt(float(fan_in))
        return jax.random.uniform(k, shape, jnp.float32, -bound, bound)

    ks = jax.random.split(key, 10)
    return {
        "conv1_w": uni(ks[0], (6, 3, 5, 5), 3 * 5 * 5),
        "conv1_b": uni(ks[1], (6,), 3 * 5 * 5),
        "conv2_w": uni(ks[2], (16, 6, 5, 5), 6 * 5 * 5),
        "conv2_b": uni(ks[3], (16,), 6 * 5 * 5),
        "fc1_w": uni(ks[4], (120, 400), 400),
        "fc1_b": uni(ks[5], (120,), 400),
        "fc2_w": uni(ks[6], (84, 120), 120),
        "fc2_b": uni(ks[7], (84,), 120),
        "fc3_w": uni(ks[8], (CLASS_NUM, 84), 84),
        "fc3_b": uni(ks[9], (CLASS_NUM,), 84),
    }


def prepare_params(params):
    """One-time (outside jit) repack into kernel layouts: lane-dense bf16
    (K_pad, 128) weights, f32 (1, 128) biases, and an fc1 weight permuted and
    zero-row-padded so the padded conv2 output flattens straight into it."""
    def pad2(m, rows, cols):
        return jnp.pad(m, ((0, rows - m.shape[0]), (0, cols - m.shape[1])))

    def pad_bias(b):
        return jnp.pad(b, (0, LANES - b.shape[0])).reshape(1, LANES).astype(jnp.float32)

    out = {}
    # conv weights: (Cout, Cin, KH, KW) -> (K_pad, 128); column order (c,ki,kj)
    out["conv1_w"] = pad2(params["conv1_w"].reshape(6, -1).T, K1_PAD, LANES).astype(COMPUTE_DTYPE)
    out["conv1_b"] = pad_bias(params["conv1_b"])
    out["conv2_w"] = pad2(params["conv2_w"].reshape(16, -1).T, K2_PAD, LANES).astype(COMPUTE_DTYPE)
    out["conv2_b"] = pad_bias(params["conv2_b"])

    # fc1: PyTorch consumes the NCHW flatten (index = c*25 + hw); the kernel
    # feeds the free reshape of the padded (32, 128) conv2 output
    # (index = hw*128 + c).  Permute + zero-pad the rows once here; padded
    # spatial rows (hw >= 25) and padded channels (c >= 16) get zero rows, so
    # the garbage in the padded lanes/rows contributes nothing.
    fc1 = params["fc1_w"].reshape(120, 16, 25)                        # (j, c, hw)
    fc1 = jnp.pad(fc1, ((0, LANES - 120), (0, LANES - 16), (0, S2_PAD - 25)))
    fc1 = fc1.transpose(2, 1, 0).reshape(S2_PAD * LANES, LANES)       # row = hw*128 + c
    out["fc1_w"] = fc1.astype(COMPUTE_DTYPE)
    out["fc1_b"] = pad_bias(params["fc1_b"])

    out["fc2_w"] = pad2(params["fc2_w"].T, LANES, LANES).astype(COMPUTE_DTYPE)
    out["fc2_b"] = pad_bias(params["fc2_b"])
    out["fc3_w"] = pad2(params["fc3_w"].T, LANES, LANES).astype(COMPUTE_DTYPE)
    out["fc3_b"] = pad_bias(params["fc3_b"])
    return out


# ----------------------------------------------------------------------------
# Full forward pass (matches Net.forward)
# ----------------------------------------------------------------------------
@jax.jit
def net_forward(prepared, x):
    # x: (N, 3, 32, 32) f32 NCHW, like PyTorch (32x32 required by fc1=400)
    N = x.shape[0]
    x_nhwc = jnp.transpose(x, (0, 2, 3, 1)).astype(COMPUTE_DTYPE)     # (N,32,32,3)

    # conv1(5x5) + ReLU + 2x2 max-pool, one fused batch-tiled kernel
    p1 = _pool_window_patches(x_nhwc, 5, S1_PAD, K1_PAD)              # (N,800,128)
    a1 = conv_relu_pool(p1, prepared["conv1_w"], prepared["conv1_b"],
                        S1_PAD, B_TILE_CONV1)                         # (N,200,128)

    # conv2(5x5) + ReLU + 2x2 max-pool
    # TODO(synk): conv1 only uses 6 of 128 output lanes; the round-trip +
    # lane-slice is accepted here (traffic is tiny at LeNet scale).
    a1_nhwc = a1[:, :196, :6].reshape(N, 14, 14, 6)
    p2 = _pool_window_patches(a1_nhwc, 5, S2_PAD, K2_PAD)             # (N,128,256)
    a2 = conv_relu_pool(p2, prepared["conv2_w"], prepared["conv2_b"],
                        S2_PAD, B_TILE_CONV2)                         # (N,32,128)

    # fc1 -> ReLU -> fc2 -> ReLU -> fc3, one fused M-tiled kernel.  The padded
    # (32, 128) layout flattens for free; fc1's weight rows were pre-permuted
    # and zeroed for the padding, so no slice is needed here.
    feat = a2.reshape(N, S2_PAD * LANES)                              # (N, 4096)
    logits = mlp_fused(feat,
                       prepared["fc1_w"], prepared["fc1_b"],
                       prepared["fc2_w"], prepared["fc2_b"],
                       prepared["fc3_w"], prepared["fc3_b"])          # (N, 128)
    return logits[:, :CLASS_NUM]                                      # (N, 10) f32


# ----------------------------------------------------------------------------
# Pure-JAX reference (same bf16 matmul operands / f32 accumulation as kernels)
# ----------------------------------------------------------------------------
@jax.jit
def reference_forward(params, x):
    cd = COMPUTE_DTYPE

    def conv(inp, w, b):
        y = lax.conv_general_dilated(
            inp.astype(cd), w.astype(cd), (1, 1), "VALID",
            dimension_numbers=("NCHW", "OIHW", "NCHW"),
            preferred_element_type=jnp.float32)
        return y + b.reshape(1, -1, 1, 1)

    def pool2x2(y):
        n, c, h, w = y.shape
        return y.reshape(n, c, h // 2, 2, w // 2, 2).max(axis=(3, 5))

    h = pool2x2(jax.nn.relu(conv(x, params["conv1_w"], params["conv1_b"])))
    h = pool2x2(jax.nn.relu(conv(h, params["conv2_w"], params["conv2_b"])))
    h = h.reshape(h.shape[0], -1)                                     # NCHW flatten
    h = jax.nn.relu(jnp.dot(h.astype(cd), params["fc1_w"].T.astype(cd),
                            preferred_element_type=jnp.float32) + params["fc1_b"])
    h = jax.nn.relu(jnp.dot(h.astype(cd), params["fc2_w"].T.astype(cd),
                            preferred_element_type=jnp.float32) + params["fc2_b"])
    return jnp.dot(h.astype(cd), params["fc3_w"].T.astype(cd),
                   preferred_element_type=jnp.float32) + params["fc3_b"]


if __name__ == "__main__":
    key = jax.random.PRNGKey(0)
    pkey, xkey = jax.random.split(key)
    params = init_params(pkey)
    prepared = prepare_params(params)          # one-time repack, outside the jit

    # LeNet's FC sizes require 3x32x32 spatial input; small batch of 4.
    x = jax.random.normal(xkey, (4, 3, 32, 32), dtype=jnp.float32)

    out = jax.block_until_ready(net_forward(prepared, x))
    assert out.shape == (4, CLASS_NUM), out.shape

    # Correctness check against the pure-JAX reference (validates the im2col
    # feature ordering and the fc1 flatten permutation).
    ref = jax.block_until_ready(reference_forward(params, x))
    max_err = float(jnp.max(jnp.abs(out - ref)))
    assert jnp.allclose(out, ref, atol=2e-2, rtol=2e-2), max_err

    print("KERNEL_OK")
</pallas_src>

<mosaic_0001>
module attributes {stable_mosaic.version = 11 : i64} {
  func.func @_conv_relu_pool_kernel(%arg0: i32, %arg1: memref<4x800x128xbf16, #tpu.memory_space<vmem>>, %arg2: memref<128x128xbf16, #tpu.memory_space<vmem>>, %arg3: memref<1x128xf32, #tpu.memory_space<vmem>>, %arg4: memref<4x200x128xbf16, #tpu.memory_space<vmem>>) attributes {dimension_semantics = [#tpu.dimension_semantics<parallel>], iteration_bounds = array<i64: 1>, scalar_prefetch = 0 : i64, scratch_operands = 0 : i64, tpu.core_type = #tpu.core_type<tc>, window_params = [{transform_indices = @transform_0, window_bounds = array<i64: 4, 800, 128>}, {pipeline_mode = #tpu.pipeline_mode<synchronous>, transform_indices = @transform_1, window_bounds = array<i64: 128, 128>}, {pipeline_mode = #tpu.pipeline_mode<synchronous>, transform_indices = @transform_2, window_bounds = array<i64: 1, 128>}, {transform_indices = @transform_3, window_bounds = array<i64: 4, 200, 128>}]} {
    %c0 = arith.constant 0 : index
    %c0_0 = arith.constant 0 : index
    %c0_1 = arith.constant 0 : index
    %0 = vector.load %arg1[%c0, %c0_0, %c0_1] : memref<4x800x128xbf16, #tpu.memory_space<vmem>>, vector<4x800x128xbf16>
    %1 = vector.shape_cast %0 : vector<4x800x128xbf16> to vector<3200x128xbf16>
    %c0_2 = arith.constant 0 : index
    %c0_3 = arith.constant 0 : index
    %2 = vector.load %arg2[%c0_2, %c0_3] : memref<128x128xbf16, #tpu.memory_space<vmem>>, vector<128x128xbf16>
    %cst = arith.constant dense<0.000000e+00> : vector<3200x128xf32>
    %3 = tpu.matmul %1, %2, %cst {dimension_numbers = #tpu.dot_dimension_numbers<[1], [0], [0], [1], [0, 0, 1, 1], [], []>} : vector<3200x128xbf16>, vector<128x128xbf16>, vector<3200x128xf32> -> vector<3200x128xf32>
    %4 = vector.shape_cast %3 : vector<3200x128xf32> to vector<4x4x200x128xf32>
    %5 = vector.extract_strided_slice %4 {offsets = [0, 0, 0, 0], sizes = [4, 1, 200, 128], strides = [1, 1, 1, 1]} : vector<4x4x200x128xf32> to vector<4x1x200x128xf32>
    %6 = vector.shape_cast %5 : vector<4x1x200x128xf32> to vector<4x200x128xf32>
    %7 = vector.extract_strided_slice %4 {offsets = [0, 1, 0, 0], sizes = [4, 1, 200, 128], strides = [1, 1, 1, 1]} : vector<4x4x200x128xf32> to vector<4x1x200x128xf32>
    %8 = vector.shape_cast %7 : vector<4x1x200x128xf32> to vector<4x200x128xf32>
    %9 = arith.maximumf %6, %8 : vector<4x200x128xf32>
    %10 = vector.extract_strided_slice %4 {offsets = [0, 2, 0, 0], sizes = [4, 1, 200, 128], strides = [1, 1, 1, 1]} : vector<4x4x200x128xf32> to vector<4x1x200x128xf32>
    %11 = vector.shape_cast %10 : vector<4x1x200x128xf32> to vector<4x200x128xf32>
    %12 = vector.extract_strided_slice %4 {offsets = [0, 3, 0, 0], sizes = [4, 1, 200, 128], strides = [1, 1, 1, 1]} : vector<4x4x200x128xf32> to vector<4x1x200x128xf32>
    %13 = vector.shape_cast %12 : vector<4x1x200x128xf32> to vector<4x200x128xf32>
    %14 = arith.maximumf %11, %13 : vector<4x200x128xf32>
    %15 = arith.maximumf %9, %14 : vector<4x200x128xf32>
    %c0_4 = arith.constant 0 : index
    %c0_5 = arith.constant 0 : index
    %16 = vector.load %arg3[%c0_4, %c0_5] : memref<1x128xf32, #tpu.memory_space<vmem>>, vector<1x128xf32>
    %17 = vector.shape_cast %16 : vector<1x128xf32> to vector<1x1x128xf32>
    %18 = vector.broadcast %17 : vector<1x1x128xf32> to vector<4x200x128xf32>
    %19 = arith.addf %15, %18 : vector<4x200x128xf32>
    %cst_6 = arith.constant 0.000000e+00 : f32
    %20 = vector.broadcast %cst_6 : f32 to vector<4x200x128xf32>
    %21 = arith.maximumf %19, %20 : vector<4x200x128xf32>
    %22 = arith.truncf %21 : vector<4x200x128xf32> to vector<4x200x128xbf16>
    %c0_7 = arith.constant 0 : index
    %c0_8 = arith.constant 0 : index
    %c0_9 = arith.constant 0 : index
    %23 = vector.load %arg4[%c0_7, %c0_8, %c0_9] : memref<4x200x128xbf16, #tpu.memory_space<vmem>>, vector<4x200x128xbf16>
    tpu.vector_store %arg4[%c0_7, %c0_8, %c0_9], %22 {strides = array<i32>} : memref<4x200x128xbf16, #tpu.memory_space<vmem>>, vector<4x200x128xbf16>,
    return
  }
  func.func @transform_0(%arg0: i32) -> (i32, i32, i32) {
    %c0_i32 = arith.constant 0 : i32
    %c0_i32_0 = arith.constant 0 : i32
    %c0_i32_1 = arith.constant 0 : i32
    return %arg0, %c0_i32, %c0_i32_0 : i32, i32, i32
  }
  func.func @transform_1(%arg0: i32) -> (i32, i32) {
    %c0_i32 = arith.constant 0 : i32
    %c0_i32_0 = arith.constant 0 : i32
    %c0_i32_1 = arith.constant 0 : i32
    return %c0_i32, %c0_i32_0 : i32, i32
  }
  func.func @transform_2(%arg0: i32) -> (i32, i32) {
    %c0_i32 = arith.constant 0 : i32
    %c0_i32_0 = arith.constant 0 : i32
    %c0_i32_1 = arith.constant 0 : i32
    return %c0_i32, %c0_i32_0 : i32, i32
  }
  func.func @transform_3(%arg0: i32) -> (i32, i32, i32) {
    %c0_i32 = arith.constant 0 : i32
    %c0_i32_0 = arith.constant 0 : i32
    %c0_i32_1 = arith.constant 0 : i32
    return %arg0, %c0_i32, %c0_i32_0 : i32, i32, i32
  }
}

module attributes {stable_mosaic.version = 11 : i64} {
  func.func @_conv_relu_pool_kernel(%arg0: i32, %arg1: memref<4x128x256xbf16, #tpu.memory_space<vmem>>, %arg2: memref<256x128xbf16, #tpu.memory_space<vmem>>, %arg3: memref<1x128xf32, #tpu.memory_space<vmem>>, %arg4: memref<4x32x128xbf16, #tpu.memory_space<vmem>>) attributes {dimension_semantics = [#tpu.dimension_semantics<parallel>], iteration_bounds = array<i64: 1>, scalar_prefetch = 0 : i64, scratch_operands = 0 : i64, tpu.core_type = #tpu.core_type<tc>, window_params = [{transform_indices = @transform_0, window_bounds = array<i64: 4, 128, 256>}, {pipeline_mode = #tpu.pipeline_mode<synchronous>, transform_indices = @transform_1, window_bounds = array<i64: 256, 128>}, {pipeline_mode = #tpu.pipeline_mode<synchronous>, transform_indices = @transform_2, window_bounds = array<i64: 1, 128>}, {transform_indices = @transform_3, window_bounds = array<i64: 4, 32, 128>}]} {
    %c0 = arith.constant 0 : index
    %c0_0 = arith.constant 0 : index
    %c0_1 = arith.constant 0 : index
    %0 = vector.load %arg1[%c0, %c0_0, %c0_1] : memref<4x128x256xbf16, #tpu.memory_space<vmem>>, vector<4x128x256xbf16>
    %1 = vector.shape_cast %0 : vector<4x128x256xbf16> to vector<512x256xbf16>
    %c0_2 = arith.constant 0 : index
    %c0_3 = arith.constant 0 : index
    %2 = vector.load %arg2[%c0_2, %c0_3] : memref<256x128xbf16, #tpu.memory_space<vmem>>, vector<256x128xbf16>
    %cst = arith.constant dense<0.000000e+00> : vector<512x128xf32>
    %3 = tpu.matmul %1, %2, %cst {dimension_numbers = #tpu.dot_dimension_numbers<[1], [0], [0], [1], [0, 0, 1, 1], [], []>} : vector<512x256xbf16>, vector<256x128xbf16>, vector<512x128xf32> -> vector<512x128xf32>
    %4 = vector.shape_cast %3 : vector<512x128xf32> to vector<4x4x32x128xf32>
    %5 = vector.extract_strided_slice %4 {offsets = [0, 0, 0, 0], sizes = [4, 1, 32, 128], strides = [1, 1, 1, 1]} : vector<4x4x32x128xf32> to vector<4x1x32x128xf32>
    %6 = vector.shape_cast %5 : vector<4x1x32x128xf32> to vector<4x32x128xf32>
    %7 = vector.extract_strided_slice %4 {offsets = [0, 1, 0, 0], sizes = [4, 1, 32, 128], strides = [1, 1, 1, 1]} : vector<4x4x32x128xf32> to vector<4x1x32x128xf32>
    %8 = vector.shape_cast %7 : vector<4x1x32x128xf32> to vector<4x32x128xf32>
    %9 = arith.maximumf %6, %8 : vector<4x32x128xf32>
    %10 = vector.extract_strided_slice %4 {offsets = [0, 2, 0, 0], sizes = [4, 1, 32, 128], strides = [1, 1, 1, 1]} : vector<4x4x32x128xf32> to vector<4x1x32x128xf32>
    %11 = vector.shape_cast %10 : vector<4x1x32x128xf32> to vector<4x32x128xf32>
    %12 = vector.extract_strided_slice %4 {offsets = [0, 3, 0, 0], sizes = [4, 1, 32, 128], strides = [1, 1, 1, 1]} : vector<4x4x32x128xf32> to vector<4x1x32x128xf32>
    %13 = vector.shape_cast %12 : vector<4x1x32x128xf32> to vector<4x32x128xf32>
    %14 = arith.maximumf %11, %13 : vector<4x32x128xf32>
    %15 = arith.maximumf %9, %14 : vector<4x32x128xf32>
    %c0_4 = arith.constant 0 : index
    %c0_5 = arith.constant 0 : index
    %16 = vector.load %arg3[%c0_4, %c0_5] : memref<1x128xf32, #tpu.memory_space<vmem>>, vector<1x128xf32>
    %17 = vector.shape_cast %16 : vector<1x128xf32> to vector<1x1x128xf32>
    %18 = vector.broadcast %17 : vector<1x1x128xf32> to vector<4x32x128xf32>
    %19 = arith.addf %15, %18 : vector<4x32x128xf32>
    %cst_6 = arith.constant 0.000000e+00 : f32
    %20 = vector.broadcast %cst_6 : f32 to vector<4x32x128xf32>
    %21 = arith.maximumf %19, %20 : vector<4x32x128xf32>
    %22 = arith.truncf %21 : vector<4x32x128xf32> to vector<4x32x128xbf16>
    %c0_7 = arith.constant 0 : index
    %c0_8 = arith.constant 0 : index
    %c0_9 = arith.constant 0 : index
    %23 = vector.load %arg4[%c0_7, %c0_8, %c0_9] : memref<4x32x128xbf16, #tpu.memory_space<vmem>>, vector<4x32x128xbf16>
    tpu.vector_store %arg4[%c0_7, %c0_8, %c0_9], %22 {strides = array<i32>} : memref<4x32x128xbf16, #tpu.memory_space<vmem>>, vector<4x32x128xbf16>,
    return
  }
  func.func @transform_0(%arg0: i32) -> (i32, i32, i32) {
    %c0_i32 = arith.constant 0 : i32
    %c0_i32_0 = arith.constant 0 : i32
    %c0_i32_1 = arith.constant 0 : i32
    return %arg0, %c0_i32, %c0_i32_0 : i32, i32, i32
  }
  func.func @transform_1(%arg0: i32) -> (i32, i32) {
    %c0_i32 = arith.constant 0 : i32
    %c0_i32_0 = arith.constant 0 : i32
    %c0_i32_1 = arith.constant 0 : i32
    return %c0_i32, %c0_i32_0 : i32, i32
  }
  func.func @transform_2(%arg0: i32) -> (i32, i32) {
    %c0_i32 = arith.constant 0 : i32
    %c0_i32_0 = arith.constant 0 : i32
    %c0_i32_1 = arith.constant 0 : i32
    return %c0_i32, %c0_i32_0 : i32, i32
  }
  func.func @transform_3(%arg0: i32) -> (i32, i32, i32) {
    %c0_i32 = arith.constant 0 : i32
    %c0_i32_0 = arith.constant 0 : i32
    %c0_i32_1 = arith.constant 0 : i32
    return %arg0, %c0_i32, %c0_i32_0 : i32, i32, i32
  }
}

module attributes {stable_mosaic.version = 11 : i64} {
  func.func @_mlp_kernel(%arg0: i32, %arg1: memref<4x4096xbf16, #tpu.memory_space<vmem>>, %arg2: memref<4096x128xbf16, #tpu.memory_space<vmem>>, %arg3: memref<1x128xf32, #tpu.memory_space<vmem>>, %arg4: memref<128x128xbf16, #tpu.memory_space<vmem>>, %arg5: memref<1x128xf32, #tpu.memory_space<vmem>>, %arg6: memref<128x128xbf16, #tpu.memory_space<vmem>>, %arg7: memref<1x128xf32, #tpu.memory_space<vmem>>, %arg8: memref<4x128xf32, #tpu.memory_space<vmem>>) attributes {dimension_semantics = [#tpu.dimension_semantics<parallel>], iteration_bounds = array<i64: 1>, scalar_prefetch = 0 : i64, scratch_operands = 0 : i64, tpu.core_type = #tpu.core_type<tc>, window_params = [{transform_indices = @transform_0, window_bounds = array<i64: 4, 4096>}, {pipeline_mode = #tpu.pipeline_mode<synchronous>, transform_indices = @transform_1, window_bounds = array<i64: 4096, 128>}, {pipeline_mode = #tpu.pipeline_mode<synchronous>, transform_indices = @transform_2, window_bounds = array<i64: 1, 128>}, {pipeline_mode = #tpu.pipeline_mode<synchronous>, transform_indices = @transform_3, window_bounds = array<i64: 128, 128>}, {pipeline_mode = #tpu.pipeline_mode<synchronous>, transform_indices = @transform_4, window_bounds = array<i64: 1, 128>}, {pipeline_mode = #tpu.pipeline_mode<synchronous>, transform_indices = @transform_5, window_bounds = array<i64: 128, 128>}, {pipeline_mode = #tpu.pipeline_mode<synchronous>, transform_indices = @transform_6, window_bounds = array<i64: 1, 128>}, {transform_indices = @transform_7, window_bounds = array<i64: 4, 128>}]} {
    %c0 = arith.constant 0 : index
    %c0_0 = arith.constant 0 : index
    %0 = vector.load %arg1[%c0, %c0_0] : memref<4x4096xbf16, #tpu.memory_space<vmem>>, vector<4x4096xbf16>
    %c0_1 = arith.constant 0 : index
    %c0_2 = arith.constant 0 : index
    %1 = vector.load %arg2[%c0_1, %c0_2] : memref<4096x128xbf16, #tpu.memory_space<vmem>>, vector<4096x128xbf16>
    %cst = arith.constant dense<0.000000e+00> : vector<4x128xf32>
    %2 = tpu.matmul %0, %1, %cst {dimension_numbers = #tpu.dot_dimension_numbers<[1], [0], [0], [1], [0, 0, 1, 1], [], []>} : vector<4x4096xbf16>, vector<4096x128xbf16>, vector<4x128xf32> -> vector<4x128xf32>
    %c0_3 = arith.constant 0 : index
    %c0_4 = arith.constant 0 : index
    %3 = vector.load %arg3[%c0_3, %c0_4] : memref<1x128xf32, #tpu.memory_space<vmem>>, vector<1x128xf32>
    %4 = vector.broadcast %3 : vector<1x128xf32> to vector<4x128xf32>
    %5 = arith.addf %2, %4 : vector<4x128xf32>
    %cst_5 = arith.constant 0.000000e+00 : f32
    %6 = vector.broadcast %cst_5 : f32 to vector<4x128xf32>
    %7 = arith.maximumf %5, %6 : vector<4x128xf32>
    %8 = arith.truncf %7 : vector<4x128xf32> to vector<4x128xbf16>
    %c0_6 = arith.constant 0 : index
    %c0_7 = arith.constant 0 : index
    %9 = vector.load %arg4[%c0_6, %c0_7] : memref<128x128xbf16, #tpu.memory_space<vmem>>, vector<128x128xbf16>
    %cst_8 = arith.constant dense<0.000000e+00> : vector<4x128xf32>
    %10 = tpu.matmul %8, %9, %cst_8 {dimension_numbers = #tpu.dot_dimension_numbers<[1], [0], [0], [1], [0, 0, 1, 1], [], []>} : vector<4x128xbf16>, vector<128x128xbf16>, vector<4x128xf32> -> vector<4x128xf32>
    %c0_9 = arith.constant 0 : index
    %c0_10 = arith.constant 0 : index
    %11 = vector.load %arg5[%c0_9, %c0_10] : memref<1x128xf32, #tpu.memory_space<vmem>>, vector<1x128xf32>
    %12 = vector.broadcast %11 : vector<1x128xf32> to vector<4x128xf32>
    %13 = arith.addf %10, %12 : vector<4x128xf32>
    %cst_11 = arith.constant 0.000000e+00 : f32
    %14 = vector.broadcast %cst_11 : f32 to vector<4x128xf32>
    %15 = arith.maximumf %13, %14 : vector<4x128xf32>
    %16 = arith.truncf %15 : vector<4x128xf32> to vector<4x128xbf16>
    %c0_12 = arith.constant 0 : index
    %c0_13 = arith.constant 0 : index
    %17 = vector.load %arg6[%c0_12, %c0_13] : memref<128x128xbf16, #tpu.memory_space<vmem>>, vector<128x128xbf16>
    %cst_14 = arith.constant dense<0.000000e+00> : vector<4x128xf32>
    %18 = tpu.matmul %16, %17, %cst_14 {dimension_numbers = #tpu.dot_dimension_numbers<[1], [0], [0], [1], [0, 0, 1, 1], [], []>} : vector<4x128xbf16>, vector<128x128xbf16>, vector<4x128xf32> -> vector<4x128xf32>
    %c0_15 = arith.constant 0 : index
    %c0_16 = arith.constant 0 : index
    %19 = vector.load %arg7[%c0_15, %c0_16] : memref<1x128xf32, #tpu.memory_space<vmem>>, vector<1x128xf32>
    %20 = vector.broadcast %19 : vector<1x128xf32> to vector<4x128xf32>
    %21 = arith.addf %18, %20 : vector<4x128xf32>
    %c0_17 = arith.constant 0 : index
    %c0_18 = arith.constant 0 : index
    %22 = vector.load %arg8[%c0_17, %c0_18] : memref<4x128xf32, #tpu.memory_space<vmem>>, vector<4x128xf32>
    tpu.vector_store %arg8[%c0_17, %c0_18], %21 {strides = array<i32>} : memref<4x128xf32, #tpu.memory_space<vmem>>, vector<4x128xf32>,
    return
  }
  func.func @transform_0(%arg0: i32) -> (i32, i32) {
    %c0_i32 = arith.constant 0 : i32
    %c0_i32_0 = arith.constant 0 : i32
    return %arg0, %c0_i32 : i32, i32
  }
  func.func @transform_1(%arg0: i32) -> (i32, i32) {
    %c0_i32 = arith.constant 0 : i32
    %c0_i32_0 = arith.constant 0 : i32
    %c0_i32_1 = arith.constant 0 : i32
    return %c0_i32, %c0_i32_0 : i32, i32
  }
  func.func @transform_2(%arg0: i32) -> (i32, i32) {
    %c0_i32 = arith.constant 0 : i32
    %c0_i32_0 = arith.constant 0 : i32
    %c0_i32_1 = arith.constant 0 : i32
    return %c0_i32, %c0_i32_0 : i32, i32
  }
  func.func @transform_3(%arg0: i32) -> (i32, i32) {
    %c0_i32 = arith.constant 0 : i32
    %c0_i32_0 = arith.constant 0 : i32
    %c0_i32_1 = arith.constant 0 : i32
    return %c0_i32, %c0_i32_0 : i32, i32
  }
  func.func @transform_4(%arg0: i32) -> (i32, i32) {
    %c0_i32 = arith.constant 0 : i32
    %c0_i32_0 = arith.constant 0 : i32
    %c0_i32_1 = arith.constant 0 : i32
    return %c0_i32, %c0_i32_0 : i32, i32
  }
  func.func @transform_5(%arg0: i32) -> (i32, i32) {
    %c0_i32 = arith.constant 0 : i32
    %c0_i32_0 = arith.constant 0 : i32
    %c0_i32_1 = arith.constant 0 : i32
    return %c0_i32, %c0_i32_0 : i32, i32
  }
  func.func @transform_6(%arg0: i32) -> (i32, i32) {
    %c0_i32 = arith.constant 0 : i32
    %c0_i32_0 = arith.constant 0 : i32
    %c0_i32_1 = arith.constant 0 : i32
    return %c0_i32, %c0_i32_0 : i32, i32
  }
  func.func @transform_7(%arg0: i32) -> (i32, i32) {
    %c0_i32 = arith.constant 0 : i32
    %c0_i32_0 = arith.constant 0 : i32
    return %arg0, %c0_i32 : i32, i32
  }
}

</mosaic_0001>

<llo_original>
// kernel: net_forward.3
$region0: #{net_forward.3}
  #allocation0 [shape = 'u32[]', space=smem, size = 0x4, offset = 0x4, fixed_abs, tag = 'smem constant byte address 0x4 - core index']
  #allocation1 [shape = 'u32[144,128]{1,0:T(1,128)}', space=vmem, size = 0x12000, scoped, tag = 'internal scratch']
  %s0 = inlined_call_operand.vmem [shape: bf16[4,800,128], index: 0, kind: input, shape index: {}]
  %s1 = inlined_call_operand.vmem [shape: bf16[128,128], index: 1, kind: input, shape index: {}]
  %s2 = inlined_call_operand.vmem [shape: f32[1,128], index: 2, kind: input, shape index: {}]
  %s3 = inlined_call_operand.vmem [shape: bf16[4,200,128], index: 3, kind: output, shape index: {}]
  %s4 = sld [smem:[#allocation0]]
  $region22: #{net_forward.3} parent=0
    _
  %s6 = ssub.s32 1, %s4
  %s7 = scalar_select 0, %s6, %s4
  // Predicated region
  $region2: #{net_forward.3} parent=0 // pred_check
    _
  $region3: #{net_forward.3} parent=0 // pred_check_branch
    %9 = sbr.rel (0) target = $region5
  $region4: #{net_forward.3} parent=0 // pred_region
    _
  $region5: #{net_forward.3} parent=0 // pred_fallthru
    _
  // Predicated region
  $region6: #{net_forward.3} parent=0 // pred_check
    _
  $region7: #{net_forward.3} parent=0 // pred_check_branch
    %11 = sbr.rel (0) target = $region9
  $region8: #{net_forward.3} parent=0 // pred_region
    _
  $region9: #{net_forward.3} parent=0 // pred_fallthru
    _
  // Predicated region
  $region10: #{net_forward.3} parent=0 // pred_check
    _
  $region11: #{net_forward.3} parent=0 // pred_check_branch
    %13 = sbr.rel (0) target = $region13
  $region12: #{net_forward.3} parent=0 // pred_region
    _
  $region13: #{net_forward.3} parent=0 // pred_fallthru
    _
  %v15 = vld [vmem:[%s0] sm:$0xf]
  %v16 = vld [vmem:[%s0 + $0x4] sm:$0xf]
  %v17 = vld [vmem:[%s0 + $0x8] sm:$0xf]
  %v18 = vld [vmem:[%s0 + $0xc] sm:$0xf]
  %v19 = vld [vmem:[%s0 + $0x10] sm:$0xf]
  %v20 = vld [vmem:[%s0 + $0x14] sm:$0xf]
  %v21 = vld [vmem:[%s0 + $0x18] sm:$0xf]
  %v22 = vld [vmem:[%s0 + $0x1c] sm:$0xf]
  %v23 = vld [vmem:[%s0 + $0x20] sm:$0xf]
  %v24 = vld [vmem:[%s0 + $0x24] sm:$0xf]
  %v25 = vld [vmem:[%s0 + $0x28] sm:$0xf]
  %v26 = vld [vmem:[%s0 + $0x2c] sm:$0xf]
  %v27 = vld [vmem:[%s0 + $0x30] sm:$0xf]
  %v28 = vld [vmem:[%s0 + $0x34] sm:$0xf]
  %v29 = vld [vmem:[%s0 + $0x38] sm:$0xf]
  %v30 = vld [vmem:[%s0 + $0x3c] sm:$0xf]
  %v31 = vld [vmem:[%s0 + $0x40] sm:$0xf]
  %v32 = vld [vmem:[%s0 + $0x44] sm:$0xf]
  %v33 = vld [vmem:[%s0 + $0x48] sm:$0xf]
  %v34 = vld [vmem:[%s0 + $0x4c] sm:$0xf]
  %v35 = vld [vmem:[%s0 + $0x50] sm:$0xf]
  %v36 = vld [vmem:[%s0 + $0x54] sm:$0xf]
  %v37 = vld [vmem:[%s0 + $0x58] sm:$0xf]
  %v38 = vld [vmem:[%s0 + $0x5c] sm:$0xf]
  %v39 = vld [vmem:[%s0 + $0x60] sm:$0xf]
  %v40 = vld [vmem:[%s0 + $0x64] sm:$0xf]
  %v41 = vld [vmem:[%s0 + $0x68] sm:$0xf]
  %v42 = vld [vmem:[%s0 + $0x6c] sm:$0xf]
  %v43 = vld [vmem:[%s0 + $0x70] sm:$0xf]
  %v44 = vld [vmem:[%s0 + $0x74] sm:$0xf]
  %v45 = vld [vmem:[%s0 + $0x78] sm:$0xf]
  %v46 = vld [vmem:[%s0 + $0x7c] sm:$0xf]
  %v47 = vld [vmem:[%s0 + $0x80] sm:$0xf]
  %v48 = vld [vmem:[%s0 + $0x84] sm:$0xf]
  %v49 = vld [vmem:[%s0 + $0x88] sm:$0xf]
  %v50 = vld [vmem:[%s0 + $0x8c] sm:$0xf]
  %v51 = vld [vmem:[%s0 + $0x90] sm:$0xf]
  %v52 = vld [vmem:[%s0 + $0x94] sm:$0xf]
  %v53 = vld [vmem:[%s0 + $0x98] sm:$0xf]
  %v54 = vld [vmem:[%s0 + $0x9c] sm:$0xf]
  %v55 = vld [vmem:[%s0 + $0xa0] sm:$0xf]
  %v56 = vld [vmem:[%s0 + $0xa4] sm:$0xf]
  %v57 = vld [vmem:[%s0 + $0xa8] sm:$0xf]
  %v58 = vld [vmem:[%s0 + $0xac] sm:$0xf]
  %v59 = vld [vmem:[%s0 + $0xb0] sm:$0xf]
  %v60 = vld [vmem:[%s0 + $0xb4] sm:$0xf]
  %v61 = vld [vmem:[%s0 + $0xb8] sm:$0xf]
  %v62 = vld [vmem:[%s0 + $0xbc] sm:$0xf]
  %v63 = vld [vmem:[%s0 + $0xc0] sm:$0xf]
  %v64 = vld [vmem:[%s0 + $0xc4] sm:$0xf]
  %v65 = vld [vmem:[%s0 + $0xc8] sm:$0xf]
  %v66 = vld [vmem:[%s0 + $0xcc] sm:$0xf]
  %v67 = vld [vmem:[%s0 + $0xd0] sm:$0xf]
  %v68 = vld [vmem:[%s0 + $0xd4] sm:$0xf]
  %v69 = vld [vmem:[%s0 + $0xd8] sm:$0xf]
  %v70 = vld [vmem:[%s0 + $0xdc] sm:$0xf]
  %v71 = vld [vmem:[%s0 + $0xe0] sm:$0xf]
  %v72 = vld [vmem:[%s0 + $0xe4] sm:$0xf]
  %v73 = vld [vmem:[%s0 + $0xe8] sm:$0xf]
  %v74 = vld [vmem:[%s0 + $0xec] sm:$0xf]
  %v75 = vld [vmem:[%s0 + $0xf0] sm:$0xf]
  %v76 = vld [vmem:[%s0 + $0xf4] sm:$0xf]
  %v77 = vld [vmem:[%s0 + $0xf8] sm:$0xf]
  %v78 = vld [vmem:[%s0 + $0xfc] sm:$0xf]
  %v79 = vld [vmem:[%s0 + $0x100] sm:$0xf]
  %v80 = vld [vmem:[%s0 + $0x104] sm:$0xf]
  %v81 = vld [vmem:[%s0 + $0x108] sm:$0xf]
  %v82 = vld [vmem:[%s0 + $0x10c] sm:$0xf]
  %v83 = vld [vmem:[%s0 + $0x110] sm:$0xf]
  %v84 = vld [vmem:[%s0 + $0x114] sm:$0xf]
  %v85 = vld [vmem:[%s0 + $0x118] sm:$0xf]
  %v86 = vld [vmem:[%s0 + $0x11c] sm:$0xf]
  %v87 = vld [vmem:[%s0 + $0x120] sm:$0xf]
  %v88 = vld [vmem:[%s0 + $0x124] sm:$0xf]
  %v89 = vld [vmem:[%s0 + $0x128] sm:$0xf]
  %v90 = vld [vmem:[%s0 + $0x12c] sm:$0xf]
  %v91 = vld [vmem:[%s0 + $0x130] sm:$0xf]
  %v92 = vld [vmem:[%s0 + $0x134] sm:$0xf]
  %v93 = vld [vmem:[%s0 + $0x138] sm:$0xf]
  %v94 = vld [vmem:[%s0 + $0x13c] sm:$0xf]
  %v95 = vld [vmem:[%s0 + $0x140] sm:$0xf]
  %v96 = vld [vmem:[%s0 + $0x144] sm:$0xf]
  %v97 = vld [vmem:[%s0 + $0x148] sm:$0xf]
  %v98 = vld [vmem:[%s0 + $0x14c] sm:$0xf]
  %v99 = vld [vmem:[%s0 + $0x150] sm:$0xf]
  %v100 = vld [vmem:[%s0 + $0x154] sm:$0xf]
  %v101 = vld [vmem:[%s0 + $0x158] sm:$0xf]
  %v102 = vld [vmem:[%s0 + $0x15c] sm:$0xf]
  %v103 = vld [vmem:[%s0 + $0x160] sm:$0xf]
  %v104 = vld [vmem:[%s0 + $0x164] sm:$0xf]
  %v105 = vld [vmem:[%s0 + $0x168] sm:$0xf]
  %v106 = vld [vmem:[%s0 + $0x16c] sm:$0xf]
  %v107 = vld [vmem:[%s0 + $0x170] sm:$0xf]
  %v108 = vld [vmem:[%s0 + $0x174] sm:$0xf]
  %v109 = vld [vmem:[%s0 + $0x178] sm:$0xf]
  %v110 = vld [vmem:[%s0 + $0x17c] sm:$0xf]
  %v111 = vld [vmem:[%s0 + $0x180] sm:$0xf]
  %v112 = vld [vmem:[%s0 + $0x184] sm:$0xf]
  %v113 = vld [vmem:[%s0 + $0x188] sm:$0xf]
  %v114 = vld [vmem:[%s0 + $0x18c] sm:$0xf]
  %v115 = vld [vmem:[%s0 + $0x190] sm:$0xf]
  %v116 = vld [vmem:[%s0 + $0x194] sm:$0xf]
  %v117 = vld [vmem:[%s0 + $0x198] sm:$0xf]
  %v118 = vld [vmem:[%s0 + $0x19c] sm:$0xf]
  %v119 = vld [vmem:[%s0 + $0x1a0] sm:$0xf]
  %v120 = vld [vmem:[%s0 + $0x1a4] sm:$0xf]
  %v121 = vld [vmem:[%s0 + $0x1a8] sm:$0xf]
  %v122 = vld [vmem:[%s0 + $0x1ac] sm:$0xf]
  %v123 = vld [vmem:[%s0 + $0x1b0] sm:$0xf]
  %v124 = vld [vmem:[%s0 + $0x1b4] sm:$0xf]
  %v125 = vld [vmem:[%s0 + $0x1b8] sm:$0xf]
  %v126 = vld [vmem:[%s0 + $0x1bc] sm:$0xf]
  %v127 = vld [vmem:[%s0 + $0x1c0] sm:$0xf]
  %v128 = vld [vmem:[%s0 + $0x1c4] sm:$0xf]
  %v129 = vld [vmem:[%s0 + $0x1c8] sm:$0xf]
  %v130 = vld [vmem:[%s0 + $0x1cc] sm:$0xf]
  %v131 = vld [vmem:[%s0 + $0x1d0] sm:$0xf]
  %v132 = vld [vmem:[%s0 + $0x1d4] sm:$0xf]
  %v133 = vld [vmem:[%s0 + $0x1d8] sm:$0xf]
  %v134 = vld [vmem:[%s0 + $0x1dc] sm:$0xf]
  %v135 = vld [vmem:[%s0 + $0x1e0] sm:$0xf]
  %v136 = vld [vmem:[%s0 + $0x1e4] sm:$0xf]
  %v137 = vld [vmem:[%s0 + $0x1e8] sm:$0xf]
  %v138 = vld [vmem:[%s0 + $0x1ec] sm:$0xf]
  %v139 = vld [vmem:[%s0 + $0x1f0] sm:$0xf]
  %v140 = vld [vmem:[%s0 + $0x1f4] sm:$0xf]
  %v141 = vld [vmem:[%s0 + $0x1f8] sm:$0xf]
  %v142 = vld [vmem:[%s0 + $0x1fc] sm:$0xf]
  %v143 = vld [vmem:[%s0 + $0x200] sm:$0xf]
  %v144 = vld [vmem:[%s0 + $0x204] sm:$0xf]
  %v145 = vld [vmem:[%s0 + $0x208] sm:$0xf]
  %v146 = vld [vmem:[%s0 + $0x20c] sm:$0xf]
  %v147 = vld [vmem:[%s0 + $0x210] sm:$0xf]
  %v148 = vld [vmem:[%s0 + $0x214] sm:$0xf]
  %v149 = vld [vmem:[%s0 + $0x218] sm:$0xf]
  %v150 = vld [vmem:[%s0 + $0x21c] sm:$0xf]
  %v151 = vld [vmem:[%s0 + $0x220] sm:$0xf]
  %v152 = vld [vmem:[%s0 + $0x224] sm:$0xf]
  %v153 = vld [vmem:[%s0 + $0x228] sm:$0xf]
  %v154 = vld [vmem:[%s0 + $0x22c] sm:$0xf]
  %v155 = vld [vmem:[%s0 + $0x230] sm:$0xf]
  %v156 = vld [vmem:[%s0 + $0x234] sm:$0xf]
  %v157 = vld [vmem:[%s0 + $0x238] sm:$0xf]
  %v158 = vld [vmem:[%s0 + $0x23c] sm:$0xf]
  %v159 = vld [vmem:[%s0 + $0x240] sm:$0xf]
  %v160 = vld [vmem:[%s0 + $0x244] sm:$0xf]
  %v161 = vld [vmem:[%s0 + $0x248] sm:$0xf]
  %v162 = vld [vmem:[%s0 + $0x24c] sm:$0xf]
  %v163 = vld [vmem:[%s0 + $0x250] sm:$0xf]
  %v164 = vld [vmem:[%s0 + $0x254] sm:$0xf]
  %v165 = vld [vmem:[%s0 + $0x258] sm:$0xf]
  %v166 = vld [vmem:[%s0 + $0x25c] sm:$0xf]
  %v167 = vld [vmem:[%s0 + $0x260] sm:$0xf]
  %v168 = vld [vmem:[%s0 + $0x264] sm:$0xf]
  %v169 = vld [vmem:[%s0 + $0x268] sm:$0xf]
  %v170 = vld [vmem:[%s0 + $0x26c] sm:$0xf]
  %v171 = vld [vmem:[%s0 + $0x270] sm:$0xf]
  %v172 = vld [vmem:[%s0 + $0x274] sm:$0xf]
  %v173 = vld [vmem:[%s0 + $0x278] sm:$0xf]
  %v174 = vld [vmem:[%s0 + $0x27c] sm:$0xf]
  %v175 = vld [vmem:[%s0 + $0x280] sm:$0xf]
  %v176 = vld [vmem:[%s0 + $0x284] sm:$0xf]
  %v177 = vld [vmem:[%s0 + $0x288] sm:$0xf]
  %v178 = vld [vmem:[%s0 + $0x28c] sm:$0xf]
  %v179 = vld [vmem:[%s0 + $0x290] sm:$0xf]
  %v180 = vld [vmem:[%s0 + $0x294] sm:$0xf]
  %v181 = vld [vmem:[%s0 + $0x298] sm:$0xf]
  %v182 = vld [vmem:[%s0 + $0x29c] sm:$0xf]
  %v183 = vld [vmem:[%s0 + $0x2a0] sm:$0xf]
  %v184 = vld [vmem:[%s0 + $0x2a4] sm:$0xf]
  %v185 = vld [vmem:[%s0 + $0x2a8] sm:$0xf]
  %v186 = vld [vmem:[%s0 + $0x2ac] sm:$0xf]
  %v187 = vld [vmem:[%s0 + $0x2b0] sm:$0xf]
  %v188 = vld [vmem:[%s0 + $0x2b4] sm:$0xf]
  %v189 = vld [vmem:[%s0 + $0x2b8] sm:$0xf]
  %v190 = vld [vmem:[%s0 + $0x2bc] sm:$0xf]
  %v191 = vld [vmem:[%s0 + $0x2c0] sm:$0xf]
  %v192 = vld [vmem:[%s0 + $0x2c4] sm:$0xf]
  %v193 = vld [vmem:[%s0 + $0x2c8] sm:$0xf]
  %v194 = vld [vmem:[%s0 + $0x2cc] sm:$0xf]
  %v195 = vld [vmem:[%s0 + $0x2d0] sm:$0xf]
  %v196 = vld [vmem:[%s0 + $0x2d4] sm:$0xf]
  %v197 = vld [vmem:[%s0 + $0x2d8] sm:$0xf]
  %v198 = vld [vmem:[%s0 + $0x2dc] sm:$0xf]
  %v199 = vld [vmem:[%s0 + $0x2e0] sm:$0xf]
  %v200 = vld [vmem:[%s0 + $0x2e4] sm:$0xf]
  %v201 = vld [vmem:[%s0 + $0x2e8] sm:$0xf]
  %v202 = vld [vmem:[%s0 + $0x2ec] sm:$0xf]
  %v203 = vld [vmem:[%s0 + $0x2f0] sm:$0xf]
  %v204 = vld [vmem:[%s0 + $0x2f4] sm:$0xf]
  %v205 = vld [vmem:[%s0 + $0x2f8] sm:$0xf]
  %v206 = vld [vmem:[%s0 + $0x2fc] sm:$0xf]
  %v207 = vld [vmem:[%s0 + $0x300] sm:$0xf]
  %v208 = vld [vmem:[%s0 + $0x304] sm:$0xf]
  %v209 = vld [vmem:[%s0 + $0x308] sm:$0xf]
  %v210 = vld [vmem:[%s0 + $0x30c] sm:$0xf]
  %v211 = vld [vmem:[%s0 + $0x310] sm:$0xf]
  %v212 = vld [vmem:[%s0 + $0x314] sm:$0xf]
  %v213 = vld [vmem:[%s0 + $0x318] sm:$0xf]
  %v214 = vld [vmem:[%s0 + $0x31c] sm:$0xf]
  %v215 = vld [vmem:[%s0 + $0x320] sm:$0xf]
  %v216 = vld [vmem:[%s0 + $0x324] sm:$0xf]
  %v217 = vld [vmem:[%s0 + $0x328] sm:$0xf]
  %v218 = vld [vmem:[%s0 + $0x32c] sm:$0xf]
  %v219 = vld [vmem:[%s0 + $0x330] sm:$0xf]
  %v220 = vld [vmem:[%s0 + $0x334] sm:$0xf]
  %v221 = vld [vmem:[%s0 + $0x338] sm:$0xf]
  %v222 = vld [vmem:[%s0 + $0x33c] sm:$0xf]
  %v223 = vld [vmem:[%s0 + $0x340] sm:$0xf]
  %v224 = vld [vmem:[%s0 + $0x344] sm:$0xf]
  %v225 = vld [vmem:[%s0 + $0x348] sm:$0xf]
  %v226 = vld [vmem:[%s0 + $0x34c] sm:$0xf]
  %v227 = vld [vmem:[%s0 + $0x350] sm:$0xf]
  %v228 = vld [vmem:[%s0 + $0x354] sm:$0xf]
  %v229 = vld [vmem:[%s0 + $0x358] sm:$0xf]
  %v230 = vld [vmem:[%s0 + $0x35c] sm:$0xf]
  %v231 = vld [vmem:[%s0 + $0x360] sm:$0xf]
  %v232 = vld [vmem:[%s0 + $0x364] sm:$0xf]
  %v233 = vld [vmem:[%s0 + $0x368] sm:$0xf]
  %v234 = vld [vmem:[%s0 + $0x36c] sm:$0xf]
  %v235 = vld [vmem:[%s0 + $0x370] sm:$0xf]
  %v236 = vld [vmem:[%s0 + $0x374] sm:$0xf]
  %v237 = vld [vmem:[%s0 + $0x378] sm:$0xf]
  %v238 = vld [vmem:[%s0 + $0x37c] sm:$0xf]
  %v239 = vld [vmem:[%s0 + $0x380] sm:$0xf]
  %v240 = vld [vmem:[%s0 + $0x384] sm:$0xf]
  %v241 = vld [vmem:[%s0 + $0x388] sm:$0xf]
  %v242 = vld [vmem:[%s0 + $0x38c] sm:$0xf]
  %v243 = vld [vmem:[%s0 + $0x390] sm:$0xf]
  %v244 = vld [vmem:[%s0 + $0x394] sm:$0xf]
  %v245 = vld [vmem:[%s0 + $0x398] sm:$0xf]
  %v246 = vld [vmem:[%s0 + $0x39c] sm:$0xf]
  %v247 = vld [vmem:[%s0 + $0x3a0] sm:$0xf]
  %v248 = vld [vmem:[%s0 + $0x3a4] sm:$0xf]
  %v249 = vld [vmem:[%s0 + $0x3a8] sm:$0xf]
  %v250 = vld [vmem:[%s0 + $0x3ac] sm:$0xf]
  %v251 = vld [vmem:[%s0 + $0x3b0] sm:$0xf]
  %v252 = vld [vmem:[%s0 + $0x3b4] sm:$0xf]
  %v253 = vld [vmem:[%s0 + $0x3b8] sm:$0xf]
  %v254 = vld [vmem:[%s0 + $0x3bc] sm:$0xf]
  %v255 = vld [vmem:[%s0 + $0x3c0] sm:$0xf]
  %v256 = vld [vmem:[%s0 + $0x3c4] sm:$0xf]
  %v257 = vld [vmem:[%s0 + $0x3c8] sm:$0xf]
  %v258 = vld [vmem:[%s0 + $0x3cc] sm:$0xf]
  %v259 = vld [vmem:[%s0 + $0x3d0] sm:$0xf]
  %v260 = vld [vmem:[%s0 + $0x3d4] sm:$0xf]
  %v261 = vld [vmem:[%s0 + $0x3d8] sm:$0xf]
  %v262 = vld [vmem:[%s0 + $0x3dc] sm:$0xf]
  %v263 = vld [vmem:[%s0 + $0x3e0] sm:$0xf]
  %v264 = vld [vmem:[%s0 + $0x3e4] sm:$0xf]
  %v265 = vld [vmem:[%s0 + $0x3e8] sm:$0xf]
  %v266 = vld [vmem:[%s0 + $0x3ec] sm:$0xf]
  %v267 = vld [vmem:[%s0 + $0x3f0] sm:$0xf]
  %v268 = vld [vmem:[%s0 + $0x3f4] sm:$0xf]
  %v269 = vld [vmem:[%s0 + $0x3f8] sm:$0xf]
  %v270 = vld [vmem:[%s0 + $0x3fc] sm:$0xf]
  %v271 = vld [vmem:[%s0 + $0x400] sm:$0xf]
  %v272 = vld [vmem:[%s0 + $0x404] sm:$0xf]
  %v273 = vld [vmem:[%s0 + $0x408] sm:$0xf]
  %v274 = vld [vmem:[%s0 + $0x40c] sm:$0xf]
  %v275 = vld [vmem:[%s0 + $0x410] sm:$0xf]
  %v276 = vld [vmem:[%s0 + $0x414] sm:$0xf]
  %v277 = vld [vmem:[%s0 + $0x418] sm:$0xf]
  %v278 = vld [vmem:[%s0 + $0x41c] sm:$0xf]
  %v279 = vld [vmem:[%s0 + $0x420] sm:$0xf]
  %v280 = vld [vmem:[%s0 + $0x424] sm:$0xf]
  %v281 = vld [vmem:[%s0 + $0x428] sm:$0xf]
  %v282 = vld [vmem:[%s0 + $0x42c] sm:$0xf]
  %v283 = vld [vmem:[%s0 + $0x430] sm:$0xf]
  %v284 = vld [vmem:[%s0 + $0x434] sm:$0xf]
  %v285 = vld [vmem:[%s0 + $0x438] sm:$0xf]
  %v286 = vld [vmem:[%s0 + $0x43c] sm:$0xf]
  %v287 = vld [vmem:[%s0 + $0x440] sm:$0xf]
  %v288 = vld [vmem:[%s0 + $0x444] sm:$0xf]
  %v289 = vld [vmem:[%s0 + $0x448] sm:$0xf]
  %v290 = vld [vmem:[%s0 + $0x44c] sm:$0xf]
  %v291 = vld [vmem:[%s0 + $0x450] sm:$0xf]
  %v292 = vld [vmem:[%s0 + $0x454] sm:$0xf]
  %v293 = vld [vmem:[%s0 + $0x458] sm:$0xf]
  %v294 = vld [vmem:[%s0 + $0x45c] sm:$0xf]
  %v295 = vld [vmem:[%s0 + $0x460] sm:$0xf]
  %v296 = vld [vmem:[%s0 + $0x464] sm:$0xf]
  %v297 = vld [vmem:[%s0 + $0x468] sm:$0xf]
  %v298 = vld [vmem:[%s0 + $0x46c] sm:$0xf]
  %v299 = vld [vmem:[%s0 + $0x470] sm:$0xf]
  %v300 = vld [vmem:[%s0 + $0x474] sm:$0xf]
  %v301 = vld [vmem:[%s0 + $0x478] sm:$0xf]
  %v302 = vld [vmem:[%s0 + $0x47c] sm:$0xf]
  %v303 = vld [vmem:[%s0 + $0x480] sm:$0xf]
  %v304 = vld [vmem:[%s0 + $0x484] sm:$0xf]
  %v305 = vld [vmem:[%s0 + $0x488] sm:$0xf]
  %v306 = vld [vmem:[%s0 + $0x48c] sm:$0xf]
  %v307 = vld [vmem:[%s0 + $0x490] sm:$0xf]
  %v308 = vld [vmem:[%s0 + $0x494] sm:$0xf]
  %v309 = vld [vmem:[%s0 + $0x498] sm:$0xf]
  %v310 = vld [vmem:[%s0 + $0x49c] sm:$0xf]
  %v311 = vld [vmem:[%s0 + $0x4a0] sm:$0xf]
  %v312 = vld [vmem:[%s0 + $0x4a4] sm:$0xf]
  %v313 = vld [vmem:[%s0 + $0x4a8] sm:$0xf]
  %v314 = vld [vmem:[%s0 + $0x4ac] sm:$0xf]
  %v315 = vld [vmem:[%s0 + $0x4b0] sm:$0xf]
  %v316 = vld [vmem:[%s0 + $0x4b4] sm:$0xf]
  %v317 = vld [vmem:[%s0 + $0x4b8] sm:$0xf]
  %v318 = vld [vmem:[%s0 + $0x4bc] sm:$0xf]
  %v319 = vld [vmem:[%s0 + $0x4c0] sm:$0xf]
  %v320 = vld [vmem:[%s0 + $0x4c4] sm:$0xf]
  %v321 = vld [vmem:[%s0 + $0x4c8] sm:$0xf]
  %v322 = vld [vmem:[%s0 + $0x4cc] sm:$0xf]
  %v323 = vld [vmem:[%s0 + $0x4d0] sm:$0xf]
  %v324 = vld [vmem:[%s0 + $0x4d4] sm:$0xf]
  %v325 = vld [vmem:[%s0 + $0x4d8] sm:$0xf]
  %v326 = vld [vmem:[%s0 + $0x4dc] sm:$0xf]
  %v327 = vld [vmem:[%s0 + $0x4e0] sm:$0xf]
  %v328 = vld [vmem:[%s0 + $0x4e4] sm:$0xf]
  %v329 = vld [vmem:[%s0 + $0x4e8] sm:$0xf]
  %v330 = vld [vmem:[%s0 + $0x4ec] sm:$0xf]
  %v331 = vld [vmem:[%s0 + $0x4f0] sm:$0xf]
  %v332 = vld [vmem:[%s0 + $0x4f4] sm:$0xf]
  %v333 = vld [vmem:[%s0 + $0x4f8] sm:$0xf]
  %v334 = vld [vmem:[%s0 + $0x4fc] sm:$0xf]
  %v335 = vld [vmem:[%s0 + $0x500] sm:$0xf]
  %v336 = vld [vmem:[%s0 + $0x504] sm:$0xf]
  %v337 = vld [vmem:[%s0 + $0x508] sm:$0xf]
  %v338 = vld [vmem:[%s0 + $0x50c] sm:$0xf]
  %v339 = vld [vmem:[%s0 + $0x510] sm:$0xf]
  %v340 = vld [vmem:[%s0 + $0x514] sm:$0xf]
  %v341 = vld [vmem:[%s0 + $0x518] sm:$0xf]
  %v342 = vld [vmem:[%s0 + $0x51c] sm:$0xf]
  %v343 = vld [vmem:[%s0 + $0x520] sm:$0xf]
  %v344 = vld [vmem:[%s0 + $0x524] sm:$0xf]
  %v345 = vld [vmem:[%s0 + $0x528] sm:$0xf]
  %v346 = vld [vmem:[%s0 + $0x52c] sm:$0xf]
  %v347 = vld [vmem:[%s0 + $0x530] sm:$0xf]
  %v348 = vld [vmem:[%s0 + $0x534] sm:$0xf]
  %v349 = vld [vmem:[%s0 + $0x538] sm:$0xf]
  %v350 = vld [vmem:[%s0 + $0x53c] sm:$0xf]
  %v351 = vld [vmem:[%s0 + $0x540] sm:$0xf]
  %v352 = vld [vmem:[%s0 + $0x544] sm:$0xf]
  %v353 = vld [vmem:[%s0 + $0x548] sm:$0xf]
  %v354 = vld [vmem:[%s0 + $0x54c] sm:$0xf]
  %v355 = vld [vmem:[%s0 + $0x550] sm:$0xf]
  %v356 = vld [vmem:[%s0 + $0x554] sm:$0xf]
  %v357 = vld [vmem:[%s0 + $0x558] sm:$0xf]
  %v358 = vld [vmem:[%s0 + $0x55c] sm:$0xf]
  %v359 = vld [vmem:[%s0 + $0x560] sm:$0xf]
  %v360 = vld [vmem:[%s0 + $0x564] sm:$0xf]
  %v361 = vld [vmem:[%s0 + $0x568] sm:$0xf]
  %v362 = vld [vmem:[%s0 + $0x56c] sm:$0xf]
  %v363 = vld [vmem:[%s0 + $0x570] sm:$0xf]
  %v364 = vld [vmem:[%s0 + $0x574] sm:$0xf]
  %v365 = vld [vmem:[%s0 + $0x578] sm:$0xf]
  %v366 = vld [vmem:[%s0 + $0x57c] sm:$0xf]
  %v367 = vld [vmem:[%s0 + $0x580] sm:$0xf]
  %v368 = vld [vmem:[%s0 + $0x584] sm:$0xf]
  %v369 = vld [vmem:[%s0 + $0x588] sm:$0xf]
  %v370 = vld [vmem:[%s0 + $0x58c] sm:$0xf]
  %v371 = vld [vmem:[%s0 + $0x590] sm:$0xf]
  %v372 = vld [vmem:[%s0 + $0x594] sm:$0xf]
  %v373 = vld [vmem:[%s0 + $0x598] sm:$0xf]
  %v374 = vld [vmem:[%s0 + $0x59c] sm:$0xf]
  %v375 = vld [vmem:[%s0 + $0x5a0] sm:$0xf]
  %v376 = vld [vmem:[%s0 + $0x5a4] sm:$0xf]
  %v377 = vld [vmem:[%s0 + $0x5a8] sm:$0xf]
  %v378 = vld [vmem:[%s0 + $0x5ac] sm:$0xf]
  %v379 = vld [vmem:[%s0 + $0x5b0] sm:$0xf]
  %v380 = vld [vmem:[%s0 + $0x5b4] sm:$0xf]
  %v381 = vld [vmem:[%s0 + $0x5b8] sm:$0xf]
  %v382 = vld [vmem:[%s0 + $0x5bc] sm:$0xf]
  %v383 = vld [vmem:[%s0 + $0x5c0] sm:$0xf]
  %v384 = vld [vmem:[%s0 + $0x5c4] sm:$0xf]
  %v385 = vld [vmem:[%s0 + $0x5c8] sm:$0xf]
  %v386 = vld [vmem:[%s0 + $0x5cc] sm:$0xf]
  %v387 = vld [vmem:[%s0 + $0x5d0] sm:$0xf]
  %v388 = vld [vmem:[%s0 + $0x5d4] sm:$0xf]
  %v389 = vld [vmem:[%s0 + $0x5d8] sm:$0xf]
  %v390 = vld [vmem:[%s0 + $0x5dc] sm:$0xf]
  %v391 = vld [vmem:[%s0 + $0x5e0] sm:$0xf]
  %v392 = vld [vmem:[%s0 + $0x5e4] sm:$0xf]
  %v393 = vld [vmem:[%s0 + $0x5e8] sm:$0xf]
  %v394 = vld [vmem:[%s0 + $0x5ec] sm:$0xf]
  %v395 = vld [vmem:[%s0 + $0x5f0] sm:$0xf]
  %v396 = vld [vmem:[%s0 + $0x5f4] sm:$0xf]
  %v397 = vld [vmem:[%s0 + $0x5f8] sm:$0xf]
  %v398 = vld [vmem:[%s0 + $0x5fc] sm:$0xf]
  %v399 = vld [vmem:[%s0 + $0x600] sm:$0xf]
  %v400 = vld [vmem:[%s0 + $0x604] sm:$0xf]
  %v401 = vld [vmem:[%s0 + $0x608] sm:$0xf]
  %v402 = vld [vmem:[%s0 + $0x60c] sm:$0xf]
  %v403 = vld [vmem:[%s0 + $0x610] sm:$0xf]
  %v404 = vld [vmem:[%s0 + $0x614] sm:$0xf]
  %v405 = vld [vmem:[%s0 + $0x618] sm:$0xf]
  %v406 = vld [vmem:[%s0 + $0x61c] sm:$0xf]
  %v407 = vld [vmem:[%s0 + $0x620] sm:$0xf]
  %v408 = vld [vmem:[%s0 + $0x624] sm:$0xf]
  %v409 = vld [vmem:[%s0 + $0x628] sm:$0xf]
  %v410 = vld [vmem:[%s0 + $0x62c] sm:$0xf]
  %v411 = vld [vmem:[%s0 + $0x630] sm:$0xf]
  %v412 = vld [vmem:[%s0 + $0x634] sm:$0xf]
  %v413 = vld [vmem:[%s0 + $0x638] sm:$0xf]
  %v414 = vld [vmem:[%s0 + $0x63c] sm:$0xf]
  %v415 = vld [vmem:[%s1] sm:$0xf]
  %v416 = vld [vmem:[%s1 + $0x4] sm:$0xf]
  %v417 = vld [vmem:[%s1 + $0x8] sm:$0xf]
  %v418 = vld [vmem:[%s1 + $0xc] sm:$0xf]
  %v419 = vld [vmem:[%s1 + $0x10] sm:$0xf]
  %v420 = vld [vmem:[%s1 + $0x14] sm:$0xf]
  %v421 = vld [vmem:[%s1 + $0x18] sm:$0xf]
  %v422 = vld [vmem:[%s1 + $0x1c] sm:$0xf]
  %v423 = vld [vmem:[%s1 + $0x20] sm:$0xf]
  %v424 = vld [vmem:[%s1 + $0x24] sm:$0xf]
  %v425 = vld [vmem:[%s1 + $0x28] sm:$0xf]
  %v426 = vld [vmem:[%s1 + $0x2c] sm:$0xf]
  %v427 = vld [vmem:[%s1 + $0x30] sm:$0xf]
  %v428 = vld [vmem:[%s1 + $0x34] sm:$0xf]
  %v429 = vld [vmem:[%s1 + $0x38] sm:$0xf]
  %v430 = vld [vmem:[%s1 + $0x3c] sm:$0xf]
  %v831 = vunpack.c.l.b16 %v15
  %v832 = vunpack.c.l.b16 %v16
  %v833 = vunpack.c.l.b16 %v17
  %v834 = vunpack.c.l.b16 %v18
  %v835 = vunpack.c.l.b16 %v19
  %v836 = vunpack.c.l.b16 %v20
  %v837 = vunpack.c.l.b16 %v21
  %v838 = vunpack.c.l.b16 %v22
  %v839 = vunpack.c.l.b16 %v23
  %v840 = vunpack.c.l.b16 %v24
  %v841 = vunpack.c.l.b16 %v25
  %v842 = vunpack.c.l.b16 %v26
  %v843 = vunpack.c.l.b16 %v27
  %v844 = vunpack.c.l.b16 %v28
  %v845 = vunpack.c.l.b16 %v29
  %v846 = vunpack.c.l.b16 %v30
  %v847 = vunpack.c.l.b16 %v31
  %v848 = vunpack.c.l.b16 %v32
  %v849 = vunpack.c.l.b16 %v33
  %v850 = vunpack.c.l.b16 %v34
  %v851 = vunpack.c.l.b16 %v35
  %v852 = vunpack.c.l.b16 %v36
  %v853 = vunpack.c.l.b16 %v37
  %v854 = vunpack.c.l.b16 %v38
  %v855 = vunpack.c.l.b16 %v39
  %v856 = vunpack.c.l.b16 %v40
  %v857 = vunpack.c.l.b16 %v41
  %v858 = vunpack.c.l.b16 %v42
  %v859 = vunpack.c.l.b16 %v43
  %v860 = vunpack.c.l.b16 %v44
  %v861 = vunpack.c.l.b16 %v45
  %v862 = vunpack.c.l.b16 %v46
  %v863 = vunpack.c.l.b16 %v47
  %v864 = vunpack.c.l.b16 %v48
  %v865 = vunpack.c.l.b16 %v49
  %v866 = vunpack.c.l.b16 %v50
  %v867 = vunpack.c.l.b16 %v51
  %v868 = vunpack.c.l.b16 %v52
  %v869 = vunpack.c.l.b16 %v53
  %v870 = vunpack.c.l.b16 %v54
  %v871 = vunpack.c.l.b16 %v55
  %v872 = vunpack.c.l.b16 %v56
  %v873 = vunpack.c.l.b16 %v57
  %v874 = vunpack.c.l.b16 %v58
  %v875 = vunpack.c.l.b16 %v59
  %v876 = vunpack.c.l.b16 %v60
  %v877 = vunpack.c.l.b16 %v61
  %v878 = vunpack.c.l.b16 %v62
  %v879 = vunpack.c.l.b16 %v63
  %v880 = vunpack.c.l.b16 %v64
  %v881 = vunpack.c.l.b16 %v65
  %v882 = vunpack.c.l.b16 %v66
  %v883 = vunpack.c.l.b16 %v67
  %v884 = vunpack.c.l.b16 %v68
  %v885 = vunpack.c.l.b16 %v69
  %v886 = vunpack.c.l.b16 %v70
  %v887 = vunpack.c.l.b16 %v71
  %v888 = vunpack.c.l.b16 %v72
  %v889 = vunpack.c.l.b16 %v73
  %v890 = vunpack.c.l.b16 %v74
  %v891 = vunpack.c.l.b16 %v75
  %v892 = vunpack.c.l.b16 %v76
  %v893 = vunpack.c.l.b16 %v77
  %v894 = vunpack.c.l.b16 %v78
  %v895 = vunpack.c.l.b16 %v79
  %v896 = vunpack.c.l.b16 %v80
  %v897 = vunpack.c.l.b16 %v81
  %v898 = vunpack.c.l.b16 %v82
  %v899 = vunpack.c.l.b16 %v83
  %v900 = vunpack.c.l.b16 %v84
  %v901 = vunpack.c.l.b16 %v85
  %v902 = vunpack.c.l.b16 %v86
  %v903 = vunpack.c.l.b16 %v87
  %v904 = vunpack.c.l.b16 %v88
  %v905 = vunpack.c.l.b16 %v89
  %v906 = vunpack.c.l.b16 %v90
  %v907 = vunpack.c.l.b16 %v91
  %v908 = vunpack.c.l.b16 %v92
  %v909 = vunpack.c.l.b16 %v93
  %v910 = vunpack.c.l.b16 %v94
  %v911 = vunpack.c.l.b16 %v95
  %v912 = vunpack.c.l.b16 %v96
  %v913 = vunpack.c.l.b16 %v97
  %v914 = vunpack.c.l.b16 %v98
  %v915 = vunpack.c.l.b16 %v99
  %v916 = vunpack.c.l.b16 %v100
  %v917 = vunpack.c.l.b16 %v101
  %v918 = vunpack.c.l.b16 %v102
  %v919 = vunpack.c.l.b16 %v103
  %v920 = vunpack.c.l.b16 %v104
  %v921 = vunpack.c.l.b16 %v105
  %v922 = vunpack.c.l.b16 %v106
  %v923 = vunpack.c.l.b16 %v107
  %v924 = vunpack.c.l.b16 %v108
  %v925 = vunpack.c.l.b16 %v109
  %v926 = vunpack.c.l.b16 %v110
  %v927 = vunpack.c.l.b16 %v111
  %v928 = vunpack.c.l.b16 %v112
  %v929 = vunpack.c.l.b16 %v113
  %v930 = vunpack.c.l.b16 %v114
  %v931 = vunpack.c.l.b16 %v115
  %v932 = vunpack.c.l.b16 %v116
  %v933 = vunpack.c.l.b16 %v117
  %v934 = vunpack.c.l.b16 %v118
  %v935 = vunpack.c.l.b16 %v119
  %v936 = vunpack.c.l.b16 %v120
  %v937 = vunpack.c.l.b16 %v121
  %v938 = vunpack.c.l.b16 %v122
  %v939 = vunpack.c.l.b16 %v123
  %v940 = vunpack.c.l.b16 %v124
  %v941 = vunpack.c.l.b16 %v125
  %v942 = vunpack.c.l.b16 %v126
  %v943 = vunpack.c.l.b16 %v127
  %v944 = vunpack.c.l.b16 %v128
  %v945 = vunpack.c.l.b16 %v129
  %v946 = vunpack.c.l.b16 %v130
  %v947 = vunpack.c.l.b16 %v131
  %v948 = vunpack.c.l.b16 %v132
  %v949 = vunpack.c.l.b16 %v133
  %v950 = vunpack.c.l.b16 %v134
  %v951 = vunpack.c.l.b16 %v135
  %v952 = vunpack.c.l.b16 %v136
  %v953 = vunpack.c.l.b16 %v137
  %v954 = vunpack.c.l.b16 %v138
  %v955 = vunpack.c.l.b16 %v139
  %v956 = vunpack.c.l.b16 %v140
  %v957 = vunpack.c.l.b16 %v141
  %v958 = vunpack.c.l.b16 %v142
  %v959 = vunpack.c.l.b16 %v143
  %v960 = vunpack.c.l.b16 %v144
  %v961 = vunpack.c.l.b16 %v145
  %v962 = vunpack.c.l.b16 %v146
  %v963 = vunpack.c.l.b16 %v147
  %v964 = vunpack.c.l.b16 %v148
  %v965 = vunpack.c.l.b16 %v149
  %v966 = vunpack.c.l.b16 %v150
  %v967 = vunpack.c.l.b16 %v151
  %v968 = vunpack.c.l.b16 %v152
  %v969 = vunpack.c.l.b16 %v153
  %v970 = vunpack.c.l.b16 %v154
  %v971 = vunpack.c.l.b16 %v155
  %v972 = vunpack.c.l.b16 %v156
  %v973 = vunpack.c.l.b16 %v157
  %v974 = vunpack.c.l.b16 %v158
  %v975 = vunpack.c.l.b16 %v159
  %v976 = vunpack.c.l.b16 %v160
  %v977 = vunpack.c.l.b16 %v161
  %v978 = vunpack.c.l.b16 %v162
  %v979 = vunpack.c.l.b16 %v163
  %v980 = vunpack.c.l.b16 %v164
  %v981 = vunpack.c.l.b16 %v165
  %v982 = vunpack.c.l.b16 %v166
  %v983 = vunpack.c.l.b16 %v167
  %v984 = vunpack.c.l.b16 %v168
  %v985 = vunpack.c.l.b16 %v169
  %v986 = vunpack.c.l.b16 %v170
  %v987 = vunpack.c.l.b16 %v171
  %v988 = vunpack.c.l.b16 %v172
  %v989 = vunpack.c.l.b16 %v173
  %v990 = vunpack.c.l.b16 %v174
  %v991 = vunpack.c.l.b16 %v175
  %v992 = vunpack.c.l.b16 %v176
  %v993 = vunpack.c.l.b16 %v177
  %v994 = vunpack.c.l.b16 %v178
  %v995 = vunpack.c.l.b16 %v179
  %v996 = vunpack.c.l.b16 %v180
  %v997 = vunpack.c.l.b16 %v181
  %v998 = vunpack.c.l.b16 %v182
  %v999 = vunpack.c.l.b16 %v183
  %v1000 = vunpack.c.l.b16 %v184
  %v1001 = vunpack.c.l.b16 %v185
  %v1002 = vunpack.c.l.b16 %v186
  %v1003 = vunpack.c.l.b16 %v187
  %v1004 = vunpack.c.l.b16 %v188
  %v1005 = vunpack.c.l.b16 %v189
  %v1006 = vunpack.c.l.b16 %v190
  %v1007 = vunpack.c.l.b16 %v191
  %v1008 = vunpack.c.l.b16 %v192
  %v1009 = vunpack.c.l.b16 %v193
  %v1010 = vunpack.c.l.b16 %v194
  %v1011 = vunpack.c.l.b16 %v195
  %v1012 = vunpack.c.l.b16 %v196
  %v1013 = vunpack.c.l.b16 %v197
  %v1014 = vunpack.c.l.b16 %v198
  %v1015 = vunpack.c.l.b16 %v199
  %v1016 = vunpack.c.l.b16 %v200
  %v1017 = vunpack.c.l.b16 %v201
  %v1018 = vunpack.c.l.b16 %v202
  %v1019 = vunpack.c.l.b16 %v203
  %v1020 = vunpack.c.l.b16 %v204
  %v1021 = vunpack.c.l.b16 %v205
  %v1022 = vunpack.c.l.b16 %v206
  %v1023 = vunpack.c.l.b16 %v207
  %v1024 = vunpack.c.l.b16 %v208
  %v1025 = vunpack.c.l.b16 %v209
  %v1026 = vunpack.c.l.b16 %v210
  %v1027 = vunpack.c.l.b16 %v211
  %v1028 = vunpack.c.l.b16 %v212
  %v1029 = vunpack.c.l.b16 %v213
  %v1030 = vunpack.c.l.b16 %v214
  %v1031 = vunpack.c.l.b16 %v215
  %v1032 = vunpack.c.l.b16 %v216
  %v1033 = vunpack.c.l.b16 %v217
  %v1034 = vunpack.c.l.b16 %v218
  %v1035 = vunpack.c.l.b16 %v219
  %v1036 = vunpack.c.l.b16 %v220
  %v1037 = vunpack.c.l.b16 %v221
  %v1038 = vunpack.c.l.b16 %v222
  %v1039 = vunpack.c.l.b16 %v223
  %v1040 = vunpack.c.l.b16 %v224
  %v1041 = vunpack.c.l.b16 %v225
  %v1042 = vunpack.c.l.b16 %v226
  %v1043 = vunpack.c.l.b16 %v227
  %v1044 = vunpack.c.l.b16 %v228
  %v1045 = vunpack.c.l.b16 %v229
  %v1046 = vunpack.c.l.b16 %v230
  %v1047 = vunpack.c.l.b16 %v231
  %v1048 = vunpack.c.l.b16 %v232
  %v1049 = vunpack.c.l.b16 %v233
  %v1050 = vunpack.c.l.b16 %v234
  %v1051 = vunpack.c.l.b16 %v235
  %v1052 = vunpack.c.l.b16 %v236
  %v1053 = vunpack.c.l.b16 %v237
  %v1054 = vunpack.c.l.b16 %v238
  %v1055 = vunpack.c.l.b16 %v239
  %v1056 = vunpack.c.l.b16 %v240
  %v1057 = vunpack.c.l.b16 %v241
  %v1058 = vunpack.c.l.b16 %v242
  %v1059 = vunpack.c.l.b16 %v243
  %v1060 = vunpack.c.l.b16 %v244
  %v1061 = vunpack.c.l.b16 %v245
  %v1062 = vunpack.c.l.b16 %v246
  %v1063 = vunpack.c.l.b16 %v247
  %v1064 = vunpack.c.l.b16 %v248
  %v1065 = vunpack.c.l.b16 %v249
  %v1066 = vunpack.c.l.b16 %v250
  %v1067 = vunpack.c.l.b16 %v251
  %v1068 = vunpack.c.l.b16 %v252
  %v1069 = vunpack.c.l.b16 %v253
  %v1070 = vunpack.c.l.b16 %v254
  %v1071 = vunpack.c.l.b16 %v255
  %v1072 = vunpack.c.l.b16 %v256
  %v1073 = vunpack.c.l.b16 %v257
  %v1074 = vunpack.c.l.b16 %v258
  %v1075 = vunpack.c.l.b16 %v259
  %v1076 = vunpack.c.l.b16 %v260
  %v1077 = vunpack.c.l.b16 %v261
  %v1078 = vunpack.c.l.b16 %v262
  %v1079 = vunpack.c.l.b16 %v263
  %v1080 = vunpack.c.l.b16 %v264
  %v1081 = vunpack.c.l.b16 %v265
  %v1082 = vunpack.c.l.b16 %v266
  %v1083 = vunpack.c.l.b16 %v267
  %v1084 = vunpack.c.l.b16 %v268
  %v1085 = vunpack.c.l.b16 %v269
  %v1086 = vunpack.c.l.b16 %v270
  %v1087 = vunpack.c.l.b16 %v271
  %v1088 = vunpack.c.l.b16 %v272
  %v1089 = vunpack.c.l.b16 %v273
  %v1090 = vunpack.c.l.b16 %v274
  %v1091 = vunpack.c.l.b16 %v275
  %v1092 = vunpack.c.l.b16 %v276
  %v1093 = vunpack.c.l.b16 %v277
  %v1094 = vunpack.c.l.b16 %v278
  %v1095 = vunpack.c.l.b16 %v279
  %v1096 = vunpack.c.l.b16 %v280
  %v1097 = vunpack.c.l.b16 %v281
  %v1098 = vunpack.c.l.b16 %v282
  %v1099 = vunpack.c.l.b16 %v283
  %v1100 = vunpack.c.l.b16 %v284
  %v1101 = vunpack.c.l.b16 %v285
  %v1102 = vunpack.c.l.b16 %v286
  %v1103 = vunpack.c.l.b16 %v287
  %v1104 = vunpack.c.l.b16 %v288
  %v1105 = vunpack.c.l.b16 %v289
  %v1106 = vunpack.c.l.b16 %v290
  %v1107 = vunpack.c.l.b16 %v291
  %v1108 = vunpack.c.l.b16 %v292
  %v1109 = vunpack.c.l.b16 %v293
  %v1110 = vunpack.c.l.b16 %v294
  %v1111 = vunpack.c.l.b16 %v295
  %v1112 = vunpack.c.l.b16 %v296
  %v1113 = vunpack.c.l.b16 %v297
  %v1114 = vunpack.c.l.b16 %v298
  %v1115 = vunpack.c.l.b16 %v299
  %v1116 = vunpack.c.l.b16 %v300
  %v1117 = vunpack.c.l.b16 %v301
  %v1118 = vunpack.c.l.b16 %v302
  %v1119 = vunpack.c.l.b16 %v303
  %v1120 = vunpack.c.l.b16 %v304
  %v1121 = vunpack.c.l.b16 %v305
  %v1122 = vunpack.c.l.b16 %v306
  %v1123 = vunpack.c.l.b16 %v307
  %v1124 = vunpack.c.l.b16 %v308
  %v1125 = vunpack.c.l.b16 %v309
  %v1126 = vunpack.c.l.b16 %v310
  %v1127 = vunpack.c.l.b16 %v311
  %v1128 = vunpack.c.l.b16 %v312
  %v1129 = vunpack.c.l.b16 %v313
  %v1130 = vunpack.c.l.b16 %v314
  %v1131 = vunpack.c.l.b16 %v315
  %v1132 = vunpack.c.l.b16 %v316
  %v1133 = vunpack.c.l.b16 %v317
  %v1134 = vunpack.c.l.b16 %v318
  %v1135 = vunpack.c.l.b16 %v319
  %v1136 = vunpack.c.l.b16 %v320
  %v1137 = vunpack.c.l.b16 %v321
  %v1138 = vunpack.c.l.b16 %v322
  %v1139 = vunpack.c.l.b16 %v323
  %v1140 = vunpack.c.l.b16 %v324
  %v1141 = vunpack.c.l.b16 %v325
  %v1142 = vunpack.c.l.b16 %v326
  %v1143 = vunpack.c.l.b16 %v327
  %v1144 = vunpack.c.l.b16 %v328
  %v1145 = vunpack.c.l.b16 %v329
  %v1146 = vunpack.c.l.b16 %v330
  %v1147 = vunpack.c.l.b16 %v331
  %v1148 = vunpack.c.l.b16 %v332
  %v1149 = vunpack.c.l.b16 %v333
  %v1150 = vunpack.c.l.b16 %v334
  %v1151 = vunpack.c.l.b16 %v335
  %v1152 = vunpack.c.l.b16 %v336
  %v1153 = vunpack.c.l.b16 %v337
  %v1154 = vunpack.c.l.b16 %v338
  %v1155 = vunpack.c.l.b16 %v339
  %v1156 = vunpack.c.l.b16 %v340
  %v1157 = vunpack.c.l.b16 %v341
  %v1158 = vunpack.c.l.b16 %v342
  %v1159 = vunpack.c.l.b16 %v343
  %v1160 = vunpack.c.l.b16 %v344
  %v1161 = vunpack.c.l.b16 %v345
  %v1162 = vunpack.c.l.b16 %v346
  %v1163 = vunpack.c.l.b16 %v347
  %v1164 = vunpack.c.l.b16 %v348
  %v1165 = vunpack.c.l.b16 %v349
  %v1166 = vunpack.c.l.b16 %v350
  %v1167 = vunpack.c.l.b16 %v351
  %v1168 = vunpack.c.l.b16 %v352
  %v1169 = vunpack.c.l.b16 %v353
  %v1170 = vunpack.c.l.b16 %v354
  %v1171 = vunpack.c.l.b16 %v355
  %v1172 = vunpack.c.l.b16 %v356
  %v1173 = vunpack.c.l.b16 %v357
  %v1174 = vunpack.c.l.b16 %v358
  %v1175 = vunpack.c.l.b16 %v359
  %v1176 = vunpack.c.l.b16 %v360
  %v1177 = vunpack.c.l.b16 %v361
  %v1178 = vunpack.c.l.b16 %v362
  %v1179 = vunpack.c.l.b16 %v363
  %v1180 = vunpack.c.l.b16 %v364
  %v1181 = vunpack.c.l.b16 %v365
  %v1182 = vunpack.c.l.b16 %v366
  %v1183 = vunpack.c.l.b16 %v367
  %v1184 = vunpack.c.l.b16 %v368
  %v1185 = vunpack.c.l.b16 %v369
  %v1186 = vunpack.c.l.b16 %v370
  %v1187 = vunpack.c.l.b16 %v371
  %v1188 = vunpack.c.l.b16 %v372
  %v1189 = vunpack.c.l.b16 %v373
  %v1190 = vunpack.c.l.b16 %v374
  %v1191 = vunpack.c.l.b16 %v375
  %v1192 = vunpack.c.l.b16 %v376
  %v1193 = vunpack.c.l.b16 %v377
  %v1194 = vunpack.c.l.b16 %v378
  %v1195 = vunpack.c.l.b16 %v379
  %v1196 = vunpack.c.l.b16 %v380
  %v1197 = vunpack.c.l.b16 %v381
  %v1198 = vunpack.c.l.b16 %v382
  %v1199 = vunpack.c.l.b16 %v383
  %v1200 = vunpack.c.l.b16 %v384
  %v1201 = vunpack.c.l.b16 %v385
  %v1202 = vunpack.c.l.b16 %v386
  %v1203 = vunpack.c.l.b16 %v387
  %v1204 = vunpack.c.l.b16 %v388
  %v1205 = vunpack.c.l.b16 %v389
  %v1206 = vunpack.c.l.b16 %v390
  %v1207 = vunpack.c.l.b16 %v391
  %v1208 = vunpack.c.l.b16 %v392
  %v1209 = vunpack.c.l.b16 %v393
  %v1210 = vunpack.c.l.b16 %v394
  %v1211 = vunpack.c.l.b16 %v395
  %v1212 = vunpack.c.l.b16 %v396
  %v1213 = vunpack.c.l.b16 %v397
  %v1214 = vunpack.c.l.b16 %v398
  %v1215 = vunpack.c.l.b16 %v399
  %v1216 = vunpack.c.l.b16 %v400
  %v1217 = vunpack.c.l.b16 %v401
  %v1218 = vunpack.c.l.b16 %v402
  %v1219 = vunpack.c.l.b16 %v403
  %v1220 = vunpack.c.l.b16 %v404
  %v1221 = vunpack.c.l.b16 %v405
  %v1222 = vunpack.c.l.b16 %v406
  %v1223 = vunpack.c.l.b16 %v407
  %v1224 = vunpack.c.l.b16 %v408
  %v1225 = vunpack.c.l.b16 %v409
  %v1226 = vunpack.c.l.b16 %v410
  %v1227 = vunpack.c.l.b16 %v411
  %v1228 = vunpack.c.l.b16 %v412
  %v1229 = vunpack.c.l.b16 %v413
  %v1230 = vunpack.c.l.b16 %v414
  %v1231 = vpack.c.b16 %v832, %v831
  %v1232 = vpack.c.b16 %v834, %v833
  %v1233 = vpack.c.b16 %v836, %v835
  %v1234 = vpack.c.b16 %v838, %v837
  %v1235 = vpack.c.b16 %v840, %v839
  %v1236 = vpack.c.b16 %v842, %v841
  %v1237 = vpack.c.b16 %v844, %v843
  %v1238 = vpack.c.b16 %v846, %v845
  %v1239 = vpack.c.b16 %v848, %v847
  %v1240 = vpack.c.b16 %v850, %v849
  %v1241 = vpack.c.b16 %v852, %v851
  %v1242 = vpack.c.b16 %v854, %v853
  %v1243 = vpack.c.b16 %v856, %v855
  %v1244 = vpack.c.b16 %v858, %v857
  %v1245 = vpack.c.b16 %v860, %v859
  %v1246 = vpack.c.b16 %v862, %v861
  %v1247 = vpack.c.b16 %v864, %v863
  %v1248 = vpack.c.b16 %v866, %v865
  %v1249 = vpack.c.b16 %v868, %v867
  %v1250 = vpack.c.b16 %v870, %v869
  %v1251 = vpack.c.b16 %v872, %v871
  %v1252 = vpack.c.b16 %v874, %v873
  %v1253 = vpack.c.b16 %v876, %v875
  %v1254 = vpack.c.b16 %v878, %v877
  %v1255 = vpack.c.b16 %v880, %v879
  %v1256 = vpack.c.b16 %v882, %v881
  %v1257 = vpack.c.b16 %v884, %v883
  %v1258 = vpack.c.b16 %v886, %v885
  %v1259 = vpack.c.b16 %v888, %v887
  %v1260 = vpack.c.b16 %v890, %v889
  %v1261 = vpack.c.b16 %v892, %v891
  %v1262 = vpack.c.b16 %v894, %v893
  %v1263 = vpack.c.b16 %v896, %v895
  %v1264 = vpack.c.b16 %v898, %v897
  %v1265 = vpack.c.b16 %v900, %v899
  %v1266 = vpack.c.b16 %v902, %v901
  %v1267 = vpack.c.b16 %v904, %v903
  %v1268 = vpack.c.b16 %v906, %v905
  %v1269 = vpack.c.b16 %v908, %v907
  %v1270 = vpack.c.b16 %v910, %v909
  %v1271 = vpack.c.b16 %v912, %v911
  %v1272 = vpack.c.b16 %v914, %v913
  %v1273 = vpack.c.b16 %v916, %v915
  %v1274 = vpack.c.b16 %v918, %v917
  %v1275 = vpack.c.b16 %v920, %v919
  %v1276 = vpack.c.b16 %v922, %v921
  %v1277 = vpack.c.b16 %v924, %v923
  %v1278 = vpack.c.b16 %v926, %v925
  %v1279 = vpack.c.b16 %v928, %v927
  %v1280 = vpack.c.b16 %v930, %v929
  %v1281 = vpack.c.b16 %v932, %v931
  %v1282 = vpack.c.b16 %v934, %v933
  %v1283 = vpack.c.b16 %v936, %v935
  %v1284 = vpack.c.b16 %v938, %v937
  %v1285 = vpack.c.b16 %v940, %v939
  %v1286 = vpack.c.b16 %v942, %v941
  %v1287 = vpack.c.b16 %v944, %v943
  %v1288 = vpack.c.b16 %v946, %v945
  %v1289 = vpack.c.b16 %v948, %v947
  %v1290 = vpack.c.b16 %v950, %v949
  %v1291 = vpack.c.b16 %v952, %v951
  %v1292 = vpack.c.b16 %v954, %v953
  %v1293 = vpack.c.b16 %v956, %v955
  %v1294 = vpack.c.b16 %v958, %v957
  %v1295 = vpack.c.b16 %v960, %v959
  %v1296 = vpack.c.b16 %v962, %v961
  %v1297 = vpack.c.b16 %v964, %v963
  %v1298 = vpack.c.b16 %v966, %v965
  %v1299 = vpack.c.b16 %v968, %v967
  %v1300 = vpack.c.b16 %v970, %v969
  %v1301 = vpack.c.b16 %v972, %v971
  %v1302 = vpack.c.b16 %v974, %v973
  %v1303 = vpack.c.b16 %v976, %v975
  %v1304 = vpack.c.b16 %v978, %v977
  %v1305 = vpack.c.b16 %v980, %v979
  %v1306 = vpack.c.b16 %v982, %v981
  %v1307 = vpack.c.b16 %v984, %v983
  %v1308 = vpack.c.b16 %v986, %v985
  %v1309 = vpack.c.b16 %v988, %v987
  %v1310 = vpack.c.b16 %v990, %v989
  %v1311 = vpack.c.b16 %v992, %v991
  %v1312 = vpack.c.b16 %v994, %v993
  %v1313 = vpack.c.b16 %v996, %v995
  %v1314 = vpack.c.b16 %v998, %v997
  %v1315 = vpack.c.b16 %v1000, %v999
  %v1316 = vpack.c.b16 %v1002, %v1001
  %v1317 = vpack.c.b16 %v1004, %v1003
  %v1318 = vpack.c.b16 %v1006, %v1005
  %v1319 = vpack.c.b16 %v1008, %v1007
  %v1320 = vpack.c.b16 %v1010, %v1009
  %v1321 = vpack.c.b16 %v1012, %v1011
  %v1322 = vpack.c.b16 %v1014, %v1013
  %v1323 = vpack.c.b16 %v1016, %v1015
  %v1324 = vpack.c.b16 %v1018, %v1017
  %v1325 = vpack.c.b16 %v1020, %v1019
  %v1326 = vpack.c.b16 %v1022, %v1021
  %v1327 = vpack.c.b16 %v1024, %v1023
  %v1328 = vpack.c.b16 %v1026, %v1025
  %v1329 = vpack.c.b16 %v1028, %v1027
  %v1330 = vpack.c.b16 %v1030, %v1029
  %v1331 = vpack.c.b16 %v1032, %v1031
  %v1332 = vpack.c.b16 %v1034, %v1033
  %v1333 = vpack.c.b16 %v1036, %v1035
  %v1334 = vpack.c.b16 %v1038, %v1037
  %v1335 = vpack.c.b16 %v1040, %v1039
  %v1336 = vpack.c.b16 %v1042, %v1041
  %v1337 = vpack.c.b16 %v1044, %v1043
  %v1338 = vpack.c.b16 %v1046, %v1045
  %v1339 = vpack.c.b16 %v1048, %v1047
  %v1340 = vpack.c.b16 %v1050, %v1049
  %v1341 = vpack.c.b16 %v1052, %v1051
  %v1342 = vpack.c.b16 %v1054, %v1053
  %v1343 = vpack.c.b16 %v1056, %v1055
  %v1344 = vpack.c.b16 %v1058, %v1057
  %v1345 = vpack.c.b16 %v1060, %v1059
  %v1346 = vpack.c.b16 %v1062, %v1061
  %v1347 = vpack.c.b16 %v1064, %v1063
  %v1348 = vpack.c.b16 %v1066, %v1065
  %v1349 = vpack.c.b16 %v1068, %v1067
  %v1350 = vpack.c.b16 %v1070, %v1069
  %v1351 = vpack.c.b16 %v1072, %v1071
  %v1352 = vpack.c.b16 %v1074, %v1073
  %v1353 = vpack.c.b16 %v1076, %v1075
  %v1354 = vpack.c.b16 %v1078, %v1077
  %v1355 = vpack.c.b16 %v1080, %v1079
  %v1356 = vpack.c.b16 %v1082, %v1081
  %v1357 = vpack.c.b16 %v1084, %v1083
  %v1358 = vpack.c.b16 %v1086, %v1085
  %v1359 = vpack.c.b16 %v1088, %v1087
  %v1360 = vpack.c.b16 %v1090, %v1089
  %v1361 = vpack.c.b16 %v1092, %v1091
  %v1362 = vpack.c.b16 %v1094, %v1093
  %v1363 = vpack.c.b16 %v1096, %v1095
  %v1364 = vpack.c.b16 %v1098, %v1097
  %v1365 = vpack.c.b16 %v1100, %v1099
  %v1366 = vpack.c.b16 %v1102, %v1101
  %v1367 = vpack.c.b16 %v1104, %v1103
  %v1368 = vpack.c.b16 %v1106, %v1105
  %v1369 = vpack.c.b16 %v1108, %v1107
  %v1370 = vpack.c.b16 %v1110, %v1109
  %v1371 = vpack.c.b16 %v1112, %v1111
  %v1372 = vpack.c.b16 %v1114, %v1113
  %v1373 = vpack.c.b16 %v1116, %v1115
  %v1374 = vpack.c.b16 %v1118, %v1117
  %v1375 = vpack.c.b16 %v1120, %v1119
  %v1376 = vpack.c.b16 %v1122, %v1121
  %v1377 = vpack.c.b16 %v1124, %v1123
  %v1378 = vpack.c.b16 %v1126, %v1125
  %v1379 = vpack.c.b16 %v1128, %v1127
  %v1380 = vpack.c.b16 %v1130, %v1129
  %v1381 = vpack.c.b16 %v1132, %v1131
  %v1382 = vpack.c.b16 %v1134, %v1133
  %v1383 = vpack.c.b16 %v1136, %v1135
  %v1384 = vpack.c.b16 %v1138, %v1137
  %v1385 = vpack.c.b16 %v1140, %v1139
  %v1386 = vpack.c.b16 %v1142, %v1141
  %v1387 = vpack.c.b16 %v1144, %v1143
  %v1388 = vpack.c.b16 %v1146, %v1145
  %v1389 = vpack.c.b16 %v1148, %v1147
  %v1390 = vpack.c.b16 %v1150, %v1149
  %v1391 = vpack.c.b16 %v1152, %v1151
  %v1392 = vpack.c.b16 %v1154, %v1153
  %v1393 = vpack.c.b16 %v1156, %v1155
  %v1394 = vpack.c.b16 %v1158, %v1157
  %v1395 = vpack.c.b16 %v1160, %v1159
  %v1396 = vpack.c.b16 %v1162, %v1161
  %v1397 = vpack.c.b16 %v1164, %v1163
  %v1398 = vpack.c.b16 %v1166, %v1165
  %v1399 = vpack.c.b16 %v1168, %v1167
  %v1400 = vpack.c.b16 %v1170, %v1169
  %v1401 = vpack.c.b16 %v1172, %v1171
  %v1402 = vpack.c.b16 %v1174, %v1173
  %v1403 = vpack.c.b16 %v1176, %v1175
  %v1404 = vpack.c.b16 %v1178, %v1177
  %v1405 = vpack.c.b16 %v1180, %v1179
  %v1406 = vpack.c.b16 %v1182, %v1181
  %v1407 = vpack.c.b16 %v1184, %v1183
  %v1408 = vpack.c.b16 %v1186, %v1185
  %v1409 = vpack.c.b16 %v1188, %v1187
  %v1410 = vpack.c.b16 %v1190, %v1189
  %v1411 = vpack.c.b16 %v1192, %v1191
  %v1412 = vpack.c.b16 %v1194, %v1193
  %v1413 = vpack.c.b16 %v1196, %v1195
  %v1414 = vpack.c.b16 %v1198, %v1197
  %v1415 = vpack.c.b16 %v1200, %v1199
  %v1416 = vpack.c.b16 %v1202, %v1201
  %v1417 = vpack.c.b16 %v1204, %v1203
  %v1418 = vpack.c.b16 %v1206, %v1205
  %v1419 = vpack.c.b16 %v1208, %v1207
  %v1420 = vpack.c.b16 %v1210, %v1209
  %v1421 = vpack.c.b16 %v1212, %v1211
  %v1422 = vpack.c.b16 %v1214, %v1213
  %v1423 = vpack.c.b16 %v1216, %v1215
  %v1424 = vpack.c.b16 %v1218, %v1217
  %v1425 = vpack.c.b16 %v1220, %v1219
  %v1426 = vpack.c.b16 %v1222, %v1221
  %v1427 = vpack.c.b16 %v1224, %v1223
  %v1428 = vpack.c.b16 %v1226, %v1225
  %v1429 = vpack.c.b16 %v1228, %v1227
  %v1430 = vpack.c.b16 %v1230, %v1229
  %v1647 = vunpack.c.l.b16 %v415
  %v1648 = vunpack.c.l.b16 %v416
  %v1649 = vunpack.c.l.b16 %v417
  %v1650 = vunpack.c.l.b16 %v418
  %v1651 = vunpack.c.l.b16 %v419
  %v1652 = vunpack.c.l.b16 %v420
  %v1653 = vunpack.c.l.b16 %v421
  %v1654 = vunpack.c.l.b16 %v422
  %v1655 = vunpack.c.l.b16 %v423
  %v1656 = vunpack.c.l.b16 %v424
  %v1657 = vunpack.c.l.b16 %v425
  %v1658 = vunpack.c.l.b16 %v426
  %v1659 = vunpack.c.l.b16 %v427
  %v1660 = vunpack.c.l.b16 %v428
  %v1661 = vunpack.c.l.b16 %v429
  %v1662 = vunpack.c.l.b16 %v430
  %v1663 = vpack.c.b16 %v1648, %v1647
  %v1664 = vpack.c.b16 %v1650, %v1649
  %v1665 = vpack.c.b16 %v1652, %v1651
  %v1666 = vpack.c.b16 %v1654, %v1653
  %v1667 = vpack.c.b16 %v1656, %v1655
  %v1668 = vpack.c.b16 %v1658, %v1657
  %v1669 = vpack.c.b16 %v1660, %v1659
  %v1670 = vpack.c.b16 %v1662, %v1661
  %1679 = vmatprep.subr.bf16.mxu0 0
  %1680 = vmatpush1.bf16.msra.mxu0 %v1663
  %1681 = vmatprep.subr.bf16.mxu0 0
  %1682 = vmatpush1.bf16.msra.mxu0 %v1664
  %1683 = vmatprep.subr.bf16.mxu0 0
  %1684 = vmatpush1.bf16.msra.mxu0 %v1665
  %1685 = vmatprep.subr.bf16.mxu0 0
  %1686 = vmatpush1.bf16.msra.mxu0 %v1666
  %1687 = vmatprep.subr.bf16.mxu0 0
  %1688 = vmatpush1.bf16.msra.mxu0 %v1667
  %1689 = vmatprep.subr.bf16.mxu0 0
  %1690 = vmatpush1.bf16.msra.mxu0 %v1668
  %1691 = vmatprep.subr.bf16.mxu0 0
  %1692 = vmatpush1.bf16.msra.mxu0 %v1669
  %1693 = vmatprep.subr.bf16.mxu0 0
  %1694 = vmatpush1.bf16.msra.mxu0 %v1670
  %1695 = vmatprep.subr.bf16.mxu0 0
  %1696 = vmatpush1.bf16.msra.mxu0 0
  %1697 = vmatprep.subr.bf16.mxu0 0
  %1698 = vmatpush1.bf16.msra.mxu0 0
  %1699 = vmatprep.subr.bf16.mxu0 0
  %1700 = vmatpush1.bf16.msra.mxu0 0
  %1701 = vmatprep.subr.bf16.mxu0 0
  %1702 = vmatpush1.bf16.msra.mxu0 0
  %1703 = vmatprep.subr.bf16.mxu0 0
  %1704 = vmatpush1.bf16.msra.mxu0 0
  %1705 = vmatprep.subr.bf16.mxu0 0
  %1706 = vmatpush1.bf16.msra.mxu0 0
  %1707 = vmatprep.subr.bf16.mxu0 0
  %1708 = vmatpush1.bf16.msra.mxu0 0
  %1709 = vmatprep.subr.bf16.mxu0 0
  %1710 = vmatpush1.bf16.msra.mxu0 0
  %1711 = vmatprep.mubr.bf16.mxu0 0
  %1712 = vmatmul.mubr.bf16.gmra.mrb[0].mxu0 %v1231
  %v1713 = vpop.f32.mrb[0].mxu0
  %v1714 = vadd.f32 0.0, %v1713
  %v1715 = vpop.f32.mrb[0].mxu0
  %v1716 = vpop.f32.mrb[0].mxu0
  %v1717 = vadd.f32 0.0, %v1716
  %v1718 = vpop.f32.mrb[0].mxu0
  %1719 = vmatprep.mubr.bf16.mxu0 0
  %1720 = vmatmul.mubr.bf16.gmra.mrb[0].mxu0 %v1232
  %v1721 = vpop.f32.mrb[0].mxu0
  %v1722 = vadd.f32 0.0, %v1721
  %v1723 = vpop.f32.mrb[0].mxu0
  %v1724 = vpop.f32.mrb[0].mxu0
  %v1725 = vadd.f32 0.0, %v1724
  %v1726 = vpop.f32.mrb[0].mxu0
  %1727 = vmatprep.mubr.bf16.mxu0 0
  %1728 = vmatmul.mubr.bf16.gmra.mrb[0].mxu0 %v1233
  %v1729 = vpop.f32.mrb[0].mxu0
  %v1730 = vadd.f32 0.0, %v1729
  %v1731 = vpop.f32.mrb[0].mxu0
  %v1732 = vpop.f32.mrb[0].mxu0
  %v1733 = vadd.f32 0.0, %v1732
  %v1734 = vpop.f32.mrb[0].mxu0
  %1735 = vmatprep.mubr.bf16.mxu0 0
  %1736 = vmatmul.mubr.bf16.gmra.mrb[0].mxu0 %v1234
  %v1737 = vpop.f32.mrb[0].mxu0
  %v1738 = vadd.f32 0.0, %v1737
  %v1739 = vpop.f32.mrb[0].mxu0
  %v1740 = vpop.f32.mrb[0].mxu0
  %v1741 = vadd.f32 0.0, %v1740
  %v1742 = vpop.f32.mrb[0].mxu0
  %1743 = vmatprep.mubr.bf16.mxu0 0
  %1744 = vmatmul.mubr.bf16.gmra.mrb[0].mxu0 %v1235
  %v1745 = vpop.f32.mrb[0].mxu0
  %v1746 = vadd.f32 0.0, %v1745
  %v1747 = vpop.f32.mrb[0].mxu0
  %v1748 = vpop.f32.mrb[0].mxu0
  %v1749 = vadd.f32 0.0, %v1748
  %v1750 = vpop.f32.mrb[0].mxu0
  %1751 = vmatprep.mubr.bf16.mxu0 0
  %1752 = vmatmul.mubr.bf16.gmra.mrb[0].mxu0 %v1236
  %v1753 = vpop.f32.mrb[0].mxu0
  %v1754 = vadd.f32 0.0, %v1753
  %v1755 = vpop.f32.mrb[0].mxu0
  %v1756 = vpop.f32.mrb[0].mxu0
  %v1757 = vadd.f32 0.0, %v1756
  %v1758 = vpop.f32.mrb[0].mxu0
  %1759 = vmatprep.mubr.bf16.mxu0 0
  %1760 = vmatmul.mubr.bf16.gmra.mrb[0].mxu0 %v1237
  %v1761 = vpop.f32.mrb[0].mxu0
  %v1762 = vadd.f32 0.0, %v1761
  %v1763 = vpop.f32.mrb[0].mxu0
  %v1764 = vpop.f32.mrb[0].mxu0
  %v1765 = vadd.f32 0.0, %v1764
  %v1766 = vpop.f32.mrb[0].mxu0
  %1767 = vmatprep.mubr.bf16.mxu0 0
  %1768 = vmatmul.mubr.bf16.gmra.mrb[0].mxu0 %v1238
  %v1769 = vpop.f32.mrb[0].mxu0
  %v1770 = vadd.f32 0.0, %v1769
  %v1771 = vpop.f32.mrb[0].mxu0
  %v1772 = vpop.f32.mrb[0].mxu0
  %v1773 = vadd.f32 0.0, %v1772
  %v1774 = vpop.f32.mrb[0].mxu0
  %1775 = vmatprep.mubr.bf16.mxu0 0
  %1776 = vmatmul.mubr.bf16.gmra.mrb[0].mxu0 %v1239
  %v1777 = vpop.f32.mrb[0].mxu0
  %v1778 = vadd.f32 0.0, %v1777
  %v1779 = vpop.f32.mrb[0].mxu0
  %v1780 = vpop.f32.mrb[0].mxu0
  %v1781 = vadd.f32 0.0, %v1780
  %v1782 = vpop.f32.mrb[0].mxu0
  %1783 = vmatprep.mubr.bf16.mxu0 0
  %1784 = vmatmul.mubr.bf16.gmra.mrb[0].mxu0 %v1240
  %v1785 = vpop.f32.mrb[0].mxu0
  %v1786 = vadd.f32 0.0, %v1785
  %v1787 = vpop.f32.mrb[0].mxu0
  %v1788 = vpop.f32.mrb[0].mxu0
  %v1789 = vadd.f32 0.0, %v1788
  %v1790 = vpop.f32.mrb[0].mxu0
  %1791 = vmatprep.mubr.bf16.mxu0 0
  %1792 = vmatmul.mubr.bf16.gmra.mrb[0].mxu0 %v1241
  %v1793 = vpop.f32.mrb[0].mxu0
  %v1794 = vadd.f32 0.0, %v1793
  %v1795 = vpop.f32.mrb[0].mxu0
  %v1796 = vpop.f32.mrb[0].mxu0
  %v1797 = vadd.f32 0.0, %v1796
  %v1798 = vpop.f32.mrb[0].mxu0
  %1799 = vmatprep.mubr.bf16.mxu0 0
  %1800 = vmatmul.mubr.bf16.gmra.mrb[0].mxu0 %v1242
  %v1801 = vpop.f32.mrb[0].mxu0
  %v1802 = vadd.f32 0.0, %v1801
  %v1803 = vpop.f32.mrb[0].mxu0
  %v1804 = vpop.f32.mrb[0].mxu0
  %v1805 = vadd.f32 0.0, %v1804
  %v1806 = vpop.f32.mrb[0].mxu0
  %1807 = vmatprep.mubr.bf16.mxu0 0
  %1808 = vmatmul.mubr.bf16.gmra.mrb[0].mxu0 %v1243
  %v1809 = vpop.f32.mrb[0].mxu0
  %v1810 = vadd.f32 0.0, %v1809
  %v1811 = vpop.f32.mrb[0].mxu0
  %v1812 = vpop.f32.mrb[0].mxu0
  %v1813 = vadd.f32 0.0, %v1812
  %v1814 = vpop.f32.mrb[0].mxu0
  %1815 = vmatprep.mubr.bf16.mxu0 0
  %1816 = vmatmul.mubr.bf16.gmra.mrb[0].mxu0 %v1244
  %v1817 = vpop.f32.mrb[0].mxu0
  %v1818 = vadd.f32 0.0, %v1817
  %v1819 = vpop.f32.mrb[0].mxu0
  %v1820 = vpop.f32.mrb[0].mxu0
  %v1821 = vadd.f32 0.0, %v1820
  %v1822 = vpop.f32.mrb[0].mxu0
  %1823 = vmatprep.mubr.bf16.mxu0 0
  %1824 = vmatmul.mubr.bf16.gmra.mrb[0].mxu0 %v1245
  %v1825 = vpop.f32.mrb[0].mxu0
  %v1826 = vadd.f32 0.0, %v1825
  %v1827 = vpop.f32.mrb[0].mxu0
  %v1828 = vpop.f32.mrb[0].mxu0
  %v1829 = vadd.f32 0.0, %v1828
  %v1830 = vpop.f32.mrb[0].mxu0
  %1831 = vmatprep.mubr.bf16.mxu0 0
  %1832 = vmatmul.mubr.bf16.gmra.mrb[0].mxu0 %v1246
  %v1833 = vpop.f32.mrb[0].mxu0
  %v1834 = vadd.f32 0.0, %v1833
  %v1835 = vpop.f32.mrb[0].mxu0
  %v1836 = vpop.f32.mrb[0].mxu0
  %v1837 = vadd.f32 0.0, %v1836
  %v1838 = vpop.f32.mrb[0].mxu0
  %1839 = vmatprep.mubr.bf16.mxu0 0
  %1840 = vmatmul.mubr.bf16.gmra.mrb[0].mxu0 %v1247
  %v1841 = vpop.f32.mrb[0].mxu0
  %v1842 = vadd.f32 0.0, %v1841
  %v1843 = vpop.f32.mrb[0].mxu0
  %v1844 = vpop.f32.mrb[0].mxu0
  %v1845 = vadd.f32 0.0, %v1844
  %v1846 = vpop.f32.mrb[0].mxu0
  %1847 = vmatprep.mubr.bf16.mxu0 0
  %1848 = vmatmul.mubr.bf16.gmra.mrb[0].mxu0 %v1248
  %v1849 = vpop.f32.mrb[0].mxu0
  %v1850 = vadd.f32 0.0, %v1849
  %v1851 = vpop.f32.mrb[0].mxu0
  %v1852 = vpop.f32.mrb[0].mxu0
  %v1853 = vadd.f32 0.0, %v1852
  %v1854 = vpop.f32.mrb[0].mxu0
  %1855 = vmatprep.mubr.bf16.mxu0 0
  %1856 = vmatmul.mubr.bf16.gmra.mrb[0].mxu0 %v1249
  %v1857 = vpop.f32.mrb[0].mxu0
  %v1858 = vadd.f32 0.0, %v1857
  %v1859 = vpop.f32.mrb[0].mxu0
  %v1860 = vpop.f32.mrb[0].mxu0
  %v1861 = vadd.f32 0.0, %v1860
  %v1862 = vpop.f32.mrb[0].mxu0
  %1863 = vmatprep.mubr.bf16.mxu0 0
  %1864 = vmatmul.mubr.bf16.gmra.mrb[0].mxu0 %v1250
  %v1865 = vpop.f32.mrb[0].mxu0
  %v1866 = vadd.f32 0.0, %v1865
  %v1867 = vpop.f32.mrb[0].mxu0
  %v1868 = vpop.f32.mrb[0].mxu0
  %v1869 = vadd.f32 0.0, %v1868
  %v1870 = vpop.f32.mrb[0].mxu0
  %1871 = vmatprep.mubr.bf16.mxu0 0
  %1872 = vmatmul.mubr.bf16.gmra.mrb[0].mxu0 %v1251
  %v1873 = vpop.f32.mrb[0].mxu0
  %v1874 = vadd.f32 0.0, %v1873
  %v1875 = vpop.f32.mrb[0].mxu0
  %v1876 = vpop.f32.mrb[0].mxu0
  %v1877 = vadd.f32 0.0, %v1876
  %v1878 = vpop.f32.mrb[0].mxu0
  %1879 = vmatprep.mubr.bf16.mxu0 0
  %1880 = vmatmul.mubr.bf16.gmra.mrb[0].mxu0 %v1252
  %v1881 = vpop.f32.mrb[0].mxu0
  %v1882 = vadd.f32 0.0, %v1881
  %v1883 = vpop.f32.mrb[0].mxu0
  %v1884 = vpop.f32.mrb[0].mxu0
  %v1885 = vadd.f32 0.0, %v1884
  %v1886 = vpop.f32.mrb[0].mxu0
  %1887 = vmatprep.mubr.bf16.mxu0 0
  %1888 = vmatmul.mubr.bf16.gmra.mrb[0].mxu0 %v1253
  %v1889 = vpop.f32.mrb[0].mxu0
  %v1890 = vadd.f32 0.0, %v1889
  %v1891 = vpop.f32.mrb[0].mxu0
  %v1892 = vpop.f32.mrb[0].mxu0
  %v1893 = vadd.f32 0.0, %v1892
  %v1894 = vpop.f32.mrb[0].mxu0
  %1895 = vmatprep.mubr.bf16.mxu0 0
  %1896 = vmatmul.mubr.bf16.gmra.mrb[0].mxu0 %v1254
  %v1897 = vpop.f32.mrb[0].mxu0
  %v1898 = vadd.f32 0.0, %v1897
  %v1899 = vpop.f32.mrb[0].mxu0
  %v1900 = vpop.f32.mrb[0].mxu0
  %v1901 = vadd.f32 0.0, %v1900
  %v1902 = vpop.f32.mrb[0].mxu0
  %1903 = vmatprep.mubr.bf16.mxu0 0
  %1904 = vmatmul.mubr.bf16.gmra.mrb[0].mxu0 %v1255
  %v1905 = vpop.f32.mrb[0].mxu0
  %v1906 = vadd.f32 0.0, %v1905
  %v1907 = vpop.f32.mrb[0].mxu0
  %v1908 = vpop.f32.mrb[0].mxu0
  %v1909 = vadd.f32 0.0, %v1908
  %v1910 = vpop.f32.mrb[0].mxu0
  %1911 = vmatprep.mubr.bf16.mxu0 0
  %1912 = vmatmul.mubr.bf16.gmra.mrb[0].mxu0 %v1256
  %v1913 = vpop.f32.mrb[0].mxu0
  %v1914 = vadd.f32 0.0, %v1913
  %v1915 = vpop.f32.mrb[0].mxu0
  %v1916 = vpop.f32.mrb[0].mxu0
  %v1917 = vadd.f32 0.0, %v1916
  %v1918 = vpop.f32.mrb[0].mxu0
  %1919 = vmatprep.mubr.bf16.mxu0 0
  %1920 = vmatmul.mubr.bf16.gmra.mrb[0].mxu0 %v1257
  %v1921 = vpop.f32.mrb[0].mxu0
  %v1922 = vadd.f32 0.0, %v1921
  %v1923 = vpop.f32.mrb[0].mxu0
  %v1924 = vpop.f32.mrb[0].mxu0
  %v1925 = vadd.f32 0.0, %v1924
  %v1926 = vpop.f32.mrb[0].mxu0
  %1927 = vmatprep.mubr.bf16.mxu0 0
  %1928 = vmatmul.mubr.bf16.gmra.mrb[0].mxu0 %v1258
  %v1929 = vpop.f32.mrb[0].mxu0
  %v1930 = vadd.f32 0.0, %v1929
  %v1931 = vpop.f32.mrb[0].mxu0
  %v1932 = vpop.f32.mrb[0].mxu0
  %v1933 = vadd.f32 0.0, %v1932
  %v1934 = vpop.f32.mrb[0].mxu0
  %1935 = vmatprep.mubr.bf16.mxu0 0
  %1936 = vmatmul.mubr.bf16.gmra.mrb[0].mxu0 %v1259
  %v1937 = vpop.f32.mrb[0].mxu0
  %v1938 = vadd.f32 0.0, %v1937
  %v1939 = vpop.f32.mrb[0].mxu0
  %v1940 = vpop.f32.mrb[0].mxu0
  %v1941 = vadd.f32 0.0, %v1940
  %v1942 = vpop.f32.mrb[0].mxu0
  %1943 = vmatprep.mubr.bf16.mxu0 0
  %1944 = vmatmul.mubr.bf16.gmra.mrb[0].mxu0 %v1260
  %v1945 = vpop.f32.mrb[0].mxu0
  %v1946 = vadd.f32 0.0, %v1945
  %v1947 = vpop.f32.mrb[0].mxu0
  %v1948 = vpop.f32.mrb[0].mxu0
  %v1949 = vadd.f32 0.0, %v1948
  %v1950 = vpop.f32.mrb[0].mxu0
  %1951 = vmatprep.mubr.bf16.mxu0 0
  %1952 = vmatmul.mubr.bf16.gmra.mrb[0].mxu0 %v1261
  %v1953 = vpop.f32.mrb[0].mxu0
  %v1954 = vadd.f32 0.0, %v1953
  %v1955 = vpop.f32.mrb[0].mxu0
  %v1956 = vpop.f32.mrb[0].mxu0
  %v1957 = vadd.f32 0.0, %v1956
  %v1958 = vpop.f32.mrb[0].mxu0
  %1959 = vmatprep.mubr.bf16.mxu0 0
  %1960 = vmatmul.mubr.bf16.gmra.mrb[0].mxu0 %v1262
  %v1961 = vpop.f32.mrb[0].mxu0
  %v1962 = vadd.f32 0.0, %v1961
  %v1963 = vpop.f32.mrb[0].mxu0
  %v1964 = vpop.f32.mrb[0].mxu0
  %v1965 = vadd.f32 0.0, %v1964
  %v1966 = vpop.f32.mrb[0].mxu0
  %1967 = vmatprep.mubr.bf16.mxu0 0
  %1968 = vmatmul.mubr.bf16.gmra.mrb[0].mxu0 %v1263
  %v1969 = vpop.f32.mrb[0].mxu0
  %v1970 = vadd.f32 0.0, %v1969
  %v1971 = vpop.f32.mrb[0].mxu0
  %v1972 = vpop.f32.mrb[0].mxu0
  %v1973 = vadd.f32 0.0, %v1972
  %v1974 = vpop.f32.mrb[0].mxu0
  %1975 = vmatprep.mubr.bf16.mxu0 0
  %1976 = vmatmul.mubr.bf16.gmra.mrb[0].mxu0 %v1264
  %v1977 = vpop.f32.mrb[0].mxu0
  %v1978 = vadd.f32 0.0, %v1977
  %v1979 = vpop.f32.mrb[0].mxu0
  %v1980 = vpop.f32.mrb[0].mxu0
  %v1981 = vadd.f32 0.0, %v1980
  %v1982 = vpop.f32.mrb[0].mxu0
  %1983 = vmatprep.mubr.bf16.mxu0 0
  %1984 = vmatmul.mubr.bf16.gmra.mrb[0].mxu0 %v1265
  %v1985 = vpop.f32.mrb[0].mxu0
  %v1986 = vadd.f32 0.0, %v1985
  %v1987 = vpop.f32.mrb[0].mxu0
  %v1988 = vpop.f32.mrb[0].mxu0
  %v1989 = vadd.f32 0.0, %v1988
  %v1990 = vpop.f32.mrb[0].mxu0
  %1991 = vmatprep.mubr.bf16.mxu0 0
  %1992 = vmatmul.mubr.bf16.gmra.mrb[0].mxu0 %v1266
  %v1993 = vpop.f32.mrb[0].mxu0
  %v1994 = vadd.f32 0.0, %v1993
  %v1995 = vpop.f32.mrb[0].mxu0
  %v1996 = vpop.f32.mrb[0].mxu0
  %v1997 = vadd.f32 0.0, %v1996
  %v1998 = vpop.f32.mrb[0].mxu0
  %1999 = vmatprep.mubr.bf16.mxu0 0
  %2000 = vmatmul.mubr.bf16.gmra.mrb[0].mxu0 %v1267
  %v2001 = vpop.f32.mrb[0].mxu0
  %v2002 = vadd.f32 0.0, %v2001
  %v2003 = vpop.f32.mrb[0].mxu0
  %v2004 = vpop.f32.mrb[0].mxu0
  %v2005 = vadd.f32 0.0, %v2004
  %v2006 = vpop.f32.mrb[0].mxu0
  %2007 = vmatprep.mubr.bf16.mxu0 0
  %2008 = vmatmul.mubr.bf16.gmra.mrb[0].mxu0 %v1268
  %v2009 = vpop.f32.mrb[0].mxu0
  %v2010 = vadd.f32 0.0, %v2009
  %v2011 = vpop.f32.mrb[0].mxu0
  %v2012 = vpop.f32.mrb[0].mxu0
  %v2013 = vadd.f32 0.0, %v2012
  %v2014 = vpop.f32.mrb[0].mxu0
  %2015 = vmatprep.mubr.bf16.mxu0 0
  %2016 = vmatmul.mubr.bf16.gmra.mrb[0].mxu0 %v1269
  %v2017 = vpop.f32.mrb[0].mxu0
  %v2018 = vadd.f32 0.0, %v2017
  %v2019 = vpop.f32.mrb[0].mxu0
  %v2020 = vpop.f32.mrb[0].mxu0
  %v2021 = vadd.f32 0.0, %v2020
  %v2022 = vpop.f32.mrb[0].mxu0
  %2023 = vmatprep.mubr.bf16.mxu0 0
  %2024 = vmatmul.mubr.bf16.gmra.mrb[0].mxu0 %v1270
  %v2025 = vpop.f32.mrb[0].mxu0
  %v2026 = vadd.f32 0.0, %v2025
  %v2027 = vpop.f32.mrb[0].mxu0
  %v2028 = vpop.f32.mrb[0].mxu0
  %v2029 = vadd.f32 0.0, %v2028
  %v2030 = vpop.f32.mrb[0].mxu0
  %2031 = vmatprep.mubr.bf16.mxu0 0
  %2032 = vmatmul.mubr.bf16.gmra.mrb[0].mxu0 %v1271
  %v2033 = vpop.f32.mrb[0].mxu0
  %v2034 = vadd.f32 0.0, %v2033
  %v2035 = vpop.f32.mrb[0].mxu0
  %v2036 = vpop.f32.mrb[0].mxu0
  %v2037 = vadd.f32 0.0, %v2036
  %v2038 = vpop.f32.mrb[0].mxu0
  %2039 = vmatprep.mubr.bf16.mxu0 0
  %2040 = vmatmul.mubr.bf16.gmra.mrb[0].mxu0 %v1272
  %v2041 = vpop.f32.mrb[0].mxu0
  %v2042 = vadd.f32 0.0, %v2041
  %v2043 = vpop.f32.mrb[0].mxu0
  %v2044 = vpop.f32.mrb[0].mxu0
  %v2045 = vadd.f32 0.0, %v2044
  %v2046 = vpop.f32.mrb[0].mxu0
  %2047 = vmatprep.mubr.bf16.mxu0 0
  %2048 = vmatmul.mubr.bf16.gmra.mrb[0].mxu0 %v1273
  %v2049 = vpop.f32.mrb[0].mxu0
  %v2050 = vadd.f32 0.0, %v2049
  %v2051 = vpop.f32.mrb[0].mxu0
  %v2052 = vpop.f32.mrb[0].mxu0
  %v2053 = vadd.f32 0.0, %v2052
  %v2054 = vpop.f32.mrb[0].mxu0
  %2055 = vmatprep.mubr.bf16.mxu0 0
  %2056 = vmatmul.mubr.bf16.gmra.mrb[0].mxu0 %v1274
  %v2057 = vpop.f32.mrb[0].mxu0
  %v2058 = vadd.f32 0.0, %v2057
  %v2059 = vpop.f32.mrb[0].mxu0
  %v2060 = vpop.f32.mrb[0].mxu0
  %v2061 = vadd.f32 0.0, %v2060
  %v2062 = vpop.f32.mrb[0].mxu0
  %2063 = vmatprep.mubr.bf16.mxu0 0
  %2064 = vmatmul.mubr.bf16.gmra.mrb[0].mxu0 %v1275
  %v2065 = vpop.f32.mrb[0].mxu0
  %v2066 = vadd.f32 0.0, %v2065
  %v2067 = vpop.f32.mrb[0].mxu0
  %v2068 = vpop.f32.mrb[0].mxu0
  %v2069 = vadd.f32 0.0, %v2068
  %v2070 = vpop.f32.mrb[0].mxu0
  %2071 = vmatprep.mubr.bf16.mxu0 0
  %2072 = vmatmul.mubr.bf16.gmra.mrb[0].mxu0 %v1276
  %v2073 = vpop.f32.mrb[0].mxu0
  %v2074 = vadd.f32 0.0, %v2073
  %v2075 = vpop.f32.mrb[0].mxu0
  %v2076 = vpop.f32.mrb[0].mxu0
  %v2077 = vadd.f32 0.0, %v2076
  %v2078 = vpop.f32.mrb[0].mxu0
  %2079 = vmatprep.mubr.bf16.mxu0 0
  %2080 = vmatmul.mubr.bf16.gmra.mrb[0].mxu0 %v1277
  %v2081 = vpop.f32.mrb[0].mxu0
  %v2082 = vadd.f32 0.0, %v2081
  %v2083 = vpop.f32.mrb[0].mxu0
  %v2084 = vpop.f32.mrb[0].mxu0
  %v2085 = vadd.f32 0.0, %v2084
  %v2086 = vpop.f32.mrb[0].mxu0
  %2087 = vmatprep.mubr.bf16.mxu0 0
  %2088 = vmatmul.mubr.bf16.gmra.mrb[0].mxu0 %v1278
  %v2089 = vpop.f32.mrb[0].mxu0
  %v2090 = vadd.f32 0.0, %v2089
  %v2091 = vpop.f32.mrb[0].mxu0
  %v2092 = vpop.f32.mrb[0].mxu0
  %v2093 = vadd.f32 0.0, %v2092
  %v2094 = vpop.f32.mrb[0].mxu0
  %2095 = vmatprep.mubr.bf16.mxu0 0
  %2096 = vmatmul.mubr.bf16.gmra.mrb[0].mxu0 %v1279
  %v2097 = vpop.f32.mrb[0].mxu0
  %v2098 = vadd.f32 0.0, %v2097
  %v2099 = vpop.f32.mrb[0].mxu0
  %v2100 = vpop.f32.mrb[0].mxu0
  %v2101 = vadd.f32 0.0, %v2100
  %v2102 = vpop.f32.mrb[0].mxu0
  %2103 = vmatprep.mubr.bf16.mxu0 0
  %2104 = vmatmul.mubr.bf16.gmra.mrb[0].mxu0 %v1280
  %v2105 = vpop.f32.mrb[0].mxu0
  %v2106 = vadd.f32 0.0, %v2105
  %v2107 = vpop.f32.mrb[0].mxu0
  %v2108 = vpop.f32.mrb[0].mxu0
  %v2109 = vadd.f32 0.0, %v2108
  %v2110 = vpop.f32.mrb[0].mxu0
  %2111 = vmatprep.mubr.bf16.mxu0 0
  %2112 = vmatmul.mubr.bf16.gmra.mrb[0].mxu0 %v1281
  %v2113 = vpop.f32.mrb[0].mxu0
  %v2114 = vadd.f32 0.0, %v2113
  %v2115 = vpop.f32.mrb[0].mxu0
  %v2116 = vpop.f32.mrb[0].mxu0
  %v2117 = vadd.f32 0.0, %v2116
  %v2118 = vpop.f32.mrb[0].mxu0
  %2119 = vmatprep.mubr.bf16.mxu0 0
  %2120 = vmatmul.mubr.bf16.gmra.mrb[0].mxu0 %v1282
  %v2121 = vpop.f32.mrb[0].mxu0
  %v2122 = vadd.f32 0.0, %v2121
  %v2123 = vpop.f32.mrb[0].mxu0
  %v2124 = vpop.f32.mrb[0].mxu0
  %v2125 = vadd.f32 0.0, %v2124
  %v2126 = vpop.f32.mrb[0].mxu0
  %2127 = vmatprep.mubr.bf16.mxu0 0
  %2128 = vmatmul.mubr.bf16.gmra.mrb[0].mxu0 %v1283
  %v2129 = vpop.f32.mrb[0].mxu0
  %v2130 = vadd.f32 0.0, %v2129
  %v2131 = vpop.f32.mrb[0].mxu0
  %v2132 = vpop.f32.mrb[0].mxu0
  %v2133 = vadd.f32 0.0, %v2132
  %v2134 = vpop.f32.mrb[0].mxu0
  %2135 = vmatprep.mubr.bf16.mxu0 0
  %2136 = vmatmul.mubr.bf16.gmra.mrb[0].mxu0 %v1284
  %v2137 = vpop.f32.mrb[0].mxu0
  %v2138 = vadd.f32 0.0, %v2137
  %v2139 = vpop.f32.mrb[0].mxu0
  %v2140 = vpop.f32.mrb[0].mxu0
  %v2141 = vadd.f32 0.0, %v2140
  %v2142 = vpop.f32.mrb[0].mxu0
  %2143 = vmatprep.mubr.bf16.mxu0 0
  %2144 = vmatmul.mubr.bf16.gmra.mrb[0].mxu0 %v1285
  %v2145 = vpop.f32.mrb[0].mxu0
  %v2146 = vadd.f32 0.0, %v2145
  %v2147 = vpop.f32.mrb[0].mxu0
  %v2148 = vpop.f32.mrb[0].mxu0
  %v2149 = vadd.f32 0.0, %v2148
  %v2150 = vpop.f32.mrb[0].mxu0
  %2151 = vmatprep.mubr.bf16.mxu0 0
  %2152 = vmatmul.mubr.bf16.gmra.mrb[0].mxu0 %v1286
  %v2153 = vpop.f32.mrb[0].mxu0
  %v2154 = vadd.f32 0.0, %v2153
  %v2155 = vpop.f32.mrb[0].mxu0
  %v2156 = vpop.f32.mrb[0].mxu0
  %v2157 = vadd.f32 0.0, %v2156
  %v2158 = vpop.f32.mrb[0].mxu0
  %2159 = vmatprep.mubr.bf16.mxu0 0
  %2160 = vmatmul.mubr.bf16.gmra.mrb[0].mxu0 %v1287
  %v2161 = vpop.f32.mrb[0].mxu0
  %v2162 = vadd.f32 0.0, %v2161
  %v2163 = vpop.f32.mrb[0].mxu0
  %v2164 = vpop.f32.mrb[0].mxu0
  %v2165 = vadd.f32 0.0, %v2164
  %v2166 = vpop.f32.mrb[0].mxu0
  %2167 = vmatprep.mubr.bf16.mxu0 0
  %2168 = vmatmul.mubr.bf16.gmra.mrb[0].mxu0 %v1288
  %v2169 = vpop.f32.mrb[0].mxu0
  %v2170 = vadd.f32 0.0, %v2169
  %v2171 = vpop.f32.mrb[0].mxu0
  %v2172 = vpop.f32.mrb[0].mxu0
  %v2173 = vadd.f32 0.0, %v2172
  %v2174 = vpop.f32.mrb[0].mxu0
  %2175 = vmatprep.mubr.bf16.mxu0 0
  %2176 = vmatmul.mubr.bf16.gmra.mrb[0].mxu0 %v1289
  %v2177 = vpop.f32.mrb[0].mxu0
  %v2178 = vadd.f32 0.0, %v2177
  %v2179 = vpop.f32.mrb[0].mxu0
  %v2180 = vpop.f32.mrb[0].mxu0
  %v2181 = vadd.f32 0.0, %v2180
  %v2182 = vpop.f32.mrb[0].mxu0
  %2183 = vmatprep.mubr.bf16.mxu0 0
  %2184 = vmatmul.mubr.bf16.gmra.mrb[0].mxu0 %v1290
  %v2185 = vpop.f32.mrb[0].mxu0
  %v2186 = vadd.f32 0.0, %v2185
  %v2187 = vpop.f32.mrb[0].mxu0
  %v2188 = vpop.f32.mrb[0].mxu0
  %v2189 = vadd.f32 0.0, %v2188
  %v2190 = vpop.f32.mrb[0].mxu0
  %2191 = vmatprep.mubr.bf16.mxu0 0
  %2192 = vmatmul.mubr.bf16.gmra.mrb[0].mxu0 %v1291
  %v2193 = vpop.f32.mrb[0].mxu0
  %v2194 = vadd.f32 0.0, %v2193
  %v2195 = vpop.f32.mrb[0].mxu0
  %v2196 = vpop.f32.mrb[0].mxu0
  %v2197 = vadd.f32 0.0, %v2196
  %v2198 = vpop.f32.mrb[0].mxu0
  %2199 = vmatprep.mubr.bf16.mxu0 0
  %2200 = vmatmul.mubr.bf16.gmra.mrb[0].mxu0 %v1292
  %v2201 = vpop.f32.mrb[0].mxu0
  %v2202 = vadd.f32 0.0, %v2201
  %v2203 = vpop.f32.mrb[0].mxu0
  %v2204 = vpop.f32.mrb[0].mxu0
  %v2205 = vadd.f32 0.0, %v2204
  %v2206 = vpop.f32.mrb[0].mxu0
  %2207 = vmatprep.mubr.bf16.mxu0 0
  %2208 = vmatmul.mubr.bf16.gmra.mrb[0].mxu0 %v1293
  %v2209 = vpop.f32.mrb[0].mxu0
  %v2210 = vadd.f32 0.0, %v2209
  %v2211 = vpop.f32.mrb[0].mxu0
  %v2212 = vpop.f32.mrb[0].mxu0
  %v2213 = vadd.f32 0.0, %v2212
  %v2214 = vpop.f32.mrb[0].mxu0
  %2215 = vmatprep.mubr.bf16.mxu0 0
  %2216 = vmatmul.mubr.bf16.gmra.mrb[0].mxu0 %v1294
  %v2217 = vpop.f32.mrb[0].mxu0
  %v2218 = vadd.f32 0.0, %v2217
  %v2219 = vpop.f32.mrb[0].mxu0
  %v2220 = vpop.f32.mrb[0].mxu0
  %v2221 = vadd.f32 0.0, %v2220
  %v2222 = vpop.f32.mrb[0].mxu0
  %2223 = vmatprep.mubr.bf16.mxu0 0
  %2224 = vmatmul.mubr.bf16.gmra.mrb[0].mxu0 %v1295
  %v2225 = vpop.f32.mrb[0].mxu0
  %v2226 = vadd.f32 0.0, %v2225
  %v2227 = vpop.f32.mrb[0].mxu0
  %v2228 = vpop.f32.mrb[0].mxu0
  %v2229 = vadd.f32 0.0, %v2228
  %v2230 = vpop.f32.mrb[0].mxu0
  %2231 = vmatprep.mubr.bf16.mxu0 0
  %2232 = vmatmul.mubr.bf16.gmra.mrb[0].mxu0 %v1296
  %v2233 = vpop.f32.mrb[0].mxu0
  %v2234 = vadd.f32 0.0, %v2233
  %v2235 = vpop.f32.mrb[0].mxu0
  %v2236 = vpop.f32.mrb[0].mxu0
  %v2237 = vadd.f32 0.0, %v2236
  %v2238 = vpop.f32.mrb[0].mxu0
  %2239 = vmatprep.mubr.bf16.mxu0 0
  %2240 = vmatmul.mubr.bf16.gmra.mrb[0].mxu0 %v1297
  %v2241 = vpop.f32.mrb[0].mxu0
  %v2242 = vadd.f32 0.0, %v2241
  %v2243 = vpop.f32.mrb[0].mxu0
  %v2244 = vpop.f32.mrb[0].mxu0
  %v2245 = vadd.f32 0.0, %v2244
  %v2246 = vpop.f32.mrb[0].mxu0
  %2247 = vmatprep.mubr.bf16.mxu0 0
  %2248 = vmatmul.mubr.bf16.gmra.mrb[0].mxu0 %v1298
  %v2249 = vpop.f32.mrb[0].mxu0
  %v2250 = vadd.f32 0.0, %v2249
  %v2251 = vpop.f32.mrb[0].mxu0
  %v2252 = vpop.f32.mrb[0].mxu0
  %v2253 = vadd.f32 0.0, %v2252
  %v2254 = vpop.f32.mrb[0].mxu0
  %2255 = vmatprep.mubr.bf16.mxu0 0
  %2256 = vmatmul.mubr.bf16.gmra.mrb[0].mxu0 %v1299
  %v2257 = vpop.f32.mrb[0].mxu0
  %v2258 = vadd.f32 0.0, %v2257
  %v2259 = vpop.f32.mrb[0].mxu0
  %v2260 = vpop.f32.mrb[0].mxu0
  %v2261 = vadd.f32 0.0, %v2260
  %v2262 = vpop.f32.mrb[0].mxu0
  %2263 = vmatprep.mubr.bf16.mxu0 0
  %2264 = vmatmul.mubr.bf16.gmra.mrb[0].mxu0 %v1300
  %v2265 = vpop.f32.mrb[0].mxu0
  %v2266 = vadd.f32 0.0, %v2265
  %v2267 = vpop.f32.mrb[0].mxu0
  %v2268 = vpop.f32.mrb[0].mxu0
  %v2269 = vadd.f32 0.0, %v2268
  %v2270 = vpop.f32.mrb[0].mxu0
  %2271 = vmatprep.mubr.bf16.mxu0 0
  %2272 = vmatmul.mubr.bf16.gmra.mrb[0].mxu0 %v1301
  %v2273 = vpop.f32.mrb[0].mxu0
  %v2274 = vadd.f32 0.0, %v2273
  %v2275 = vpop.f32.mrb[0].mxu0
  %v2276 = vpop.f32.mrb[0].mxu0
  %v2277 = vadd.f32 0.0, %v2276
  %v2278 = vpop.f32.mrb[0].mxu0
  %2279 = vmatprep.mubr.bf16.mxu0 0
  %2280 = vmatmul.mubr.bf16.gmra.mrb[0].mxu0 %v1302
  %v2281 = vpop.f32.mrb[0].mxu0
  %v2282 = vadd.f32 0.0, %v2281
  %v2283 = vpop.f32.mrb[0].mxu0
  %v2284 = vpop.f32.mrb[0].mxu0
  %v2285 = vadd.f32 0.0, %v2284
  %v2286 = vpop.f32.mrb[0].mxu0
  %2287 = vmatprep.mubr.bf16.mxu0 0
  %2288 = vmatmul.mubr.bf16.gmra.mrb[0].mxu0 %v1303
  %v2289 = vpop.f32.mrb[0].mxu0
  %v2290 = vadd.f32 0.0, %v2289
  %v2291 = vpop.f32.mrb[0].mxu0
  %v2292 = vpop.f32.mrb[0].mxu0
  %v2293 = vadd.f32 0.0, %v2292
  %v2294 = vpop.f32.mrb[0].mxu0
  %2295 = vmatprep.mubr.bf16.mxu0 0
  %2296 = vmatmul.mubr.bf16.gmra.mrb[0].mxu0 %v1304
  %v2297 = vpop.f32.mrb[0].mxu0
  %v2298 = vadd.f32 0.0, %v2297
  %v2299 = vpop.f32.mrb[0].mxu0
  %v2300 = vpop.f32.mrb[0].mxu0
  %v2301 = vadd.f32 0.0, %v2300
  %v2302 = vpop.f32.mrb[0].mxu0
  %2303 = vmatprep.mubr.bf16.mxu0 0
  %2304 = vmatmul.mubr.bf16.gmra.mrb[0].mxu0 %v1305
  %v2305 = vpop.f32.mrb[0].mxu0
  %v2306 = vadd.f32 0.0, %v2305
  %v2307 = vpop.f32.mrb[0].mxu0
  %v2308 = vpop.f32.mrb[0].mxu0
  %v2309 = vadd.f32 0.0, %v2308
  %v2310 = vpop.f32.mrb[0].mxu0
  %2311 = vmatprep.mubr.bf16.mxu0 0
  %2312 = vmatmul.mubr.bf16.gmra.mrb[0].mxu0 %v1306
  %v2313 = vpop.f32.mrb[0].mxu0
  %v2314 = vadd.f32 0.0, %v2313
  %v2315 = vpop.f32.mrb[0].mxu0
  %v2316 = vpop.f32.mrb[0].mxu0
  %v2317 = vadd.f32 0.0, %v2316
  %v2318 = vpop.f32.mrb[0].mxu0
  %2319 = vmatprep.mubr.bf16.mxu0 0
  %2320 = vmatmul.mubr.bf16.gmra.mrb[0].mxu0 %v1307
  %v2321 = vpop.f32.mrb[0].mxu0
  %v2322 = vadd.f32 0.0, %v2321
  %v2323 = vpop.f32.mrb[0].mxu0
  %v2324 = vpop.f32.mrb[0].mxu0
  %v2325 = vadd.f32 0.0, %v2324
  %v2326 = vpop.f32.mrb[0].mxu0
  %2327 = vmatprep.mubr.bf16.mxu0 0
  %2328 = vmatmul.mubr.bf16.gmra.mrb[0].mxu0 %v1308
  %v2329 = vpop.f32.mrb[0].mxu0
  %v2330 = vadd.f32 0.0, %v2329
  %v2331 = vpop.f32.mrb[0].mxu0
  %v2332 = vpop.f32.mrb[0].mxu0
  %v2333 = vadd.f32 0.0, %v2332
  %v2334 = vpop.f32.mrb[0].mxu0
  %2335 = vmatprep.mubr.bf16.mxu0 0
  %2336 = vmatmul.mubr.bf16.gmra.mrb[0].mxu0 %v1309
  %v2337 = vpop.f32.mrb[0].mxu0
  %v2338 = vadd.f32 0.0, %v2337
  %v2339 = vpop.f32.mrb[0].mxu0
  %v2340 = vpop.f32.mrb[0].mxu0
  %v2341 = vadd.f32 0.0, %v2340
  %v2342 = vpop.f32.mrb[0].mxu0
  %2343 = vmatprep.mubr.bf16.mxu0 0
  %2344 = vmatmul.mubr.bf16.gmra.mrb[0].mxu0 %v1310
  %v2345 = vpop.f32.mrb[0].mxu0
  %v2346 = vadd.f32 0.0, %v2345
  %v2347 = vpop.f32.mrb[0].mxu0
  %v2348 = vpop.f32.mrb[0].mxu0
  %v2349 = vadd.f32 0.0, %v2348
  %v2350 = vpop.f32.mrb[0].mxu0
  %2351 = vmatprep.mubr.bf16.mxu0 0
  %2352 = vmatmul.mubr.bf16.gmra.mrb[0].mxu0 %v1311
  %v2353 = vpop.f32.mrb[0].mxu0
  %v2354 = vadd.f32 0.0, %v2353
  %v2355 = vpop.f32.mrb[0].mxu0
  %v2356 = vpop.f32.mrb[0].mxu0
  %v2357 = vadd.f32 0.0, %v2356
  %v2358 = vpop.f32.mrb[0].mxu0
  %2359 = vmatprep.mubr.bf16.mxu0 0
  %2360 = vmatmul.mubr.bf16.gmra.mrb[0].mxu0 %v1312
  %v2361 = vpop.f32.mrb[0].mxu0
  %v2362 = vadd.f32 0.0, %v2361
  %v2363 = vpop.f32.mrb[0].mxu0
  %v2364 = vpop.f32.mrb[0].mxu0
  %v2365 = vadd.f32 0.0, %v2364
  %v2366 = vpop.f32.mrb[0].mxu0
  %2367 = vmatprep.mubr.bf16.mxu0 0
  %2368 = vmatmul.mubr.bf16.gmra.mrb[0].mxu0 %v1313
  %v2369 = vpop.f32.mrb[0].mxu0
  %v2370 = vadd.f32 0.0, %v2369
  %v2371 = vpop.f32.mrb[0].mxu0
  %v2372 = vpop.f32.mrb[0].mxu0
  %v2373 = vadd.f32 0.0, %v2372
  %v2374 = vpop.f32.mrb[0].mxu0
  %2375 = vmatprep.mubr.bf16.mxu0 0
  %2376 = vmatmul.mubr.bf16.gmra.mrb[0].mxu0 %v1314
  %v2377 = vpop.f32.mrb[0].mxu0
  %v2378 = vadd.f32 0.0, %v2377
  %v2379 = vpop.f32.mrb[0].mxu0
  %v2380 = vpop.f32.mrb[0].mxu0
  %v2381 = vadd.f32 0.0, %v2380
  %v2382 = vpop.f32.mrb[0].mxu0
  %2383 = vmatprep.mubr.bf16.mxu0 0
  %2384 = vmatmul.mubr.bf16.gmra.mrb[0].mxu0 %v1315
  %v2385 = vpop.f32.mrb[0].mxu0
  %v2386 = vadd.f32 0.0, %v2385
  %v2387 = vpop.f32.mrb[0].mxu0
  %v2388 = vpop.f32.mrb[0].mxu0
  %v2389 = vadd.f32 0.0, %v2388
  %v2390 = vpop.f32.mrb[0].mxu0
  %2391 = vmatprep.mubr.bf16.mxu0 0
  %2392 = vmatmul.mubr.bf16.gmra.mrb[0].mxu0 %v1316
  %v2393 = vpop.f32.mrb[0].mxu0
  %v2394 = vadd.f32 0.0, %v2393
  %v2395 = vpop.f32.mrb[0].mxu0
  %v2396 = vpop.f32.mrb[0].mxu0
  %v2397 = vadd.f32 0.0, %v2396
  %v2398 = vpop.f32.mrb[0].mxu0
  %2399 = vmatprep.mubr.bf16.mxu0 0
  %2400 = vmatmul.mubr.bf16.gmra.mrb[0].mxu0 %v1317
  %v2401 = vpop.f32.mrb[0].mxu0
  %v2402 = vadd.f32 0.0, %v2401
  %v2403 = vpop.f32.mrb[0].mxu0
  %v2404 = vpop.f32.mrb[0].mxu0
  %v2405 = vadd.f32 0.0, %v2404
  %v2406 = vpop.f32.mrb[0].mxu0
  %2407 = vmatprep.mubr.bf16.mxu0 0
  %2408 = vmatmul.mubr.bf16.gmra.mrb[0].mxu0 %v1318
  %v2409 = vpop.f32.mrb[0].mxu0
  %v2410 = vadd.f32 0.0, %v2409
  %v2411 = vpop.f32.mrb[0].mxu0
  %v2412 = vpop.f32.mrb[0].mxu0
  %v2413 = vadd.f32 0.0, %v2412
  %v2414 = vpop.f32.mrb[0].mxu0
  %2415 = vmatprep.mubr.bf16.mxu0 0
  %2416 = vmatmul.mubr.bf16.gmra.mrb[0].mxu0 %v1319
  %v2417 = vpop.f32.mrb[0].mxu0
  %v2418 = vadd.f32 0.0, %v2417
  %v2419 = vpop.f32.mrb[0].mxu0
  %v2420 = vpop.f32.mrb[0].mxu0
  %v2421 = vadd.f32 0.0, %v2420
  %v2422 = vpop.f32.mrb[0].mxu0
  %2423 = vmatprep.mubr.bf16.mxu0 0
  %2424 = vmatmul.mubr.bf16.gmra.mrb[0].mxu0 %v1320
  %v2425 = vpop.f32.mrb[0].mxu0
  %v2426 = vadd.f32 0.0, %v2425
  %v2427 = vpop.f32.mrb[0].mxu0
  %v2428 = vpop.f32.mrb[0].mxu0
  %v2429 = vadd.f32 0.0, %v2428
  %v2430 = vpop.f32.mrb[0].mxu0
  %2431 = vmatprep.mubr.bf16.mxu0 0
  %2432 = vmatmul.mubr.bf16.gmra.mrb[0].mxu0 %v1321
  %v2433 = vpop.f32.mrb[0].mxu0
  %v2434 = vadd.f32 0.0, %v2433
  %v2435 = vpop.f32.mrb[0].mxu0
  %v2436 = vpop.f32.mrb[0].mxu0
  %v2437 = vadd.f32 0.0, %v2436
  %v2438 = vpop.f32.mrb[0].mxu0
  %2439 = vmatprep.mubr.bf16.mxu0 0
  %2440 = vmatmul.mubr.bf16.gmra.mrb[0].mxu0 %v1322
  %v2441 = vpop.f32.mrb[0].mxu0
  %v2442 = vadd.f32 0.0, %v2441
  %v2443 = vpop.f32.mrb[0].mxu0
  %v2444 = vpop.f32.mrb[0].mxu0
  %v2445 = vadd.f32 0.0, %v2444
  %v2446 = vpop.f32.mrb[0].mxu0
  %2447 = vmatprep.mubr.bf16.mxu0 0
  %2448 = vmatmul.mubr.bf16.gmra.mrb[0].mxu0 %v1323
  %v2449 = vpop.f32.mrb[0].mxu0
  %v2450 = vadd.f32 0.0, %v2449
  %v2451 = vpop.f32.mrb[0].mxu0
  %v2452 = vpop.f32.mrb[0].mxu0
  %v2453 = vadd.f32 0.0, %v2452
  %v2454 = vpop.f32.mrb[0].mxu0
  %2455 = vmatprep.mubr.bf16.mxu0 0
  %2456 = vmatmul.mubr.bf16.gmra.mrb[0].mxu0 %v1324
  %v2457 = vpop.f32.mrb[0].mxu0
  %v2458 = vadd.f32 0.0, %v2457
  %v2459 = vpop.f32.mrb[0].mxu0
  %v2460 = vpop.f32.mrb[0].mxu0
  %v2461 = vadd.f32 0.0, %v2460
  %v2462 = vpop.f32.mrb[0].mxu0
  %2463 = vmatprep.mubr.bf16.mxu0 0
  %2464 = vmatmul.mubr.bf16.gmra.mrb[0].mxu0 %v1325
  %v2465 = vpop.f32.mrb[0].mxu0
  %v2466 = vadd.f32 0.0, %v2465
  %v2467 = vpop.f32.mrb[0].mxu0
  %v2468 = vpop.f32.mrb[0].mxu0
  %v2469 = vadd.f32 0.0, %v2468
  %v2470 = vpop.f32.mrb[0].mxu0
  %2471 = vmatprep.mubr.bf16.mxu0 0
  %2472 = vmatmul.mubr.bf16.gmra.mrb[0].mxu0 %v1326
  %v2473 = vpop.f32.mrb[0].mxu0
  %v2474 = vadd.f32 0.0, %v2473
  %v2475 = vpop.f32.mrb[0].mxu0
  %v2476 = vpop.f32.mrb[0].mxu0
  %v2477 = vadd.f32 0.0, %v2476
  %v2478 = vpop.f32.mrb[0].mxu0
  %2479 = vmatprep.mubr.bf16.mxu0 0
  %2480 = vmatmul.mubr.bf16.gmra.mrb[0].mxu0 %v1327
  %v2481 = vpop.f32.mrb[0].mxu0
  %v2482 = vadd.f32 0.0, %v2481
  %v2483 = vpop.f32.mrb[0].mxu0
  %v2484 = vpop.f32.mrb[0].mxu0
  %v2485 = vadd.f32 0.0, %v2484
  %v2486 = vpop.f32.mrb[0].mxu0
  %2487 = vmatprep.mubr.bf16.mxu0 0
  %2488 = vmatmul.mubr.bf16.gmra.mrb[0].mxu0 %v1328
  %v2489 = vpop.f32.mrb[0].mxu0
  %v2490 = vadd.f32 0.0, %v2489
  %v2491 = vpop.f32.mrb[0].mxu0
  %v2492 = vpop.f32.mrb[0].mxu0
  %v2493 = vadd.f32 0.0, %v2492
  %v2494 = vpop.f32.mrb[0].mxu0
  %2495 = vmatprep.mubr.bf16.mxu0 0
  %2496 = vmatmul.mubr.bf16.gmra.mrb[0].mxu0 %v1329
  %v2497 = vpop.f32.mrb[0].mxu0
  %v2498 = vadd.f32 0.0, %v2497
  %v2499 = vpop.f32.mrb[0].mxu0
  %v2500 = vpop.f32.mrb[0].mxu0
  %v2501 = vadd.f32 0.0, %v2500
  %v2502 = vpop.f32.mrb[0].mxu0
  %2503 = vmatprep.mubr.bf16.mxu0 0
  %2504 = vmatmul.mubr.bf16.gmra.mrb[0].mxu0 %v1330
  %v2505 = vpop.f32.mrb[0].mxu0
  %v2506 = vadd.f32 0.0, %v2505
  %v2507 = vpop.f32.mrb[0].mxu0
  %v2508 = vpop.f32.mrb[0].mxu0
  %v2509 = vadd.f32 0.0, %v2508
  %v2510 = vpop.f32.mrb[0].mxu0
  %2511 = vmatprep.mubr.bf16.mxu0 0
  %2512 = vmatmul.mubr.bf16.gmra.mrb[0].mxu0 %v1331
  %v2513 = vpop.f32.mrb[0].mxu0
  %v2514 = vadd.f32 0.0, %v2513
  %v2515 = vpop.f32.mrb[0].mxu0
  %v2516 = vpop.f32.mrb[0].mxu0
  %v2517 = vadd.f32 0.0, %v2516
  %v2518 = vpop.f32.mrb[0].mxu0
  %2519 = vmatprep.mubr.bf16.mxu0 0
  %2520 = vmatmul.mubr.bf16.gmra.mrb[0].mxu0 %v1332
  %v2521 = vpop.f32.mrb[0].mxu0
  %v2522 = vadd.f32 0.0, %v2521
  %v2523 = vpop.f32.mrb[0].mxu0
  %v2524 = vpop.f32.mrb[0].mxu0
  %v2525 = vadd.f32 0.0, %v2524
  %v2526 = vpop.f32.mrb[0].mxu0
  %2527 = vmatprep.mubr.bf16.mxu0 0
  %2528 = vmatmul.mubr.bf16.gmra.mrb[0].mxu0 %v1333
  %v2529 = vpop.f32.mrb[0].mxu0
  %v2530 = vadd.f32 0.0, %v2529
  %v2531 = vpop.f32.mrb[0].mxu0
  %v2532 = vpop.f32.mrb[0].mxu0
  %v2533 = vadd.f32 0.0, %v2532
  %v2534 = vpop.f32.mrb[0].mxu0
  %2535 = vmatprep.mubr.bf16.mxu0 0
  %2536 = vmatmul.mubr.bf16.gmra.mrb[0].mxu0 %v1334
  %v2537 = vpop.f32.mrb[0].mxu0
  %v2538 = vadd.f32 0.0, %v2537
  %v2539 = vpop.f32.mrb[0].mxu0
  %v2540 = vpop.f32.mrb[0].mxu0
  %v2541 = vadd.f32 0.0, %v2540
  %v2542 = vpop.f32.mrb[0].mxu0
  %2543 = vmatprep.mubr.bf16.mxu0 0
  %2544 = vmatmul.mubr.bf16.gmra.mrb[0].mxu0 %v1335
  %v2545 = vpop.f32.mrb[0].mxu0
  %v2546 = vadd.f32 0.0, %v2545
  %v2547 = vpop.f32.mrb[0].mxu0
  %v2548 = vpop.f32.mrb[0].mxu0
  %v2549 = vadd.f32 0.0, %v2548
  %v2550 = vpop.f32.mrb[0].mxu0
  %2551 = vmatprep.mubr.bf16.mxu0 0
  %2552 = vmatmul.mubr.bf16.gmra.mrb[0].mxu0 %v1336
  %v2553 = vpop.f32.mrb[0].mxu0
  %v2554 = vadd.f32 0.0, %v2553
  %v2555 = vpop.f32.mrb[0].mxu0
  %v2556 = vpop.f32.mrb[0].mxu0
  %v2557 = vadd.f32 0.0, %v2556
  %v2558 = vpop.f32.mrb[0].mxu0
  %2559 = vmatprep.mubr.bf16.mxu0 0
  %2560 = vmatmul.mubr.bf16.gmra.mrb[0].mxu0 %v1337
  %v2561 = vpop.f32.mrb[0].mxu0
  %v2562 = vadd.f32 0.0, %v2561
  %v2563 = vpop.f32.mrb[0].mxu0
  %v2564 = vpop.f32.mrb[0].mxu0
  %v2565 = vadd.f32 0.0, %v2564
  %v2566 = vpop.f32.mrb[0].mxu0
  %2567 = vmatprep.mubr.bf16.mxu0 0
  %2568 = vmatmul.mubr.bf16.gmra.mrb[0].mxu0 %v1338
  %v2569 = vpop.f32.mrb[0].mxu0
  %v2570 = vadd.f32 0.0, %v2569
  %v2571 = vpop.f32.mrb[0].mxu0
  %v2572 = vpop.f32.mrb[0].mxu0
  %v2573 = vadd.f32 0.0, %v2572
  %v2574 = vpop.f32.mrb[0].mxu0
  %2575 = vmatprep.mubr.bf16.mxu0 0
  %2576 = vmatmul.mubr.bf16.gmra.mrb[0].mxu0 %v1339
  %v2577 = vpop.f32.mrb[0].mxu0
  %v2578 = vadd.f32 0.0, %v2577
  %v2579 = vpop.f32.mrb[0].mxu0
  %v2580 = vpop.f32.mrb[0].mxu0
  %v2581 = vadd.f32 0.0, %v2580
  %v2582 = vpop.f32.mrb[0].mxu0
  %2583 = vmatprep.mubr.bf16.mxu0 0
  %2584 = vmatmul.mubr.bf16.gmra.mrb[0].mxu0 %v1340
  %v2585 = vpop.f32.mrb[0].mxu0
  %v2586 = vadd.f32 0.0, %v2585
  %v2587 = vpop.f32.mrb[0].mxu0
  %v2588 = vpop.f32.mrb[0].mxu0
  %v2589 = vadd.f32 0.0, %v2588
  %v2590 = vpop.f32.mrb[0].mxu0
  %2591 = vmatprep.mubr.bf16.mxu0 0
  %2592 = vmatmul.mubr.bf16.gmra.mrb[0].mxu0 %v1341
  %v2593 = vpop.f32.mrb[0].mxu0
  %v2594 = vadd.f32 0.0, %v2593
  %v2595 = vpop.f32.mrb[0].mxu0
  %v2596 = vpop.f32.mrb[0].mxu0
  %v2597 = vadd.f32 0.0, %v2596
  %v2598 = vpop.f32.mrb[0].mxu0
  %2599 = vmatprep.mubr.bf16.mxu0 0
  %2600 = vmatmul.mubr.bf16.gmra.mrb[0].mxu0 %v1342
  %v2601 = vpop.f32.mrb[0].mxu0
  %v2602 = vadd.f32 0.0, %v2601
  %v2603 = vpop.f32.mrb[0].mxu0
  %v2604 = vpop.f32.mrb[0].mxu0
  %v2605 = vadd.f32 0.0, %v2604
  %v2606 = vpop.f32.mrb[0].mxu0
  %2607 = vmatprep.mubr.bf16.mxu0 0
  %2608 = vmatmul.mubr.bf16.gmra.mrb[0].mxu0 %v1343
  %v2609 = vpop.f32.mrb[0].mxu0
  %v2610 = vadd.f32 0.0, %v2609
  %v2611 = vpop.f32.mrb[0].mxu0
  %v2612 = vpop.f32.mrb[0].mxu0
  %v2613 = vadd.f32 0.0, %v2612
  %v2614 = vpop.f32.mrb[0].mxu0
  %2615 = vmatprep.mubr.bf16.mxu0 0
  %2616 = vmatmul.mubr.bf16.gmra.mrb[0].mxu0 %v1344
  %v2617 = vpop.f32.mrb[0].mxu0
  %v2618 = vadd.f32 0.0, %v2617
  %v2619 = vpop.f32.mrb[0].mxu0
  %v2620 = vpop.f32.mrb[0].mxu0
  %v2621 = vadd.f32 0.0, %v2620
  %v2622 = vpop.f32.mrb[0].mxu0
  %2623 = vmatprep.mubr.bf16.mxu0 0
  %2624 = vmatmul.mubr.bf16.gmra.mrb[0].mxu0 %v1345
  %v2625 = vpop.f32.mrb[0].mxu0
  %v2626 = vadd.f32 0.0, %v2625
  %v2627 = vpop.f32.mrb[0].mxu0
  %v2628 = vpop.f32.mrb[0].mxu0
  %v2629 = vadd.f32 0.0, %v2628
  %v2630 = vpop.f32.mrb[0].mxu0
  %2631 = vmatprep.mubr.bf16.mxu0 0
  %2632 = vmatmul.mubr.bf16.gmra.mrb[0].mxu0 %v1346
  %v2633 = vpop.f32.mrb[0].mxu0
  %v2634 = vadd.f32 0.0, %v2633
  %v2635 = vpop.f32.mrb[0].mxu0
  %v2636 = vpop.f32.mrb[0].mxu0
  %v2637 = vadd.f32 0.0, %v2636
  %v2638 = vpop.f32.mrb[0].mxu0
  %2639 = vmatprep.mubr.bf16.mxu0 0
  %2640 = vmatmul.mubr.bf16.gmra.mrb[0].mxu0 %v1347
  %v2641 = vpop.f32.mrb[0].mxu0
  %v2642 = vadd.f32 0.0, %v2641
  %v2643 = vpop.f32.mrb[0].mxu0
  %v2644 = vpop.f32.mrb[0].mxu0
  %v2645 = vadd.f32 0.0, %v2644
  %v2646 = vpop.f32.mrb[0].mxu0
  %2647 = vmatprep.mubr.bf16.mxu0 0
  %2648 = vmatmul.mubr.bf16.gmra.mrb[0].mxu0 %v1348
  %v2649 = vpop.f32.mrb[0].mxu0
  %v2650 = vadd.f32 0.0, %v2649
  %v2651 = vpop.f32.mrb[0].mxu0
  %v2652 = vpop.f32.mrb[0].mxu0
  %v2653 = vadd.f32 0.0, %v2652
  %v2654 = vpop.f32.mrb[0].mxu0
  %2655 = vmatprep.mubr.bf16.mxu0 0
  %2656 = vmatmul.mubr.bf16.gmra.mrb[0].mxu0 %v1349
  %v2657 = vpop.f32.mrb[0].mxu0
  %v2658 = vadd.f32 0.0, %v2657
  %v2659 = vpop.f32.mrb[0].mxu0
  %v2660 = vpop.f32.mrb[0].mxu0
  %v2661 = vadd.f32 0.0, %v2660
  %v2662 = vpop.f32.mrb[0].mxu0
  %2663 = vmatprep.mubr.bf16.mxu0 0
  %2664 = vmatmul.mubr.bf16.gmra.mrb[0].mxu0 %v1350
  %v2665 = vpop.f32.mrb[0].mxu0
  %v2666 = vadd.f32 0.0, %v2665
  %v2667 = vpop.f32.mrb[0].mxu0
  %v2668 = vpop.f32.mrb[0].mxu0
  %v2669 = vadd.f32 0.0, %v2668
  %v2670 = vpop.f32.mrb[0].mxu0
  %2671 = vmatprep.mubr.bf16.mxu0 0
  %2672 = vmatmul.mubr.bf16.gmra.mrb[0].mxu0 %v1351
  %v2673 = vpop.f32.mrb[0].mxu0
  %v2674 = vadd.f32 0.0, %v2673
  %v2675 = vpop.f32.mrb[0].mxu0
  %v2676 = vpop.f32.mrb[0].mxu0
  %v2677 = vadd.f32 0.0, %v2676
  %v2678 = vpop.f32.mrb[0].mxu0
  %2679 = vmatprep.mubr.bf16.mxu0 0
  %2680 = vmatmul.mubr.bf16.gmra.mrb[0].mxu0 %v1352
  %v2681 = vpop.f32.mrb[0].mxu0
  %v2682 = vadd.f32 0.0, %v2681
  %v2683 = vpop.f32.mrb[0].mxu0
  %v2684 = vpop.f32.mrb[0].mxu0
  %v2685 = vadd.f32 0.0, %v2684
  %v2686 = vpop.f32.mrb[0].mxu0
  %2687 = vmatprep.mubr.bf16.mxu0 0
  %2688 = vmatmul.mubr.bf16.gmra.mrb[0].mxu0 %v1353
  %v2689 = vpop.f32.mrb[0].mxu0
  %v2690 = vadd.f32 0.0, %v2689
  %v2691 = vpop.f32.mrb[0].mxu0
  %v2692 = vpop.f32.mrb[0].mxu0
  %v2693 = vadd.f32 0.0, %v2692
  %v2694 = vpop.f32.mrb[0].mxu0
  %2695 = vmatprep.mubr.bf16.mxu0 0
  %2696 = vmatmul.mubr.bf16.gmra.mrb[0].mxu0 %v1354
  %v2697 = vpop.f32.mrb[0].mxu0
  %v2698 = vadd.f32 0.0, %v2697
  %v2699 = vpop.f32.mrb[0].mxu0
  %v2700 = vpop.f32.mrb[0].mxu0
  %v2701 = vadd.f32 0.0, %v2700
  %v2702 = vpop.f32.mrb[0].mxu0
  %2703 = vmatprep.mubr.bf16.mxu0 0
  %2704 = vmatmul.mubr.bf16.gmra.mrb[0].mxu0 %v1355
  %v2705 = vpop.f32.mrb[0].mxu0
  %v2706 = vadd.f32 0.0, %v2705
  %v2707 = vpop.f32.mrb[0].mxu0
  %v2708 = vpop.f32.mrb[0].mxu0
  %v2709 = vadd.f32 0.0, %v2708
  %v2710 = vpop.f32.mrb[0].mxu0
  %2711 = vmatprep.mubr.bf16.mxu0 0
  %2712 = vmatmul.mubr.bf16.gmra.mrb[0].mxu0 %v1356
  %v2713 = vpop.f32.mrb[0].mxu0
  %v2714 = vadd.f32 0.0, %v2713
  %v2715 = vpop.f32.mrb[0].mxu0
  %v2716 = vpop.f32.mrb[0].mxu0
  %v2717 = vadd.f32 0.0, %v2716
  %v2718 = vpop.f32.mrb[0].mxu0
  %2719 = vmatprep.mubr.bf16.mxu0 0
  %2720 = vmatmul.mubr.bf16.gmra.mrb[0].mxu0 %v1357
  %v2721 = vpop.f32.mrb[0].mxu0
  %v2722 = vadd.f32 0.0, %v2721
  %v2723 = vpop.f32.mrb[0].mxu0
  %v2724 = vpop.f32.mrb[0].mxu0
  %v2725 = vadd.f32 0.0, %v2724
  %v2726 = vpop.f32.mrb[0].mxu0
  %2727 = vmatprep.mubr.bf16.mxu0 0
  %2728 = vmatmul.mubr.bf16.gmra.mrb[0].mxu0 %v1358
  %v2729 = vpop.f32.mrb[0].mxu0
  %v2730 = vadd.f32 0.0, %v2729
  %v2731 = vpop.f32.mrb[0].mxu0
  %v2732 = vpop.f32.mrb[0].mxu0
  %v2733 = vadd.f32 0.0, %v2732
  %v2734 = vpop.f32.mrb[0].mxu0
  %2735 = vmatprep.mubr.bf16.mxu0 0
  %2736 = vmatmul.mubr.bf16.gmra.mrb[0].mxu0 %v1359
  %v2737 = vpop.f32.mrb[0].mxu0
  %v2738 = vadd.f32 0.0, %v2737
  %v2739 = vpop.f32.mrb[0].mxu0
  %v2740 = vpop.f32.mrb[0].mxu0
  %v2741 = vadd.f32 0.0, %v2740
  %v2742 = vpop.f32.mrb[0].mxu0
  %2743 = vmatprep.mubr.bf16.mxu0 0
  %2744 = vmatmul.mubr.bf16.gmra.mrb[0].mxu0 %v1360
  %v2745 = vpop.f32.mrb[0].mxu0
  %v2746 = vadd.f32 0.0, %v2745
  %v2747 = vpop.f32.mrb[0].mxu0
  %v2748 = vpop.f32.mrb[0].mxu0
  %v2749 = vadd.f32 0.0, %v2748
  %v2750 = vpop.f32.mrb[0].mxu0
  %2751 = vmatprep.mubr.bf16.mxu0 0
  %2752 = vmatmul.mubr.bf16.gmra.mrb[0].mxu0 %v1361
  %v2753 = vpop.f32.mrb[0].mxu0
  %v2754 = vadd.f32 0.0, %v2753
  %v2755 = vpop.f32.mrb[0].mxu0
  %v2756 = vpop.f32.mrb[0].mxu0
  %v2757 = vadd.f32 0.0, %v2756
  %v2758 = vpop.f32.mrb[0].mxu0
  %2759 = vmatprep.mubr.bf16.mxu0 0
  %2760 = vmatmul.mubr.bf16.gmra.mrb[0].mxu0 %v1362
  %v2761 = vpop.f32.mrb[0].mxu0
  %v2762 = vadd.f32 0.0, %v2761
  %v2763 = vpop.f32.mrb[0].mxu0
  %v2764 = vpop.f32.mrb[0].mxu0
  %v2765 = vadd.f32 0.0, %v2764
  %v2766 = vpop.f32.mrb[0].mxu0
  %2767 = vmatprep.mubr.bf16.mxu0 0
  %2768 = vmatmul.mubr.bf16.gmra.mrb[0].mxu0 %v1363
  %v2769 = vpop.f32.mrb[0].mxu0
  %v2770 = vadd.f32 0.0, %v2769
  %v2771 = vpop.f32.mrb[0].mxu0
  %v2772 = vpop.f32.mrb[0].mxu0
  %v2773 = vadd.f32 0.0, %v2772
  %v2774 = vpop.f32.mrb[0].mxu0
  %2775 = vmatprep.mubr.bf16.mxu0 0
  %2776 = vmatmul.mubr.bf16.gmra.mrb[0].mxu0 %v1364
  %v2777 = vpop.f32.mrb[0].mxu0
  %v2778 = vadd.f32 0.0, %v2777
  %v2779 = vpop.f32.mrb[0].mxu0
  %v2780 = vpop.f32.mrb[0].mxu0
  %v2781 = vadd.f32 0.0, %v2780
  %v2782 = vpop.f32.mrb[0].mxu0
  %2783 = vmatprep.mubr.bf16.mxu0 0
  %2784 = vmatmul.mubr.bf16.gmra.mrb[0].mxu0 %v1365
  %v2785 = vpop.f32.mrb[0].mxu0
  %v2786 = vadd.f32 0.0, %v2785
  %v2787 = vpop.f32.mrb[0].mxu0
  %v2788 = vpop.f32.mrb[0].mxu0
  %v2789 = vadd.f32 0.0, %v2788
  %v2790 = vpop.f32.mrb[0].mxu0
  %2791 = vmatprep.mubr.bf16.mxu0 0
  %2792 = vmatmul.mubr.bf16.gmra.mrb[0].mxu0 %v1366
  %v2793 = vpop.f32.mrb[0].mxu0
  %v2794 = vadd.f32 0.0, %v2793
  %v2795 = vpop.f32.mrb[0].mxu0
  %v2796 = vpop.f32.mrb[0].mxu0
  %v2797 = vadd.f32 0.0, %v2796
  %v2798 = vpop.f32.mrb[0].mxu0
  %2799 = vmatprep.mubr.bf16.mxu0 0
  %2800 = vmatmul.mubr.bf16.gmra.mrb[0].mxu0 %v1367
  %v2801 = vpop.f32.mrb[0].mxu0
  %v2802 = vadd.f32 0.0, %v2801
  %v2803 = vpop.f32.mrb[0].mxu0
  %v2804 = vpop.f32.mrb[0].mxu0
  %v2805 = vadd.f32 0.0, %v2804
  %v2806 = vpop.f32.mrb[0].mxu0
  %2807 = vmatprep.mubr.bf16.mxu0 0
  %2808 = vmatmul.mubr.bf16.gmra.mrb[0].mxu0 %v1368
  %v2809 = vpop.f32.mrb[0].mxu0
  %v2810 = vadd.f32 0.0, %v2809
  %v2811 = vpop.f32.mrb[0].mxu0
  %v2812 = vpop.f32.mrb[0].mxu0
  %v2813 = vadd.f32 0.0, %v2812
  %v2814 = vpop.f32.mrb[0].mxu0
  %2815 = vmatprep.mubr.bf16.mxu0 0
  %2816 = vmatmul.mubr.bf16.gmra.mrb[0].mxu0 %v1369
  %v2817 = vpop.f32.mrb[0].mxu0
  %v2818 = vadd.f32 0.0, %v2817
  %v2819 = vpop.f32.mrb[0].mxu0
  %v2820 = vpop.f32.mrb[0].mxu0
  %v2821 = vadd.f32 0.0, %v2820
  %v2822 = vpop.f32.mrb[0].mxu0
  %2823 = vmatprep.mubr.bf16.mxu0 0
  %2824 = vmatmul.mubr.bf16.gmra.mrb[0].mxu0 %v1370
  %v2825 = vpop.f32.mrb[0].mxu0
  %v2826 = vadd.f32 0.0, %v2825
  %v2827 = vpop.f32.mrb[0].mxu0
  %v2828 = vpop.f32.mrb[0].mxu0
  %v2829 = vadd.f32 0.0, %v2828
  %v2830 = vpop.f32.mrb[0].mxu0
  %2831 = vmatprep.mubr.bf16.mxu0 0
  %2832 = vmatmul.mubr.bf16.gmra.mrb[0].mxu0 %v1371
  %v2833 = vpop.f32.mrb[0].mxu0
  %v2834 = vadd.f32 0.0, %v2833
  %v2835 = vpop.f32.mrb[0].mxu0
  %v2836 = vpop.f32.mrb[0].mxu0
  %v2837 = vadd.f32 0.0, %v2836
  %v2838 = vpop.f32.mrb[0].mxu0
  %2839 = vmatprep.mubr.bf16.mxu0 0
  %2840 = vmatmul.mubr.bf16.gmra.mrb[0].mxu0 %v1372
  %v2841 = vpop.f32.mrb[0].mxu0
  %v2842 = vadd.f32 0.0, %v2841
  %v2843 = vpop.f32.mrb[0].mxu0
  %v2844 = vpop.f32.mrb[0].mxu0
  %v2845 = vadd.f32 0.0, %v2844
  %v2846 = vpop.f32.mrb[0].mxu0
  %2847 = vmatprep.mubr.bf16.mxu0 0
  %2848 = vmatmul.mubr.bf16.gmra.mrb[0].mxu0 %v1373
  %v2849 = vpop.f32.mrb[0].mxu0
  %v2850 = vadd.f32 0.0, %v2849
  %v2851 = vpop.f32.mrb[0].mxu0
  %v2852 = vpop.f32.mrb[0].mxu0
  %v2853 = vadd.f32 0.0, %v2852
  %v2854 = vpop.f32.mrb[0].mxu0
  %2855 = vmatprep.mubr.bf16.mxu0 0
  %2856 = vmatmul.mubr.bf16.gmra.mrb[0].mxu0 %v1374
  %v2857 = vpop.f32.mrb[0].mxu0
  %v2858 = vadd.f32 0.0, %v2857
  %v2859 = vpop.f32.mrb[0].mxu0
  %v2860 = vpop.f32.mrb[0].mxu0
  %v2861 = vadd.f32 0.0, %v2860
  %v2862 = vpop.f32.mrb[0].mxu0
  %2863 = vmatprep.mubr.bf16.mxu0 0
  %2864 = vmatmul.mubr.bf16.gmra.mrb[0].mxu0 %v1375
  %v2865 = vpop.f32.mrb[0].mxu0
  %v2866 = vadd.f32 0.0, %v2865
  %v2867 = vpop.f32.mrb[0].mxu0
  %v2868 = vpop.f32.mrb[0].mxu0
  %v2869 = vadd.f32 0.0, %v2868
  %v2870 = vpop.f32.mrb[0].mxu0
  %2871 = vmatprep.mubr.bf16.mxu0 0
  %2872 = vmatmul.mubr.bf16.gmra.mrb[0].mxu0 %v1376
  %v2873 = vpop.f32.mrb[0].mxu0
  %v2874 = vadd.f32 0.0, %v2873
  %v2875 = vpop.f32.mrb[0].mxu0
  %v2876 = vpop.f32.mrb[0].mxu0
  %v2877 = vadd.f32 0.0, %v2876
  %v2878 = vpop.f32.mrb[0].mxu0
  %2879 = vmatprep.mubr.bf16.mxu0 0
  %2880 = vmatmul.mubr.bf16.gmra.mrb[0].mxu0 %v1377
  %v2881 = vpop.f32.mrb[0].mxu0
  %v2882 = vadd.f32 0.0, %v2881
  %v2883 = vpop.f32.mrb[0].mxu0
  %v2884 = vpop.f32.mrb[0].mxu0
  %v2885 = vadd.f32 0.0, %v2884
  %v2886 = vpop.f32.mrb[0].mxu0
  %2887 = vmatprep.mubr.bf16.mxu0 0
  %2888 = vmatmul.mubr.bf16.gmra.mrb[0].mxu0 %v1378
  %v2889 = vpop.f32.mrb[0].mxu0
  %v2890 = vadd.f32 0.0, %v2889
  %v2891 = vpop.f32.mrb[0].mxu0
  %v2892 = vpop.f32.mrb[0].mxu0
  %v2893 = vadd.f32 0.0, %v2892
  %v2894 = vpop.f32.mrb[0].mxu0
  %2895 = vmatprep.mubr.bf16.mxu0 0
  %2896 = vmatmul.mubr.bf16.gmra.mrb[0].mxu0 %v1379
  %v2897 = vpop.f32.mrb[0].mxu0
  %v2898 = vadd.f32 0.0, %v2897
  %v2899 = vpop.f32.mrb[0].mxu0
  %v2900 = vpop.f32.mrb[0].mxu0
  %v2901 = vadd.f32 0.0, %v2900
  %v2902 = vpop.f32.mrb[0].mxu0
  %2903 = vmatprep.mubr.bf16.mxu0 0
  %2904 = vmatmul.mubr.bf16.gmra.mrb[0].mxu0 %v1380
  %v2905 = vpop.f32.mrb[0].mxu0
  %v2906 = vadd.f32 0.0, %v2905
  %v2907 = vpop.f32.mrb[0].mxu0
  %v2908 = vpop.f32.mrb[0].mxu0
  %v2909 = vadd.f32 0.0, %v2908
  %v2910 = vpop.f32.mrb[0].mxu0
  %2911 = vmatprep.mubr.bf16.mxu0 0
  %2912 = vmatmul.mubr.bf16.gmra.mrb[0].mxu0 %v1381
  %v2913 = vpop.f32.mrb[0].mxu0
  %v2914 = vadd.f32 0.0, %v2913
  %v2915 = vpop.f32.mrb[0].mxu0
  %v2916 = vpop.f32.mrb[0].mxu0
  %v2917 = vadd.f32 0.0, %v2916
  %v2918 = vpop.f32.mrb[0].mxu0
  %2919 = vmatprep.mubr.bf16.mxu0 0
  %2920 = vmatmul.mubr.bf16.gmra.mrb[0].mxu0 %v1382
  %v2921 = vpop.f32.mrb[0].mxu0
  %v2922 = vadd.f32 0.0, %v2921
  %v2923 = vpop.f32.mrb[0].mxu0
  %v2924 = vpop.f32.mrb[0].mxu0
  %v2925 = vadd.f32 0.0, %v2924
  %v2926 = vpop.f32.mrb[0].mxu0
  %2927 = vmatprep.mubr.bf16.mxu0 0
  %2928 = vmatmul.mubr.bf16.gmra.mrb[0].mxu0 %v1383
  %v2929 = vpop.f32.mrb[0].mxu0
  %v2930 = vadd.f32 0.0, %v2929
  %v2931 = vpop.f32.mrb[0].mxu0
  %v2932 = vpop.f32.mrb[0].mxu0
  %v2933 = vadd.f32 0.0, %v2932
  %v2934 = vpop.f32.mrb[0].mxu0
  %2935 = vmatprep.mubr.bf16.mxu0 0
  %2936 = vmatmul.mubr.bf16.gmra.mrb[0].mxu0 %v1384
  %v2937 = vpop.f32.mrb[0].mxu0
  %v2938 = vadd.f32 0.0, %v2937
  %v2939 = vpop.f32.mrb[0].mxu0
  %v2940 = vpop.f32.mrb[0].mxu0
  %v2941 = vadd.f32 0.0, %v2940
  %v2942 = vpop.f32.mrb[0].mxu0
  %2943 = vmatprep.mubr.bf16.mxu0 0
  %2944 = vmatmul.mubr.bf16.gmra.mrb[0].mxu0 %v1385
  %v2945 = vpop.f32.mrb[0].mxu0
  %v2946 = vadd.f32 0.0, %v2945
  %v2947 = vpop.f32.mrb[0].mxu0
  %v2948 = vpop.f32.mrb[0].mxu0
  %v2949 = vadd.f32 0.0, %v2948
  %v2950 = vpop.f32.mrb[0].mxu0
  %2951 = vmatprep.mubr.bf16.mxu0 0
  %2952 = vmatmul.mubr.bf16.gmra.mrb[0].mxu0 %v1386
  %v2953 = vpop.f32.mrb[0].mxu0
  %v2954 = vadd.f32 0.0, %v2953
  %v2955 = vpop.f32.mrb[0].mxu0
  %v2956 = vpop.f32.mrb[0].mxu0
  %v2957 = vadd.f32 0.0, %v2956
  %v2958 = vpop.f32.mrb[0].mxu0
  %2959 = vmatprep.mubr.bf16.mxu0 0
  %2960 = vmatmul.mubr.bf16.gmra.mrb[0].mxu0 %v1387
  %v2961 = vpop.f32.mrb[0].mxu0
  %v2962 = vadd.f32 0.0, %v2961
  %v2963 = vpop.f32.mrb[0].mxu0
  %v2964 = vpop.f32.mrb[0].mxu0
  %v2965 = vadd.f32 0.0, %v2964
  %v2966 = vpop.f32.mrb[0].mxu0
  %2967 = vmatprep.mubr.bf16.mxu0 0
  %2968 = vmatmul.mubr.bf16.gmra.mrb[0].mxu0 %v1388
  %v2969 = vpop.f32.mrb[0].mxu0
  %v2970 = vadd.f32 0.0, %v2969
  %v2971 = vpop.f32.mrb[0].mxu0
  %v2972 = vpop.f32.mrb[0].mxu0
  %v2973 = vadd.f32 0.0, %v2972
  %v2974 = vpop.f32.mrb[0].mxu0
  %2975 = vmatprep.mubr.bf16.mxu0 0
  %2976 = vmatmul.mubr.bf16.gmra.mrb[0].mxu0 %v1389
  %v2977 = vpop.f32.mrb[0].mxu0
  %v2978 = vadd.f32 0.0, %v2977
  %v2979 = vpop.f32.mrb[0].mxu0
  %v2980 = vpop.f32.mrb[0].mxu0
  %v2981 = vadd.f32 0.0, %v2980
  %v2982 = vpop.f32.mrb[0].mxu0
  %2983 = vmatprep.mubr.bf16.mxu0 0
  %2984 = vmatmul.mubr.bf16.gmra.mrb[0].mxu0 %v1390
  %v2985 = vpop.f32.mrb[0].mxu0
  %v2986 = vadd.f32 0.0, %v2985
  %v2987 = vpop.f32.mrb[0].mxu0
  %v2988 = vpop.f32.mrb[0].mxu0
  %v2989 = vadd.f32 0.0, %v2988
  %v2990 = vpop.f32.mrb[0].mxu0
  %2991 = vmatprep.mubr.bf16.mxu0 0
  %2992 = vmatmul.mubr.bf16.gmra.mrb[0].mxu0 %v1391
  %v2993 = vpop.f32.mrb[0].mxu0
  %v2994 = vadd.f32 0.0, %v2993
  %v2995 = vpop.f32.mrb[0].mxu0
  %v2996 = vpop.f32.mrb[0].mxu0
  %v2997 = vadd.f32 0.0, %v2996
  %v2998 = vpop.f32.mrb[0].mxu0
  %2999 = vmatprep.mubr.bf16.mxu0 0
  %3000 = vmatmul.mubr.bf16.gmra.mrb[0].mxu0 %v1392
  %v3001 = vpop.f32.mrb[0].mxu0
  %v3002 = vadd.f32 0.0, %v3001
  %v3003 = vpop.f32.mrb[0].mxu0
  %v3004 = vpop.f32.mrb[0].mxu0
  %v3005 = vadd.f32 0.0, %v3004
  %v3006 = vpop.f32.mrb[0].mxu0
  %3007 = vmatprep.mubr.bf16.mxu0 0
  %3008 = vmatmul.mubr.bf16.gmra.mrb[0].mxu0 %v1393
  %v3009 = vpop.f32.mrb[0].mxu0
  %v3010 = vadd.f32 0.0, %v3009
  %v3011 = vpop.f32.mrb[0].mxu0
  %v3012 = vpop.f32.mrb[0].mxu0
  %v3013 = vadd.f32 0.0, %v3012
  %v3014 = vpop.f32.mrb[0].mxu0
  %3015 = vmatprep.mubr.bf16.mxu0 0
  %3016 = vmatmul.mubr.bf16.gmra.mrb[0].mxu0 %v1394
  %v3017 = vpop.f32.mrb[0].mxu0
  %v3018 = vadd.f32 0.0, %v3017
  %v3019 = vpop.f32.mrb[0].mxu0
  %v3020 = vpop.f32.mrb[0].mxu0
  %v3021 = vadd.f32 0.0, %v3020
  %v3022 = vpop.f32.mrb[0].mxu0
  %3023 = vmatprep.mubr.bf16.mxu0 0
  %3024 = vmatmul.mubr.bf16.gmra.mrb[0].mxu0 %v1395
  %v3025 = vpop.f32.mrb[0].mxu0
  %v3026 = vadd.f32 0.0, %v3025
  %v3027 = vpop.f32.mrb[0].mxu0
  %v3028 = vpop.f32.mrb[0].mxu0
  %v3029 = vadd.f32 0.0, %v3028
  %v3030 = vpop.f32.mrb[0].mxu0
  %3031 = vmatprep.mubr.bf16.mxu0 0
  %3032 = vmatmul.mubr.bf16.gmra.mrb[0].mxu0 %v1396
  %v3033 = vpop.f32.mrb[0].mxu0
  %v3034 = vadd.f32 0.0, %v3033
  %v3035 = vpop.f32.mrb[0].mxu0
  %v3036 = vpop.f32.mrb[0].mxu0
  %v3037 = vadd.f32 0.0, %v3036
  %v3038 = vpop.f32.mrb[0].mxu0
  %3039 = vmatprep.mubr.bf16.mxu0 0
  %3040 = vmatmul.mubr.bf16.gmra.mrb[0].mxu0 %v1397
  %v3041 = vpop.f32.mrb[0].mxu0
  %v3042 = vadd.f32 0.0, %v3041
  %v3043 = vpop.f32.mrb[0].mxu0
  %v3044 = vpop.f32.mrb[0].mxu0
  %v3045 = vadd.f32 0.0, %v3044
  %v3046 = vpop.f32.mrb[0].mxu0
  %3047 = vmatprep.mubr.bf16.mxu0 0
  %3048 = vmatmul.mubr.bf16.gmra.mrb[0].mxu0 %v1398
  %v3049 = vpop.f32.mrb[0].mxu0
  %v3050 = vadd.f32 0.0, %v3049
  %v3051 = vpop.f32.mrb[0].mxu0
  %v3052 = vpop.f32.mrb[0].mxu0
  %v3053 = vadd.f32 0.0, %v3052
  %v3054 = vpop.f32.mrb[0].mxu0
  %3055 = vmatprep.mubr.bf16.mxu0 0
  %3056 = vmatmul.mubr.bf16.gmra.mrb[0].mxu0 %v1399
  %v3057 = vpop.f32.mrb[0].mxu0
  %v3058 = vadd.f32 0.0, %v3057
  %v3059 = vpop.f32.mrb[0].mxu0
  %v3060 = vpop.f32.mrb[0].mxu0
  %v3061 = vadd.f32 0.0, %v3060
  %v3062 = vpop.f32.mrb[0].mxu0
  %3063 = vmatprep.mubr.bf16.mxu0 0
  %3064 = vmatmul.mubr.bf16.gmra.mrb[0].mxu0 %v1400
  %v3065 = vpop.f32.mrb[0].mxu0
  %v3066 = vadd.f32 0.0, %v3065
  %v3067 = vpop.f32.mrb[0].mxu0
  %v3068 = vpop.f32.mrb[0].mxu0
  %v3069 = vadd.f32 0.0, %v3068
  %v3070 = vpop.f32.mrb[0].mxu0
  %3071 = vmatprep.mubr.bf16.mxu0 0
  %3072 = vmatmul.mubr.bf16.gmra.mrb[0].mxu0 %v1401
  %v3073 = vpop.f32.mrb[0].mxu0
  %v3074 = vadd.f32 0.0, %v3073
  %v3075 = vpop.f32.mrb[0].mxu0
  %v3076 = vpop.f32.mrb[0].mxu0
  %v3077 = vadd.f32 0.0, %v3076
  %v3078 = vpop.f32.mrb[0].mxu0
  %3079 = vmatprep.mubr.bf16.mxu0 0
  %3080 = vmatmul.mubr.bf16.gmra.mrb[0].mxu0 %v1402
  %v3081 = vpop.f32.mrb[0].mxu0
  %v3082 = vadd.f32 0.0, %v3081
  %v3083 = vpop.f32.mrb[0].mxu0
  %v3084 = vpop.f32.mrb[0].mxu0
  %v3085 = vadd.f32 0.0, %v3084
  %v3086 = vpop.f32.mrb[0].mxu0
  %3087 = vmatprep.mubr.bf16.mxu0 0
  %3088 = vmatmul.mubr.bf16.gmra.mrb[0].mxu0 %v1403
  %v3089 = vpop.f32.mrb[0].mxu0
  %v3090 = vadd.f32 0.0, %v3089
  %v3091 = vpop.f32.mrb[0].mxu0
  %v3092 = vpop.f32.mrb[0].mxu0
  %v3093 = vadd.f32 0.0, %v3092
  %v3094 = vpop.f32.mrb[0].mxu0
  %3095 = vmatprep.mubr.bf16.mxu0 0
  %3096 = vmatmul.mubr.bf16.gmra.mrb[0].mxu0 %v1404
  %v3097 = vpop.f32.mrb[0].mxu0
  %v3098 = vadd.f32 0.0, %v3097
  %v3099 = vpop.f32.mrb[0].mxu0
  %v3100 = vpop.f32.mrb[0].mxu0
  %v3101 = vadd.f32 0.0, %v3100
  %v3102 = vpop.f32.mrb[0].mxu0
  %3103 = vmatprep.mubr.bf16.mxu0 0
  %3104 = vmatmul.mubr.bf16.gmra.mrb[0].mxu0 %v1405
  %v3105 = vpop.f32.mrb[0].mxu0
  %v3106 = vadd.f32 0.0, %v3105
  %v3107 = vpop.f32.mrb[0].mxu0
  %v3108 = vpop.f32.mrb[0].mxu0
  %v3109 = vadd.f32 0.0, %v3108
  %v3110 = vpop.f32.mrb[0].mxu0
  %3111 = vmatprep.mubr.bf16.mxu0 0
  %3112 = vmatmul.mubr.bf16.gmra.mrb[0].mxu0 %v1406
  %v3113 = vpop.f32.mrb[0].mxu0
  %v3114 = vadd.f32 0.0, %v3113
  %v3115 = vpop.f32.mrb[0].mxu0
  %v3116 = vpop.f32.mrb[0].mxu0
  %v3117 = vadd.f32 0.0, %v3116
  %v3118 = vpop.f32.mrb[0].mxu0
  %3119 = vmatprep.mubr.bf16.mxu0 0
  %3120 = vmatmul.mubr.bf16.gmra.mrb[0].mxu0 %v1407
  %v3121 = vpop.f32.mrb[0].mxu0
  %v3122 = vadd.f32 0.0, %v3121
  %v3123 = vpop.f32.mrb[0].mxu0
  %v3124 = vpop.f32.mrb[0].mxu0
  %v3125 = vadd.f32 0.0, %v3124
  %v3126 = vpop.f32.mrb[0].mxu0
  %3127 = vmatprep.mubr.bf16.mxu0 0
  %3128 = vmatmul.mubr.bf16.gmra.mrb[0].mxu0 %v1408
  %v3129 = vpop.f32.mrb[0].mxu0
  %v3130 = vadd.f32 0.0, %v3129
  %v3131 = vpop.f32.mrb[0].mxu0
  %v3132 = vpop.f32.mrb[0].mxu0
  %v3133 = vadd.f32 0.0, %v3132
  %v3134 = vpop.f32.mrb[0].mxu0
  %3135 = vmatprep.mubr.bf16.mxu0 0
  %3136 = vmatmul.mubr.bf16.gmra.mrb[0].mxu0 %v1409
  %v3137 = vpop.f32.mrb[0].mxu0
  %v3138 = vadd.f32 0.0, %v3137
  %v3139 = vpop.f32.mrb[0].mxu0
  %v3140 = vpop.f32.mrb[0].mxu0
  %v3141 = vadd.f32 0.0, %v3140
  %v3142 = vpop.f32.mrb[0].mxu0
  %3143 = vmatprep.mubr.bf16.mxu0 0
  %3144 = vmatmul.mubr.bf16.gmra.mrb[0].mxu0 %v1410
  %v3145 = vpop.f32.mrb[0].mxu0
  %v3146 = vadd.f32 0.0, %v3145
  %v3147 = vpop.f32.mrb[0].mxu0
  %v3148 = vpop.f32.mrb[0].mxu0
  %v3149 = vadd.f32 0.0, %v3148
  %v3150 = vpop.f32.mrb[0].mxu0
  %3151 = vmatprep.mubr.bf16.mxu0 0
  %3152 = vmatmul.mubr.bf16.gmra.mrb[0].mxu0 %v1411
  %v3153 = vpop.f32.mrb[0].mxu0
  %v3154 = vadd.f32 0.0, %v3153
  %v3155 = vpop.f32.mrb[0].mxu0
  %v3156 = vpop.f32.mrb[0].mxu0
  %v3157 = vadd.f32 0.0, %v3156
  %v3158 = vpop.f32.mrb[0].mxu0
  %3159 = vmatprep.mubr.bf16.mxu0 0
  %3160 = vmatmul.mubr.bf16.gmra.mrb[0].mxu0 %v1412
  %v3161 = vpop.f32.mrb[0].mxu0
  %v3162 = vadd.f32 0.0, %v3161
  %v3163 = vpop.f32.mrb[0].mxu0
  %v3164 = vpop.f32.mrb[0].mxu0
  %v3165 = vadd.f32 0.0, %v3164
  %v3166 = vpop.f32.mrb[0].mxu0
  %3167 = vmatprep.mubr.bf16.mxu0 0
  %3168 = vmatmul.mubr.bf16.gmra.mrb[0].mxu0 %v1413
  %v3169 = vpop.f32.mrb[0].mxu0
  %v3170 = vadd.f32 0.0, %v3169
  %v3171 = vpop.f32.mrb[0].mxu0
  %v3172 = vpop.f32.mrb[0].mxu0
  %v3173 = vadd.f32 0.0, %v3172
  %v3174 = vpop.f32.mrb[0].mxu0
  %3175 = vmatprep.mubr.bf16.mxu0 0
  %3176 = vmatmul.mubr.bf16.gmra.mrb[0].mxu0 %v1414
  %v3177 = vpop.f32.mrb[0].mxu0
  %v3178 = vadd.f32 0.0, %v3177
  %v3179 = vpop.f32.mrb[0].mxu0
  %v3180 = vpop.f32.mrb[0].mxu0
  %v3181 = vadd.f32 0.0, %v3180
  %v3182 = vpop.f32.mrb[0].mxu0
  %3183 = vmatprep.mubr.bf16.mxu0 0
  %3184 = vmatmul.mubr.bf16.gmra.mrb[0].mxu0 %v1415
  %v3185 = vpop.f32.mrb[0].mxu0
  %v3186 = vadd.f32 0.0, %v3185
  %v3187 = vpop.f32.mrb[0].mxu0
  %v3188 = vpop.f32.mrb[0].mxu0
  %v3189 = vadd.f32 0.0, %v3188
  %v3190 = vpop.f32.mrb[0].mxu0
  %3191 = vmatprep.mubr.bf16.mxu0 0
  %3192 = vmatmul.mubr.bf16.gmra.mrb[0].mxu0 %v1416
  %v3193 = vpop.f32.mrb[0].mxu0
  %v3194 = vadd.f32 0.0, %v3193
  %v3195 = vpop.f32.mrb[0].mxu0
  %v3196 = vpop.f32.mrb[0].mxu0
  %v3197 = vadd.f32 0.0, %v3196
  %v3198 = vpop.f32.mrb[0].mxu0
  %3199 = vmatprep.mubr.bf16.mxu0 0
  %3200 = vmatmul.mubr.bf16.gmra.mrb[0].mxu0 %v1417
  %v3201 = vpop.f32.mrb[0].mxu0
  %v3202 = vadd.f32 0.0, %v3201
  %v3203 = vpop.f32.mrb[0].mxu0
  %v3204 = vpop.f32.mrb[0].mxu0
  %v3205 = vadd.f32 0.0, %v3204
  %v3206 = vpop.f32.mrb[0].mxu0
  %3207 = vmatprep.mubr.bf16.mxu0 0
  %3208 = vmatmul.mubr.bf16.gmra.mrb[0].mxu0 %v1418
  %v3209 = vpop.f32.mrb[0].mxu0
  %v3210 = vadd.f32 0.0, %v3209
  %v3211 = vpop.f32.mrb[0].mxu0
  %v3212 = vpop.f32.mrb[0].mxu0
  %v3213 = vadd.f32 0.0, %v3212
  %v3214 = vpop.f32.mrb[0].mxu0
  %3215 = vmatprep.mubr.bf16.mxu0 0
  %3216 = vmatmul.mubr.bf16.gmra.mrb[0].mxu0 %v1419
  %v3217 = vpop.f32.mrb[0].mxu0
  %v3218 = vadd.f32 0.0, %v3217
  %v3219 = vpop.f32.mrb[0].mxu0
  %v3220 = vpop.f32.mrb[0].mxu0
  %v3221 = vadd.f32 0.0, %v3220
  %v3222 = vpop.f32.mrb[0].mxu0
  %3223 = vmatprep.mubr.bf16.mxu0 0
  %3224 = vmatmul.mubr.bf16.gmra.mrb[0].mxu0 %v1420
  %v3225 = vpop.f32.mrb[0].mxu0
  %v3226 = vadd.f32 0.0, %v3225
  %v3227 = vpop.f32.mrb[0].mxu0
  %v3228 = vpop.f32.mrb[0].mxu0
  %v3229 = vadd.f32 0.0, %v3228
  %v3230 = vpop.f32.mrb[0].mxu0
  %3231 = vmatprep.mubr.bf16.mxu0 0
  %3232 = vmatmul.mubr.bf16.gmra.mrb[0].mxu0 %v1421
  %v3233 = vpop.f32.mrb[0].mxu0
  %v3234 = vadd.f32 0.0, %v3233
  %v3235 = vpop.f32.mrb[0].mxu0
  %v3236 = vpop.f32.mrb[0].mxu0
  %v3237 = vadd.f32 0.0, %v3236
  %v3238 = vpop.f32.mrb[0].mxu0
  %3239 = vmatprep.mubr.bf16.mxu0 0
  %3240 = vmatmul.mubr.bf16.gmra.mrb[0].mxu0 %v1422
  %v3241 = vpop.f32.mrb[0].mxu0
  %v3242 = vadd.f32 0.0, %v3241
  %v3243 = vpop.f32.mrb[0].mxu0
  %v3244 = vpop.f32.mrb[0].mxu0
  %v3245 = vadd.f32 0.0, %v3244
  %v3246 = vpop.f32.mrb[0].mxu0
  %3247 = vmatprep.mubr.bf16.mxu0 0
  %3248 = vmatmul.mubr.bf16.gmra.mrb[0].mxu0 %v1423
  %v3249 = vpop.f32.mrb[0].mxu0
  %v3250 = vadd.f32 0.0, %v3249
  %v3251 = vpop.f32.mrb[0].mxu0
  %v3252 = vpop.f32.mrb[0].mxu0
  %v3253 = vadd.f32 0.0, %v3252
  %v3254 = vpop.f32.mrb[0].mxu0
  %3255 = vmatprep.mubr.bf16.mxu0 0
  %3256 = vmatmul.mubr.bf16.gmra.mrb[0].mxu0 %v1424
  %v3257 = vpop.f32.mrb[0].mxu0
  %v3258 = vadd.f32 0.0, %v3257
  %v3259 = vpop.f32.mrb[0].mxu0
  %v3260 = vpop.f32.mrb[0].mxu0
  %v3261 = vadd.f32 0.0, %v3260
  %v3262 = vpop.f32.mrb[0].mxu0
  %3263 = vmatprep.mubr.bf16.mxu0 0
  %3264 = vmatmul.mubr.bf16.gmra.mrb[0].mxu0 %v1425
  %v3265 = vpop.f32.mrb[0].mxu0
  %v3266 = vadd.f32 0.0, %v3265
  %v3267 = vpop.f32.mrb[0].mxu0
  %v3268 = vpop.f32.mrb[0].mxu0
  %v3269 = vadd.f32 0.0, %v3268
  %v3270 = vpop.f32.mrb[0].mxu0
  %3271 = vmatprep.mubr.bf16.mxu0 0
  %3272 = vmatmul.mubr.bf16.gmra.mrb[0].mxu0 %v1426
  %v3273 = vpop.f32.mrb[0].mxu0
  %v3274 = vadd.f32 0.0, %v3273
  %v3275 = vpop.f32.mrb[0].mxu0
  %v3276 = vpop.f32.mrb[0].mxu0
  %v3277 = vadd.f32 0.0, %v3276
  %v3278 = vpop.f32.mrb[0].mxu0
  %3279 = vmatprep.mubr.bf16.mxu0 0
  %3280 = vmatmul.mubr.bf16.gmra.mrb[0].mxu0 %v1427
  %v3281 = vpop.f32.mrb[0].mxu0
  %v3282 = vadd.f32 0.0, %v3281
  %v3283 = vpop.f32.mrb[0].mxu0
  %v3284 = vpop.f32.mrb[0].mxu0
  %v3285 = vadd.f32 0.0, %v3284
  %v3286 = vpop.f32.mrb[0].mxu0
  %3287 = vmatprep.mubr.bf16.mxu0 0
  %3288 = vmatmul.mubr.bf16.gmra.mrb[0].mxu0 %v1428
  %v3289 = vpop.f32.mrb[0].mxu0
  %v3290 = vadd.f32 0.0, %v3289
  %v3291 = vpop.f32.mrb[0].mxu0
  %v3292 = vpop.f32.mrb[0].mxu0
  %v3293 = vadd.f32 0.0, %v3292
  %v3294 = vpop.f32.mrb[0].mxu0
  %3295 = vmatprep.mubr.bf16.mxu0 0
  %3296 = vmatmul.mubr.bf16.gmra.mrb[0].mxu0 %v1429
  %v3297 = vpop.f32.mrb[0].mxu0
  %v3298 = vadd.f32 0.0, %v3297
  %v3299 = vpop.f32.mrb[0].mxu0
  %v3300 = vpop.f32.mrb[0].mxu0
  %v3301 = vadd.f32 0.0, %v3300
  %v3302 = vpop.f32.mrb[0].mxu0
  %3303 = vmatprep.mubr.bf16.mxu0 0
  %3304 = vmatmul.mubr.bf16.gmra.mrb[0].mxu0 %v1430
  %v3305 = vpop.f32.mrb[0].mxu0
  %v3306 = vadd.f32 0.0, %v3305
  %v3307 = vpop.f32.mrb[0].mxu0
  %v3308 = vpop.f32.mrb[0].mxu0
  %v3309 = vadd.f32 0.0, %v3308
  %v3310 = vpop.f32.mrb[0].mxu0
  %3311 = vdwg.mxu0
  %v3312 = vmax.f32 %v1714, %v1813
  %v3313 = vmax.f32 %v1717, %v1818
  %v3314 = vmax.f32 %v1722, %v1821
  %v3315 = vmax.f32 %v1725, %v1826
  %v3316 = vmax.f32 %v1730, %v1829
  %v3317 = vmax.f32 %v1733, %v1834
  %v3318 = vmax.f32 %v1738, %v1837
  %v3319 = vmax.f32 %v1741, %v1842
  %v3320 = vmax.f32 %v1746, %v1845
  %v3321 = vmax.f32 %v1749, %v1850
  %v3322 = vmax.f32 %v1754, %v1853
  %v3323 = vmax.f32 %v1757, %v1858
  %v3324 = vmax.f32 %v1762, %v1861
  %v3325 = vmax.f32 %v1765, %v1866
  %v3326 = vmax.f32 %v1770, %v1869
  %v3327 = vmax.f32 %v1773, %v1874
  %v3328 = vmax.f32 %v1778, %v1877
  %v3329 = vmax.f32 %v1781, %v1882
  %v3330 = vmax.f32 %v1786, %v1885
  %v3331 = vmax.f32 %v1789, %v1890
  %v3332 = vmax.f32 %v1794, %v1893
  %v3333 = vmax.f32 %v1797, %v1898
  %v3334 = vmax.f32 %v1802, %v1901
  %v3335 = vmax.f32 %v1805, %v1906
  %v3336 = vmax.f32 %v1810, %v1909
  %v3337 = vmax.f32 %v2114, %v2213
  %v3338 = vmax.f32 %v2117, %v2218
  %v3339 = vmax.f32 %v2122, %v2221
  %v3340 = vmax.f32 %v2125, %v2226
  %v3341 = vmax.f32 %v2130, %v2229
  %v3342 = vmax.f32 %v2133, %v2234
  %v3343 = vmax.f32 %v2138, %v2237
  %v3344 = vmax.f32 %v2141, %v2242
  %v3345 = vmax.f32 %v2146, %v2245
  %v3346 = vmax.f32 %v2149, %v2250
  %v3347 = vmax.f32 %v2154, %v2253
  %v3348 = vmax.f32 %v2157, %v2258
  %v3349 = vmax.f32 %v2162, %v2261
  %v3350 = vmax.f32 %v2165, %v2266
  %v3351 = vmax.f32 %v2170, %v2269
  %v3352 = vmax.f32 %v2173, %v2274
  %v3353 = vmax.f32 %v2178, %v2277
  %v3354 = vmax.f32 %v2181, %v2282
  %v3355 = vmax.f32 %v2186, %v2285
  %v3356 = vmax.f32 %v2189, %v2290
  %v3357 = vmax.f32 %v2194, %v2293
  %v3358 = vmax.f32 %v2197, %v2298
  %v3359 = vmax.f32 %v2202, %v2301
  %v3360 = vmax.f32 %v2205, %v2306
  %v3361 = vmax.f32 %v2210, %v2309
  %v3362 = vmax.f32 %v2514, %v2613
  %v3363 = vmax.f32 %v2517, %v2618
  %v3364 = vmax.f32 %v2522, %v2621
  %v3365 = vmax.f32 %v2525, %v2626
  %v3366 = vmax.f32 %v2530, %v2629
  %v3367 = vmax.f32 %v2533, %v2634
  %v3368 = vmax.f32 %v2538, %v2637
  %v3369 = vmax.f32 %v2541, %v2642
  %v3370 = vmax.f32 %v2546, %v2645
  %v3371 = vmax.f32 %v2549, %v2650
  %v3372 = vmax.f32 %v2554, %v2653
  %v3373 = vmax.f32 %v2557, %v2658
  %v3374 = vmax.f32 %v2562, %v2661
  %v3375 = vmax.f32 %v2565, %v2666
  %v3376 = vmax.f32 %v2570, %v2669
  %v3377 = vmax.f32 %v2573, %v2674
  %v3378 = vmax.f32 %v2578, %v2677
  %v3379 = vmax.f32 %v2581, %v2682
  %v3380 = vmax.f32 %v2586, %v2685
  %v3381 = vmax.f32 %v2589, %v2690
  %v3382 = vmax.f32 %v2594, %v2693
  %v3383 = vmax.f32 %v2597, %v2698
  %v3384 = vmax.f32 %v2602, %v2701
  %v3385 = vmax.f32 %v2605, %v2706
  %v3386 = vmax.f32 %v2610, %v2709
  %v3387 = vmax.f32 %v2914, %v3013
  %v3388 = vmax.f32 %v2917, %v3018
  %v3389 = vmax.f32 %v2922, %v3021
  %v3390 = vmax.f32 %v2925, %v3026
  %v3391 = vmax.f32 %v2930, %v3029
  %v3392 = vmax.f32 %v2933, %v3034
  %v3393 = vmax.f32 %v2938, %v3037
  %v3394 = vmax.f32 %v2941, %v3042
  %v3395 = vmax.f32 %v2946, %v3045
  %v3396 = vmax.f32 %v2949, %v3050
  %v3397 = vmax.f32 %v2954, %v3053
  %v3398 = vmax.f32 %v2957, %v3058
  %v3399 = vmax.f32 %v2962, %v3061
  %v3400 = vmax.f32 %v2965, %v3066
  %v3401 = vmax.f32 %v2970, %v3069
  %v3402 = vmax.f32 %v2973, %v3074
  %v3403 = vmax.f32 %v2978, %v3077
  %v3404 = vmax.f32 %v2981, %v3082
  %v3405 = vmax.f32 %v2986, %v3085
  %v3406 = vmax.f32 %v2989, %v3090
  %v3407 = vmax.f32 %v2994, %v3093
  %v3408 = vmax.f32 %v2997, %v3098
  %v3409 = vmax.f32 %v3002, %v3101
  %v3410 = vmax.f32 %v3005, %v3106
  %v3411 = vmax.f32 %v3010, %v3109
  %v3412 = vmax.f32 %v1914, %v2013
  %v3413 = vmax.f32 %v1917, %v2018
  %v3414 = vmax.f32 %v1922, %v2021
  %v3415 = vmax.f32 %v1925, %v2026
  %v3416 = vmax.f32 %v1930, %v2029
  %v3417 = vmax.f32 %v1933, %v2034
  %v3418 = vmax.f32 %v1938, %v2037
  %v3419 = vmax.f32 %v1941, %v2042
  %v3420 = vmax.f32 %v1946, %v2045
  %v3421 = vmax.f32 %v1949, %v2050
  %v3422 = vmax.f32 %v1954, %v2053
  %v3423 = vmax.f32 %v1957, %v2058
  %v3424 = vmax.f32 %v1962, %v2061
  %v3425 = vmax.f32 %v1965, %v2066
  %v3426 = vmax.f32 %v1970, %v2069
  %v3427 = vmax.f32 %v1973, %v2074
  %v3428 = vmax.f32 %v1978, %v2077
  %v3429 = vmax.f32 %v1981, %v2082
  %v3430 = vmax.f32 %v1986, %v2085
  %v3431 = vmax.f32 %v1989, %v2090
  %v3432 = vmax.f32 %v1994, %v2093
  %v3433 = vmax.f32 %v1997, %v2098
  %v3434 = vmax.f32 %v2002, %v2101
  %v3435 = vmax.f32 %v2005, %v2106
  %v3436 = vmax.f32 %v2010, %v2109
  %v3437 = vmax.f32 %v2314, %v2413
  %v3438 = vmax.f32 %v2317, %v2418
  %v3439 = vmax.f32 %v2322, %v2421
  %v3440 = vmax.f32 %v2325, %v2426
  %v3441 = vmax.f32 %v2330, %v2429
  %v3442 = vmax.f32 %v2333, %v2434
  %v3443 = vmax.f32 %v2338, %v2437
  %v3444 = vmax.f32 %v2341, %v2442
  %v3445 = vmax.f32 %v2346, %v2445
  %v3446 = vmax.f32 %v2349, %v2450
  %v3447 = vmax.f32 %v2354, %v2453
  %v3448 = vmax.f32 %v2357, %v2458
  %v3449 = vmax.f32 %v2362, %v2461
  %v3450 = vmax.f32 %v2365, %v2466
  %v3451 = vmax.f32 %v2370, %v2469
  %v3452 = vmax.f32 %v2373, %v2474
  %v3453 = vmax.f32 %v2378, %v2477
  %v3454 = vmax.f32 %v2381, %v2482
  %v3455 = vmax.f32 %v2386, %v2485
  %v3456 = vmax.f32 %v2389, %v2490
  %v3457 = vmax.f32 %v2394, %v2493
  %v3458 = vmax.f32 %v2397, %v2498
  %v3459 = vmax.f32 %v2402, %v2501
  %v3460 = vmax.f32 %v2405, %v2506
  %v3461 = vmax.f32 %v2410, %v2509
  %v3462 = vmax.f32 %v2714, %v2813
  %v3463 = vmax.f32 %v2717, %v2818
  %v3464 = vmax.f32 %v2722, %v2821
  %v3465 = vmax.f32 %v2725, %v2826
  %v3466 = vmax.f32 %v2730, %v2829
  %v3467 = vmax.f32 %v2733, %v2834
  %v3468 = vmax.f32 %v2738, %v2837
  %v3469 = vmax.f32 %v2741, %v2842
  %v3470 = vmax.f32 %v2746, %v2845
  %v3471 = vmax.f32 %v2749, %v2850
  %v3472 = vmax.f32 %v2754, %v2853
  %v3473 = vmax.f32 %v2757, %v2858
  %v3474 = vmax.f32 %v2762, %v2861
  %v3475 = vmax.f32 %v2765, %v2866
  %v3476 = vmax.f32 %v2770, %v2869
  %v3477 = vmax.f32 %v2773, %v2874
  %v3478 = vmax.f32 %v2778, %v2877
  %v3479 = vmax.f32 %v2781, %v2882
  %v3480 = vmax.f32 %v2786, %v2885
  %v3481 = vmax.f32 %v2789, %v2890
  %v3482 = vmax.f32 %v2794, %v2893
  %v3483 = vmax.f32 %v2797, %v2898
  %v3484 = vmax.f32 %v2802, %v2901
  %v3485 = vmax.f32 %v2805, %v2906
  %v3486 = vmax.f32 %v2810, %v2909
  %v3487 = vmax.f32 %v3114, %v3213
  %v3488 = vmax.f32 %v3117, %v3218
  %v3489 = vmax.f32 %v3122, %v3221
  %v3490 = vmax.f32 %v3125, %v3226
  %v3491 = vmax.f32 %v3130, %v3229
  %v3492 = vmax.f32 %v3133, %v3234
  %v3493 = vmax.f32 %v3138, %v3237
  %v3494 = vmax.f32 %v3141, %v3242
  %v3495 = vmax.f32 %v3146, %v3245
  %v3496 = vmax.f32 %v3149, %v3250
  %v3497 = vmax.f32 %v3154, %v3253
  %v3498 = vmax.f32 %v3157, %v3258
  %v3499 = vmax.f32 %v3162, %v3261
  %v3500 = vmax.f32 %v3165, %v3266
  %v3501 = vmax.f32 %v3170, %v3269
  %v3502 = vmax.f32 %v3173, %v3274
  %v3503 = vmax.f32 %v3178, %v3277
  %v3504 = vmax.f32 %v3181, %v3282
  %v3505 = vmax.f32 %v3186, %v3285
  %v3506 = vmax.f32 %v3189, %v3290
  %v3507 = vmax.f32 %v3194, %v3293
  %v3508 = vmax.f32 %v3197, %v3298
  %v3509 = vmax.f32 %v3202, %v3301
  %v3510 = vmax.f32 %v3205, %v3306
  %v3511 = vmax.f32 %v3210, %v3309
  %v3512 = vmax.f32 %v3312, %v3412
  %v3513 = vmax.f32 %v3313, %v3413
  %v3514 = vmax.f32 %v3314, %v3414
  %v3515 = vmax.f32 %v3315, %v3415
  %v3516 = vmax.f32 %v3316, %v3416
  %v3517 = vmax.f32 %v3317, %v3417
  %v3518 = vmax.f32 %v3318, %v3418
  %v3519 = vmax.f32 %v3319, %v3419
  %v3520 = vmax.f32 %v3320, %v3420
  %v3521 = vmax.f32 %v3321, %v3421
  %v3522 = vmax.f32 %v3322, %v3422
  %v3523 = vmax.f32 %v3323, %v3423
  %v3524 = vmax.f32 %v3324, %v3424
  %v3525 = vmax.f32 %v3325, %v3425
  %v3526 = vmax.f32 %v3326, %v3426
  %v3527 = vmax.f32 %v3327, %v3427
  %v3528 = vmax.f32 %v3328, %v3428
  %v3529 = vmax.f32 %v3329, %v3429
  %v3530 = vmax.f32 %v3330, %v3430
  %v3531 = vmax.f32 %v3331, %v3431
  %v3532 = vmax.f32 %v3332, %v3432
  %v3533 = vmax.f32 %v3333, %v3433
  %v3534 = vmax.f32 %v3334, %v3434
  %v3535 = vmax.f32 %v3335, %v3435
  %v3536 = vmax.f32 %v3336, %v3436
  %v3537 = vmax.f32 %v3337, %v3437
  %v3538 = vmax.f32 %v3338, %v3438
  %v3539 = vmax.f32 %v3339, %v3439
  %v3540 = vmax.f32 %v3340, %v3440
  %v3541 = vmax.f32 %v3341, %v3441
  %v3542 = vmax.f32 %v3342, %v3442
  %v3543 = vmax.f32 %v3343, %v3443
  %v3544 = vmax.f32 %v3344, %v3444
  %v3545 = vmax.f32 %v3345, %v3445
  %v3546 = vmax.f32 %v3346, %v3446
  %v3547 = vmax.f32 %v3347, %v3447
  %v3548 = vmax.f32 %v3348, %v3448
  %v3549 = vmax.f32 %v3349, %v3449
  %v3550 = vmax.f32 %v3350, %v3450
  %v3551 = vmax.f32 %v3351, %v3451
  %v3552 = vmax.f32 %v3352, %v3452
  %v3553 = vmax.f32 %v3353, %v3453
  %v3554 = vmax.f32 %v3354, %v3454
  %v3555 = vmax.f32 %v3355, %v3455
  %v3556 = vmax.f32 %v3356, %v3456
  %v3557 = vmax.f32 %v3357, %v3457
  %v3558 = vmax.f32 %v3358, %v3458
  %v3559 = vmax.f32 %v3359, %v3459
  %v3560 = vmax.f32 %v3360, %v3460
  %v3561 = vmax.f32 %v3361, %v3461
  %v3562 = vmax.f32 %v3362, %v3462
  %v3563 = vmax.f32 %v3363, %v3463
  %v3564 = vmax.f32 %v3364, %v3464
  %v3565 = vmax.f32 %v3365, %v3465
  %v3566 = vmax.f32 %v3366, %v3466
  %v3567 = vmax.f32 %v3367, %v3467
  %v3568 = vmax.f32 %v3368, %v3468
  %v3569 = vmax.f32 %v3369, %v3469
  %v3570 = vmax.f32 %v3370, %v3470
  %v3571 = vmax.f32 %v3371, %v3471
  %v3572 = vmax.f32 %v3372, %v3472
  %v3573 = vmax.f32 %v3373, %v3473
  %v3574 = vmax.f32 %v3374, %v3474
  %v3575 = vmax.f32 %v3375, %v3475
  %v3576 = vmax.f32 %v3376, %v3476
  %v3577 = vmax.f32 %v3377, %v3477
  %v3578 = vmax.f32 %v3378, %v3478
  %v3579 = vmax.f32 %v3379, %v3479
  %v3580 = vmax.f32 %v3380, %v3480
  %v3581 = vmax.f32 %v3381, %v3481
  %v3582 = vmax.f32 %v3382, %v3482
  %v3583 = vmax.f32 %v3383, %v3483
  %v3584 = vmax.f32 %v3384, %v3484
  %v3585 = vmax.f32 %v3385, %v3485
  %v3586 = vmax.f32 %v3386, %v3486
  %v3587 = vmax.f32 %v3387, %v3487
  %v3588 = vmax.f32 %v3388, %v3488
  %v3589 = vmax.f32 %v3389, %v3489
  %v3590 = vmax.f32 %v3390, %v3490
  %v3591 = vmax.f32 %v3391, %v3491
  %v3592 = vmax.f32 %v3392, %v3492
  %v3593 = vmax.f32 %v3393, %v3493
  %v3594 = vmax.f32 %v3394, %v3494
  %v3595 = vmax.f32 %v3395, %v3495
  %v3596 = vmax.f32 %v3396, %v3496
  %v3597 = vmax.f32 %v3397, %v3497
  %v3598 = vmax.f32 %v3398, %v3498
  %v3599 = vmax.f32 %v3399, %v3499
  %v3600 = vmax.f32 %v3400, %v3500
  %v3601 = vmax.f32 %v3401, %v3501
  %v3602 = vmax.f32 %v3402, %v3502
  %v3603 = vmax.f32 %v3403, %v3503
  %v3604 = vmax.f32 %v3404, %v3504
  %v3605 = vmax.f32 %v3405, %v3505
  %v3606 = vmax.f32 %v3406, %v3506
  %v3607 = vmax.f32 %v3407, %v3507
  %v3608 = vmax.f32 %v3408, %v3508
  %v3609 = vmax.f32 %v3409, %v3509
  %v3610 = vmax.f32 %v3410, %v3510
  %v3611 = vmax.f32 %v3411, %v3511
  %v3612 = vld [vmem:[%s2] sm:$0x1]
  %v3614 = vlaneseq
  %v3615 = vshrl.u32 %v3614, 7
  %v3616 = vsub.s32 0, %v3615
  %v3617 = vrot.slane %v3612, %v3616
  %v3619 = vadd.f32 %v3512, %v3617
  %v3620 = vadd.f32 %v3513, %v3617
  %v3621 = vadd.f32 %v3514, %v3617
  %v3622 = vadd.f32 %v3515, %v3617
  %v3623 = vadd.f32 %v3516, %v3617
  %v3624 = vadd.f32 %v3517, %v3617
  %v3625 = vadd.f32 %v3518, %v3617
  %v3626 = vadd.f32 %v3519, %v3617
  %v3627 = vadd.f32 %v3520, %v3617
  %v3628 = vadd.f32 %v3521, %v3617
  %v3629 = vadd.f32 %v3522, %v3617
  %v3630 = vadd.f32 %v3523, %v3617
  %v3631 = vadd.f32 %v3524, %v3617
  %v3632 = vadd.f32 %v3525, %v3617
  %v3633 = vadd.f32 %v3526, %v3617
  %v3634 = vadd.f32 %v3527, %v3617
  %v3635 = vadd.f32 %v3528, %v3617
  %v3636 = vadd.f32 %v3529, %v3617
  %v3637 = vadd.f32 %v3530, %v3617
  %v3638 = vadd.f32 %v3531, %v3617
  %v3639 = vadd.f32 %v3532, %v3617
  %v3640 = vadd.f32 %v3533, %v3617
  %v3641 = vadd.f32 %v3534, %v3617
  %v3642 = vadd.f32 %v3535, %v3617
  %v3643 = vadd.f32 %v3536, %v3617
  %v3644 = vadd.f32 %v3537, %v3617
  %v3645 = vadd.f32 %v3538, %v3617
  %v3646 = vadd.f32 %v3539, %v3617
  %v3647 = vadd.f32 %v3540, %v3617
  %v3648 = vadd.f32 %v3541, %v3617
  %v3649 = vadd.f32 %v3542, %v3617
  %v3650 = vadd.f32 %v3543, %v3617
  %v3651 = vadd.f32 %v3544, %v3617
  %v3652 = vadd.f32 %v3545, %v3617
  %v3653 = vadd.f32 %v3546, %v3617
  %v3654 = vadd.f32 %v3547, %v3617
  %v3655 = vadd.f32 %v3548, %v3617
  %v3656 = vadd.f32 %v3549, %v3617
  %v3657 = vadd.f32 %v3550, %v3617
  %v3658 = vadd.f32 %v3551, %v3617
  %v3659 = vadd.f32 %v3552, %v3617
  %v3660 = vadd.f32 %v3553, %v3617
  %v3661 = vadd.f32 %v3554, %v3617
  %v3662 = vadd.f32 %v3555, %v3617
  %v3663 = vadd.f32 %v3556, %v3617
  %v3664 = vadd.f32 %v3557, %v3617
  %v3665 = vadd.f32 %v3558, %v3617
  %v3666 = vadd.f32 %v3559, %v3617
  %v3667 = vadd.f32 %v3560, %v3617
  %v3668 = vadd.f32 %v3561, %v3617
  %v3669 = vadd.f32 %v3562, %v3617
  %v3670 = vadd.f32 %v3563, %v3617
  %v3671 = vadd.f32 %v3564, %v3617
  %v3672 = vadd.f32 %v3565, %v3617
  %v3673 = vadd.f32 %v3566, %v3617
  %v3674 = vadd.f32 %v3567, %v3617
  %v3675 = vadd.f32 %v3568, %v3617
  %v3676 = vadd.f32 %v3569, %v3617
  %v3677 = vadd.f32 %v3570, %v3617
  %v3678 = vadd.f32 %v3571, %v3617
  %v3679 = vadd.f32 %v3572, %v3617
  %v3680 = vadd.f32 %v3573, %v3617
  %v3681 = vadd.f32 %v3574, %v3617
  %v3682 = vadd.f32 %v3575, %v3617
  %v3683 = vadd.f32 %v3576, %v3617
  %v3684 = vadd.f32 %v3577, %v3617
  %v3685 = vadd.f32 %v3578, %v3617
  %v3686 = vadd.f32 %v3579, %v3617
  %v3687 = vadd.f32 %v3580, %v3617
  %v3688 = vadd.f32 %v3581, %v3617
  %v3689 = vadd.f32 %v3582, %v3617
  %v3690 = vadd.f32 %v3583, %v3617
  %v3691 = vadd.f32 %v3584, %v3617
  %v3692 = vadd.f32 %v3585, %v3617
  %v3693 = vadd.f32 %v3586, %v3617
  %v3694 = vadd.f32 %v3587, %v3617
  %v3695 = vadd.f32 %v3588, %v3617
  %v3696 = vadd.f32 %v3589, %v3617
  %v3697 = vadd.f32 %v3590, %v3617
  %v3698 = vadd.f32 %v3591, %v3617
  %v3699 = vadd.f32 %v3592, %v3617
  %v3700 = vadd.f32 %v3593, %v3617
  %v3701 = vadd.f32 %v3594, %v3617
  %v3702 = vadd.f32 %v3595, %v3617
  %v3703 = vadd.f32 %v3596, %v3617
  %v3704 = vadd.f32 %v3597, %v3617
  %v3705 = vadd.f32 %v3598, %v3617
  %v3706 = vadd.f32 %v3599, %v3617
  %v3707 = vadd.f32 %v3600, %v3617
  %v3708 = vadd.f32 %v3601, %v3617
  %v3709 = vadd.f32 %v3602, %v3617
  %v3710 = vadd.f32 %v3603, %v3617
  %v3711 = vadd.f32 %v3604, %v3617
  %v3712 = vadd.f32 %v3605, %v3617
  %v3713 = vadd.f32 %v3606, %v3617
  %v3714 = vadd.f32 %v3607, %v3617
  %v3715 = vadd.f32 %v3608, %v3617
  %v3716 = vadd.f32 %v3609, %v3617
  %v3717 = vadd.f32 %v3610, %v3617
  %v3718 = vadd.f32 %v3611, %v3617
  %v3719 = vmax.f32 %v3619, 0.0
  %v3720 = vmax.f32 %v3620, 0.0
  %v3721 = vmax.f32 %v3621, 0.0
  %v3722 = vmax.f32 %v3622, 0.0
  %v3723 = vmax.f32 %v3623, 0.0
  %v3724 = vmax.f32 %v3624, 0.0
  %v3725 = vmax.f32 %v3625, 0.0
  %v3726 = vmax.f32 %v3626, 0.0
  %v3727 = vmax.f32 %v3627, 0.0
  %v3728 = vmax.f32 %v3628, 0.0
  %v3729 = vmax.f32 %v3629, 0.0
  %v3730 = vmax.f32 %v3630, 0.0
  %v3731 = vmax.f32 %v3631, 0.0
  %v3732 = vmax.f32 %v3632, 0.0
  %v3733 = vmax.f32 %v3633, 0.0
  %v3734 = vmax.f32 %v3634, 0.0
  %v3735 = vmax.f32 %v3635, 0.0
  %v3736 = vmax.f32 %v3636, 0.0
  %v3737 = vmax.f32 %v3637, 0.0
  %v3738 = vmax.f32 %v3638, 0.0
  %v3739 = vmax.f32 %v3639, 0.0
  %v3740 = vmax.f32 %v3640, 0.0
  %v3741 = vmax.f32 %v3641, 0.0
  %v3742 = vmax.f32 %v3642, 0.0
  %v3743 = vmax.f32 %v3643, 0.0
  %v3744 = vmax.f32 %v3644, 0.0
  %v3745 = vmax.f32 %v3645, 0.0
  %v3746 = vmax.f32 %v3646, 0.0
  %v3747 = vmax.f32 %v3647, 0.0
  %v3748 = vmax.f32 %v3648, 0.0
  %v3749 = vmax.f32 %v3649, 0.0
  %v3750 = vmax.f32 %v3650, 0.0
  %v3751 = vmax.f32 %v3651, 0.0
  %v3752 = vmax.f32 %v3652, 0.0
  %v3753 = vmax.f32 %v3653, 0.0
  %v3754 = vmax.f32 %v3654, 0.0
  %v3755 = vmax.f32 %v3655, 0.0
  %v3756 = vmax.f32 %v3656, 0.0
  %v3757 = vmax.f32 %v3657, 0.0
  %v3758 = vmax.f32 %v3658, 0.0
  %v3759 = vmax.f32 %v3659, 0.0
  %v3760 = vmax.f32 %v3660, 0.0
  %v3761 = vmax.f32 %v3661, 0.0
  %v3762 = vmax.f32 %v3662, 0.0
  %v3763 = vmax.f32 %v3663, 0.0
  %v3764 = vmax.f32 %v3664, 0.0
  %v3765 = vmax.f32 %v3665, 0.0
  %v3766 = vmax.f32 %v3666, 0.0
  %v3767 = vmax.f32 %v3667, 0.0
  %v3768 = vmax.f32 %v3668, 0.0
  %v3769 = vmax.f32 %v3669, 0.0
  %v3770 = vmax.f32 %v3670, 0.0
  %v3771 = vmax.f32 %v3671, 0.0
  %v3772 = vmax.f32 %v3672, 0.0
  %v3773 = vmax.f32 %v3673, 0.0
  %v3774 = vmax.f32 %v3674, 0.0
  %v3775 = vmax.f32 %v3675, 0.0
  %v3776 = vmax.f32 %v3676, 0.0
  %v3777 = vmax.f32 %v3677, 0.0
  %v3778 = vmax.f32 %v3678, 0.0
  %v3779 = vmax.f32 %v3679, 0.0
  %v3780 = vmax.f32 %v3680, 0.0
  %v3781 = vmax.f32 %v3681, 0.0
  %v3782 = vmax.f32 %v3682, 0.0
  %v3783 = vmax.f32 %v3683, 0.0
  %v3784 = vmax.f32 %v3684, 0.0
  %v3785 = vmax.f32 %v3685, 0.0
  %v3786 = vmax.f32 %v3686, 0.0
  %v3787 = vmax.f32 %v3687, 0.0
  %v3788 = vmax.f32 %v3688, 0.0
  %v3789 = vmax.f32 %v3689, 0.0
  %v3790 = vmax.f32 %v3690, 0.0
  %v3791 = vmax.f32 %v3691, 0.0
  %v3792 = vmax.f32 %v3692, 0.0
  %v3793 = vmax.f32 %v3693, 0.0
  %v3794 = vmax.f32 %v3694, 0.0
  %v3795 = vmax.f32 %v3695, 0.0
  %v3796 = vmax.f32 %v3696, 0.0
  %v3797 = vmax.f32 %v3697, 0.0
  %v3798 = vmax.f32 %v3698, 0.0
  %v3799 = vmax.f32 %v3699, 0.0
  %v3800 = vmax.f32 %v3700, 0.0
  %v3801 = vmax.f32 %v3701, 0.0
  %v3802 = vmax.f32 %v3702, 0.0
  %v3803 = vmax.f32 %v3703, 0.0
  %v3804 = vmax.f32 %v3704, 0.0
  %v3805 = vmax.f32 %v3705, 0.0
  %v3806 = vmax.f32 %v3706, 0.0
  %v3807 = vmax.f32 %v3707, 0.0
  %v3808 = vmax.f32 %v3708, 0.0
  %v3809 = vmax.f32 %v3709, 0.0
  %v3810 = vmax.f32 %v3710, 0.0
  %v3811 = vmax.f32 %v3711, 0.0
  %v3812 = vmax.f32 %v3712, 0.0
  %v3813 = vmax.f32 %v3713, 0.0
  %v3814 = vmax.f32 %v3714, 0.0
  %v3815 = vmax.f32 %v3715, 0.0
  %v3816 = vmax.f32 %v3716, 0.0
  %v3817 = vmax.f32 %v3717, 0.0
  %v3818 = vmax.f32 %v3718, 0.0
  %v3819 = vpack.c.bf16 %v3720, %v3719
  %v3820 = vpack.c.bf16 %v3722, %v3721
  %v3821 = vpack.c.bf16 %v3724, %v3723
  %v3822 = vpack.c.bf16 %v3726, %v3725
  %v3823 = vpack.c.bf16 %v3728, %v3727
  %v3824 = vpack.c.bf16 %v3730, %v3729
  %v3825 = vpack.c.bf16 %v3732, %v3731
  %v3826 = vpack.c.bf16 %v3734, %v3733
  %v3827 = vpack.c.bf16 %v3736, %v3735
  %v3828 = vpack.c.bf16 %v3738, %v3737
  %v3829 = vpack.c.bf16 %v3740, %v3739
  %v3830 = vpack.c.bf16 %v3742, %v3741
  %v3831 = vpack.c.bf16 %v3743, %v3743
  %v3832 = vpack.c.bf16 %v3745, %v3744
  %v3833 = vpack.c.bf16 %v3747, %v3746
  %v3834 = vpack.c.bf16 %v3749, %v3748
  %v3835 = vpack.c.bf16 %v3751, %v3750
  %v3836 = vpack.c.bf16 %v3753, %v3752
  %v3837 = vpack.c.bf16 %v3755, %v3754
  %v3838 = vpack.c.bf16 %v3757, %v3756
  %v3839 = vpack.c.bf16 %v3759, %v3758
  %v3840 = vpack.c.bf16 %v3761, %v3760
  %v3841 = vpack.c.bf16 %v3763, %v3762
  %v3842 = vpack.c.bf16 %v3765, %v3764
  %v3843 = vpack.c.bf16 %v3767, %v3766
  %v3844 = vpack.c.bf16 %v3768, %v3768
  %v3845 = vpack.c.bf16 %v3770, %v3769
  %v3846 = vpack.c.bf16 %v3772, %v3771
  %v3847 = vpack.c.bf16 %v3774, %v3773
  %v3848 = vpack.c.bf16 %v3776, %v3775
  %v3849 = vpack.c.bf16 %v3778, %v3777
  %v3850 = vpack.c.bf16 %v3780, %v3779
  %v3851 = vpack.c.bf16 %v3782, %v3781
  %v3852 = vpack.c.bf16 %v3784, %v3783
  %v3853 = vpack.c.bf16 %v3786, %v3785
  %v3854 = vpack.c.bf16 %v3788, %v3787
  %v3855 = vpack.c.bf16 %v3790, %v3789
  %v3856 = vpack.c.bf16 %v3792, %v3791
  %v3857 = vpack.c.bf16 %v3793, %v3793
  %v3858 = vpack.c.bf16 %v3795, %v3794
  %v3859 = vpack.c.bf16 %v3797, %v3796
  %v3860 = vpack.c.bf16 %v3799, %v3798
  %v3861 = vpack.c.bf16 %v3801, %v3800
  %v3862 = vpack.c.bf16 %v3803, %v3802
  %v3863 = vpack.c.bf16 %v3805, %v3804
  %v3864 = vpack.c.bf16 %v3807, %v3806
  %v3865 = vpack.c.bf16 %v3809, %v3808
  %v3866 = vpack.c.bf16 %v3811, %v3810
  %v3867 = vpack.c.bf16 %v3813, %v3812
  %v3868 = vpack.c.bf16 %v3815, %v3814
  %v3869 = vpack.c.bf16 %v3817, %v3816
  %v3870 = vpack.c.bf16 %v3818, %v3818
  %v3923 = vunpack.c.l.b16 %v3819
  %v3924 = vunpack.c.h.b16 %v3819
  %v3925 = vunpack.c.l.b16 %v3820
  %v3926 = vunpack.c.h.b16 %v3820
  %v3927 = vunpack.c.l.b16 %v3821
  %v3928 = vunpack.c.h.b16 %v3821
  %v3929 = vunpack.c.l.b16 %v3822
  %v3930 = vunpack.c.h.b16 %v3822
  %v3931 = vunpack.c.l.b16 %v3823
  %v3932 = vunpack.c.h.b16 %v3823
  %v3933 = vunpack.c.l.b16 %v3824
  %v3934 = vunpack.c.h.b16 %v3824
  %v3935 = vunpack.c.l.b16 %v3825
  %v3936 = vunpack.c.h.b16 %v3825
  %v3937 = vunpack.c.l.b16 %v3826
  %v3938 = vunpack.c.h.b16 %v3826
  %v3939 = vunpack.c.l.b16 %v3827
  %v3940 = vunpack.c.h.b16 %v3827
  %v3941 = vunpack.c.l.b16 %v3828
  %v3942 = vunpack.c.h.b16 %v3828
  %v3943 = vunpack.c.l.b16 %v3829
  %v3944 = vunpack.c.h.b16 %v3829
  %v3945 = vunpack.c.l.b16 %v3830
  %v3946 = vunpack.c.h.b16 %v3830
  %v3947 = vunpack.c.l.b16 %v3831
  %v3948 = vunpack.c.l.b16 %v3832
  %v3949 = vunpack.c.h.b16 %v3832
  %v3950 = vunpack.c.l.b16 %v3833
  %v3951 = vunpack.c.h.b16 %v3833
  %v3952 = vunpack.c.l.b16 %v3834
  %v3953 = vunpack.c.h.b16 %v3834
  %v3954 = vunpack.c.l.b16 %v3835
  %v3955 = vunpack.c.h.b16 %v3835
  %v3956 = vunpack.c.l.b16 %v3836
  %v3957 = vunpack.c.h.b16 %v3836
  %v3958 = vunpack.c.l.b16 %v3837
  %v3959 = vunpack.c.h.b16 %v3837
  %v3960 = vunpack.c.l.b16 %v3838
  %v3961 = vunpack.c.h.b16 %v3838
  %v3962 = vunpack.c.l.b16 %v3839
  %v3963 = vunpack.c.h.b16 %v3839
  %v3964 = vunpack.c.l.b16 %v3840
  %v3965 = vunpack.c.h.b16 %v3840
  %v3966 = vunpack.c.l.b16 %v3841
  %v3967 = vunpack.c.h.b16 %v3841
  %v3968 = vunpack.c.l.b16 %v3842
  %v3969 = vunpack.c.h.b16 %v3842
  %v3970 = vunpack.c.l.b16 %v3843
  %v3971 = vunpack.c.h.b16 %v3843
  %v3972 = vunpack.c.l.b16 %v3844
  %v3973 = vunpack.c.l.b16 %v3845
  %v3974 = vunpack.c.h.b16 %v3845
  %v3975 = vunpack.c.l.b16 %v3846
  %v3976 = vunpack.c.h.b16 %v3846
  %v3977 = vunpack.c.l.b16 %v3847
  %v3978 = vunpack.c.h.b16 %v3847
  %v3979 = vunpack.c.l.b16 %v3848
  %v3980 = vunpack.c.h.b16 %v3848
  %v3981 = vunpack.c.l.b16 %v3849
  %v3982 = vunpack.c.h.b16 %v3849
  %v3983 = vunpack.c.l.b16 %v3850
  %v3984 = vunpack.c.h.b16 %v3850
  %v3985 = vunpack.c.l.b16 %v3851
  %v3986 = vunpack.c.h.b16 %v3851
  %v3987 = vunpack.c.l.b16 %v3852
  %v3988 = vunpack.c.h.b16 %v3852
  %v3989 = vunpack.c.l.b16 %v3853
  %v3990 = vunpack.c.h.b16 %v3853
  %v3991 = vunpack.c.l.b16 %v3854
  %v3992 = vunpack.c.h.b16 %v3854
  %v3993 = vunpack.c.l.b16 %v3855
  %v3994 = vunpack.c.h.b16 %v3855
  %v3995 = vunpack.c.l.b16 %v3856
  %v3996 = vunpack.c.h.b16 %v3856
  %v3997 = vunpack.c.l.b16 %v3857
  %v3998 = vunpack.c.l.b16 %v3858
  %v3999 = vunpack.c.h.b16 %v3858
  %v4000 = vunpack.c.l.b16 %v3859
  %v4001 = vunpack.c.h.b16 %v3859
  %v4002 = vunpack.c.l.b16 %v3860
  %v4003 = vunpack.c.h.b16 %v3860
  %v4004 = vunpack.c.l.b16 %v3861
  %v4005 = vunpack.c.h.b16 %v3861
  %v4006 = vunpack.c.l.b16 %v3862
  %v4007 = vunpack.c.h.b16 %v3862
  %v4008 = vunpack.c.l.b16 %v3863
  %v4009 = vunpack.c.h.b16 %v3863
  %v4010 = vunpack.c.l.b16 %v3864
  %v4011 = vunpack.c.h.b16 %v3864
  %v4012 = vunpack.c.l.b16 %v3865
  %v4013 = vunpack.c.h.b16 %v3865
  %v4014 = vunpack.c.l.b16 %v3866
  %v4015 = vunpack.c.h.b16 %v3866
  %v4016 = vunpack.c.l.b16 %v3867
  %v4017 = vunpack.c.h.b16 %v3867
  %v4018 = vunpack.c.l.b16 %v3868
  %v4019 = vunpack.c.h.b16 %v3868
  %v4020 = vunpack.c.l.b16 %v3869
  %v4021 = vunpack.c.h.b16 %v3869
  %v4022 = vunpack.c.l.b16 %v3870
  %v4023 = vpack.c.b16 %v3923, %v3923
  %v4024 = vpack.c.b16 %v3924, %v3924
  %v4025 = vpack.c.b16 %v3925, %v3925
  %v4026 = vpack.c.b16 %v3926, %v3926
  %v4027 = vpack.c.b16 %v3927, %v3927
  %v4028 = vpack.c.b16 %v3928, %v3928
  %v4029 = vpack.c.b16 %v3929, %v3929
  %v4030 = vpack.c.b16 %v3930, %v3930
  %v4031 = vpack.c.b16 %v3931, %v3931
  %v4032 = vpack.c.b16 %v3932, %v3932
  %v4033 = vpack.c.b16 %v3933, %v3933
  %v4034 = vpack.c.b16 %v3934, %v3934
  %v4035 = vpack.c.b16 %v3935, %v3935
  %v4036 = vpack.c.b16 %v3936, %v3936
  %v4037 = vpack.c.b16 %v3937, %v3937
  %v4038 = vpack.c.b16 %v3938, %v3938
  %v4039 = vpack.c.b16 %v3939, %v3939
  %v4040 = vpack.c.b16 %v3940, %v3940
  %v4041 = vpack.c.b16 %v3941, %v3941
  %v4042 = vpack.c.b16 %v3942, %v3942
  %v4043 = vpack.c.b16 %v3943, %v3943
  %v4044 = vpack.c.b16 %v3944, %v3944
  %v4045 = vpack.c.b16 %v3945, %v3945
  %v4046 = vpack.c.b16 %v3946, %v3946
  %v4047 = vpack.c.b16 %v3947, %v3947
  %v4048 = vpack.c.b16 %v3948, %v3948
  %v4049 = vpack.c.b16 %v3949, %v3949
  %v4050 = vpack.c.b16 %v3950, %v3950
  %v4051 = vpack.c.b16 %v3951, %v3951
  %v4052 = vpack.c.b16 %v3952, %v3952
  %v4053 = vpack.c.b16 %v3953, %v3953
  %v4054 = vpack.c.b16 %v3954, %v3954
  %v4055 = vpack.c.b16 %v3955, %v3955
  %v4056 = vpack.c.b16 %v3956, %v3956
  %v4057 = vpack.c.b16 %v3957, %v3957
  %v4058 = vpack.c.b16 %v3958, %v3958
  %v4059 = vpack.c.b16 %v3959, %v3959
  %v4060 = vpack.c.b16 %v3960, %v3960
  %v4061 = vpack.c.b16 %v3961, %v3961
  %v4062 = vpack.c.b16 %v3962, %v3962
  %v4063 = vpack.c.b16 %v3963, %v3963
  %v4064 = vpack.c.b16 %v3964, %v3964
  %v4065 = vpack.c.b16 %v3965, %v3965
  %v4066 = vpack.c.b16 %v3966, %v3966
  %v4067 = vpack.c.b16 %v3967, %v3967
  %v4068 = vpack.c.b16 %v3968, %v3968
  %v4069 = vpack.c.b16 %v3969, %v3969
  %v4070 = vpack.c.b16 %v3970, %v3970
  %v4071 = vpack.c.b16 %v3971, %v3971
  %v4072 = vpack.c.b16 %v3972, %v3972
  %v4073 = vpack.c.b16 %v3973, %v3973
  %v4074 = vpack.c.b16 %v3974, %v3974
  %v4075 = vpack.c.b16 %v3975, %v3975
  %v4076 = vpack.c.b16 %v3976, %v3976
  %v4077 = vpack.c.b16 %v3977, %v3977
  %v4078 = vpack.c.b16 %v3978, %v3978
  %v4079 = vpack.c.b16 %v3979, %v3979
  %v4080 = vpack.c.b16 %v3980, %v3980
  %v4081 = vpack.c.b16 %v3981, %v3981
  %v4082 = vpack.c.b16 %v3982, %v3982
  %v4083 = vpack.c.b16 %v3983, %v3983
  %v4084 = vpack.c.b16 %v3984, %v3984
  %v4085 = vpack.c.b16 %v3985, %v3985
  %v4086 = vpack.c.b16 %v3986, %v3986
  %v4087 = vpack.c.b16 %v3987, %v3987
  %v4088 = vpack.c.b16 %v3988, %v3988
  %v4089 = vpack.c.b16 %v3989, %v3989
  %v4090 = vpack.c.b16 %v3990, %v3990
  %v4091 = vpack.c.b16 %v3991, %v3991
  %v4092 = vpack.c.b16 %v3992, %v3992
  %v4093 = vpack.c.b16 %v3993, %v3993
  %v4094 = vpack.c.b16 %v3994, %v3994
  %v4095 = vpack.c.b16 %v3995, %v3995
  %v4096 = vpack.c.b16 %v3996, %v3996
  %v4097 = vpack.c.b16 %v3997, %v3997
  %v4098 = vpack.c.b16 %v3998, %v3998
  %v4099 = vpack.c.b16 %v3999, %v3999
  %v4100 = vpack.c.b16 %v4000, %v4000
  %v4101 = vpack.c.b16 %v4001, %v4001
  %v4102 = vpack.c.b16 %v4002, %v4002
  %v4103 = vpack.c.b16 %v4003, %v4003
  %v4104 = vpack.c.b16 %v4004, %v4004
  %v4105 = vpack.c.b16 %v4005, %v4005
  %v4106 = vpack.c.b16 %v4006, %v4006
  %v4107 = vpack.c.b16 %v4007, %v4007
  %v4108 = vpack.c.b16 %v4008, %v4008
  %v4109 = vpack.c.b16 %v4009, %v4009
  %v4110 = vpack.c.b16 %v4010, %v4010
  %v4111 = vpack.c.b16 %v4011, %v4011
  %v4112 = vpack.c.b16 %v4012, %v4012
  %v4113 = vpack.c.b16 %v4013, %v4013
  %v4114 = vpack.c.b16 %v4014, %v4014
  %v4115 = vpack.c.b16 %v4015, %v4015
  %v4116 = vpack.c.b16 %v4016, %v4016
  %v4117 = vpack.c.b16 %v4017, %v4017
  %v4118 = vpack.c.b16 %v4018, %v4018
  %v4119 = vpack.c.b16 %v4019, %v4019
  %v4120 = vpack.c.b16 %v4020, %v4020
  %v4121 = vpack.c.b16 %v4021, %v4021
  %v4122 = vpack.c.b16 %v4022, %v4022
  %4223 = vst [vmem:[%s3] sm:$0xf] %v4023
  %4224 = vst [vmem:[%s3 + $0x4] sm:$0xf] %v4024
  %4225 = vst [vmem:[%s3 + $0x8] sm:$0xf] %v4025
  %4226 = vst [vmem:[%s3 + $0xc] sm:$0xf] %v4026
  %4227 = vst [vmem:[%s3 + $0x10] sm:$0xf] %v4027
  %4228 = vst [vmem:[%s3 + $0x14] sm:$0xf] %v4028
  %4229 = vst [vmem:[%s3 + $0x18] sm:$0xf] %v4029
  %4230 = vst [vmem:[%s3 + $0x1c] sm:$0xf] %v4030
  %4231 = vst [vmem:[%s3 + $0x20] sm:$0xf] %v4031
  %4232 = vst [vmem:[%s3 + $0x24] sm:$0xf] %v4032
  %4233 = vst [vmem:[%s3 + $0x28] sm:$0xf] %v4033
  %4234 = vst [vmem:[%s3 + $0x2c] sm:$0xf] %v4034
  %4235 = vst [vmem:[%s3 + $0x30] sm:$0xf] %v4035
  %4236 = vst [vmem:[%s3 + $0x34] sm:$0xf] %v4036
  %4237 = vst [vmem:[%s3 + $0x38] sm:$0xf] %v4037
  %4238 = vst [vmem:[%s3 + $0x3c] sm:$0xf] %v4038
  %4239 = vst [vmem:[%s3 + $0x40] sm:$0xf] %v4039
  %4240 = vst [vmem:[%s3 + $0x44] sm:$0xf] %v4040
  %4241 = vst [vmem:[%s3 + $0x48] sm:$0xf] %v4041
  %4242 = vst [vmem:[%s3 + $0x4c] sm:$0xf] %v4042
  %4243 = vst [vmem:[%s3 + $0x50] sm:$0xf] %v4043
  %4244 = vst [vmem:[%s3 + $0x54] sm:$0xf] %v4044
  %4245 = vst [vmem:[%s3 + $0x58] sm:$0xf] %v4045
  %4246 = vst [vmem:[%s3 + $0x5c] sm:$0xf] %v4046
  %4247 = vst [vmem:[%s3 + $0x60] sm:$0xf] %v4047
  %4248 = vst [vmem:[%s3 + $0x64] sm:$0xf] %v4048
  %4249 = vst [vmem:[%s3 + $0x68] sm:$0xf] %v4049
  %4250 = vst [vmem:[%s3 + $0x6c] sm:$0xf] %v4050
  %4251 = vst [vmem:[%s3 + $0x70] sm:$0xf] %v4051
  %4252 = vst [vmem:[%s3 + $0x74] sm:$0xf] %v4052
  %4253 = vst [vmem:[%s3 + $0x78] sm:$0xf] %v4053
  %4254 = vst [vmem:[%s3 + $0x7c] sm:$0xf] %v4054
  %4255 = vst [vmem:[%s3 + $0x80] sm:$0xf] %v4055
  %4256 = vst [vmem:[%s3 + $0x84] sm:$0xf] %v4056
  %4257 = vst [vmem:[%s3 + $0x88] sm:$0xf] %v4057
  %4258 = vst [vmem:[%s3 + $0x8c] sm:$0xf] %v4058
  %4259 = vst [vmem:[%s3 + $0x90] sm:$0xf] %v4059
  %4260 = vst [vmem:[%s3 + $0x94] sm:$0xf] %v4060
  %4261 = vst [vmem:[%s3 + $0x98] sm:$0xf] %v4061
  %4262 = vst [vmem:[%s3 + $0x9c] sm:$0xf] %v4062
  %4263 = vst [vmem:[%s3 + $0xa0] sm:$0xf] %v4063
  %4264 = vst [vmem:[%s3 + $0xa4] sm:$0xf] %v4064
  %4265 = vst [vmem:[%s3 + $0xa8] sm:$0xf] %v4065
  %4266 = vst [vmem:[%s3 + $0xac] sm:$0xf] %v4066
  %4267 = vst [vmem:[%s3 + $0xb0] sm:$0xf] %v4067
  %4268 = vst [vmem:[%s3 + $0xb4] sm:$0xf] %v4068
  %4269 = vst [vmem:[%s3 + $0xb8] sm:$0xf] %v4069
  %4270 = vst [vmem:[%s3 + $0xbc] sm:$0xf] %v4070
  %4271 = vst [vmem:[%s3 + $0xc0] sm:$0xf] %v4071
  %4272 = vst [vmem:[%s3 + $0xc4] sm:$0xf] %v4072
  %4273 = vst [vmem:[%s3 + $0xc8] sm:$0xf] %v4073
  %4274 = vst [vmem:[%s3 + $0xcc] sm:$0xf] %v4074
  %4275 = vst [vmem:[%s3 + $0xd0] sm:$0xf] %v4075
  %4276 = vst [vmem:[%s3 + $0xd4] sm:$0xf] %v4076
  %4277 = vst [vmem:[%s3 + $0xd8] sm:$0xf] %v4077
  %4278 = vst [vmem:[%s3 + $0xdc] sm:$0xf] %v4078
  %4279 = vst [vmem:[%s3 + $0xe0] sm:$0xf] %v4079
  %4280 = vst [vmem:[%s3 + $0xe4] sm:$0xf] %v4080
  %4281 = vst [vmem:[%s3 + $0xe8] sm:$0xf] %v4081
  %4282 = vst [vmem:[%s3 + $0xec] sm:$0xf] %v4082
  %4283 = vst [vmem:[%s3 + $0xf0] sm:$0xf] %v4083
  %4284 = vst [vmem:[%s3 + $0xf4] sm:$0xf] %v4084
  %4285 = vst [vmem:[%s3 + $0xf8] sm:$0xf] %v4085
  %4286 = vst [vmem:[%s3 + $0xfc] sm:$0xf] %v4086
  %4287 = vst [vmem:[%s3 + $0x100] sm:$0xf] %v4087
  %4288 = vst [vmem:[%s3 + $0x104] sm:$0xf] %v4088
  %4289 = vst [vmem:[%s3 + $0x108] sm:$0xf] %v4089
  %4290 = vst [vmem:[%s3 + $0x10c] sm:$0xf] %v4090
  %4291 = vst [vmem:[%s3 + $0x110] sm:$0xf] %v4091
  %4292 = vst [vmem:[%s3 + $0x114] sm:$0xf] %v4092
  %4293 = vst [vmem:[%s3 + $0x118] sm:$0xf] %v4093
  %4294 = vst [vmem:[%s3 + $0x11c] sm:$0xf] %v4094
  %4295 = vst [vmem:[%s3 + $0x120] sm:$0xf] %v4095
  %4296 = vst [vmem:[%s3 + $0x124] sm:$0xf] %v4096
  %4297 = vst [vmem:[%s3 + $0x128] sm:$0xf] %v4097
  %4298 = vst [vmem:[%s3 + $0x12c] sm:$0xf] %v4098
  %4299 = vst [vmem:[%s3 + $0x130] sm:$0xf] %v4099
  %4300 = vst [vmem:[%s3 + $0x134] sm:$0xf] %v4100
  %4301 = vst [vmem:[%s3 + $0x138] sm:$0xf] %v4101
  %4302 = vst [vmem:[%s3 + $0x13c] sm:$0xf] %v4102
  %4303 = vst [vmem:[%s3 + $0x140] sm:$0xf] %v4103
  %4304 = vst [vmem:[%s3 + $0x144] sm:$0xf] %v4104
  %4305 = vst [vmem:[%s3 + $0x148] sm:$0xf] %v4105
  %4306 = vst [vmem:[%s3 + $0x14c] sm:$0xf] %v4106
  %4307 = vst [vmem:[%s3 + $0x150] sm:$0xf] %v4107
  %4308 = vst [vmem:[%s3 + $0x154] sm:$0xf] %v4108
  %4309 = vst [vmem:[%s3 + $0x158] sm:$0xf] %v4109
  %4310 = vst [vmem:[%s3 + $0x15c] sm:$0xf] %v4110
  %4311 = vst [vmem:[%s3 + $0x160] sm:$0xf] %v4111
  %4312 = vst [vmem:[%s3 + $0x164] sm:$0xf] %v4112
  %4313 = vst [vmem:[%s3 + $0x168] sm:$0xf] %v4113
  %4314 = vst [vmem:[%s3 + $0x16c] sm:$0xf] %v4114
  %4315 = vst [vmem:[%s3 + $0x170] sm:$0xf] %v4115
  %4316 = vst [vmem:[%s3 + $0x174] sm:$0xf] %v4116
  %4317 = vst [vmem:[%s3 + $0x178] sm:$0xf] %v4117
  %4318 = vst [vmem:[%s3 + $0x17c] sm:$0xf] %v4118
  %4319 = vst [vmem:[%s3 + $0x180] sm:$0xf] %v4119
  %4320 = vst [vmem:[%s3 + $0x184] sm:$0xf] %v4120
  %4321 = vst [vmem:[%s3 + $0x188] sm:$0xf] %v4121
  %4322 = vst [vmem:[%s3 + $0x18c] sm:$0xf] %v4122
  // Predicated region
  $region14: #{net_forward.3} parent=0 // pred_check
    _
  $region15: #{net_forward.3} parent=0 // pred_check_branch
    %4324 = sbr.rel (0) target = $region17
  $region16: #{net_forward.3} parent=0 // pred_region
    _
  $region17: #{net_forward.3} parent=0 // pred_fallthru
    _
  // Predicated region
  $region18: #{net_forward.3} parent=0 // pred_check
    _
  $region19: #{net_forward.3} parent=0 // pred_check_branch
    %4326 = sbr.rel (0) target = $region21
  $region20: #{net_forward.3} parent=0 // pred_region
    _
  $region21: #{net_forward.3} parent=0 // pred_fallthru
    _

// kernel: net_forward.4
$region0: #{net_forward.4}
  #allocation0 [shape = 'u32[]', space=smem, size = 0x4, offset = 0x4, fixed_abs, tag = 'smem constant byte address 0x4 - core index']
  #allocation1 [shape = 'u32[144,128]{1,0:T(1,128)}', space=vmem, size = 0x12000, scoped, tag = 'internal scratch']
  %s0 = inlined_call_operand.vmem [shape: bf16[4,128,256], index: 0, kind: input, shape index: {}]
  %s1 = inlined_call_operand.vmem [shape: bf16[256,128], index: 1, kind: input, shape index: {}]
  %s2 = inlined_call_operand.vmem [shape: f32[1,128], index: 2, kind: input, shape index: {}]
  %s3 = inlined_call_operand.vmem [shape: bf16[4,32,128], index: 3, kind: output, shape index: {}]
  %s4 = sld [smem:[#allocation0]]
  $region22: #{net_forward.4} parent=0
    _
  %s6 = ssub.s32 1, %s4
  %s7 = scalar_select 0, %s6, %s4
  // Predicated region
  $region2: #{net_forward.4} parent=0 // pred_check
    _
  $region3: #{net_forward.4} parent=0 // pred_check_branch
    %9 = sbr.rel (0) target = $region5
  $region4: #{net_forward.4} parent=0 // pred_region
    _
  $region5: #{net_forward.4} parent=0 // pred_fallthru
    _
  // Predicated region
  $region6: #{net_forward.4} parent=0 // pred_check
    _
  $region7: #{net_forward.4} parent=0 // pred_check_branch
    %11 = sbr.rel (0) target = $region9
  $region8: #{net_forward.4} parent=0 // pred_region
    _
  $region9: #{net_forward.4} parent=0 // pred_fallthru
    _
  // Predicated region
  $region10: #{net_forward.4} parent=0 // pred_check
    _
  $region11: #{net_forward.4} parent=0 // pred_check_branch
    %13 = sbr.rel (0) target = $region13
  $region12: #{net_forward.4} parent=0 // pred_region
    _
  $region13: #{net_forward.4} parent=0 // pred_fallthru
    _
  %v15 = vld [vmem:[%s0] sm:$0xff]
  %v16 = vld [vmem:[%s0 + $0x8] sm:$0xff]
  %v17 = vld [vmem:[%s0 + $0x10] sm:$0xff]
  %v18 = vld [vmem:[%s0 + $0x18] sm:$0xff]
  %v19 = vld [vmem:[%s0 + $0x20] sm:$0xff]
  %v20 = vld [vmem:[%s0 + $0x28] sm:$0xff]
  %v21 = vld [vmem:[%s0 + $0x30] sm:$0xff]
  %v22 = vld [vmem:[%s0 + $0x38] sm:$0xff]
  %v23 = vld [vmem:[%s0 + $0x40] sm:$0xff]
  %v24 = vld [vmem:[%s0 + $0x48] sm:$0xff]
  %v25 = vld [vmem:[%s0 + $0x50] sm:$0xff]
  %v26 = vld [vmem:[%s0 + $0x58] sm:$0xff]
  %v27 = vld [vmem:[%s0 + $0x60] sm:$0xff]
  %v28 = vld [vmem:[%s0 + $0x68] sm:$0xff]
  %v29 = vld [vmem:[%s0 + $0x70] sm:$0xff]
  %v30 = vld [vmem:[%s0 + $0x78] sm:$0xff]
  %v31 = vld [vmem:[%s0 + $0x80] sm:$0xff]
  %v32 = vld [vmem:[%s0 + $0x88] sm:$0xff]
  %v33 = vld [vmem:[%s0 + $0x90] sm:$0xff]
  %v34 = vld [vmem:[%s0 + $0x98] sm:$0xff]
  %v35 = vld [vmem:[%s0 + $0xa0] sm:$0xff]
  %v36 = vld [vmem:[%s0 + $0xa8] sm:$0xff]
  %v37 = vld [vmem:[%s0 + $0xb0] sm:$0xff]
  %v38 = vld [vmem:[%s0 + $0xb8] sm:$0xff]
  %v39 = vld [vmem:[%s0 + $0xc0] sm:$0xff]
  %v40 = vld [vmem:[%s0 + $0xc8] sm:$0xff]
  %v41 = vld [vmem:[%s0 + $0xd0] sm:$0xff]
  %v42 = vld [vmem:[%s0 + $0xd8] sm:$0xff]
  %v43 = vld [vmem:[%s0 + $0xe0] sm:$0xff]
  %v44 = vld [vmem:[%s0 + $0xe8] sm:$0xff]
  %v45 = vld [vmem:[%s0 + $0xf0] sm:$0xff]
  %v46 = vld [vmem:[%s0 + $0xf8] sm:$0xff]
  %v47 = vld [vmem:[%s0 + $0x100] sm:$0xff]
  %v48 = vld [vmem:[%s0 + $0x108] sm:$0xff]
  %v49 = vld [vmem:[%s0 + $0x110] sm:$0xff]
  %v50 = vld [vmem:[%s0 + $0x118] sm:$0xff]
  %v51 = vld [vmem:[%s0 + $0x120] sm:$0xff]
  %v52 = vld [vmem:[%s0 + $0x128] sm:$0xff]
  %v53 = vld [vmem:[%s0 + $0x130] sm:$0xff]
  %v54 = vld [vmem:[%s0 + $0x138] sm:$0xff]
  %v55 = vld [vmem:[%s0 + $0x140] sm:$0xff]
  %v56 = vld [vmem:[%s0 + $0x148] sm:$0xff]
  %v57 = vld [vmem:[%s0 + $0x150] sm:$0xff]
  %v58 = vld [vmem:[%s0 + $0x158] sm:$0xff]
  %v59 = vld [vmem:[%s0 + $0x160] sm:$0xff]
  %v60 = vld [vmem:[%s0 + $0x168] sm:$0xff]
  %v61 = vld [vmem:[%s0 + $0x170] sm:$0xff]
  %v62 = vld [vmem:[%s0 + $0x178] sm:$0xff]
  %v63 = vld [vmem:[%s0 + $0x180] sm:$0xff]
  %v64 = vld [vmem:[%s0 + $0x188] sm:$0xff]
  %v65 = vld [vmem:[%s0 + $0x190] sm:$0xff]
  %v66 = vld [vmem:[%s0 + $0x198] sm:$0xff]
  %v67 = vld [vmem:[%s0 + $0x1a0] sm:$0xff]
  %v68 = vld [vmem:[%s0 + $0x1a8] sm:$0xff]
  %v69 = vld [vmem:[%s0 + $0x1b0] sm:$0xff]
  %v70 = vld [vmem:[%s0 + $0x1b8] sm:$0xff]
  %v71 = vld [vmem:[%s0 + $0x1c0] sm:$0xff]
  %v72 = vld [vmem:[%s0 + $0x1c8] sm:$0xff]
  %v73 = vld [vmem:[%s0 + $0x1d0] sm:$0xff]
  %v74 = vld [vmem:[%s0 + $0x1d8] sm:$0xff]
  %v75 = vld [vmem:[%s0 + $0x1e0] sm:$0xff]
  %v76 = vld [vmem:[%s0 + $0x1e8] sm:$0xff]
  %v77 = vld [vmem:[%s0 + $0x1f0] sm:$0xff]
  %v78 = vld [vmem:[%s0 + $0x1f8] sm:$0xff]
  %v79 = vld [vmem:[%s1] sm:$0xf]
  %v80 = vld [vmem:[%s1 + $0x4] sm:$0xf]
  %v81 = vld [vmem:[%s1 + $0x8] sm:$0xf]
  %v82 = vld [vmem:[%s1 + $0xc] sm:$0xf]
  %v83 = vld [vmem:[%s1 + $0x10] sm:$0xf]
  %v84 = vld [vmem:[%s1 + $0x14] sm:$0xf]
  %v85 = vld [vmem:[%s1 + $0x18] sm:$0xf]
  %v86 = vld [vmem:[%s1 + $0x1c] sm:$0xf]
  %v87 = vld [vmem:[%s1 + $0x20] sm:$0xf]
  %v88 = vld [vmem:[%s1 + $0x24] sm:$0xf]
  %v89 = vld [vmem:[%s1 + $0x28] sm:$0xf]
  %v90 = vld [vmem:[%s1 + $0x2c] sm:$0xf]
  %v91 = vld [vmem:[%s1 + $0x30] sm:$0xf]
  %v92 = vld [vmem:[%s1 + $0x34] sm:$0xf]
  %v93 = vld [vmem:[%s1 + $0x38] sm:$0xf]
  %v94 = vld [vmem:[%s1 + $0x3c] sm:$0xf]
  %v95 = vld [vmem:[%s1 + $0x40] sm:$0xf]
  %v96 = vld [vmem:[%s1 + $0x44] sm:$0xf]
  %v97 = vld [vmem:[%s1 + $0x48] sm:$0xf]
  %v98 = vld [vmem:[%s1 + $0x4c] sm:$0xf]
  %v99 = vld [vmem:[%s1 + $0x50] sm:$0xf]
  %v100 = vld [vmem:[%s1 + $0x54] sm:$0xf]
  %v101 = vld [vmem:[%s1 + $0x58] sm:$0xf]
  %v102 = vld [vmem:[%s1 + $0x5c] sm:$0xf]
  %v103 = vld [vmem:[%s1 + $0x60] sm:$0xf]
  %v104 = vld [vmem:[%s1 + $0x64] sm:$0xf]
  %v105 = vld [vmem:[%s1 + $0x68] sm:$0xf]
  %v106 = vld [vmem:[%s1 + $0x6c] sm:$0xf]
  %v107 = vld [vmem:[%s1 + $0x70] sm:$0xf]
  %v108 = vld [vmem:[%s1 + $0x74] sm:$0xf]
  %v109 = vld [vmem:[%s1 + $0x78] sm:$0xf]
  %v110 = vld [vmem:[%s1 + $0x7c] sm:$0xf]
  %v175 = vunpack.c.l.b16 %v15
  %v176 = vunpack.c.h.b16 %v15
  %v177 = vunpack.c.l.b16 %v16
  %v178 = vunpack.c.h.b16 %v16
  %v179 = vunpack.c.l.b16 %v17
  %v180 = vunpack.c.h.b16 %v17
  %v181 = vunpack.c.l.b16 %v18
  %v182 = vunpack.c.h.b16 %v18
  %v183 = vunpack.c.l.b16 %v19
  %v184 = vunpack.c.h.b16 %v19
  %v185 = vunpack.c.l.b16 %v20
  %v186 = vunpack.c.h.b16 %v20
  %v187 = vunpack.c.l.b16 %v21
  %v188 = vunpack.c.h.b16 %v21
  %v189 = vunpack.c.l.b16 %v22
  %v190 = vunpack.c.h.b16 %v22
  %v191 = vunpack.c.l.b16 %v23
  %v192 = vunpack.c.h.b16 %v23
  %v193 = vunpack.c.l.b16 %v24
  %v194 = vunpack.c.h.b16 %v24
  %v195 = vunpack.c.l.b16 %v25
  %v196 = vunpack.c.h.b16 %v25
  %v197 = vunpack.c.l.b16 %v26
  %v198 = vunpack.c.h.b16 %v26
  %v199 = vunpack.c.l.b16 %v27
  %v200 = vunpack.c.h.b16 %v27
  %v201 = vunpack.c.l.b16 %v28
  %v202 = vunpack.c.h.b16 %v28
  %v203 = vunpack.c.l.b16 %v29
  %v204 = vunpack.c.h.b16 %v29
  %v205 = vunpack.c.l.b16 %v30
  %v206 = vunpack.c.h.b16 %v30
  %v207 = vunpack.c.l.b16 %v31
  %v208 = vunpack.c.h.b16 %v31
  %v209 = vunpack.c.l.b16 %v32
  %v210 = vunpack.c.h.b16 %v32
  %v211 = vunpack.c.l.b16 %v33
  %v212 = vunpack.c.h.b16 %v33
  %v213 = vunpack.c.l.b16 %v34
  %v214 = vunpack.c.h.b16 %v34
  %v215 = vunpack.c.l.b16 %v35
  %v216 = vunpack.c.h.b16 %v35
  %v217 = vunpack.c.l.b16 %v36
  %v218 = vunpack.c.h.b16 %v36
  %v219 = vunpack.c.l.b16 %v37
  %v220 = vunpack.c.h.b16 %v37
  %v221 = vunpack.c.l.b16 %v38
  %v222 = vunpack.c.h.b16 %v38
  %v223 = vunpack.c.l.b16 %v39
  %v224 = vunpack.c.h.b16 %v39
  %v225 = vunpack.c.l.b16 %v40
  %v226 = vunpack.c.h.b16 %v40
  %v227 = vunpack.c.l.b16 %v41
  %v228 = vunpack.c.h.b16 %v41
  %v229 = vunpack.c.l.b16 %v42
  %v230 = vunpack.c.h.b16 %v42
  %v231 = vunpack.c.l.b16 %v43
  %v232 = vunpack.c.h.b16 %v43
  %v233 = vunpack.c.l.b16 %v44
  %v234 = vunpack.c.h.b16 %v44
  %v235 = vunpack.c.l.b16 %v45
  %v236 = vunpack.c.h.b16 %v45
  %v237 = vunpack.c.l.b16 %v46
  %v238 = vunpack.c.h.b16 %v46
  %v239 = vunpack.c.l.b16 %v47
  %v240 = vunpack.c.h.b16 %v47
  %v241 = vunpack.c.l.b16 %v48
  %v242 = vunpack.c.h.b16 %v48
  %v243 = vunpack.c.l.b16 %v49
  %v244 = vunpack.c.h.b16 %v49
  %v245 = vunpack.c.l.b16 %v50
  %v246 = vunpack.c.h.b16 %v50
  %v247 = vunpack.c.l.b16 %v51
  %v248 = vunpack.c.h.b16 %v51
  %v249 = vunpack.c.l.b16 %v52
  %v250 = vunpack.c.h.b16 %v52
  %v251 = vunpack.c.l.b16 %v53
  %v252 = vunpack.c.h.b16 %v53
  %v253 = vunpack.c.l.b16 %v54
  %v254 = vunpack.c.h.b16 %v54
  %v255 = vunpack.c.l.b16 %v55
  %v256 = vunpack.c.h.b16 %v55
  %v257 = vunpack.c.l.b16 %v56
  %v258 = vunpack.c.h.b16 %v56
  %v259 = vunpack.c.l.b16 %v57
  %v260 = vunpack.c.h.b16 %v57
  %v261 = vunpack.c.l.b16 %v58
  %v262 = vunpack.c.h.b16 %v58
  %v263 = vunpack.c.l.b16 %v59
  %v264 = vunpack.c.h.b16 %v59
  %v265 = vunpack.c.l.b16 %v60
  %v266 = vunpack.c.h.b16 %v60
  %v267 = vunpack.c.l.b16 %v61
  %v268 = vunpack.c.h.b16 %v61
  %v269 = vunpack.c.l.b16 %v62
  %v270 = vunpack.c.h.b16 %v62
  %v271 = vunpack.c.l.b16 %v63
  %v272 = vunpack.c.h.b16 %v63
  %v273 = vunpack.c.l.b16 %v64
  %v274 = vunpack.c.h.b16 %v64
  %v275 = vunpack.c.l.b16 %v65
  %v276 = vunpack.c.h.b16 %v65
  %v277 = vunpack.c.l.b16 %v66
  %v278 = vunpack.c.h.b16 %v66
  %v279 = vunpack.c.l.b16 %v67
  %v280 = vunpack.c.h.b16 %v67
  %v281 = vunpack.c.l.b16 %v68
  %v282 = vunpack.c.h.b16 %v68
  %v283 = vunpack.c.l.b16 %v69
  %v284 = vunpack.c.h.b16 %v69
  %v285 = vunpack.c.l.b16 %v70
  %v286 = vunpack.c.h.b16 %v70
  %v287 = vunpack.c.l.b16 %v71
  %v288 = vunpack.c.h.b16 %v71
  %v289 = vunpack.c.l.b16 %v72
  %v290 = vunpack.c.h.b16 %v72
  %v291 = vunpack.c.l.b16 %v73
  %v292 = vunpack.c.h.b16 %v73
  %v293 = vunpack.c.l.b16 %v74
  %v294 = vunpack.c.h.b16 %v74
  %v295 = vunpack.c.l.b16 %v75
  %v296 = vunpack.c.h.b16 %v75
  %v297 = vunpack.c.l.b16 %v76
  %v298 = vunpack.c.h.b16 %v76
  %v299 = vunpack.c.l.b16 %v77
  %v300 = vunpack.c.h.b16 %v77
  %v301 = vunpack.c.l.b16 %v78
  %v302 = vunpack.c.h.b16 %v78
  %v303 = vpack.c.b16 %v177, %v175
  %v304 = vpack.c.b16 %v178, %v176
  %v305 = vpack.c.b16 %v181, %v179
  %v306 = vpack.c.b16 %v182, %v180
  %v307 = vpack.c.b16 %v185, %v183
  %v308 = vpack.c.b16 %v186, %v184
  %v309 = vpack.c.b16 %v189, %v187
  %v310 = vpack.c.b16 %v190, %v188
  %v311 = vpack.c.b16 %v193, %v191
  %v312 = vpack.c.b16 %v194, %v192
  %v313 = vpack.c.b16 %v197, %v195
  %v314 = vpack.c.b16 %v198, %v196
  %v315 = vpack.c.b16 %v201, %v199
  %v316 = vpack.c.b16 %v202, %v200
  %v317 = vpack.c.b16 %v205, %v203
  %v318 = vpack.c.b16 %v206, %v204
  %v319 = vpack.c.b16 %v209, %v207
  %v320 = vpack.c.b16 %v210, %v208
  %v321 = vpack.c.b16 %v213, %v211
  %v322 = vpack.c.b16 %v214, %v212
  %v323 = vpack.c.b16 %v217, %v215
  %v324 = vpack.c.b16 %v218, %v216
  %v325 = vpack.c.b16 %v221, %v219
  %v326 = vpack.c.b16 %v222, %v220
  %v327 = vpack.c.b16 %v225, %v223
  %v328 = vpack.c.b16 %v226, %v224
  %v329 = vpack.c.b16 %v229, %v227
  %v330 = vpack.c.b16 %v230, %v228
  %v331 = vpack.c.b16 %v233, %v231
  %v332 = vpack.c.b16 %v234, %v232
  %v333 = vpack.c.b16 %v237, %v235
  %v334 = vpack.c.b16 %v238, %v236
  %v335 = vpack.c.b16 %v241, %v239
  %v336 = vpack.c.b16 %v242, %v240
  %v337 = vpack.c.b16 %v245, %v243
  %v338 = vpack.c.b16 %v246, %v244
  %v339 = vpack.c.b16 %v249, %v247
  %v340 = vpack.c.b16 %v250, %v248
  %v341 = vpack.c.b16 %v253, %v251
  %v342 = vpack.c.b16 %v254, %v252
  %v343 = vpack.c.b16 %v257, %v255
  %v344 = vpack.c.b16 %v258, %v256
  %v345 = vpack.c.b16 %v261, %v259
  %v346 = vpack.c.b16 %v262, %v260
  %v347 = vpack.c.b16 %v265, %v263
  %v348 = vpack.c.b16 %v266, %v264
  %v349 = vpack.c.b16 %v269, %v267
  %v350 = vpack.c.b16 %v270, %v268
  %v351 = vpack.c.b16 %v273, %v271
  %v352 = vpack.c.b16 %v274, %v272
  %v353 = vpack.c.b16 %v277, %v275
  %v354 = vpack.c.b16 %v278, %v276
  %v355 = vpack.c.b16 %v281, %v279
  %v356 = vpack.c.b16 %v282, %v280
  %v357 = vpack.c.b16 %v285, %v283
  %v358 = vpack.c.b16 %v286, %v284
  %v359 = vpack.c.b16 %v289, %v287
  %v360 = vpack.c.b16 %v290, %v288
  %v361 = vpack.c.b16 %v293, %v291
  %v362 = vpack.c.b16 %v294, %v292
  %v363 = vpack.c.b16 %v297, %v295
  %v364 = vpack.c.b16 %v298, %v296
  %v365 = vpack.c.b16 %v301, %v299
  %v366 = vpack.c.b16 %v302, %v300
  %v463 = vunpack.c.l.b16 %v79
  %v464 = vunpack.c.l.b16 %v80
  %v465 = vunpack.c.l.b16 %v81
  %v466 = vunpack.c.l.b16 %v82
  %v467 = vunpack.c.l.b16 %v83
  %v468 = vunpack.c.l.b16 %v84
  %v469 = vunpack.c.l.b16 %v85
  %v470 = vunpack.c.l.b16 %v86
  %v471 = vunpack.c.l.b16 %v87
  %v472 = vunpack.c.l.b16 %v88
  %v473 = vunpack.c.l.b16 %v89
  %v474 = vunpack.c.l.b16 %v90
  %v475 = vunpack.c.l.b16 %v91
  %v476 = vunpack.c.l.b16 %v92
  %v477 = vunpack.c.l.b16 %v93
  %v478 = vunpack.c.l.b16 %v94
  %v479 = vunpack.c.l.b16 %v95
  %v480 = vunpack.c.l.b16 %v96
  %v481 = vunpack.c.l.b16 %v97
  %v482 = vunpack.c.l.b16 %v98
  %v483 = vunpack.c.l.b16 %v99
  %v484 = vunpack.c.l.b16 %v100
  %v485 = vunpack.c.l.b16 %v101
  %v486 = vunpack.c.l.b16 %v102
  %v487 = vunpack.c.l.b16 %v103
  %v488 = vunpack.c.l.b16 %v104
  %v489 = vunpack.c.l.b16 %v105
  %v490 = vunpack.c.l.b16 %v106
  %v491 = vunpack.c.l.b16 %v107
  %v492 = vunpack.c.l.b16 %v108
  %v493 = vunpack.c.l.b16 %v109
  %v494 = vunpack.c.l.b16 %v110
  %v495 = vpack.c.b16 %v464, %v463
  %v496 = vpack.c.b16 %v466, %v465
  %v497 = vpack.c.b16 %v468, %v467
  %v498 = vpack.c.b16 %v470, %v469
  %v499 = vpack.c.b16 %v472, %v471
  %v500 = vpack.c.b16 %v474, %v473
  %v501 = vpack.c.b16 %v476, %v475
  %v502 = vpack.c.b16 %v478, %v477
  %v503 = vpack.c.b16 %v480, %v479
  %v504 = vpack.c.b16 %v482, %v481
  %v505 = vpack.c.b16 %v484, %v483
  %v506 = vpack.c.b16 %v486, %v485
  %v507 = vpack.c.b16 %v488, %v487
  %v508 = vpack.c.b16 %v490, %v489
  %v509 = vpack.c.b16 %v492, %v491
  %v510 = vpack.c.b16 %v494, %v493
  %527 = vmatprep.subr.bf16.mxu0 0
  %528 = vmatpush1.bf16.msra.mxu0 %v495
  %529 = vmatprep.subr.bf16.mxu0 0
  %530 = vmatpush1.bf16.msra.mxu0 %v496
  %531 = vmatprep.subr.bf16.mxu0 0
  %532 = vmatpush1.bf16.msra.mxu0 %v497
  %533 = vmatprep.subr.bf16.mxu0 0
  %534 = vmatpush1.bf16.msra.mxu0 %v498
  %535 = vmatprep.subr.bf16.mxu0 0
  %536 = vmatpush1.bf16.msra.mxu0 %v499
  %537 = vmatprep.subr.bf16.mxu0 0
  %538 = vmatpush1.bf16.msra.mxu0 %v500
  %539 = vmatprep.subr.bf16.mxu0 0
  %540 = vmatpush1.bf16.msra.mxu0 %v501
  %541 = vmatprep.subr.bf16.mxu0 0
  %542 = vmatpush1.bf16.msra.mxu0 %v502
  %543 = vmatprep.subr.bf16.mxu0 0
  %544 = vmatpush1.bf16.msra.mxu0 %v503
  %545 = vmatprep.subr.bf16.mxu0 0
  %546 = vmatpush1.bf16.msra.mxu0 %v504
  %547 = vmatprep.subr.bf16.mxu0 0
  %548 = vmatpush1.bf16.msra.mxu0 %v505
  %549 = vmatprep.subr.bf16.mxu0 0
  %550 = vmatpush1.bf16.msra.mxu0 %v506
  %551 = vmatprep.subr.bf16.mxu0 0
  %552 = vmatpush1.bf16.msra.mxu0 %v507
  %553 = vmatprep.subr.bf16.mxu0 0
  %554 = vmatpush1.bf16.msra.mxu0 %v508
  %555 = vmatprep.subr.bf16.mxu0 0
  %556 = vmatpush1.bf16.msra.mxu0 %v509
  %557 = vmatprep.subr.bf16.mxu0 0
  %558 = vmatpush1.bf16.msra.mxu0 %v510
  %559 = vmatprep.mubr.bf16.mxu0 %v304
  %560 = vmatmul.mubr.bf16.gmra.mrb[0].mxu0 %v303
  %v561 = vpop.f32.mrb[0].mxu0
  %v562 = vadd.f32 0.0, %v561
  %v563 = vpop.f32.mrb[0].mxu0
  %v564 = vpop.f32.mrb[0].mxu0
  %v565 = vadd.f32 0.0, %v564
  %v566 = vpop.f32.mrb[0].mxu0
  %567 = vmatprep.mubr.bf16.mxu0 %v306
  %568 = vmatmul.mubr.bf16.gmra.mrb[0].mxu0 %v305
  %v569 = vpop.f32.mrb[0].mxu0
  %v570 = vadd.f32 0.0, %v569
  %v571 = vpop.f32.mrb[0].mxu0
  %v572 = vpop.f32.mrb[0].mxu0
  %v573 = vadd.f32 0.0, %v572
  %v574 = vpop.f32.mrb[0].mxu0
  %575 = vmatprep.mubr.bf16.mxu0 %v308
  %576 = vmatmul.mubr.bf16.gmra.mrb[0].mxu0 %v307
  %v577 = vpop.f32.mrb[0].mxu0
  %v578 = vadd.f32 0.0, %v577
  %v579 = vpop.f32.mrb[0].mxu0
  %v580 = vpop.f32.mrb[0].mxu0
  %v581 = vadd.f32 0.0, %v580
  %v582 = vpop.f32.mrb[0].mxu0
  %583 = vmatprep.mubr.bf16.mxu0 %v310
  %584 = vmatmul.mubr.bf16.gmra.mrb[0].mxu0 %v309
  %v585 = vpop.f32.mrb[0].mxu0
  %v586 = vadd.f32 0.0, %v585
  %v587 = vpop.f32.mrb[0].mxu0
  %v588 = vpop.f32.mrb[0].mxu0
  %v589 = vadd.f32 0.0, %v588
  %v590 = vpop.f32.mrb[0].mxu0
  %591 = vmatprep.mubr.bf16.mxu0 %v312
  %592 = vmatmul.mubr.bf16.gmra.mrb[0].mxu0 %v311
  %v593 = vpop.f32.mrb[0].mxu0
  %v594 = vadd.f32 0.0, %v593
  %v595 = vpop.f32.mrb[0].mxu0
  %v596 = vpop.f32.mrb[0].mxu0
  %v597 = vadd.f32 0.0, %v596
  %v598 = vpop.f32.mrb[0].mxu0
  %599 = vmatprep.mubr.bf16.mxu0 %v314
  %600 = vmatmul.mubr.bf16.gmra.mrb[0].mxu0 %v313
  %v601 = vpop.f32.mrb[0].mxu0
  %v602 = vadd.f32 0.0, %v601
  %v603 = vpop.f32.mrb[0].mxu0
  %v604 = vpop.f32.mrb[0].mxu0
  %v605 = vadd.f32 0.0, %v604
  %v606 = vpop.f32.mrb[0].mxu0
  %607 = vmatprep.mubr.bf16.mxu0 %v316
  %608 = vmatmul.mubr.bf16.gmra.mrb[0].mxu0 %v315
  %v609 = vpop.f32.mrb[0].mxu0
  %v610 = vadd.f32 0.0, %v609
  %v611 = vpop.f32.mrb[0].mxu0
  %v612 = vpop.f32.mrb[0].mxu0
  %v613 = vadd.f32 0.0, %v612
  %v614 = vpop.f32.mrb[0].mxu0
  %615 = vmatprep.mubr.bf16.mxu0 %v318
  %616 = vmatmul.mubr.bf16.gmra.mrb[0].mxu0 %v317
  %v617 = vpop.f32.mrb[0].mxu0
  %v618 = vadd.f32 0.0, %v617
  %v619 = vpop.f32.mrb[0].mxu0
  %v620 = vpop.f32.mrb[0].mxu0
  %v621 = vadd.f32 0.0, %v620
  %v622 = vpop.f32.mrb[0].mxu0
  %623 = vmatprep.mubr.bf16.mxu0 %v320
  %624 = vmatmul.mubr.bf16.gmra.mrb[0].mxu0 %v319
  %v625 = vpop.f32.mrb[0].mxu0
  %v626 = vadd.f32 0.0, %v625
  %v627 = vpop.f32.mrb[0].mxu0
  %v628 = vpop.f32.mrb[0].mxu0
  %v629 = vadd.f32 0.0, %v628
  %v630 = vpop.f32.mrb[0].mxu0
  %631 = vmatprep.mubr.bf16.mxu0 %v322
  %632 = vmatmul.mubr.bf16.gmra.mrb[0].mxu0 %v321
  %v633 = vpop.f32.mrb[0].mxu0
  %v634 = vadd.f32 0.0, %v633
  %v635 = vpop.f32.mrb[0].mxu0
  %v636 = vpop.f32.mrb[0].mxu0
  %v637 = vadd.f32 0.0, %v636
  %v638 = vpop.f32.mrb[0].mxu0
  %639 = vmatprep.mubr.bf16.mxu0 %v324
  %640 = vmatmul.mubr.bf16.gmra.mrb[0].mxu0 %v323
  %v641 = vpop.f32.mrb[0].mxu0
  %v642 = vadd.f32 0.0, %v641
  %v643 = vpop.f32.mrb[0].mxu0
  %v644 = vpop.f32.mrb[0].mxu0
  %v645 = vadd.f32 0.0, %v644
  %v646 = vpop.f32.mrb[0].mxu0
  %647 = vmatprep.mubr.bf16.mxu0 %v326
  %648 = vmatmul.mubr.bf16.gmra.mrb[0].mxu0 %v325
  %v649 = vpop.f32.mrb[0].mxu0
  %v650 = vadd.f32 0.0, %v649
  %v651 = vpop.f32.mrb[0].mxu0
  %v652 = vpop.f32.mrb[0].mxu0
  %v653 = vadd.f32 0.0, %v652
  %v654 = vpop.f32.mrb[0].mxu0
  %655 = vmatprep.mubr.bf16.mxu0 %v328
  %656 = vmatmul.mubr.bf16.gmra.mrb[0].mxu0 %v327
  %v657 = vpop.f32.mrb[0].mxu0
  %v658 = vadd.f32 0.0, %v657
  %v659 = vpop.f32.mrb[0].mxu0
  %v660 = vpop.f32.mrb[0].mxu0
  %v661 = vadd.f32 0.0, %v660
  %v662 = vpop.f32.mrb[0].mxu0
  %663 = vmatprep.mubr.bf16.mxu0 %v330
  %664 = vmatmul.mubr.bf16.gmra.mrb[0].mxu0 %v329
  %v665 = vpop.f32.mrb[0].mxu0
  %v666 = vadd.f32 0.0, %v665
  %v667 = vpop.f32.mrb[0].mxu0
  %v668 = vpop.f32.mrb[0].mxu0
  %v669 = vadd.f32 0.0, %v668
  %v670 = vpop.f32.mrb[0].mxu0
  %671 = vmatprep.mubr.bf16.mxu0 %v332
  %672 = vmatmul.mubr.bf16.gmra.mrb[0].mxu0 %v331
  %v673 = vpop.f32.mrb[0].mxu0
  %v674 = vadd.f32 0.0, %v673
  %v675 = vpop.f32.mrb[0].mxu0
  %v676 = vpop.f32.mrb[0].mxu0
  %v677 = vadd.f32 0.0, %v676
  %v678 = vpop.f32.mrb[0].mxu0
  %679 = vmatprep.mubr.bf16.mxu0 %v334
  %680 = vmatmul.mubr.bf16.gmra.mrb[0].mxu0 %v333
  %v681 = vpop.f32.mrb[0].mxu0
  %v682 = vadd.f32 0.0, %v681
  %v683 = vpop.f32.mrb[0].mxu0
  %v684 = vpop.f32.mrb[0].mxu0
  %v685 = vadd.f32 0.0, %v684
  %v686 = vpop.f32.mrb[0].mxu0
  %687 = vmatprep.mubr.bf16.mxu0 %v336
  %688 = vmatmul.mubr.bf16.gmra.mrb[0].mxu0 %v335
  %v689 = vpop.f32.mrb[0].mxu0
  %v690 = vadd.f32 0.0, %v689
  %v691 = vpop.f32.mrb[0].mxu0
  %v692 = vpop.f32.mrb[0].mxu0
  %v693 = vadd.f32 0.0, %v692
  %v694 = vpop.f32.mrb[0].mxu0
  %695 = vmatprep.mubr.bf16.mxu0 %v338
  %696 = vmatmul.mubr.bf16.gmra.mrb[0].mxu0 %v337
  %v697 = vpop.f32.mrb[0].mxu0
  %v698 = vadd.f32 0.0, %v697
  %v699 = vpop.f32.mrb[0].mxu0
  %v700 = vpop.f32.mrb[0].mxu0
  %v701 = vadd.f32 0.0, %v700
  %v702 = vpop.f32.mrb[0].mxu0
  %703 = vmatprep.mubr.bf16.mxu0 %v340
  %704 = vmatmul.mubr.bf16.gmra.mrb[0].mxu0 %v339
  %v705 = vpop.f32.mrb[0].mxu0
  %v706 = vadd.f32 0.0, %v705
  %v707 = vpop.f32.mrb[0].mxu0
  %v708 = vpop.f32.mrb[0].mxu0
  %v709 = vadd.f32 0.0, %v708
  %v710 = vpop.f32.mrb[0].mxu0
  %711 = vmatprep.mubr.bf16.mxu0 %v342
  %712 = vmatmul.mubr.bf16.gmra.mrb[0].mxu0 %v341
  %v713 = vpop.f32.mrb[0].mxu0
  %v714 = vadd.f32 0.0, %v713
  %v715 = vpop.f32.mrb[0].mxu0
  %v716 = vpop.f32.mrb[0].mxu0
  %v717 = vadd.f32 0.0, %v716
  %v718 = vpop.f32.mrb[0].mxu0
  %719 = vmatprep.mubr.bf16.mxu0 %v344
  %720 = vmatmul.mubr.bf16.gmra.mrb[0].mxu0 %v343
  %v721 = vpop.f32.mrb[0].mxu0
  %v722 = vadd.f32 0.0, %v721
  %v723 = vpop.f32.mrb[0].mxu0
  %v724 = vpop.f32.mrb[0].mxu0
  %v725 = vadd.f32 0.0, %v724
  %v726 = vpop.f32.mrb[0].mxu0
  %727 = vmatprep.mubr.bf16.mxu0 %v346
  %728 = vmatmul.mubr.bf16.gmra.mrb[0].mxu0 %v345
  %v729 = vpop.f32.mrb[0].mxu0
  %v730 = vadd.f32 0.0, %v729
  %v731 = vpop.f32.mrb[0].mxu0
  %v732 = vpop.f32.mrb[0].mxu0
  %v733 = vadd.f32 0.0, %v732
  %v734 = vpop.f32.mrb[0].mxu0
  %735 = vmatprep.mubr.bf16.mxu0 %v348
  %736 = vmatmul.mubr.bf16.gmra.mrb[0].mxu0 %v347
  %v737 = vpop.f32.mrb[0].mxu0
  %v738 = vadd.f32 0.0, %v737
  %v739 = vpop.f32.mrb[0].mxu0
  %v740 = vpop.f32.mrb[0].mxu0
  %v741 = vadd.f32 0.0, %v740
  %v742 = vpop.f32.mrb[0].mxu0
  %743 = vmatprep.mubr.bf16.mxu0 %v350
  %744 = vmatmul.mubr.bf16.gmra.mrb[0].mxu0 %v349
  %v745 = vpop.f32.mrb[0].mxu0
  %v746 = vadd.f32 0.0, %v745
  %v747 = vpop.f32.mrb[0].mxu0
  %v748 = vpop.f32.mrb[0].mxu0
  %v749 = vadd.f32 0.0, %v748
  %v750 = vpop.f32.mrb[0].mxu0
  %751 = vmatprep.mubr.bf16.mxu0 %v352
  %752 = vmatmul.mubr.bf16.gmra.mrb[0].mxu0 %v351
  %v753 = vpop.f32.mrb[0].mxu0
  %v754 = vadd.f32 0.0, %v753
  %v755 = vpop.f32.mrb[0].mxu0
  %v756 = vpop.f32.mrb[0].mxu0
  %v757 = vadd.f32 0.0, %v756
  %v758 = vpop.f32.mrb[0].mxu0
  %759 = vmatprep.mubr.bf16.mxu0 %v354
  %760 = vmatmul.mubr.bf16.gmra.mrb[0].mxu0 %v353
  %v761 = vpop.f32.mrb[0].mxu0
  %v762 = vadd.f32 0.0, %v761
  %v763 = vpop.f32.mrb[0].mxu0
  %v764 = vpop.f32.mrb[0].mxu0
  %v765 = vadd.f32 0.0, %v764
  %v766 = vpop.f32.mrb[0].mxu0
  %767 = vmatprep.mubr.bf16.mxu0 %v356
  %768 = vmatmul.mubr.bf16.gmra.mrb[0].mxu0 %v355
  %v769 = vpop.f32.mrb[0].mxu0
  %v770 = vadd.f32 0.0, %v769
  %v771 = vpop.f32.mrb[0].mxu0
  %v772 = vpop.f32.mrb[0].mxu0
  %v773 = vadd.f32 0.0, %v772
  %v774 = vpop.f32.mrb[0].mxu0
  %775 = vmatprep.mubr.bf16.mxu0 %v358
  %776 = vmatmul.mubr.bf16.gmra.mrb[0].mxu0 %v357
  %v777 = vpop.f32.mrb[0].mxu0
  %v778 = vadd.f32 0.0, %v777
  %v779 = vpop.f32.mrb[0].mxu0
  %v780 = vpop.f32.mrb[0].mxu0
  %v781 = vadd.f32 0.0, %v780
  %v782 = vpop.f32.mrb[0].mxu0
  %783 = vmatprep.mubr.bf16.mxu0 %v360
  %784 = vmatmul.mubr.bf16.gmra.mrb[0].mxu0 %v359
  %v785 = vpop.f32.mrb[0].mxu0
  %v786 = vadd.f32 0.0, %v785
  %v787 = vpop.f32.mrb[0].mxu0
  %v788 = vpop.f32.mrb[0].mxu0
  %v789 = vadd.f32 0.0, %v788
  %v790 = vpop.f32.mrb[0].mxu0
  %791 = vmatprep.mubr.bf16.mxu0 %v362
  %792 = vmatmul.mubr.bf16.gmra.mrb[0].mxu0 %v361
  %v793 = vpop.f32.mrb[0].mxu0
  %v794 = vadd.f32 0.0, %v793
  %v795 = vpop.f32.mrb[0].mxu0
  %v796 = vpop.f32.mrb[0].mxu0
  %v797 = vadd.f32 0.0, %v796
  %v798 = vpop.f32.mrb[0].mxu0
  %799 = vmatprep.mubr.bf16.mxu0 %v364
  %800 = vmatmul.mubr.bf16.gmra.mrb[0].mxu0 %v363
  %v801 = vpop.f32.mrb[0].mxu0
  %v802 = vadd.f32 0.0, %v801
  %v803 = vpop.f32.mrb[0].mxu0
  %v804 = vpop.f32.mrb[0].mxu0
  %v805 = vadd.f32 0.0, %v804
  %v806 = vpop.f32.mrb[0].mxu0
  %807 = vmatprep.mubr.bf16.mxu0 %v366
  %808 = vmatmul.mubr.bf16.gmra.mrb[0].mxu0 %v365
  %v809 = vpop.f32.mrb[0].mxu0
  %v810 = vadd.f32 0.0, %v809
  %v811 = vpop.f32.mrb[0].mxu0
  %v812 = vpop.f32.mrb[0].mxu0
  %v813 = vadd.f32 0.0, %v812
  %v814 = vpop.f32.mrb[0].mxu0
  %815 = vdwg.mxu0
  %v816 = vmax.f32 %v562, %v578
  %v817 = vmax.f32 %v565, %v581
  %v818 = vmax.f32 %v570, %v586
  %v819 = vmax.f32 %v573, %v589
  %v820 = vmax.f32 %v626, %v642
  %v821 = vmax.f32 %v629, %v645
  %v822 = vmax.f32 %v634, %v650
  %v823 = vmax.f32 %v637, %v653
  %v824 = vmax.f32 %v690, %v706
  %v825 = vmax.f32 %v693, %v709
  %v826 = vmax.f32 %v698, %v714
  %v827 = vmax.f32 %v701, %v717
  %v828 = vmax.f32 %v754, %v770
  %v829 = vmax.f32 %v757, %v773
  %v830 = vmax.f32 %v762, %v778
  %v831 = vmax.f32 %v765, %v781
  %v832 = vmax.f32 %v594, %v610
  %v833 = vmax.f32 %v597, %v613
  %v834 = vmax.f32 %v602, %v618
  %v835 = vmax.f32 %v605, %v621
  %v836 = vmax.f32 %v658, %v674
  %v837 = vmax.f32 %v661, %v677
  %v838 = vmax.f32 %v666, %v682
  %v839 = vmax.f32 %v669, %v685
  %v840 = vmax.f32 %v722, %v738
  %v841 = vmax.f32 %v725, %v741
  %v842 = vmax.f32 %v730, %v746
  %v843 = vmax.f32 %v733, %v749
  %v844 = vmax.f32 %v786, %v802
  %v845 = vmax.f32 %v789, %v805
  %v846 = vmax.f32 %v794, %v810
  %v847 = vmax.f32 %v797, %v813
  %v848 = vmax.f32 %v816, %v832
  %v849 = vmax.f32 %v817, %v833
  %v850 = vmax.f32 %v818, %v834
  %v851 = vmax.f32 %v819, %v835
  %v852 = vmax.f32 %v820, %v836
  %v853 = vmax.f32 %v821, %v837
  %v854 = vmax.f32 %v822, %v838
  %v855 = vmax.f32 %v823, %v839
  %v856 = vmax.f32 %v824, %v840
  %v857 = vmax.f32 %v825, %v841
  %v858 = vmax.f32 %v826, %v842
  %v859 = vmax.f32 %v827, %v843
  %v860 = vmax.f32 %v828, %v844
  %v861 = vmax.f32 %v829, %v845
  %v862 = vmax.f32 %v830, %v846
  %v863 = vmax.f32 %v831, %v847
  %v864 = vld [vmem:[%s2] sm:$0x1]
  %v866 = vlaneseq
  %v867 = vshrl.u32 %v866, 7
  %v868 = vsub.s32 0, %v867
  %v869 = vrot.slane %v864, %v868
  %v871 = vadd.f32 %v848, %v869
  %v872 = vadd.f32 %v849, %v869
  %v873 = vadd.f32 %v850, %v869
  %v874 = vadd.f32 %v851, %v869
  %v875 = vadd.f32 %v852, %v869
  %v876 = vadd.f32 %v853, %v869
  %v877 = vadd.f32 %v854, %v869
  %v878 = vadd.f32 %v855, %v869
  %v879 = vadd.f32 %v856, %v869
  %v880 = vadd.f32 %v857, %v869
  %v881 = vadd.f32 %v858, %v869
  %v882 = vadd.f32 %v859, %v869
  %v883 = vadd.f32 %v860, %v869
  %v884 = vadd.f32 %v861, %v869
  %v885 = vadd.f32 %v862, %v869
  %v886 = vadd.f32 %v863, %v869
  %v887 = vmax.f32 %v871, 0.0
  %v888 = vmax.f32 %v872, 0.0
  %v889 = vmax.f32 %v873, 0.0
  %v890 = vmax.f32 %v874, 0.0
  %v891 = vmax.f32 %v875, 0.0
  %v892 = vmax.f32 %v876, 0.0
  %v893 = vmax.f32 %v877, 0.0
  %v894 = vmax.f32 %v878, 0.0
  %v895 = vmax.f32 %v879, 0.0
  %v896 = vmax.f32 %v880, 0.0
  %v897 = vmax.f32 %v881, 0.0
  %v898 = vmax.f32 %v882, 0.0
  %v899 = vmax.f32 %v883, 0.0
  %v900 = vmax.f32 %v884, 0.0
  %v901 = vmax.f32 %v885, 0.0
  %v902 = vmax.f32 %v886, 0.0
  %v903 = vpack.c.bf16 %v888, %v887
  %v904 = vpack.c.bf16 %v890, %v889
  %v905 = vpack.c.bf16 %v892, %v891
  %v906 = vpack.c.bf16 %v894, %v893
  %v907 = vpack.c.bf16 %v896, %v895
  %v908 = vpack.c.bf16 %v898, %v897
  %v909 = vpack.c.bf16 %v900, %v899
  %v910 = vpack.c.bf16 %v902, %v901
  %v919 = vunpack.c.l.b16 %v903
  %v920 = vunpack.c.h.b16 %v903
  %v921 = vunpack.c.l.b16 %v904
  %v922 = vunpack.c.h.b16 %v904
  %v923 = vunpack.c.l.b16 %v905
  %v924 = vunpack.c.h.b16 %v905
  %v925 = vunpack.c.l.b16 %v906
  %v926 = vunpack.c.h.b16 %v906
  %v927 = vunpack.c.l.b16 %v907
  %v928 = vunpack.c.h.b16 %v907
  %v929 = vunpack.c.l.b16 %v908
  %v930 = vunpack.c.h.b16 %v908
  %v931 = vunpack.c.l.b16 %v909
  %v932 = vunpack.c.h.b16 %v909
  %v933 = vunpack.c.l.b16 %v910
  %v934 = vunpack.c.h.b16 %v910
  %v935 = vpack.c.b16 %v919, %v919
  %v936 = vpack.c.b16 %v920, %v920
  %v937 = vpack.c.b16 %v921, %v921
  %v938 = vpack.c.b16 %v922, %v922
  %v939 = vpack.c.b16 %v923, %v923
  %v940 = vpack.c.b16 %v924, %v924
  %v941 = vpack.c.b16 %v925, %v925
  %v942 = vpack.c.b16 %v926, %v926
  %v943 = vpack.c.b16 %v927, %v927
  %v944 = vpack.c.b16 %v928, %v928
  %v945 = vpack.c.b16 %v929, %v929
  %v946 = vpack.c.b16 %v930, %v930
  %v947 = vpack.c.b16 %v931, %v931
  %v948 = vpack.c.b16 %v932, %v932
  %v949 = vpack.c.b16 %v933, %v933
  %v950 = vpack.c.b16 %v934, %v934
  %967 = vst [vmem:[%s3] sm:$0xf] %v935
  %968 = vst [vmem:[%s3 + $0x4] sm:$0xf] %v936
  %969 = vst [vmem:[%s3 + $0x8] sm:$0xf] %v937
  %970 = vst [vmem:[%s3 + $0xc] sm:$0xf] %v938
  %971 = vst [vmem:[%s3 + $0x10] sm:$0xf] %v939
  %972 = vst [vmem:[%s3 + $0x14] sm:$0xf] %v940
  %973 = vst [vmem:[%s3 + $0x18] sm:$0xf] %v941
  %974 = vst [vmem:[%s3 + $0x1c] sm:$0xf] %v942
  %975 = vst [vmem:[%s3 + $0x20] sm:$0xf] %v943
  %976 = vst [vmem:[%s3 + $0x24] sm:$0xf] %v944
  %977 = vst [vmem:[%s3 + $0x28] sm:$0xf] %v945
  %978 = vst [vmem:[%s3 + $0x2c] sm:$0xf] %v946
  %979 = vst [vmem:[%s3 + $0x30] sm:$0xf] %v947
  %980 = vst [vmem:[%s3 + $0x34] sm:$0xf] %v948
  %981 = vst [vmem:[%s3 + $0x38] sm:$0xf] %v949
  %982 = vst [vmem:[%s3 + $0x3c] sm:$0xf] %v950
  // Predicated region
  $region14: #{net_forward.4} parent=0 // pred_check
    _
  $region15: #{net_forward.4} parent=0 // pred_check_branch
    %984 = sbr.rel (0) target = $region17
  $region16: #{net_forward.4} parent=0 // pred_region
    _
  $region17: #{net_forward.4} parent=0 // pred_fallthru
    _
  // Predicated region
  $region18: #{net_forward.4} parent=0 // pred_check
    _
  $region19: #{net_forward.4} parent=0 // pred_check_branch
    %986 = sbr.rel (0) target = $region21
  $region20: #{net_forward.4} parent=0 // pred_region
    _
  $region21: #{net_forward.4} parent=0 // pred_fallthru
    _

// kernel: net_forward.5
$region0: #{net_forward.5}
  #allocation0 [shape = 'u32[]', space=smem, size = 0x4, offset = 0x4, fixed_abs, tag = 'smem constant byte address 0x4 - core index']
  #allocation1 [shape = 'u32[144,128]{1,0:T(1,128)}', space=vmem, size = 0x12000, scoped, tag = 'internal scratch']
  %s0 = inlined_call_operand.vmem [shape: bf16[4,4096], index: 0, kind: input, shape index: {}]
  %s1 = inlined_call_operand.vmem [shape: bf16[4096,128], index: 1, kind: input, shape index: {}]
  %s2 = inlined_call_operand.vmem [shape: f32[1,128], index: 2, kind: input, shape index: {}]
  %s3 = inlined_call_operand.vmem [shape: bf16[128,128], index: 3, kind: input, shape index: {}]
  %s4 = inlined_call_operand.vmem [shape: f32[1,128], index: 4, kind: input, shape index: {}]
  %s5 = inlined_call_operand.vmem [shape: bf16[128,128], index: 5, kind: input, shape index: {}]
  %s6 = inlined_call_operand.vmem [shape: f32[1,128], index: 6, kind: input, shape index: {}]
  %s7 = inlined_call_operand.hbm [shape: f32[4,128], index: 7, kind: output, shape index: {}]
  %s8 = sld [smem:[#allocation0]]
  $region38: #{net_forward.5} parent=0
    _
  %s10 = ssub.s32 1, %s8
  %s11 = scalar_select 0, %s10, %s8
  $region1: #{net_forward.5} parent=0
    #allocation2 [shape = 'u8[2048]{0}', space=vmem, size = 0x800, scoped, tag = 'output window, operand 0, single buffered']
    #allocation3 [shape = 's32[1]{0}', space=sflag, size = 0x4, scoped, tag = 'scoped memory for net_forward.5']
    %12 = vsyncpa [#allocation3], 0
    // Predicated region
    $region2: #{net_forward.5} parent=1 // pred_check
      _
    $region3: #{net_forward.5} parent=1 // pred_check_branch
      %14 = sbr.rel (0) target = $region5
    $region4: #{net_forward.5} parent=1 // pred_region
      _
    $region5: #{net_forward.5} parent=1 // pred_fallthru
      _
    // Predicated region
    $region6: #{net_forward.5} parent=1 // pred_check
      _
    $region7: #{net_forward.5} parent=1 // pred_check_branch
      %16 = sbr.rel (0) target = $region9
    $region8: #{net_forward.5} parent=1 // pred_region
      _
    $region9: #{net_forward.5} parent=1 // pred_fallthru
      _
    // Predicated region
    $region10: #{net_forward.5} parent=1 // pred_check
      _
    $region11: #{net_forward.5} parent=1 // pred_check_branch
      %18 = sbr.rel (0) target = $region13
    $region12: #{net_forward.5} parent=1 // pred_region
      _
    $region13: #{net_forward.5} parent=1 // pred_fallthru
      _
    // Predicated region
    $region14: #{net_forward.5} parent=1 // pred_check
      _
    $region15: #{net_forward.5} parent=1 // pred_check_branch
      %20 = sbr.rel (0) target = $region17
    $region16: #{net_forward.5} parent=1 // pred_region
      _
    $region17: #{net_forward.5} parent=1 // pred_fallthru
      _
    // Predicated region
    $region18: #{net_forward.5} parent=1 // pred_check
      _
    $region19: #{net_forward.5} parent=1 // pred_check_branch
      %22 = sbr.rel (0) target = $region21
    $region20: #{net_forward.5} parent=1 // pred_region
      _
    $region21: #{net_forward.5} parent=1 // pred_fallthru
      _
    // Predicated region
    $region22: #{net_forward.5} parent=1 // pred_check
      _
    $region23: #{net_forward.5} parent=1 // pred_check_branch
      %24 = sbr.rel (0) target = $region25
    $region24: #{net_forward.5} parent=1 // pred_region
      _
    $region25: #{net_forward.5} parent=1 // pred_fallthru
      _
    // Predicated region
    $region26: #{net_forward.5} parent=1 // pred_check
      _
    $region27: #{net_forward.5} parent=1 // pred_check_branch
      %26 = sbr.rel (0) target = $region29
    $region28: #{net_forward.5} parent=1 // pred_region
      _
    $region29: #{net_forward.5} parent=1 // pred_fallthru
      _
    %v28 = vld [vmem:[%s0] sm:$0xff]
    %v29 = vld [vmem:[%s0 + $0x8] sm:$0xff]
    %v30 = vld [vmem:[%s0 + $0x10] sm:$0xff]
    %v31 = vld [vmem:[%s0 + $0x18] sm:$0xff]
    %v32 = vld [vmem:[%s0 + $0x20] sm:$0xff]
    %v33 = vld [vmem:[%s0 + $0x28] sm:$0xff]
    %v34 = vld [vmem:[%s0 + $0x30] sm:$0xff]
    %v35 = vld [vmem:[%s0 + $0x38] sm:$0xff]
    %v36 = vld [vmem:[%s1] sm:$0xf]
    %v37 = vld [vmem:[%s1 + $0x4] sm:$0xf]
    %v38 = vld [vmem:[%s1 + $0x8] sm:$0xf]
    %v39 = vld [vmem:[%s1 + $0xc] sm:$0xf]
    %v40 = vld [vmem:[%s1 + $0x10] sm:$0xf]
    %v41 = vld [vmem:[%s1 + $0x14] sm:$0xf]
    %v42 = vld [vmem:[%s1 + $0x18] sm:$0xf]
    %v43 = vld [vmem:[%s1 + $0x1c] sm:$0xf]
    %v44 = vld [vmem:[%s1 + $0x20] sm:$0xf]
    %v45 = vld [vmem:[%s1 + $0x24] sm:$0xf]
    %v46 = vld [vmem:[%s1 + $0x28] sm:$0xf]
    %v47 = vld [vmem:[%s1 + $0x2c] sm:$0xf]
    %v48 = vld [vmem:[%s1 + $0x30] sm:$0xf]
    %v49 = vld [vmem:[%s1 + $0x34] sm:$0xf]
    %v50 = vld [vmem:[%s1 + $0x38] sm:$0xf]
    %v51 = vld [vmem:[%s1 + $0x3c] sm:$0xf]
    %v52 = vld [vmem:[%s1 + $0x40] sm:$0xf]
    %v53 = vld [vmem:[%s1 + $0x44] sm:$0xf]
    %v54 = vld [vmem:[%s1 + $0x48] sm:$0xf]
    %v55 = vld [vmem:[%s1 + $0x4c] sm:$0xf]
    %v56 = vld [vmem:[%s1 + $0x50] sm:$0xf]
    %v57 = vld [vmem:[%s1 + $0x54] sm:$0xf]
    %v58 = vld [vmem:[%s1 + $0x58] sm:$0xf]
    %v59 = vld [vmem:[%s1 + $0x5c] sm:$0xf]
    %v60 = vld [vmem:[%s1 + $0x60] sm:$0xf]
    %v61 = vld [vmem:[%s1 + $0x64] sm:$0xf]
    %v62 = vld [vmem:[%s1 + $0x68] sm:$0xf]
    %v63 = vld [vmem:[%s1 + $0x6c] sm:$0xf]
    %v64 = vld [vmem:[%s1 + $0x70] sm:$0xf]
    %v65 = vld [vmem:[%s1 + $0x74] sm:$0xf]
    %v66 = vld [vmem:[%s1 + $0x78] sm:$0xf]
    %v67 = vld [vmem:[%s1 + $0x7c] sm:$0xf]
    %v68 = vld [vmem:[%s1 + $0x80] sm:$0xf]
    %v69 = vld [vmem:[%s1 + $0x84] sm:$0xf]
    %v70 = vld [vmem:[%s1 + $0x88] sm:$0xf]
    %v71 = vld [vmem:[%s1 + $0x8c] sm:$0xf]
    %v72 = vld [vmem:[%s1 + $0x90] sm:$0xf]
    %v73 = vld [vmem:[%s1 + $0x94] sm:$0xf]
    %v74 = vld [vmem:[%s1 + $0x98] sm:$0xf]
    %v75 = vld [vmem:[%s1 + $0x9c] sm:$0xf]
    %v76 = vld [vmem:[%s1 + $0xa0] sm:$0xf]
    %v77 = vld [vmem:[%s1 + $0xa4] sm:$0xf]
    %v78 = vld [vmem:[%s1 + $0xa8] sm:$0xf]
    %v79 = vld [vmem:[%s1 + $0xac] sm:$0xf]
    %v80 = vld [vmem:[%s1 + $0xb0] sm:$0xf]
    %v81 = vld [vmem:[%s1 + $0xb4] sm:$0xf]
    %v82 = vld [vmem:[%s1 + $0xb8] sm:$0xf]
    %v83 = vld [vmem:[%s1 + $0xbc] sm:$0xf]
    %v84 = vld [vmem:[%s1 + $0xc0] sm:$0xf]
    %v85 = vld [vmem:[%s1 + $0xc4] sm:$0xf]
    %v86 = vld [vmem:[%s1 + $0xc8] sm:$0xf]
    %v87 = vld [vmem:[%s1 + $0xcc] sm:$0xf]
    %v88 = vld [vmem:[%s1 + $0xd0] sm:$0xf]
    %v89 = vld [vmem:[%s1 + $0xd4] sm:$0xf]
    %v90 = vld [vmem:[%s1 + $0xd8] sm:$0xf]
    %v91 = vld [vmem:[%s1 + $0xdc] sm:$0xf]
    %v92 = vld [vmem:[%s1 + $0xe0] sm:$0xf]
    %v93 = vld [vmem:[%s1 + $0xe4] sm:$0xf]
    %v94 = vld [vmem:[%s1 + $0xe8] sm:$0xf]
    %v95 = vld [vmem:[%s1 + $0xec] sm:$0xf]
    %v96 = vld [vmem:[%s1 + $0xf0] sm:$0xf]
    %v97 = vld [vmem:[%s1 + $0xf4] sm:$0xf]
    %v98 = vld [vmem:[%s1 + $0xf8] sm:$0xf]
    %v99 = vld [vmem:[%s1 + $0xfc] sm:$0xf]
    %v100 = vld [vmem:[%s1 + $0x100] sm:$0xf]
    %v101 = vld [vmem:[%s1 + $0x104] sm:$0xf]
    %v102 = vld [vmem:[%s1 + $0x108] sm:$0xf]
    %v103 = vld [vmem:[%s1 + $0x10c] sm:$0xf]
    %v104 = vld [vmem:[%s1 + $0x110] sm:$0xf]
    %v105 = vld [vmem:[%s1 + $0x114] sm:$0xf]
    %v106 = vld [vmem:[%s1 + $0x118] sm:$0xf]
    %v107 = vld [vmem:[%s1 + $0x11c] sm:$0xf]
    %v108 = vld [vmem:[%s1 + $0x120] sm:$0xf]
    %v109 = vld [vmem:[%s1 + $0x124] sm:$0xf]
    %v110 = vld [vmem:[%s1 + $0x128] sm:$0xf]
    %v111 = vld [vmem:[%s1 + $0x12c] sm:$0xf]
    %v112 = vld [vmem:[%s1 + $0x130] sm:$0xf]
    %v113 = vld [vmem:[%s1 + $0x134] sm:$0xf]
    %v114 = vld [vmem:[%s1 + $0x138] sm:$0xf]
    %v115 = vld [vmem:[%s1 + $0x13c] sm:$0xf]
    %v116 = vld [vmem:[%s1 + $0x140] sm:$0xf]
    %v117 = vld [vmem:[%s1 + $0x144] sm:$0xf]
    %v118 = vld [vmem:[%s1 + $0x148] sm:$0xf]
    %v119 = vld [vmem:[%s1 + $0x14c] sm:$0xf]
    %v120 = vld [vmem:[%s1 + $0x150] sm:$0xf]
    %v121 = vld [vmem:[%s1 + $0x154] sm:$0xf]
    %v122 = vld [vmem:[%s1 + $0x158] sm:$0xf]
    %v123 = vld [vmem:[%s1 + $0x15c] sm:$0xf]
    %v124 = vld [vmem:[%s1 + $0x160] sm:$0xf]
    %v125 = vld [vmem:[%s1 + $0x164] sm:$0xf]
    %v126 = vld [vmem:[%s1 + $0x168] sm:$0xf]
    %v127 = vld [vmem:[%s1 + $0x16c] sm:$0xf]
    %v128 = vld [vmem:[%s1 + $0x170] sm:$0xf]
    %v129 = vld [vmem:[%s1 + $0x174] sm:$0xf]
    %v130 = vld [vmem:[%s1 + $0x178] sm:$0xf]
    %v131 = vld [vmem:[%s1 + $0x17c] sm:$0xf]
    %v132 = vld [vmem:[%s1 + $0x180] sm:$0xf]
    %v133 = vld [vmem:[%s1 + $0x184] sm:$0xf]
    %v134 = vld [vmem:[%s1 + $0x188] sm:$0xf]
    %v135 = vld [vmem:[%s1 + $0x18c] sm:$0xf]
    %v136 = vld [vmem:[%s1 + $0x190] sm:$0xf]
    %v137 = vld [vmem:[%s1 + $0x194] sm:$0xf]
    %v138 = vld [vmem:[%s1 + $0x198] sm:$0xf]
    %v139 = vld [vmem:[%s1 + $0x19c] sm:$0xf]
    %v140 = vld [vmem:[%s1 + $0x1a0] sm:$0xf]
    %v141 = vld [vmem:[%s1 + $0x1a4] sm:$0xf]
    %v142 = vld [vmem:[%s1 + $0x1a8] sm:$0xf]
    %v143 = vld [vmem:[%s1 + $0x1ac] sm:$0xf]
    %v144 = vld [vmem:[%s1 + $0x1b0] sm:$0xf]
    %v145 = vld [vmem:[%s1 + $0x1b4] sm:$0xf]
    %v146 = vld [vmem:[%s1 + $0x1b8] sm:$0xf]
    %v147 = vld [vmem:[%s1 + $0x1bc] sm:$0xf]
    %v148 = vld [vmem:[%s1 + $0x1c0] sm:$0xf]
    %v149 = vld [vmem:[%s1 + $0x1c4] sm:$0xf]
    %v150 = vld [vmem:[%s1 + $0x1c8] sm:$0xf]
    %v151 = vld [vmem:[%s1 + $0x1cc] sm:$0xf]
    %v152 = vld [vmem:[%s1 + $0x1d0] sm:$0xf]
    %v153 = vld [vmem:[%s1 + $0x1d4] sm:$0xf]
    %v154 = vld [vmem:[%s1 + $0x1d8] sm:$0xf]
    %v155 = vld [vmem:[%s1 + $0x1dc] sm:$0xf]
    %v156 = vld [vmem:[%s1 + $0x1e0] sm:$0xf]
    %v157 = vld [vmem:[%s1 + $0x1e4] sm:$0xf]
    %v158 = vld [vmem:[%s1 + $0x1e8] sm:$0xf]
    %v159 = vld [vmem:[%s1 + $0x1ec] sm:$0xf]
    %v160 = vld [vmem:[%s1 + $0x1f0] sm:$0xf]
    %v161 = vld [vmem:[%s1 + $0x1f4] sm:$0xf]
    %v162 = vld [vmem:[%s1 + $0x1f8] sm:$0xf]
    %v163 = vld [vmem:[%s1 + $0x1fc] sm:$0xf]
    %v164 = vld [vmem:[%s1 + $0x200] sm:$0xf]
    %v165 = vld [vmem:[%s1 + $0x204] sm:$0xf]
    %v166 = vld [vmem:[%s1 + $0x208] sm:$0xf]
    %v167 = vld [vmem:[%s1 + $0x20c] sm:$0xf]
    %v168 = vld [vmem:[%s1 + $0x210] sm:$0xf]
    %v169 = vld [vmem:[%s1 + $0x214] sm:$0xf]
    %v170 = vld [vmem:[%s1 + $0x218] sm:$0xf]
    %v171 = vld [vmem:[%s1 + $0x21c] sm:$0xf]
    %v172 = vld [vmem:[%s1 + $0x220] sm:$0xf]
    %v173 = vld [vmem:[%s1 + $0x224] sm:$0xf]
    %v174 = vld [vmem:[%s1 + $0x228] sm:$0xf]
    %v175 = vld [vmem:[%s1 + $0x22c] sm:$0xf]
    %v176 = vld [vmem:[%s1 + $0x230] sm:$0xf]
    %v177 = vld [vmem:[%s1 + $0x234] sm:$0xf]
    %v178 = vld [vmem:[%s1 + $0x238] sm:$0xf]
    %v179 = vld [vmem:[%s1 + $0x23c] sm:$0xf]
    %v180 = vld [vmem:[%s1 + $0x240] sm:$0xf]
    %v181 = vld [vmem:[%s1 + $0x244] sm:$0xf]
    %v182 = vld [vmem:[%s1 + $0x248] sm:$0xf]
    %v183 = vld [vmem:[%s1 + $0x24c] sm:$0xf]
    %v184 = vld [vmem:[%s1 + $0x250] sm:$0xf]
    %v185 = vld [vmem:[%s1 + $0x254] sm:$0xf]
    %v186 = vld [vmem:[%s1 + $0x258] sm:$0xf]
    %v187 = vld [vmem:[%s1 + $0x25c] sm:$0xf]
    %v188 = vld [vmem:[%s1 + $0x260] sm:$0xf]
    %v189 = vld [vmem:[%s1 + $0x264] sm:$0xf]
    %v190 = vld [vmem:[%s1 + $0x268] sm:$0xf]
    %v191 = vld [vmem:[%s1 + $0x26c] sm:$0xf]
    %v192 = vld [vmem:[%s1 + $0x270] sm:$0xf]
    %v193 = vld [vmem:[%s1 + $0x274] sm:$0xf]
    %v194 = vld [vmem:[%s1 + $0x278] sm:$0xf]
    %v195 = vld [vmem:[%s1 + $0x27c] sm:$0xf]
    %v196 = vld [vmem:[%s1 + $0x280] sm:$0xf]
    %v197 = vld [vmem:[%s1 + $0x284] sm:$0xf]
    %v198 = vld [vmem:[%s1 + $0x288] sm:$0xf]
    %v199 = vld [vmem:[%s1 + $0x28c] sm:$0xf]
    %v200 = vld [vmem:[%s1 + $0x290] sm:$0xf]
    %v201 = vld [vmem:[%s1 + $0x294] sm:$0xf]
    %v202 = vld [vmem:[%s1 + $0x298] sm:$0xf]
    %v203 = vld [vmem:[%s1 + $0x29c] sm:$0xf]
    %v204 = vld [vmem:[%s1 + $0x2a0] sm:$0xf]
    %v205 = vld [vmem:[%s1 + $0x2a4] sm:$0xf]
    %v206 = vld [vmem:[%s1 + $0x2a8] sm:$0xf]
    %v207 = vld [vmem:[%s1 + $0x2ac] sm:$0xf]
    %v208 = vld [vmem:[%s1 + $0x2b0] sm:$0xf]
    %v209 = vld [vmem:[%s1 + $0x2b4] sm:$0xf]
    %v210 = vld [vmem:[%s1 + $0x2b8] sm:$0xf]
    %v211 = vld [vmem:[%s1 + $0x2bc] sm:$0xf]
    %v212 = vld [vmem:[%s1 + $0x2c0] sm:$0xf]
    %v213 = vld [vmem:[%s1 + $0x2c4] sm:$0xf]
    %v214 = vld [vmem:[%s1 + $0x2c8] sm:$0xf]
    %v215 = vld [vmem:[%s1 + $0x2cc] sm:$0xf]
    %v216 = vld [vmem:[%s1 + $0x2d0] sm:$0xf]
    %v217 = vld [vmem:[%s1 + $0x2d4] sm:$0xf]
    %v218 = vld [vmem:[%s1 + $0x2d8] sm:$0xf]
    %v219 = vld [vmem:[%s1 + $0x2dc] sm:$0xf]
    %v220 = vld [vmem:[%s1 + $0x2e0] sm:$0xf]
    %v221 = vld [vmem:[%s1 + $0x2e4] sm:$0xf]
    %v222 = vld [vmem:[%s1 + $0x2e8] sm:$0xf]
    %v223 = vld [vmem:[%s1 + $0x2ec] sm:$0xf]
    %v224 = vld [vmem:[%s1 + $0x2f0] sm:$0xf]
    %v225 = vld [vmem:[%s1 + $0x2f4] sm:$0xf]
    %v226 = vld [vmem:[%s1 + $0x2f8] sm:$0xf]
    %v227 = vld [vmem:[%s1 + $0x2fc] sm:$0xf]
    %v228 = vld [vmem:[%s1 + $0x300] sm:$0xf]
    %v229 = vld [vmem:[%s1 + $0x304] sm:$0xf]
    %v230 = vld [vmem:[%s1 + $0x308] sm:$0xf]
    %v231 = vld [vmem:[%s1 + $0x30c] sm:$0xf]
    %v232 = vld [vmem:[%s1 + $0x310] sm:$0xf]
    %v233 = vld [vmem:[%s1 + $0x314] sm:$0xf]
    %v234 = vld [vmem:[%s1 + $0x318] sm:$0xf]
    %v235 = vld [vmem:[%s1 + $0x31c] sm:$0xf]
    %v236 = vld [vmem:[%s1 + $0x320] sm:$0xf]
    %v237 = vld [vmem:[%s1 + $0x324] sm:$0xf]
    %v238 = vld [vmem:[%s1 + $0x328] sm:$0xf]
    %v239 = vld [vmem:[%s1 + $0x32c] sm:$0xf]
    %v240 = vld [vmem:[%s1 + $0x330] sm:$0xf]
    %v241 = vld [vmem:[%s1 + $0x334] sm:$0xf]
    %v242 = vld [vmem:[%s1 + $0x338] sm:$0xf]
    %v243 = vld [vmem:[%s1 + $0x33c] sm:$0xf]
    %v244 = vld [vmem:[%s1 + $0x340] sm:$0xf]
    %v245 = vld [vmem:[%s1 + $0x344] sm:$0xf]
    %v246 = vld [vmem:[%s1 + $0x348] sm:$0xf]
    %v247 = vld [vmem:[%s1 + $0x34c] sm:$0xf]
    %v248 = vld [vmem:[%s1 + $0x350] sm:$0xf]
    %v249 = vld [vmem:[%s1 + $0x354] sm:$0xf]
    %v250 = vld [vmem:[%s1 + $0x358] sm:$0xf]
    %v251 = vld [vmem:[%s1 + $0x35c] sm:$0xf]
    %v252 = vld [vmem:[%s1 + $0x360] sm:$0xf]
    %v253 = vld [vmem:[%s1 + $0x364] sm:$0xf]
    %v254 = vld [vmem:[%s1 + $0x368] sm:$0xf]
    %v255 = vld [vmem:[%s1 + $0x36c] sm:$0xf]
    %v256 = vld [vmem:[%s1 + $0x370] sm:$0xf]
    %v257 = vld [vmem:[%s1 + $0x374] sm:$0xf]
    %v258 = vld [vmem:[%s1 + $0x378] sm:$0xf]
    %v259 = vld [vmem:[%s1 + $0x37c] sm:$0xf]
    %v260 = vld [vmem:[%s1 + $0x380] sm:$0xf]
    %v261 = vld [vmem:[%s1 + $0x384] sm:$0xf]
    %v262 = vld [vmem:[%s1 + $0x388] sm:$0xf]
    %v263 = vld [vmem:[%s1 + $0x38c] sm:$0xf]
    %v264 = vld [vmem:[%s1 + $0x390] sm:$0xf]
    %v265 = vld [vmem:[%s1 + $0x394] sm:$0xf]
    %v266 = vld [vmem:[%s1 + $0x398] sm:$0xf]
    %v267 = vld [vmem:[%s1 + $0x39c] sm:$0xf]
    %v268 = vld [vmem:[%s1 + $0x3a0] sm:$0xf]
    %v269 = vld [vmem:[%s1 + $0x3a4] sm:$0xf]
    %v270 = vld [vmem:[%s1 + $0x3a8] sm:$0xf]
    %v271 = vld [vmem:[%s1 + $0x3ac] sm:$0xf]
    %v272 = vld [vmem:[%s1 + $0x3b0] sm:$0xf]
    %v273 = vld [vmem:[%s1 + $0x3b4] sm:$0xf]
    %v274 = vld [vmem:[%s1 + $0x3b8] sm:$0xf]
    %v275 = vld [vmem:[%s1 + $0x3bc] sm:$0xf]
    %v276 = vld [vmem:[%s1 + $0x3c0] sm:$0xf]
    %v277 = vld [vmem:[%s1 + $0x3c4] sm:$0xf]
    %v278 = vld [vmem:[%s1 + $0x3c8] sm:$0xf]
    %v279 = vld [vmem:[%s1 + $0x3cc] sm:$0xf]
    %v280 = vld [vmem:[%s1 + $0x3d0] sm:$0xf]
    %v281 = vld [vmem:[%s1 + $0x3d4] sm:$0xf]
    %v282 = vld [vmem:[%s1 + $0x3d8] sm:$0xf]
    %v283 = vld [vmem:[%s1 + $0x3dc] sm:$0xf]
    %v284 = vld [vmem:[%s1 + $0x3e0] sm:$0xf]
    %v285 = vld [vmem:[%s1 + $0x3e4] sm:$0xf]
    %v286 = vld [vmem:[%s1 + $0x3e8] sm:$0xf]
    %v287 = vld [vmem:[%s1 + $0x3ec] sm:$0xf]
    %v288 = vld [vmem:[%s1 + $0x3f0] sm:$0xf]
    %v289 = vld [vmem:[%s1 + $0x3f4] sm:$0xf]
    %v290 = vld [vmem:[%s1 + $0x3f8] sm:$0xf]
    %v291 = vld [vmem:[%s1 + $0x3fc] sm:$0xf]
    %v292 = vld [vmem:[%s1 + $0x400] sm:$0xf]
    %v293 = vld [vmem:[%s1 + $0x404] sm:$0xf]
    %v294 = vld [vmem:[%s1 + $0x408] sm:$0xf]
    %v295 = vld [vmem:[%s1 + $0x40c] sm:$0xf]
    %v296 = vld [vmem:[%s1 + $0x410] sm:$0xf]
    %v297 = vld [vmem:[%s1 + $0x414] sm:$0xf]
    %v298 = vld [vmem:[%s1 + $0x418] sm:$0xf]
    %v299 = vld [vmem:[%s1 + $0x41c] sm:$0xf]
    %v300 = vld [vmem:[%s1 + $0x420] sm:$0xf]
    %v301 = vld [vmem:[%s1 + $0x424] sm:$0xf]
    %v302 = vld [vmem:[%s1 + $0x428] sm:$0xf]
    %v303 = vld [vmem:[%s1 + $0x42c] sm:$0xf]
    %v304 = vld [vmem:[%s1 + $0x430] sm:$0xf]
    %v305 = vld [vmem:[%s1 + $0x434] sm:$0xf]
    %v306 = vld [vmem:[%s1 + $0x438] sm:$0xf]
    %v307 = vld [vmem:[%s1 + $0x43c] sm:$0xf]
    %v308 = vld [vmem:[%s1 + $0x440] sm:$0xf]
    %v309 = vld [vmem:[%s1 + $0x444] sm:$0xf]
    %v310 = vld [vmem:[%s1 + $0x448] sm:$0xf]
    %v311 = vld [vmem:[%s1 + $0x44c] sm:$0xf]
    %v312 = vld [vmem:[%s1 + $0x450] sm:$0xf]
    %v313 = vld [vmem:[%s1 + $0x454] sm:$0xf]
    %v314 = vld [vmem:[%s1 + $0x458] sm:$0xf]
    %v315 = vld [vmem:[%s1 + $0x45c] sm:$0xf]
    %v316 = vld [vmem:[%s1 + $0x460] sm:$0xf]
    %v317 = vld [vmem:[%s1 + $0x464] sm:$0xf]
    %v318 = vld [vmem:[%s1 + $0x468] sm:$0xf]
    %v319 = vld [vmem:[%s1 + $0x46c] sm:$0xf]
    %v320 = vld [vmem:[%s1 + $0x470] sm:$0xf]
    %v321 = vld [vmem:[%s1 + $0x474] sm:$0xf]
    %v322 = vld [vmem:[%s1 + $0x478] sm:$0xf]
    %v323 = vld [vmem:[%s1 + $0x47c] sm:$0xf]
    %v324 = vld [vmem:[%s1 + $0x480] sm:$0xf]
    %v325 = vld [vmem:[%s1 + $0x484] sm:$0xf]
    %v326 = vld [vmem:[%s1 + $0x488] sm:$0xf]
    %v327 = vld [vmem:[%s1 + $0x48c] sm:$0xf]
    %v328 = vld [vmem:[%s1 + $0x490] sm:$0xf]
    %v329 = vld [vmem:[%s1 + $0x494] sm:$0xf]
    %v330 = vld [vmem:[%s1 + $0x498] sm:$0xf]
    %v331 = vld [vmem:[%s1 + $0x49c] sm:$0xf]
    %v332 = vld [vmem:[%s1 + $0x4a0] sm:$0xf]
    %v333 = vld [vmem:[%s1 + $0x4a4] sm:$0xf]
    %v334 = vld [vmem:[%s1 + $0x4a8] sm:$0xf]
    %v335 = vld [vmem:[%s1 + $0x4ac] sm:$0xf]
    %v336 = vld [vmem:[%s1 + $0x4b0] sm:$0xf]
    %v337 = vld [vmem:[%s1 + $0x4b4] sm:$0xf]
    %v338 = vld [vmem:[%s1 + $0x4b8] sm:$0xf]
    %v339 = vld [vmem:[%s1 + $0x4bc] sm:$0xf]
    %v340 = vld [vmem:[%s1 + $0x4c0] sm:$0xf]
    %v341 = vld [vmem:[%s1 + $0x4c4] sm:$0xf]
    %v342 = vld [vmem:[%s1 + $0x4c8] sm:$0xf]
    %v343 = vld [vmem:[%s1 + $0x4cc] sm:$0xf]
    %v344 = vld [vmem:[%s1 + $0x4d0] sm:$0xf]
    %v345 = vld [vmem:[%s1 + $0x4d4] sm:$0xf]
    %v346 = vld [vmem:[%s1 + $0x4d8] sm:$0xf]
    %v347 = vld [vmem:[%s1 + $0x4dc] sm:$0xf]
    %v348 = vld [vmem:[%s1 + $0x4e0] sm:$0xf]
    %v349 = vld [vmem:[%s1 + $0x4e4] sm:$0xf]
    %v350 = vld [vmem:[%s1 + $0x4e8] sm:$0xf]
    %v351 = vld [vmem:[%s1 + $0x4ec] sm:$0xf]
    %v352 = vld [vmem:[%s1 + $0x4f0] sm:$0xf]
    %v353 = vld [vmem:[%s1 + $0x4f4] sm:$0xf]
    %v354 = vld [vmem:[%s1 + $0x4f8] sm:$0xf]
    %v355 = vld [vmem:[%s1 + $0x4fc] sm:$0xf]
    %v356 = vld [vmem:[%s1 + $0x500] sm:$0xf]
    %v357 = vld [vmem:[%s1 + $0x504] sm:$0xf]
    %v358 = vld [vmem:[%s1 + $0x508] sm:$0xf]
    %v359 = vld [vmem:[%s1 + $0x50c] sm:$0xf]
    %v360 = vld [vmem:[%s1 + $0x510] sm:$0xf]
    %v361 = vld [vmem:[%s1 + $0x514] sm:$0xf]
    %v362 = vld [vmem:[%s1 + $0x518] sm:$0xf]
    %v363 = vld [vmem:[%s1 + $0x51c] sm:$0xf]
    %v364 = vld [vmem:[%s1 + $0x520] sm:$0xf]
    %v365 = vld [vmem:[%s1 + $0x524] sm:$0xf]
    %v366 = vld [vmem:[%s1 + $0x528] sm:$0xf]
    %v367 = vld [vmem:[%s1 + $0x52c] sm:$0xf]
    %v368 = vld [vmem:[%s1 + $0x530] sm:$0xf]
    %v369 = vld [vmem:[%s1 + $0x534] sm:$0xf]
    %v370 = vld [vmem:[%s1 + $0x538] sm:$0xf]
    %v371 = vld [vmem:[%s1 + $0x53c] sm:$0xf]
    %v372 = vld [vmem:[%s1 + $0x540] sm:$0xf]
    %v373 = vld [vmem:[%s1 + $0x544] sm:$0xf]
    %v374 = vld [vmem:[%s1 + $0x548] sm:$0xf]
    %v375 = vld [vmem:[%s1 + $0x54c] sm:$0xf]
    %v376 = vld [vmem:[%s1 + $0x550] sm:$0xf]
    %v377 = vld [vmem:[%s1 + $0x554] sm:$0xf]
    %v378 = vld [vmem:[%s1 + $0x558] sm:$0xf]
    %v379 = vld [vmem:[%s1 + $0x55c] sm:$0xf]
    %v380 = vld [vmem:[%s1 + $0x560] sm:$0xf]
    %v381 = vld [vmem:[%s1 + $0x564] sm:$0xf]
    %v382 = vld [vmem:[%s1 + $0x568] sm:$0xf]
    %v383 = vld [vmem:[%s1 + $0x56c] sm:$0xf]
    %v384 = vld [vmem:[%s1 + $0x570] sm:$0xf]
    %v385 = vld [vmem:[%s1 + $0x574] sm:$0xf]
    %v386 = vld [vmem:[%s1 + $0x578] sm:$0xf]
    %v387 = vld [vmem:[%s1 + $0x57c] sm:$0xf]
    %v388 = vld [vmem:[%s1 + $0x580] sm:$0xf]
    %v389 = vld [vmem:[%s1 + $0x584] sm:$0xf]
    %v390 = vld [vmem:[%s1 + $0x588] sm:$0xf]
    %v391 = vld [vmem:[%s1 + $0x58c] sm:$0xf]
    %v392 = vld [vmem:[%s1 + $0x590] sm:$0xf]
    %v393 = vld [vmem:[%s1 + $0x594] sm:$0xf]
    %v394 = vld [vmem:[%s1 + $0x598] sm:$0xf]
    %v395 = vld [vmem:[%s1 + $0x59c] sm:$0xf]
    %v396 = vld [vmem:[%s1 + $0x5a0] sm:$0xf]
    %v397 = vld [vmem:[%s1 + $0x5a4] sm:$0xf]
    %v398 = vld [vmem:[%s1 + $0x5a8] sm:$0xf]
    %v399 = vld [vmem:[%s1 + $0x5ac] sm:$0xf]
    %v400 = vld [vmem:[%s1 + $0x5b0] sm:$0xf]
    %v401 = vld [vmem:[%s1 + $0x5b4] sm:$0xf]
    %v402 = vld [vmem:[%s1 + $0x5b8] sm:$0xf]
    %v403 = vld [vmem:[%s1 + $0x5bc] sm:$0xf]
    %v404 = vld [vmem:[%s1 + $0x5c0] sm:$0xf]
    %v405 = vld [vmem:[%s1 + $0x5c4] sm:$0xf]
    %v406 = vld [vmem:[%s1 + $0x5c8] sm:$0xf]
    %v407 = vld [vmem:[%s1 + $0x5cc] sm:$0xf]
    %v408 = vld [vmem:[%s1 + $0x5d0] sm:$0xf]
    %v409 = vld [vmem:[%s1 + $0x5d4] sm:$0xf]
    %v410 = vld [vmem:[%s1 + $0x5d8] sm:$0xf]
    %v411 = vld [vmem:[%s1 + $0x5dc] sm:$0xf]
    %v412 = vld [vmem:[%s1 + $0x5e0] sm:$0xf]
    %v413 = vld [vmem:[%s1 + $0x5e4] sm:$0xf]
    %v414 = vld [vmem:[%s1 + $0x5e8] sm:$0xf]
    %v415 = vld [vmem:[%s1 + $0x5ec] sm:$0xf]
    %v416 = vld [vmem:[%s1 + $0x5f0] sm:$0xf]
    %v417 = vld [vmem:[%s1 + $0x5f4] sm:$0xf]
    %v418 = vld [vmem:[%s1 + $0x5f8] sm:$0xf]
    %v419 = vld [vmem:[%s1 + $0x5fc] sm:$0xf]
    %v420 = vld [vmem:[%s1 + $0x600] sm:$0xf]
    %v421 = vld [vmem:[%s1 + $0x604] sm:$0xf]
    %v422 = vld [vmem:[%s1 + $0x608] sm:$0xf]
    %v423 = vld [vmem:[%s1 + $0x60c] sm:$0xf]
    %v424 = vld [vmem:[%s1 + $0x610] sm:$0xf]
    %v425 = vld [vmem:[%s1 + $0x614] sm:$0xf]
    %v426 = vld [vmem:[%s1 + $0x618] sm:$0xf]
    %v427 = vld [vmem:[%s1 + $0x61c] sm:$0xf]
    %v428 = vld [vmem:[%s1 + $0x620] sm:$0xf]
    %v429 = vld [vmem:[%s1 + $0x624] sm:$0xf]
    %v430 = vld [vmem:[%s1 + $0x628] sm:$0xf]
    %v431 = vld [vmem:[%s1 + $0x62c] sm:$0xf]
    %v432 = vld [vmem:[%s1 + $0x630] sm:$0xf]
    %v433 = vld [vmem:[%s1 + $0x634] sm:$0xf]
    %v434 = vld [vmem:[%s1 + $0x638] sm:$0xf]
    %v435 = vld [vmem:[%s1 + $0x63c] sm:$0xf]
    %v436 = vld [vmem:[%s1 + $0x640] sm:$0xf]
    %v437 = vld [vmem:[%s1 + $0x644] sm:$0xf]
    %v438 = vld [vmem:[%s1 + $0x648] sm:$0xf]
    %v439 = vld [vmem:[%s1 + $0x64c] sm:$0xf]
    %v440 = vld [vmem:[%s1 + $0x650] sm:$0xf]
    %v441 = vld [vmem:[%s1 + $0x654] sm:$0xf]
    %v442 = vld [vmem:[%s1 + $0x658] sm:$0xf]
    %v443 = vld [vmem:[%s1 + $0x65c] sm:$0xf]
    %v444 = vld [vmem:[%s1 + $0x660] sm:$0xf]
    %v445 = vld [vmem:[%s1 + $0x664] sm:$0xf]
    %v446 = vld [vmem:[%s1 + $0x668] sm:$0xf]
    %v447 = vld [vmem:[%s1 + $0x66c] sm:$0xf]
    %v448 = vld [vmem:[%s1 + $0x670] sm:$0xf]
    %v449 = vld [vmem:[%s1 + $0x674] sm:$0xf]
    %v450 = vld [vmem:[%s1 + $0x678] sm:$0xf]
    %v451 = vld [vmem:[%s1 + $0x67c] sm:$0xf]
    %v452 = vld [vmem:[%s1 + $0x680] sm:$0xf]
    %v453 = vld [vmem:[%s1 + $0x684] sm:$0xf]
    %v454 = vld [vmem:[%s1 + $0x688] sm:$0xf]
    %v455 = vld [vmem:[%s1 + $0x68c] sm:$0xf]
    %v456 = vld [vmem:[%s1 + $0x690] sm:$0xf]
    %v457 = vld [vmem:[%s1 + $0x694] sm:$0xf]
    %v458 = vld [vmem:[%s1 + $0x698] sm:$0xf]
    %v459 = vld [vmem:[%s1 + $0x69c] sm:$0xf]
    %v460 = vld [vmem:[%s1 + $0x6a0] sm:$0xf]
    %v461 = vld [vmem:[%s1 + $0x6a4] sm:$0xf]
    %v462 = vld [vmem:[%s1 + $0x6a8] sm:$0xf]
    %v463 = vld [vmem:[%s1 + $0x6ac] sm:$0xf]
    %v464 = vld [vmem:[%s1 + $0x6b0] sm:$0xf]
    %v465 = vld [vmem:[%s1 + $0x6b4] sm:$0xf]
    %v466 = vld [vmem:[%s1 + $0x6b8] sm:$0xf]
    %v467 = vld [vmem:[%s1 + $0x6bc] sm:$0xf]
    %v468 = vld [vmem:[%s1 + $0x6c0] sm:$0xf]
    %v469 = vld [vmem:[%s1 + $0x6c4] sm:$0xf]
    %v470 = vld [vmem:[%s1 + $0x6c8] sm:$0xf]
    %v471 = vld [vmem:[%s1 + $0x6cc] sm:$0xf]
    %v472 = vld [vmem:[%s1 + $0x6d0] sm:$0xf]
    %v473 = vld [vmem:[%s1 + $0x6d4] sm:$0xf]
    %v474 = vld [vmem:[%s1 + $0x6d8] sm:$0xf]
    %v475 = vld [vmem:[%s1 + $0x6dc] sm:$0xf]
    %v476 = vld [vmem:[%s1 + $0x6e0] sm:$0xf]
    %v477 = vld [vmem:[%s1 + $0x6e4] sm:$0xf]
    %v478 = vld [vmem:[%s1 + $0x6e8] sm:$0xf]
    %v479 = vld [vmem:[%s1 + $0x6ec] sm:$0xf]
    %v480 = vld [vmem:[%s1 + $0x6f0] sm:$0xf]
    %v481 = vld [vmem:[%s1 + $0x6f4] sm:$0xf]
    %v482 = vld [vmem:[%s1 + $0x6f8] sm:$0xf]
    %v483 = vld [vmem:[%s1 + $0x6fc] sm:$0xf]
    %v484 = vld [vmem:[%s1 + $0x700] sm:$0xf]
    %v485 = vld [vmem:[%s1 + $0x704] sm:$0xf]
    %v486 = vld [vmem:[%s1 + $0x708] sm:$0xf]
    %v487 = vld [vmem:[%s1 + $0x70c] sm:$0xf]
    %v488 = vld [vmem:[%s1 + $0x710] sm:$0xf]
    %v489 = vld [vmem:[%s1 + $0x714] sm:$0xf]
    %v490 = vld [vmem:[%s1 + $0x718] sm:$0xf]
    %v491 = vld [vmem:[%s1 + $0x71c] sm:$0xf]
    %v492 = vld [vmem:[%s1 + $0x720] sm:$0xf]
    %v493 = vld [vmem:[%s1 + $0x724] sm:$0xf]
    %v494 = vld [vmem:[%s1 + $0x728] sm:$0xf]
    %v495 = vld [vmem:[%s1 + $0x72c] sm:$0xf]
    %v496 = vld [vmem:[%s1 + $0x730] sm:$0xf]
    %v497 = vld [vmem:[%s1 + $0x734] sm:$0xf]
    %v498 = vld [vmem:[%s1 + $0x738] sm:$0xf]
    %v499 = vld [vmem:[%s1 + $0x73c] sm:$0xf]
    %v500 = vld [vmem:[%s1 + $0x740] sm:$0xf]
    %v501 = vld [vmem:[%s1 + $0x744] sm:$0xf]
    %v502 = vld [vmem:[%s1 + $0x748] sm:$0xf]
    %v503 = vld [vmem:[%s1 + $0x74c] sm:$0xf]
    %v504 = vld [vmem:[%s1 + $0x750] sm:$0xf]
    %v505 = vld [vmem:[%s1 + $0x754] sm:$0xf]
    %v506 = vld [vmem:[%s1 + $0x758] sm:$0xf]
    %v507 = vld [vmem:[%s1 + $0x75c] sm:$0xf]
    %v508 = vld [vmem:[%s1 + $0x760] sm:$0xf]
    %v509 = vld [vmem:[%s1 + $0x764] sm:$0xf]
    %v510 = vld [vmem:[%s1 + $0x768] sm:$0xf]
    %v511 = vld [vmem:[%s1 + $0x76c] sm:$0xf]
    %v512 = vld [vmem:[%s1 + $0x770] sm:$0xf]
    %v513 = vld [vmem:[%s1 + $0x774] sm:$0xf]
    %v514 = vld [vmem:[%s1 + $0x778] sm:$0xf]
    %v515 = vld [vmem:[%s1 + $0x77c] sm:$0xf]
    %v516 = vld [vmem:[%s1 + $0x780] sm:$0xf]
    %v517 = vld [vmem:[%s1 + $0x784] sm:$0xf]
    %v518 = vld [vmem:[%s1 + $0x788] sm:$0xf]
    %v519 = vld [vmem:[%s1 + $0x78c] sm:$0xf]
    %v520 = vld [vmem:[%s1 + $0x790] sm:$0xf]
    %v521 = vld [vmem:[%s1 + $0x794] sm:$0xf]
    %v522 = vld [vmem:[%s1 + $0x798] sm:$0xf]
    %v523 = vld [vmem:[%s1 + $0x79c] sm:$0xf]
    %v524 = vld [vmem:[%s1 + $0x7a0] sm:$0xf]
    %v525 = vld [vmem:[%s1 + $0x7a4] sm:$0xf]
    %v526 = vld [vmem:[%s1 + $0x7a8] sm:$0xf]
    %v527 = vld [vmem:[%s1 + $0x7ac] sm:$0xf]
    %v528 = vld [vmem:[%s1 + $0x7b0] sm:$0xf]
    %v529 = vld [vmem:[%s1 + $0x7b4] sm:$0xf]
    %v530 = vld [vmem:[%s1 + $0x7b8] sm:$0xf]
    %v531 = vld [vmem:[%s1 + $0x7bc] sm:$0xf]
    %v532 = vld [vmem:[%s1 + $0x7c0] sm:$0xf]
    %v533 = vld [vmem:[%s1 + $0x7c4] sm:$0xf]
    %v534 = vld [vmem:[%s1 + $0x7c8] sm:$0xf]
    %v535 = vld [vmem:[%s1 + $0x7cc] sm:$0xf]
    %v536 = vld [vmem:[%s1 + $0x7d0] sm:$0xf]
    %v537 = vld [vmem:[%s1 + $0x7d4] sm:$0xf]
    %v538 = vld [vmem:[%s1 + $0x7d8] sm:$0xf]
    %v539 = vld [vmem:[%s1 + $0x7dc] sm:$0xf]
    %v540 = vld [vmem:[%s1 + $0x7e0] sm:$0xf]
    %v541 = vld [vmem:[%s1 + $0x7e4] sm:$0xf]
    %v542 = vld [vmem:[%s1 + $0x7e8] sm:$0xf]
    %v543 = vld [vmem:[%s1 + $0x7ec] sm:$0xf]
    %v544 = vld [vmem:[%s1 + $0x7f0] sm:$0xf]
    %v545 = vld [vmem:[%s1 + $0x7f4] sm:$0xf]
    %v546 = vld [vmem:[%s1 + $0x7f8] sm:$0xf]
    %v547 = vld [vmem:[%s1 + $0x7fc] sm:$0xf]
    %v548 = vld [vmem:[%s2] sm:$0x1]
    %v550 = vlaneseq
    %v551 = vshrl.u32 %v550, 7
    %v552 = vsub.s32 0, %v551
    %v553 = vrot.slane %v548, %v552
    %v563 = vcombine.high %v28, %v28
    %v565 = vunpack.c.l.s4 1983009808
    %v566 = vunpack.c.0.s8 %v565
    %v567 = vlaneseq
    %v568 = vshrl.u32 %v567, 7
    %v569 = vsub.s32 %v566, %v568
    %v570 = vrot.slane %v28, %v569
    %v572 = vunpack.c.l.s4 1983009808
    %v573 = vunpack.c.0.s8 %v572
    %v574 = vlaneseq
    %v575 = vshrl.u32 %v574, 7
    %v576 = vsub.s32 %v573, %v575
    %v577 = vrot.slane %v563, %v576
    %v578 = vcombine.high %v570, %v570
    %v579 = vcombine.high %v577, %v577
    %v580 = vcombine.high %v29, %v29
    %v582 = vunpack.c.l.s4 1983009808
    %v583 = vunpack.c.0.s8 %v582
    %v584 = vlaneseq
    %v585 = vshrl.u32 %v584, 7
    %v586 = vsub.s32 %v583, %v585
    %v587 = vrot.slane %v29, %v586
    %v589 = vunpack.c.l.s4 1983009808
    %v590 = vunpack.c.0.s8 %v589
    %v591 = vlaneseq
    %v592 = vshrl.u32 %v591, 7
    %v593 = vsub.s32 %v590, %v592
    %v594 = vrot.slane %v580, %v593
    %v595 = vcombine.high %v587, %v587
    %v596 = vcombine.high %v594, %v594
    %v597 = vcombine.high %v30, %v30
    %v599 = vunpack.c.l.s4 1983009808
    %v600 = vunpack.c.0.s8 %v599
    %v601 = vlaneseq
    %v602 = vshrl.u32 %v601, 7
    %v603 = vsub.s32 %v600, %v602
    %v604 = vrot.slane %v30, %v603
    %v606 = vunpack.c.l.s4 1983009808
    %v607 = vunpack.c.0.s8 %v606
    %v608 = vlaneseq
    %v609 = vshrl.u32 %v608, 7
    %v610 = vsub.s32 %v607, %v609
    %v611 = vrot.slane %v597, %v610
    %v612 = vcombine.high %v604, %v604
    %v613 = vcombine.high %v611, %v611
    %v614 = vcombine.high %v31, %v31
    %v616 = vunpack.c.l.s4 1983009808
    %v617 = vunpack.c.0.s8 %v616
    %v618 = vlaneseq
    %v619 = vshrl.u32 %v618, 7
    %v620 = vsub.s32 %v617, %v619
    %v621 = vrot.slane %v31, %v620
    %v623 = vunpack.c.l.s4 1983009808
    %v624 = vunpack.c.0.s8 %v623
    %v625 = vlaneseq
    %v626 = vshrl.u32 %v625, 7
    %v627 = vsub.s32 %v624, %v626
    %v628 = vrot.slane %v614, %v627
    %v629 = vcombine.high %v621, %v621
    %v630 = vcombine.high %v628, %v628
    %v631 = vcombine.high %v32, %v32
    %v633 = vunpack.c.l.s4 1983009808
    %v634 = vunpack.c.0.s8 %v633
    %v635 = vlaneseq
    %v636 = vshrl.u32 %v635, 7
    %v637 = vsub.s32 %v634, %v636
    %v638 = vrot.slane %v32, %v637
    %v640 = vunpack.c.l.s4 1983009808
    %v641 = vunpack.c.0.s8 %v640
    %v642 = vlaneseq
    %v643 = vshrl.u32 %v642, 7
    %v644 = vsub.s32 %v641, %v643
    %v645 = vrot.slane %v631, %v644
    %v646 = vcombine.high %v638, %v638
    %v647 = vcombine.high %v645, %v645
    %v648 = vcombine.high %v33, %v33
    %v650 = vunpack.c.l.s4 1983009808
    %v651 = vunpack.c.0.s8 %v650
    %v652 = vlaneseq
    %v653 = vshrl.u32 %v652, 7
    %v654 = vsub.s32 %v651, %v653
    %v655 = vrot.slane %v33, %v654
    %v657 = vunpack.c.l.s4 1983009808
    %v658 = vunpack.c.0.s8 %v657
    %v659 = vlaneseq
    %v660 = vshrl.u32 %v659, 7
    %v661 = vsub.s32 %v658, %v660
    %v662 = vrot.slane %v648, %v661
    %v663 = vcombine.high %v655, %v655
    %v664 = vcombine.high %v662, %v662
    %v665 = vcombine.high %v34, %v34
    %v667 = vunpack.c.l.s4 1983009808
    %v668 = vunpack.c.0.s8 %v667
    %v669 = vlaneseq
    %v670 = vshrl.u32 %v669, 7
    %v671 = vsub.s32 %v668, %v670
    %v672 = vrot.slane %v34, %v671
    %v674 = vunpack.c.l.s4 1983009808
    %v675 = vunpack.c.0.s8 %v674
    %v676 = vlaneseq
    %v677 = vshrl.u32 %v676, 7
    %v678 = vsub.s32 %v675, %v677
    %v679 = vrot.slane %v665, %v678
    %v680 = vcombine.high %v672, %v672
    %v681 = vcombine.high %v679, %v679
    %v682 = vcombine.high %v35, %v35
    %v684 = vunpack.c.l.s4 1983009808
    %v685 = vunpack.c.0.s8 %v684
    %v686 = vlaneseq
    %v687 = vshrl.u32 %v686, 7
    %v688 = vsub.s32 %v685, %v687
    %v689 = vrot.slane %v35, %v688
    %v691 = vunpack.c.l.s4 1983009808
    %v692 = vunpack.c.0.s8 %v691
    %v693 = vlaneseq
    %v694 = vshrl.u32 %v693, 7
    %v695 = vsub.s32 %v692, %v694
    %v696 = vrot.slane %v682, %v695
    %v697 = vcombine.high %v689, %v689
    %v698 = vcombine.high %v696, %v696
    %v1243 = vunpack.c.l.b16 %v36
    %v1244 = vunpack.c.l.b16 %v37
    %v1245 = vunpack.c.l.b16 %v38
    %v1246 = vunpack.c.l.b16 %v39
    %v1247 = vunpack.c.l.b16 %v40
    %v1248 = vunpack.c.l.b16 %v41
    %v1249 = vunpack.c.l.b16 %v42
    %v1250 = vunpack.c.l.b16 %v43
    %v1251 = vunpack.c.l.b16 %v44
    %v1252 = vunpack.c.l.b16 %v45
    %v1253 = vunpack.c.l.b16 %v46
    %v1254 = vunpack.c.l.b16 %v47
    %v1255 = vunpack.c.l.b16 %v48
    %v1256 = vunpack.c.l.b16 %v49
    %v1257 = vunpack.c.l.b16 %v50
    %v1258 = vunpack.c.l.b16 %v51
    %v1259 = vunpack.c.l.b16 %v52
    %v1260 = vunpack.c.l.b16 %v53
    %v1261 = vunpack.c.l.b16 %v54
    %v1262 = vunpack.c.l.b16 %v55
    %v1263 = vunpack.c.l.b16 %v56
    %v1264 = vunpack.c.l.b16 %v57
    %v1265 = vunpack.c.l.b16 %v58
    %v1266 = vunpack.c.l.b16 %v59
    %v1267 = vunpack.c.l.b16 %v60
    %v1268 = vunpack.c.l.b16 %v61
    %v1269 = vunpack.c.l.b16 %v62
    %v1270 = vunpack.c.l.b16 %v63
    %v1271 = vunpack.c.l.b16 %v64
    %v1272 = vunpack.c.l.b16 %v65
    %v1273 = vunpack.c.l.b16 %v66
    %v1274 = vunpack.c.l.b16 %v67
    %v1275 = vunpack.c.l.b16 %v68
    %v1276 = vunpack.c.l.b16 %v69
    %v1277 = vunpack.c.l.b16 %v70
    %v1278 = vunpack.c.l.b16 %v71
    %v1279 = vunpack.c.l.b16 %v72
    %v1280 = vunpack.c.l.b16 %v73
    %v1281 = vunpack.c.l.b16 %v74
    %v1282 = vunpack.c.l.b16 %v75
    %v1283 = vunpack.c.l.b16 %v76
    %v1284 = vunpack.c.l.b16 %v77
    %v1285 = vunpack.c.l.b16 %v78
    %v1286 = vunpack.c.l.b16 %v79
    %v1287 = vunpack.c.l.b16 %v80
    %v1288 = vunpack.c.l.b16 %v81
    %v1289 = vunpack.c.l.b16 %v82
    %v1290 = vunpack.c.l.b16 %v83
    %v1291 = vunpack.c.l.b16 %v84
    %v1292 = vunpack.c.l.b16 %v85
    %v1293 = vunpack.c.l.b16 %v86
    %v1294 = vunpack.c.l.b16 %v87
    %v1295 = vunpack.c.l.b16 %v88
    %v1296 = vunpack.c.l.b16 %v89
    %v1297 = vunpack.c.l.b16 %v90
    %v1298 = vunpack.c.l.b16 %v91
    %v1299 = vunpack.c.l.b16 %v92
    %v1300 = vunpack.c.l.b16 %v93
    %v1301 = vunpack.c.l.b16 %v94
    %v1302 = vunpack.c.l.b16 %v95
    %v1303 = vunpack.c.l.b16 %v96
    %v1304 = vunpack.c.l.b16 %v97
    %v1305 = vunpack.c.l.b16 %v98
    %v1306 = vunpack.c.l.b16 %v99
    %v1307 = vunpack.c.l.b16 %v100
    %v1308 = vunpack.c.l.b16 %v101
    %v1309 = vunpack.c.l.b16 %v102
    %v1310 = vunpack.c.l.b16 %v103
    %v1311 = vunpack.c.l.b16 %v104
    %v1312 = vunpack.c.l.b16 %v105
    %v1313 = vunpack.c.l.b16 %v106
    %v1314 = vunpack.c.l.b16 %v107
    %v1315 = vunpack.c.l.b16 %v108
    %v1316 = vunpack.c.l.b16 %v109
    %v1317 = vunpack.c.l.b16 %v110
    %v1318 = vunpack.c.l.b16 %v111
    %v1319 = vunpack.c.l.b16 %v112
    %v1320 = vunpack.c.l.b16 %v113
    %v1321 = vunpack.c.l.b16 %v114
    %v1322 = vunpack.c.l.b16 %v115
    %v1323 = vunpack.c.l.b16 %v116
    %v1324 = vunpack.c.l.b16 %v117
    %v1325 = vunpack.c.l.b16 %v118
    %v1326 = vunpack.c.l.b16 %v119
    %v1327 = vunpack.c.l.b16 %v120
    %v1328 = vunpack.c.l.b16 %v121
    %v1329 = vunpack.c.l.b16 %v122
    %v1330 = vunpack.c.l.b16 %v123
    %v1331 = vunpack.c.l.b16 %v124
    %v1332 = vunpack.c.l.b16 %v125
    %v1333 = vunpack.c.l.b16 %v126
    %v1334 = vunpack.c.l.b16 %v127
    %v1335 = vunpack.c.l.b16 %v128
    %v1336 = vunpack.c.l.b16 %v129
    %v1337 = vunpack.c.l.b16 %v130
    %v1338 = vunpack.c.l.b16 %v131
    %v1339 = vunpack.c.l.b16 %v132
    %v1340 = vunpack.c.l.b16 %v133
    %v1341 = vunpack.c.l.b16 %v134
    %v1342 = vunpack.c.l.b16 %v135
    %v1343 = vunpack.c.l.b16 %v136
    %v1344 = vunpack.c.l.b16 %v137
    %v1345 = vunpack.c.l.b16 %v138
    %v1346 = vunpack.c.l.b16 %v139
    %v1347 = vunpack.c.l.b16 %v140
    %v1348 = vunpack.c.l.b16 %v141
    %v1349 = vunpack.c.l.b16 %v142
    %v1350 = vunpack.c.l.b16 %v143
    %v1351 = vunpack.c.l.b16 %v144
    %v1352 = vunpack.c.l.b16 %v145
    %v1353 = vunpack.c.l.b16 %v146
    %v1354 = vunpack.c.l.b16 %v147
    %v1355 = vunpack.c.l.b16 %v148
    %v1356 = vunpack.c.l.b16 %v149
    %v1357 = vunpack.c.l.b16 %v150
    %v1358 = vunpack.c.l.b16 %v151
    %v1359 = vunpack.c.l.b16 %v152
    %v1360 = vunpack.c.l.b16 %v153
    %v1361 = vunpack.c.l.b16 %v154
    %v1362 = vunpack.c.l.b16 %v155
    %v1363 = vunpack.c.l.b16 %v156
    %v1364 = vunpack.c.l.b16 %v157
    %v1365 = vunpack.c.l.b16 %v158
    %v1366 = vunpack.c.l.b16 %v159
    %v1367 = vunpack.c.l.b16 %v160
    %v1368 = vunpack.c.l.b16 %v161
    %v1369 = vunpack.c.l.b16 %v162
    %v1370 = vunpack.c.l.b16 %v163
    %v1371 = vunpack.c.l.b16 %v164
    %v1372 = vunpack.c.l.b16 %v165
    %v1373 = vunpack.c.l.b16 %v166
    %v1374 = vunpack.c.l.b16 %v167
    %v1375 = vunpack.c.l.b16 %v168
    %v1376 = vunpack.c.l.b16 %v169
    %v1377 = vunpack.c.l.b16 %v170
    %v1378 = vunpack.c.l.b16 %v171
    %v1379 = vunpack.c.l.b16 %v172
    %v1380 = vunpack.c.l.b16 %v173
    %v1381 = vunpack.c.l.b16 %v174
    %v1382 = vunpack.c.l.b16 %v175
    %v1383 = vunpack.c.l.b16 %v176
    %v1384 = vunpack.c.l.b16 %v177
    %v1385 = vunpack.c.l.b16 %v178
    %v1386 = vunpack.c.l.b16 %v179
    %v1387 = vunpack.c.l.b16 %v180
    %v1388 = vunpack.c.l.b16 %v181
    %v1389 = vunpack.c.l.b16 %v182
    %v1390 = vunpack.c.l.b16 %v183
    %v1391 = vunpack.c.l.b16 %v184
    %v1392 = vunpack.c.l.b16 %v185
    %v1393 = vunpack.c.l.b16 %v186
    %v1394 = vunpack.c.l.b16 %v187
    %v1395 = vunpack.c.l.b16 %v188
    %v1396 = vunpack.c.l.b16 %v189
    %v1397 = vunpack.c.l.b16 %v190
    %v1398 = vunpack.c.l.b16 %v191
    %v1399 = vunpack.c.l.b16 %v192
    %v1400 = vunpack.c.l.b16 %v193
    %v1401 = vunpack.c.l.b16 %v194
    %v1402 = vunpack.c.l.b16 %v195
    %v1403 = vunpack.c.l.b16 %v196
    %v1404 = vunpack.c.l.b16 %v197
    %v1405 = vunpack.c.l.b16 %v198
    %v1406 = vunpack.c.l.b16 %v199
    %v1407 = vunpack.c.l.b16 %v200
    %v1408 = vunpack.c.l.b16 %v201
    %v1409 = vunpack.c.l.b16 %v202
    %v1410 = vunpack.c.l.b16 %v203
    %v1411 = vunpack.c.l.b16 %v204
    %v1412 = vunpack.c.l.b16 %v205
    %v1413 = vunpack.c.l.b16 %v206
    %v1414 = vunpack.c.l.b16 %v207
    %v1415 = vunpack.c.l.b16 %v208
    %v1416 = vunpack.c.l.b16 %v209
    %v1417 = vunpack.c.l.b16 %v210
    %v1418 = vunpack.c.l.b16 %v211
    %v1419 = vunpack.c.l.b16 %v212
    %v1420 = vunpack.c.l.b16 %v213
    %v1421 = vunpack.c.l.b16 %v214
    %v1422 = vunpack.c.l.b16 %v215
    %v1423 = vunpack.c.l.b16 %v216
    %v1424 = vunpack.c.l.b16 %v217
    %v1425 = vunpack.c.l.b16 %v218
    %v1426 = vunpack.c.l.b16 %v219
    %v1427 = vunpack.c.l.b16 %v220
    %v1428 = vunpack.c.l.b16 %v221
    %v1429 = vunpack.c.l.b16 %v222
    %v1430 = vunpack.c.l.b16 %v223
    %v1431 = vunpack.c.l.b16 %v224
    %v1432 = vunpack.c.l.b16 %v225
    %v1433 = vunpack.c.l.b16 %v226
    %v1434 = vunpack.c.l.b16 %v227
    %v1435 = vunpack.c.l.b16 %v228
    %v1436 = vunpack.c.l.b16 %v229
    %v1437 = vunpack.c.l.b16 %v230
    %v1438 = vunpack.c.l.b16 %v231
    %v1439 = vunpack.c.l.b16 %v232
    %v1440 = vunpack.c.l.b16 %v233
    %v1441 = vunpack.c.l.b16 %v234
    %v1442 = vunpack.c.l.b16 %v235
    %v1443 = vunpack.c.l.b16 %v236
    %v1444 = vunpack.c.l.b16 %v237
    %v1445 = vunpack.c.l.b16 %v238
    %v1446 = vunpack.c.l.b16 %v239
    %v1447 = vunpack.c.l.b16 %v240
    %v1448 = vunpack.c.l.b16 %v241
    %v1449 = vunpack.c.l.b16 %v242
    %v1450 = vunpack.c.l.b16 %v243
    %v1451 = vunpack.c.l.b16 %v244
    %v1452 = vunpack.c.l.b16 %v245
    %v1453 = vunpack.c.l.b16 %v246
    %v1454 = vunpack.c.l.b16 %v247
    %v1455 = vunpack.c.l.b16 %v248
    %v1456 = vunpack.c.l.b16 %v249
    %v1457 = vunpack.c.l.b16 %v250
    %v1458 = vunpack.c.l.b16 %v251
    %v1459 = vunpack.c.l.b16 %v252
    %v1460 = vunpack.c.l.b16 %v253
    %v1461 = vunpack.c.l.b16 %v254
    %v1462 = vunpack.c.l.b16 %v255
    %v1463 = vunpack.c.l.b16 %v256
    %v1464 = vunpack.c.l.b16 %v257
    %v1465 = vunpack.c.l.b16 %v258
    %v1466 = vunpack.c.l.b16 %v259
    %v1467 = vunpack.c.l.b16 %v260
    %v1468 = vunpack.c.l.b16 %v261
    %v1469 = vunpack.c.l.b16 %v262
    %v1470 = vunpack.c.l.b16 %v263
    %v1471 = vunpack.c.l.b16 %v264
    %v1472 = vunpack.c.l.b16 %v265
    %v1473 = vunpack.c.l.b16 %v266
    %v1474 = vunpack.c.l.b16 %v267
    %v1475 = vunpack.c.l.b16 %v268
    %v1476 = vunpack.c.l.b16 %v269
    %v1477 = vunpack.c.l.b16 %v270
    %v1478 = vunpack.c.l.b16 %v271
    %v1479 = vunpack.c.l.b16 %v272
    %v1480 = vunpack.c.l.b16 %v273
    %v1481 = vunpack.c.l.b16 %v274
    %v1482 = vunpack.c.l.b16 %v275
    %v1483 = vunpack.c.l.b16 %v276
    %v1484 = vunpack.c.l.b16 %v277
    %v1485 = vunpack.c.l.b16 %v278
    %v1486 = vunpack.c.l.b16 %v279
    %v1487 = vunpack.c.l.b16 %v280
    %v1488 = vunpack.c.l.b16 %v281
    %v1489 = vunpack.c.l.b16 %v282
    %v1490 = vunpack.c.l.b16 %v283
    %v1491 = vunpack.c.l.b16 %v284
    %v1492 = vunpack.c.l.b16 %v285
    %v1493 = vunpack.c.l.b16 %v286
    %v1494 = vunpack.c.l.b16 %v287
    %v1495 = vunpack.c.l.b16 %v288
    %v1496 = vunpack.c.l.b16 %v289
    %v1497 = vunpack.c.l.b16 %v290
    %v1498 = vunpack.c.l.b16 %v291
    %v1499 = vunpack.c.l.b16 %v292
    %v1500 = vunpack.c.l.b16 %v293
    %v1501 = vunpack.c.l.b16 %v294
    %v1502 = vunpack.c.l.b16 %v295
    %v1503 = vunpack.c.l.b16 %v296
    %v1504 = vunpack.c.l.b16 %v297
    %v1505 = vunpack.c.l.b16 %v298
    %v1506 = vunpack.c.l.b16 %v299
    %v1507 = vunpack.c.l.b16 %v300
    %v1508 = vunpack.c.l.b16 %v301
    %v1509 = vunpack.c.l.b16 %v302
    %v1510 = vunpack.c.l.b16 %v303
    %v1511 = vunpack.c.l.b16 %v304
    %v1512 = vunpack.c.l.b16 %v305
    %v1513 = vunpack.c.l.b16 %v306
    %v1514 = vunpack.c.l.b16 %v307
    %v1515 = vunpack.c.l.b16 %v308
    %v1516 = vunpack.c.l.b16 %v309
    %v1517 = vunpack.c.l.b16 %v310
    %v1518 = vunpack.c.l.b16 %v311
    %v1519 = vunpack.c.l.b16 %v312
    %v1520 = vunpack.c.l.b16 %v313
    %v1521 = vunpack.c.l.b16 %v314
    %v1522 = vunpack.c.l.b16 %v315
    %v1523 = vunpack.c.l.b16 %v316
    %v1524 = vunpack.c.l.b16 %v317
    %v1525 = vunpack.c.l.b16 %v318
    %v1526 = vunpack.c.l.b16 %v319
    %v1527 = vunpack.c.l.b16 %v320
    %v1528 = vunpack.c.l.b16 %v321
    %v1529 = vunpack.c.l.b16 %v322
    %v1530 = vunpack.c.l.b16 %v323
    %v1531 = vunpack.c.l.b16 %v324
    %v1532 = vunpack.c.l.b16 %v325
    %v1533 = vunpack.c.l.b16 %v326
    %v1534 = vunpack.c.l.b16 %v327
    %v1535 = vunpack.c.l.b16 %v328
    %v1536 = vunpack.c.l.b16 %v329
    %v1537 = vunpack.c.l.b16 %v330
    %v1538 = vunpack.c.l.b16 %v331
    %v1539 = vunpack.c.l.b16 %v332
    %v1540 = vunpack.c.l.b16 %v333
    %v1541 = vunpack.c.l.b16 %v334
    %v1542 = vunpack.c.l.b16 %v335
    %v1543 = vunpack.c.l.b16 %v336
    %v1544 = vunpack.c.l.b16 %v337
    %v1545 = vunpack.c.l.b16 %v338
    %v1546 = vunpack.c.l.b16 %v339
    %v1547 = vunpack.c.l.b16 %v340
    %v1548 = vunpack.c.l.b16 %v341
    %v1549 = vunpack.c.l.b16 %v342
    %v1550 = vunpack.c.l.b16 %v343
    %v1551 = vunpack.c.l.b16 %v344
    %v1552 = vunpack.c.l.b16 %v345
    %v1553 = vunpack.c.l.b16 %v346
    %v1554 = vunpack.c.l.b16 %v347
    %v1555 = vunpack.c.l.b16 %v348
    %v1556 = vunpack.c.l.b16 %v349
    %v1557 = vunpack.c.l.b16 %v350
    %v1558 = vunpack.c.l.b16 %v351
    %v1559 = vunpack.c.l.b16 %v352
    %v1560 = vunpack.c.l.b16 %v353
    %v1561 = vunpack.c.l.b16 %v354
    %v1562 = vunpack.c.l.b16 %v355
    %v1563 = vunpack.c.l.b16 %v356
    %v1564 = vunpack.c.l.b16 %v357
    %v1565 = vunpack.c.l.b16 %v358
    %v1566 = vunpack.c.l.b16 %v359
    %v1567 = vunpack.c.l.b16 %v360
    %v1568 = vunpack.c.l.b16 %v361
    %v1569 = vunpack.c.l.b16 %v362
    %v1570 = vunpack.c.l.b16 %v363
    %v1571 = vunpack.c.l.b16 %v364
    %v1572 = vunpack.c.l.b16 %v365
    %v1573 = vunpack.c.l.b16 %v366
    %v1574 = vunpack.c.l.b16 %v367
    %v1575 = vunpack.c.l.b16 %v368
    %v1576 = vunpack.c.l.b16 %v369
    %v1577 = vunpack.c.l.b16 %v370
    %v1578 = vunpack.c.l.b16 %v371
    %v1579 = vunpack.c.l.b16 %v372
    %v1580 = vunpack.c.l.b16 %v373
    %v1581 = vunpack.c.l.b16 %v374
    %v1582 = vunpack.c.l.b16 %v375
    %v1583 = vunpack.c.l.b16 %v376
    %v1584 = vunpack.c.l.b16 %v377
    %v1585 = vunpack.c.l.b16 %v378
    %v1586 = vunpack.c.l.b16 %v379
    %v1587 = vunpack.c.l.b16 %v380
    %v1588 = vunpack.c.l.b16 %v381
    %v1589 = vunpack.c.l.b16 %v382
    %v1590 = vunpack.c.l.b16 %v383
    %v1591 = vunpack.c.l.b16 %v384
    %v1592 = vunpack.c.l.b16 %v385
    %v1593 = vunpack.c.l.b16 %v386
    %v1594 = vunpack.c.l.b16 %v387
    %v1595 = vunpack.c.l.b16 %v388
    %v1596 = vunpack.c.l.b16 %v389
    %v1597 = vunpack.c.l.b16 %v390
    %v1598 = vunpack.c.l.b16 %v391
    %v1599 = vunpack.c.l.b16 %v392
    %v1600 = vunpack.c.l.b16 %v393
    %v1601 = vunpack.c.l.b16 %v394
    %v1602 = vunpack.c.l.b16 %v395
    %v1603 = vunpack.c.l.b16 %v396
    %v1604 = vunpack.c.l.b16 %v397
    %v1605 = vunpack.c.l.b16 %v398
    %v1606 = vunpack.c.l.b16 %v399
    %v1607 = vunpack.c.l.b16 %v400
    %v1608 = vunpack.c.l.b16 %v401
    %v1609 = vunpack.c.l.b16 %v402
    %v1610 = vunpack.c.l.b16 %v403
    %v1611 = vunpack.c.l.b16 %v404
    %v1612 = vunpack.c.l.b16 %v405
    %v1613 = vunpack.c.l.b16 %v406
    %v1614 = vunpack.c.l.b16 %v407
    %v1615 = vunpack.c.l.b16 %v408
    %v1616 = vunpack.c.l.b16 %v409
    %v1617 = vunpack.c.l.b16 %v410
    %v1618 = vunpack.c.l.b16 %v411
    %v1619 = vunpack.c.l.b16 %v412
    %v1620 = vunpack.c.l.b16 %v413
    %v1621 = vunpack.c.l.b16 %v414
    %v1622 = vunpack.c.l.b16 %v415
    %v1623 = vunpack.c.l.b16 %v416
    %v1624 = vunpack.c.l.b16 %v417
    %v1625 = vunpack.c.l.b16 %v418
    %v1626 = vunpack.c.l.b16 %v419
    %v1627 = vunpack.c.l.b16 %v420
    %v1628 = vunpack.c.l.b16 %v421
    %v1629 = vunpack.c.l.b16 %v422
    %v1630 = vunpack.c.l.b16 %v423
    %v1631 = vunpack.c.l.b16 %v424
    %v1632 = vunpack.c.l.b16 %v425
    %v1633 = vunpack.c.l.b16 %v426
    %v1634 = vunpack.c.l.b16 %v427
    %v1635 = vunpack.c.l.b16 %v428
    %v1636 = vunpack.c.l.b16 %v429
    %v1637 = vunpack.c.l.b16 %v430
    %v1638 = vunpack.c.l.b16 %v431
    %v1639 = vunpack.c.l.b16 %v432
    %v1640 = vunpack.c.l.b16 %v433
    %v1641 = vunpack.c.l.b16 %v434
    %v1642 = vunpack.c.l.b16 %v435
    %v1643 = vunpack.c.l.b16 %v436
    %v1644 = vunpack.c.l.b16 %v437
    %v1645 = vunpack.c.l.b16 %v438
    %v1646 = vunpack.c.l.b16 %v439
    %v1647 = vunpack.c.l.b16 %v440
    %v1648 = vunpack.c.l.b16 %v441
    %v1649 = vunpack.c.l.b16 %v442
    %v1650 = vunpack.c.l.b16 %v443
    %v1651 = vunpack.c.l.b16 %v444
    %v1652 = vunpack.c.l.b16 %v445
    %v1653 = vunpack.c.l.b16 %v446
    %v1654 = vunpack.c.l.b16 %v447
    %v1655 = vunpack.c.l.b16 %v448
    %v1656 = vunpack.c.l.b16 %v449
    %v1657 = vunpack.c.l.b16 %v450
    %v1658 = vunpack.c.l.b16 %v451
    %v1659 = vunpack.c.l.b16 %v452
    %v1660 = vunpack.c.l.b16 %v453
    %v1661 = vunpack.c.l.b16 %v454
    %v1662 = vunpack.c.l.b16 %v455
    %v1663 = vunpack.c.l.b16 %v456
    %v1664 = vunpack.c.l.b16 %v457
    %v1665 = vunpack.c.l.b16 %v458
    %v1666 = vunpack.c.l.b16 %v459
    %v1667 = vunpack.c.l.b16 %v460
    %v1668 = vunpack.c.l.b16 %v461
    %v1669 = vunpack.c.l.b16 %v462
    %v1670 = vunpack.c.l.b16 %v463
    %v1671 = vunpack.c.l.b16 %v464
    %v1672 = vunpack.c.l.b16 %v465
    %v1673 = vunpack.c.l.b16 %v466
    %v1674 = vunpack.c.l.b16 %v467
    %v1675 = vunpack.c.l.b16 %v468
    %v1676 = vunpack.c.l.b16 %v469
    %v1677 = vunpack.c.l.b16 %v470
    %v1678 = vunpack.c.l.b16 %v471
    %v1679 = vunpack.c.l.b16 %v472
    %v1680 = vunpack.c.l.b16 %v473
    %v1681 = vunpack.c.l.b16 %v474
    %v1682 = vunpack.c.l.b16 %v475
    %v1683 = vunpack.c.l.b16 %v476
    %v1684 = vunpack.c.l.b16 %v477
    %v1685 = vunpack.c.l.b16 %v478
    %v1686 = vunpack.c.l.b16 %v479
    %v1687 = vunpack.c.l.b16 %v480
    %v1688 = vunpack.c.l.b16 %v481
    %v1689 = vunpack.c.l.b16 %v482
    %v1690 = vunpack.c.l.b16 %v483
    %v1691 = vunpack.c.l.b16 %v484
    %v1692 = vunpack.c.l.b16 %v485
    %v1693 = vunpack.c.l.b16 %v486
    %v1694 = vunpack.c.l.b16 %v487
    %v1695 = vunpack.c.l.b16 %v488
    %v1696 = vunpack.c.l.b16 %v489
    %v1697 = vunpack.c.l.b16 %v490
    %v1698 = vunpack.c.l.b16 %v491
    %v1699 = vunpack.c.l.b16 %v492
    %v1700 = vunpack.c.l.b16 %v493
    %v1701 = vunpack.c.l.b16 %v494
    %v1702 = vunpack.c.l.b16 %v495
    %v1703 = vunpack.c.l.b16 %v496
    %v1704 = vunpack.c.l.b16 %v497
    %v1705 = vunpack.c.l.b16 %v498
    %v1706 = vunpack.c.l.b16 %v499
    %v1707 = vunpack.c.l.b16 %v500
    %v1708 = vunpack.c.l.b16 %v501
    %v1709 = vunpack.c.l.b16 %v502
    %v1710 = vunpack.c.l.b16 %v503
    %v1711 = vunpack.c.l.b16 %v504
    %v1712 = vunpack.c.l.b16 %v505
    %v1713 = vunpack.c.l.b16 %v506
    %v1714 = vunpack.c.l.b16 %v507
    %v1715 = vunpack.c.l.b16 %v508
    %v1716 = vunpack.c.l.b16 %v509
    %v1717 = vunpack.c.l.b16 %v510
    %v1718 = vunpack.c.l.b16 %v511
    %v1719 = vunpack.c.l.b16 %v512
    %v1720 = vunpack.c.l.b16 %v513
    %v1721 = vunpack.c.l.b16 %v514
    %v1722 = vunpack.c.l.b16 %v515
    %v1723 = vunpack.c.l.b16 %v516
    %v1724 = vunpack.c.l.b16 %v517
    %v1725 = vunpack.c.l.b16 %v518
    %v1726 = vunpack.c.l.b16 %v519
    %v1727 = vunpack.c.l.b16 %v520
    %v1728 = vunpack.c.l.b16 %v521
    %v1729 = vunpack.c.l.b16 %v522
    %v1730 = vunpack.c.l.b16 %v523
    %v1731 = vunpack.c.l.b16 %v524
    %v1732 = vunpack.c.l.b16 %v525
    %v1733 = vunpack.c.l.b16 %v526
    %v1734 = vunpack.c.l.b16 %v527
    %v1735 = vunpack.c.l.b16 %v528
    %v1736 = vunpack.c.l.b16 %v529
    %v1737 = vunpack.c.l.b16 %v530
    %v1738 = vunpack.c.l.b16 %v531
    %v1739 = vunpack.c.l.b16 %v532
    %v1740 = vunpack.c.l.b16 %v533
    %v1741 = vunpack.c.l.b16 %v534
    %v1742 = vunpack.c.l.b16 %v535
    %v1743 = vunpack.c.l.b16 %v536
    %v1744 = vunpack.c.l.b16 %v537
    %v1745 = vunpack.c.l.b16 %v538
    %v1746 = vunpack.c.l.b16 %v539
    %v1747 = vunpack.c.l.b16 %v540
    %v1748 = vunpack.c.l.b16 %v541
    %v1749 = vunpack.c.l.b16 %v542
    %v1750 = vunpack.c.l.b16 %v543
    %v1751 = vunpack.c.l.b16 %v544
    %v1752 = vunpack.c.l.b16 %v545
    %v1753 = vunpack.c.l.b16 %v546
    %v1754 = vunpack.c.l.b16 %v547
    %v1755 = vpack.c.b16 %v1244, %v1243
    %v1756 = vpack.c.b16 %v1246, %v1245
    %v1757 = vpack.c.b16 %v1248, %v1247
    %v1758 = vpack.c.b16 %v1250, %v1249
    %v1759 = vpack.c.b16 %v1252, %v1251
    %v1760 = vpack.c.b16 %v1254, %v1253
    %v1761 = vpack.c.b16 %v1256, %v1255
    %v1762 = vpack.c.b16 %v1258, %v1257
    %v1763 = vpack.c.b16 %v1260, %v1259
    %v1764 = vpack.c.b16 %v1262, %v1261
    %v1765 = vpack.c.b16 %v1264, %v1263
    %v1766 = vpack.c.b16 %v1266, %v1265
    %v1767 = vpack.c.b16 %v1268, %v1267
    %v1768 = vpack.c.b16 %v1270, %v1269
    %v1769 = vpack.c.b16 %v1272, %v1271
    %v1770 = vpack.c.b16 %v1274, %v1273
    %v1771 = vpack.c.b16 %v1276, %v1275
    %v1772 = vpack.c.b16 %v1278, %v1277
    %v1773 = vpack.c.b16 %v1280, %v1279
    %v1774 = vpack.c.b16 %v1282, %v1281
    %v1775 = vpack.c.b16 %v1284, %v1283
    %v1776 = vpack.c.b16 %v1286, %v1285
    %v1777 = vpack.c.b16 %v1288, %v1287
    %v1778 = vpack.c.b16 %v1290, %v1289
    %v1779 = vpack.c.b16 %v1292, %v1291
    %v1780 = vpack.c.b16 %v1294, %v1293
    %v1781 = vpack.c.b16 %v1296, %v1295
    %v1782 = vpack.c.b16 %v1298, %v1297
    %v1783 = vpack.c.b16 %v1300, %v1299
    %v1784 = vpack.c.b16 %v1302, %v1301
    %v1785 = vpack.c.b16 %v1304, %v1303
    %v1786 = vpack.c.b16 %v1306, %v1305
    %v1787 = vpack.c.b16 %v1308, %v1307
    %v1788 = vpack.c.b16 %v1310, %v1309
    %v1789 = vpack.c.b16 %v1312, %v1311
    %v1790 = vpack.c.b16 %v1314, %v1313
    %v1791 = vpack.c.b16 %v1316, %v1315
    %v1792 = vpack.c.b16 %v1318, %v1317
    %v1793 = vpack.c.b16 %v1320, %v1319
    %v1794 = vpack.c.b16 %v1322, %v1321
    %v1795 = vpack.c.b16 %v1324, %v1323
    %v1796 = vpack.c.b16 %v1326, %v1325
    %v1797 = vpack.c.b16 %v1328, %v1327
    %v1798 = vpack.c.b16 %v1330, %v1329
    %v1799 = vpack.c.b16 %v1332, %v1331
    %v1800 = vpack.c.b16 %v1334, %v1333
    %v1801 = vpack.c.b16 %v1336, %v1335
    %v1802 = vpack.c.b16 %v1338, %v1337
    %v1803 = vpack.c.b16 %v1340, %v1339
    %v1804 = vpack.c.b16 %v1342, %v1341
    %v1805 = vpack.c.b16 %v1344, %v1343
    %v1806 = vpack.c.b16 %v1346, %v1345
    %v1807 = vpack.c.b16 %v1348, %v1347
    %v1808 = vpack.c.b16 %v1350, %v1349
    %v1809 = vpack.c.b16 %v1352, %v1351
    %v1810 = vpack.c.b16 %v1354, %v1353
    %v1811 = vpack.c.b16 %v1356, %v1355
    %v1812 = vpack.c.b16 %v1358, %v1357
    %v1813 = vpack.c.b16 %v1360, %v1359
    %v1814 = vpack.c.b16 %v1362, %v1361
    %v1815 = vpack.c.b16 %v1364, %v1363
    %v1816 = vpack.c.b16 %v1366, %v1365
    %v1817 = vpack.c.b16 %v1368, %v1367
    %v1818 = vpack.c.b16 %v1370, %v1369
    %v1819 = vpack.c.b16 %v1372, %v1371
    %v1820 = vpack.c.b16 %v1374, %v1373
    %v1821 = vpack.c.b16 %v1376, %v1375
    %v1822 = vpack.c.b16 %v1378, %v1377
    %v1823 = vpack.c.b16 %v1380, %v1379
    %v1824 = vpack.c.b16 %v1382, %v1381
    %v1825 = vpack.c.b16 %v1384, %v1383
    %v1826 = vpack.c.b16 %v1386, %v1385
    %v1827 = vpack.c.b16 %v1388, %v1387
    %v1828 = vpack.c.b16 %v1390, %v1389
    %v1829 = vpack.c.b16 %v1392, %v1391
    %v1830 = vpack.c.b16 %v1394, %v1393
    %v1831 = vpack.c.b16 %v1396, %v1395
    %v1832 = vpack.c.b16 %v1398, %v1397
    %v1833 = vpack.c.b16 %v1400, %v1399
    %v1834 = vpack.c.b16 %v1402, %v1401
    %v1835 = vpack.c.b16 %v1404, %v1403
    %v1836 = vpack.c.b16 %v1406, %v1405
    %v1837 = vpack.c.b16 %v1408, %v1407
    %v1838 = vpack.c.b16 %v1410, %v1409
    %v1839 = vpack.c.b16 %v1412, %v1411
    %v1840 = vpack.c.b16 %v1414, %v1413
    %v1841 = vpack.c.b16 %v1416, %v1415
    %v1842 = vpack.c.b16 %v1418, %v1417
    %v1843 = vpack.c.b16 %v1420, %v1419
    %v1844 = vpack.c.b16 %v1422, %v1421
    %v1845 = vpack.c.b16 %v1424, %v1423
    %v1846 = vpack.c.b16 %v1426, %v1425
    %v1847 = vpack.c.b16 %v1428, %v1427
    %v1848 = vpack.c.b16 %v1430, %v1429
    %v1849 = vpack.c.b16 %v1432, %v1431
    %v1850 = vpack.c.b16 %v1434, %v1433
    %v1851 = vpack.c.b16 %v1436, %v1435
    %v1852 = vpack.c.b16 %v1438, %v1437
    %v1853 = vpack.c.b16 %v1440, %v1439
    %v1854 = vpack.c.b16 %v1442, %v1441
    %v1855 = vpack.c.b16 %v1444, %v1443
    %v1856 = vpack.c.b16 %v1446, %v1445
    %v1857 = vpack.c.b16 %v1448, %v1447
    %v1858 = vpack.c.b16 %v1450, %v1449
    %v1859 = vpack.c.b16 %v1452, %v1451
    %v1860 = vpack.c.b16 %v1454, %v1453
    %v1861 = vpack.c.b16 %v1456, %v1455
    %v1862 = vpack.c.b16 %v1458, %v1457
    %v1863 = vpack.c.b16 %v1460, %v1459
    %v1864 = vpack.c.b16 %v1462, %v1461
    %v1865 = vpack.c.b16 %v1464, %v1463
    %v1866 = vpack.c.b16 %v1466, %v1465
    %v1867 = vpack.c.b16 %v1468, %v1467
    %v1868 = vpack.c.b16 %v1470, %v1469
    %v1869 = vpack.c.b16 %v1472, %v1471
    %v1870 = vpack.c.b16 %v1474, %v1473
    %v1871 = vpack.c.b16 %v1476, %v1475
    %v1872 = vpack.c.b16 %v1478, %v1477
    %v1873 = vpack.c.b16 %v1480, %v1479
    %v1874 = vpack.c.b16 %v1482, %v1481
    %v1875 = vpack.c.b16 %v1484, %v1483
    %v1876 = vpack.c.b16 %v1486, %v1485
    %v1877 = vpack.c.b16 %v1488, %v1487
    %v1878 = vpack.c.b16 %v1490, %v1489
    %v1879 = vpack.c.b16 %v1492, %v1491
    %v1880 = vpack.c.b16 %v1494, %v1493
    %v1881 = vpack.c.b16 %v1496, %v1495
    %v1882 = vpack.c.b16 %v1498, %v1497
    %v1883 = vpack.c.b16 %v1500, %v1499
    %v1884 = vpack.c.b16 %v1502, %v1501
    %v1885 = vpack.c.b16 %v1504, %v1503
    %v1886 = vpack.c.b16 %v1506, %v1505
    %v1887 = vpack.c.b16 %v1508, %v1507
    %v1888 = vpack.c.b16 %v1510, %v1509
    %v1889 = vpack.c.b16 %v1512, %v1511
    %v1890 = vpack.c.b16 %v1514, %v1513
    %v1891 = vpack.c.b16 %v1516, %v1515
    %v1892 = vpack.c.b16 %v1518, %v1517
    %v1893 = vpack.c.b16 %v1520, %v1519
    %v1894 = vpack.c.b16 %v1522, %v1521
    %v1895 = vpack.c.b16 %v1524, %v1523
    %v1896 = vpack.c.b16 %v1526, %v1525
    %v1897 = vpack.c.b16 %v1528, %v1527
    %v1898 = vpack.c.b16 %v1530, %v1529
    %v1899 = vpack.c.b16 %v1532, %v1531
    %v1900 = vpack.c.b16 %v1534, %v1533
    %v1901 = vpack.c.b16 %v1536, %v1535
    %v1902 = vpack.c.b16 %v1538, %v1537
    %v1903 = vpack.c.b16 %v1540, %v1539
    %v1904 = vpack.c.b16 %v1542, %v1541
    %v1905 = vpack.c.b16 %v1544, %v1543
    %v1906 = vpack.c.b16 %v1546, %v1545
    %v1907 = vpack.c.b16 %v1548, %v1547
    %v1908 = vpack.c.b16 %v1550, %v1549
    %v1909 = vpack.c.b16 %v1552, %v1551
    %v1910 = vpack.c.b16 %v1554, %v1553
    %v1911 = vpack.c.b16 %v1556, %v1555
    %v1912 = vpack.c.b16 %v1558, %v1557
    %v1913 = vpack.c.b16 %v1560, %v1559
    %v1914 = vpack.c.b16 %v1562, %v1561
    %v1915 = vpack.c.b16 %v1564, %v1563
    %v1916 = vpack.c.b16 %v1566, %v1565
    %v1917 = vpack.c.b16 %v1568, %v1567
    %v1918 = vpack.c.b16 %v1570, %v1569
    %v1919 = vpack.c.b16 %v1572, %v1571
    %v1920 = vpack.c.b16 %v1574, %v1573
    %v1921 = vpack.c.b16 %v1576, %v1575
    %v1922 = vpack.c.b16 %v1578, %v1577
    %v1923 = vpack.c.b16 %v1580, %v1579
    %v1924 = vpack.c.b16 %v1582, %v1581
    %v1925 = vpack.c.b16 %v1584, %v1583
    %v1926 = vpack.c.b16 %v1586, %v1585
    %v1927 = vpack.c.b16 %v1588, %v1587
    %v1928 = vpack.c.b16 %v1590, %v1589
    %v1929 = vpack.c.b16 %v1592, %v1591
    %v1930 = vpack.c.b16 %v1594, %v1593
    %v1931 = vpack.c.b16 %v1596, %v1595
    %v1932 = vpack.c.b16 %v1598, %v1597
    %v1933 = vpack.c.b16 %v1600, %v1599
    %v1934 = vpack.c.b16 %v1602, %v1601
    %v1935 = vpack.c.b16 %v1604, %v1603
    %v1936 = vpack.c.b16 %v1606, %v1605
    %v1937 = vpack.c.b16 %v1608, %v1607
    %v1938 = vpack.c.b16 %v1610, %v1609
    %v1939 = vpack.c.b16 %v1612, %v1611
    %v1940 = vpack.c.b16 %v1614, %v1613
    %v1941 = vpack.c.b16 %v1616, %v1615
    %v1942 = vpack.c.b16 %v1618, %v1617
    %v1943 = vpack.c.b16 %v1620, %v1619
    %v1944 = vpack.c.b16 %v1622, %v1621
    %v1945 = vpack.c.b16 %v1624, %v1623
    %v1946 = vpack.c.b16 %v1626, %v1625
    %v1947 = vpack.c.b16 %v1628, %v1627
    %v1948 = vpack.c.b16 %v1630, %v1629
    %v1949 = vpack.c.b16 %v1632, %v1631
    %v1950 = vpack.c.b16 %v1634, %v1633
    %v1951 = vpack.c.b16 %v1636, %v1635
    %v1952 = vpack.c.b16 %v1638, %v1637
    %v1953 = vpack.c.b16 %v1640, %v1639
    %v1954 = vpack.c.b16 %v1642, %v1641
    %v1955 = vpack.c.b16 %v1644, %v1643
    %v1956 = vpack.c.b16 %v1646, %v1645
    %v1957 = vpack.c.b16 %v1648, %v1647
    %v1958 = vpack.c.b16 %v1650, %v1649
    %v1959 = vpack.c.b16 %v1652, %v1651
    %v1960 = vpack.c.b16 %v1654, %v1653
    %v1961 = vpack.c.b16 %v1656, %v1655
    %v1962 = vpack.c.b16 %v1658, %v1657
    %v1963 = vpack.c.b16 %v1660, %v1659
    %v1964 = vpack.c.b16 %v1662, %v1661
    %v1965 = vpack.c.b16 %v1664, %v1663
    %v1966 = vpack.c.b16 %v1666, %v1665
    %v1967 = vpack.c.b16 %v1668, %v1667
    %v1968 = vpack.c.b16 %v1670, %v1669
    %v1969 = vpack.c.b16 %v1672, %v1671
    %v1970 = vpack.c.b16 %v1674, %v1673
    %v1971 = vpack.c.b16 %v1676, %v1675
    %v1972 = vpack.c.b16 %v1678, %v1677
    %v1973 = vpack.c.b16 %v1680, %v1679
    %v1974 = vpack.c.b16 %v1682, %v1681
    %v1975 = vpack.c.b16 %v1684, %v1683
    %v1976 = vpack.c.b16 %v1686, %v1685
    %v1977 = vpack.c.b16 %v1688, %v1687
    %v1978 = vpack.c.b16 %v1690, %v1689
    %v1979 = vpack.c.b16 %v1692, %v1691
    %v1980 = vpack.c.b16 %v1694, %v1693
    %v1981 = vpack.c.b16 %v1696, %v1695
    %v1982 = vpack.c.b16 %v1698, %v1697
    %v1983 = vpack.c.b16 %v1700, %v1699
    %v1984 = vpack.c.b16 %v1702, %v1701
    %v1985 = vpack.c.b16 %v1704, %v1703
    %v1986 = vpack.c.b16 %v1706, %v1705
    %v1987 = vpack.c.b16 %v1708, %v1707
    %v1988 = vpack.c.b16 %v1710, %v1709
    %v1989 = vpack.c.b16 %v1712, %v1711
    %v1990 = vpack.c.b16 %v1714, %v1713
    %v1991 = vpack.c.b16 %v1716, %v1715
    %v1992 = vpack.c.b16 %v1718, %v1717
    %v1993 = vpack.c.b16 %v1720, %v1719
    %v1994 = vpack.c.b16 %v1722, %v1721
    %v1995 = vpack.c.b16 %v1724, %v1723
    %v1996 = vpack.c.b16 %v1726, %v1725
    %v1997 = vpack.c.b16 %v1728, %v1727
    %v1998 = vpack.c.b16 %v1730, %v1729
    %v1999 = vpack.c.b16 %v1732, %v1731
    %v2000 = vpack.c.b16 %v1734, %v1733
    %v2001 = vpack.c.b16 %v1736, %v1735
    %v2002 = vpack.c.b16 %v1738, %v1737
    %v2003 = vpack.c.b16 %v1740, %v1739
    %v2004 = vpack.c.b16 %v1742, %v1741
    %v2005 = vpack.c.b16 %v1744, %v1743
    %v2006 = vpack.c.b16 %v1746, %v1745
    %v2007 = vpack.c.b16 %v1748, %v1747
    %v2008 = vpack.c.b16 %v1750, %v1749
    %v2009 = vpack.c.b16 %v1752, %v1751
    %v2010 = vpack.c.b16 %v1754, %v1753
    %2267 = vmatprep.subr.bf16.mxu0 0
    %2268 = vmatpush1.bf16.msra.mxu0 %v1755
    %2269 = vmatprep.subr.bf16.mxu0 0
    %2270 = vmatpush1.bf16.msra.mxu0 %v1756
    %2271 = vmatprep.subr.bf16.mxu0 0
    %2272 = vmatpush1.bf16.msra.mxu0 %v1757
    %2273 = vmatprep.subr.bf16.mxu0 0
    %2274 = vmatpush1.bf16.msra.mxu0 %v1758
    %2275 = vmatprep.subr.bf16.mxu0 0
    %2276 = vmatpush1.bf16.msra.mxu0 %v1759
    %2277 = vmatprep.subr.bf16.mxu0 0
    %2278 = vmatpush1.bf16.msra.mxu0 %v1760
    %2279 = vmatprep.subr.bf16.mxu0 0
    %2280 = vmatpush1.bf16.msra.mxu0 %v1761
    %2281 = vmatprep.subr.bf16.mxu0 0
    %2282 = vmatpush1.bf16.msra.mxu0 %v1762
    %2283 = vmatprep.subr.bf16.mxu0 0
    %2284 = vmatpush1.bf16.msra.mxu0 %v1763
    %2285 = vmatprep.subr.bf16.mxu0 0
    %2286 = vmatpush1.bf16.msra.mxu0 %v1764
    %2287 = vmatprep.subr.bf16.mxu0 0
    %2288 = vmatpush1.bf16.msra.mxu0 %v1765
    %2289 = vmatprep.subr.bf16.mxu0 0
    %2290 = vmatpush1.bf16.msra.mxu0 %v1766
    %2291 = vmatprep.subr.bf16.mxu0 0
    %2292 = vmatpush1.bf16.msra.mxu0 %v1767
    %2293 = vmatprep.subr.bf16.mxu0 0
    %2294 = vmatpush1.bf16.msra.mxu0 %v1768
    %2295 = vmatprep.subr.bf16.mxu0 0
    %2296 = vmatpush1.bf16.msra.mxu0 %v1769
    %2297 = vmatprep.subr.bf16.mxu0 0
    %2298 = vmatpush1.bf16.msra.mxu0 %v1770
    %2299 = vmatprep.mubr.bf16.mxu0 %v578
    %2300 = vmatmul.mubr.bf16.gmra.mrb[0].mxu0 %v570
    %v2301 = vpop.f32.mrb[0].mxu0
    %v2302 = vadd.f32 %v553, %v2301
    %v2303 = vpop.f32.mrb[0].mxu0
    %v2304 = vpop.f32.mrb[0].mxu0
    %v2305 = vpop.f32.mrb[0].mxu0
    %2306 = vdwg.mxu0
    %2307 = vmatprep.subr.bf16.mxu0 0
    %2308 = vmatpush1.bf16.msra.mxu0 %v1771
    %2309 = vmatprep.subr.bf16.mxu0 0
    %2310 = vmatpush1.bf16.msra.mxu0 %v1772
    %2311 = vmatprep.subr.bf16.mxu0 0
    %2312 = vmatpush1.bf16.msra.mxu0 %v1773
    %2313 = vmatprep.subr.bf16.mxu0 0
    %2314 = vmatpush1.bf16.msra.mxu0 %v1774
    %2315 = vmatprep.subr.bf16.mxu0 0
    %2316 = vmatpush1.bf16.msra.mxu0 %v1775
    %2317 = vmatprep.subr.bf16.mxu0 0
    %2318 = vmatpush1.bf16.msra.mxu0 %v1776
    %2319 = vmatprep.subr.bf16.mxu0 0
    %2320 = vmatpush1.bf16.msra.mxu0 %v1777
    %2321 = vmatprep.subr.bf16.mxu0 0
    %2322 = vmatpush1.bf16.msra.mxu0 %v1778
    %2323 = vmatprep.subr.bf16.mxu0 0
    %2324 = vmatpush1.bf16.msra.mxu0 %v1779
    %2325 = vmatprep.subr.bf16.mxu0 0
    %2326 = vmatpush1.bf16.msra.mxu0 %v1780
    %2327 = vmatprep.subr.bf16.mxu0 0
    %2328 = vmatpush1.bf16.msra.mxu0 %v1781
    %2329 = vmatprep.subr.bf16.mxu0 0
    %2330 = vmatpush1.bf16.msra.mxu0 %v1782
    %2331 = vmatprep.subr.bf16.mxu0 0
    %2332 = vmatpush1.bf16.msra.mxu0 %v1783
    %2333 = vmatprep.subr.bf16.mxu0 0
    %2334 = vmatpush1.bf16.msra.mxu0 %v1784
    %2335 = vmatprep.subr.bf16.mxu0 0
    %2336 = vmatpush1.bf16.msra.mxu0 %v1785
    %2337 = vmatprep.subr.bf16.mxu0 0
    %2338 = vmatpush1.bf16.msra.mxu0 %v1786
    %2339 = vmatprep.mubr.bf16.mxu0 %v579
    %2340 = vmatmul.mubr.bf16.gmra.mrb[0].mxu0 %v577
    %v2341 = vpop.f32.mrb[0].mxu0
    %v2342 = vadd.f32 %v2302, %v2341
    %v2343 = vpop.f32.mrb[0].mxu0
    %v2344 = vpop.f32.mrb[0].mxu0
    %v2345 = vpop.f32.mrb[0].mxu0
    %2346 = vdwg.mxu0
    %2347 = vmatprep.subr.bf16.mxu0 0
    %2348 = vmatpush1.bf16.msra.mxu0 %v1787
    %2349 = vmatprep.subr.bf16.mxu0 0
    %2350 = vmatpush1.bf16.msra.mxu0 %v1788
    %2351 = vmatprep.subr.bf16.mxu0 0
    %2352 = vmatpush1.bf16.msra.mxu0 %v1789
    %2353 = vmatprep.subr.bf16.mxu0 0
    %2354 = vmatpush1.bf16.msra.mxu0 %v1790
    %2355 = vmatprep.subr.bf16.mxu0 0
    %2356 = vmatpush1.bf16.msra.mxu0 %v1791
    %2357 = vmatprep.subr.bf16.mxu0 0
    %2358 = vmatpush1.bf16.msra.mxu0 %v1792
    %2359 = vmatprep.subr.bf16.mxu0 0
    %2360 = vmatpush1.bf16.msra.mxu0 %v1793
    %2361 = vmatprep.subr.bf16.mxu0 0
    %2362 = vmatpush1.bf16.msra.mxu0 %v1794
    %2363 = vmatprep.subr.bf16.mxu0 0
    %2364 = vmatpush1.bf16.msra.mxu0 %v1795
    %2365 = vmatprep.subr.bf16.mxu0 0
    %2366 = vmatpush1.bf16.msra.mxu0 %v1796
    %2367 = vmatprep.subr.bf16.mxu0 0
    %2368 = vmatpush1.bf16.msra.mxu0 %v1797
    %2369 = vmatprep.subr.bf16.mxu0 0
    %2370 = vmatpush1.bf16.msra.mxu0 %v1798
    %2371 = vmatprep.subr.bf16.mxu0 0
    %2372 = vmatpush1.bf16.msra.mxu0 %v1799
    %2373 = vmatprep.subr.bf16.mxu0 0
    %2374 = vmatpush1.bf16.msra.mxu0 %v1800
    %2375 = vmatprep.subr.bf16.mxu0 0
    %2376 = vmatpush1.bf16.msra.mxu0 %v1801
    %2377 = vmatprep.subr.bf16.mxu0 0
    %2378 = vmatpush1.bf16.msra.mxu0 %v1802
    %2379 = vmatprep.mubr.bf16.mxu0 %v595
    %2380 = vmatmul.mubr.bf16.gmra.mrb[0].mxu0 %v587
    %v2381 = vpop.f32.mrb[0].mxu0
    %v2382 = vadd.f32 %v2342, %v2381
    %v2383 = vpop.f32.mrb[0].mxu0
    %v2384 = vpop.f32.mrb[0].mxu0
    %v2385 = vpop.f32.mrb[0].mxu0
    %2386 = vdwg.mxu0
    %2387 = vmatprep.subr.bf16.mxu0 0
    %2388 = vmatpush1.bf16.msra.mxu0 %v1803
    %2389 = vmatprep.subr.bf16.mxu0 0
    %2390 = vmatpush1.bf16.msra.mxu0 %v1804
    %2391 = vmatprep.subr.bf16.mxu0 0
    %2392 = vmatpush1.bf16.msra.mxu0 %v1805
    %2393 = vmatprep.subr.bf16.mxu0 0
    %2394 = vmatpush1.bf16.msra.mxu0 %v1806
    %2395 = vmatprep.subr.bf16.mxu0 0
    %2396 = vmatpush1.bf16.msra.mxu0 %v1807
    %2397 = vmatprep.subr.bf16.mxu0 0
    %2398 = vmatpush1.bf16.msra.mxu0 %v1808
    %2399 = vmatprep.subr.bf16.mxu0 0
    %2400 = vmatpush1.bf16.msra.mxu0 %v1809
    %2401 = vmatprep.subr.bf16.mxu0 0
    %2402 = vmatpush1.bf16.msra.mxu0 %v1810
    %2403 = vmatprep.subr.bf16.mxu0 0
    %2404 = vmatpush1.bf16.msra.mxu0 %v1811
    %2405 = vmatprep.subr.bf16.mxu0 0
    %2406 = vmatpush1.bf16.msra.mxu0 %v1812
    %2407 = vmatprep.subr.bf16.mxu0 0
    %2408 = vmatpush1.bf16.msra.mxu0 %v1813
    %2409 = vmatprep.subr.bf16.mxu0 0
    %2410 = vmatpush1.bf16.msra.mxu0 %v1814
    %2411 = vmatprep.subr.bf16.mxu0 0
    %2412 = vmatpush1.bf16.msra.mxu0 %v1815
    %2413 = vmatprep.subr.bf16.mxu0 0
    %2414 = vmatpush1.bf16.msra.mxu0 %v1816
    %2415 = vmatprep.subr.bf16.mxu0 0
    %2416 = vmatpush1.bf16.msra.mxu0 %v1817
    %2417 = vmatprep.subr.bf16.mxu0 0
    %2418 = vmatpush1.bf16.msra.mxu0 %v1818
    %2419 = vmatprep.mubr.bf16.mxu0 %v596
    %2420 = vmatmul.mubr.bf16.gmra.mrb[0].mxu0 %v594
    %v2421 = vpop.f32.mrb[0].mxu0
    %v2422 = vadd.f32 %v2382, %v2421
    %v2423 = vpop.f32.mrb[0].mxu0
    %v2424 = vpop.f32.mrb[0].mxu0
    %v2425 = vpop.f32.mrb[0].mxu0
    %2426 = vdwg.mxu0
    %2427 = vmatprep.subr.bf16.mxu0 0
    %2428 = vmatpush1.bf16.msra.mxu0 %v1819
    %2429 = vmatprep.subr.bf16.mxu0 0
    %2430 = vmatpush1.bf16.msra.mxu0 %v1820
    %2431 = vmatprep.subr.bf16.mxu0 0
    %2432 = vmatpush1.bf16.msra.mxu0 %v1821
    %2433 = vmatprep.subr.bf16.mxu0 0
    %2434 = vmatpush1.bf16.msra.mxu0 %v1822
    %2435 = vmatprep.subr.bf16.mxu0 0
    %2436 = vmatpush1.bf16.msra.mxu0 %v1823
    %2437 = vmatprep.subr.bf16.mxu0 0
    %2438 = vmatpush1.bf16.msra.mxu0 %v1824
    %2439 = vmatprep.subr.bf16.mxu0 0
    %2440 = vmatpush1.bf16.msra.mxu0 %v1825
    %2441 = vmatprep.subr.bf16.mxu0 0
    %2442 = vmatpush1.bf16.msra.mxu0 %v1826
    %2443 = vmatprep.subr.bf16.mxu0 0
    %2444 = vmatpush1.bf16.msra.mxu0 %v1827
    %2445 = vmatprep.subr.bf16.mxu0 0
    %2446 = vmatpush1.bf16.msra.mxu0 %v1828
    %2447 = vmatprep.subr.bf16.mxu0 0
    %2448 = vmatpush1.bf16.msra.mxu0 %v1829
    %2449 = vmatprep.subr.bf16.mxu0 0
    %2450 = vmatpush1.bf16.msra.mxu0 %v1830
    %2451 = vmatprep.subr.bf16.mxu0 0
    %2452 = vmatpush1.bf16.msra.mxu0 %v1831
    %2453 = vmatprep.subr.bf16.mxu0 0
    %2454 = vmatpush1.bf16.msra.mxu0 %v1832
    %2455 = vmatprep.subr.bf16.mxu0 0
    %2456 = vmatpush1.bf16.msra.mxu0 %v1833
    %2457 = vmatprep.subr.bf16.mxu0 0
    %2458 = vmatpush1.bf16.msra.mxu0 %v1834
    %2459 = vmatprep.mubr.bf16.mxu0 %v612
    %2460 = vmatmul.mubr.bf16.gmra.mrb[0].mxu0 %v604
    %v2461 = vpop.f32.mrb[0].mxu0
    %v2462 = vadd.f32 %v2422, %v2461
    %v2463 = vpop.f32.mrb[0].mxu0
    %v2464 = vpop.f32.mrb[0].mxu0
    %v2465 = vpop.f32.mrb[0].mxu0
    %2466 = vdwg.mxu0
    %2467 = vmatprep.subr.bf16.mxu0 0
    %2468 = vmatpush1.bf16.msra.mxu0 %v1835
    %2469 = vmatprep.subr.bf16.mxu0 0
    %2470 = vmatpush1.bf16.msra.mxu0 %v1836
    %2471 = vmatprep.subr.bf16.mxu0 0
    %2472 = vmatpush1.bf16.msra.mxu0 %v1837
    %2473 = vmatprep.subr.bf16.mxu0 0
    %2474 = vmatpush1.bf16.msra.mxu0 %v1838
    %2475 = vmatprep.subr.bf16.mxu0 0
    %2476 = vmatpush1.bf16.msra.mxu0 %v1839
    %2477 = vmatprep.subr.bf16.mxu0 0
    %2478 = vmatpush1.bf16.msra.mxu0 %v1840
    %2479 = vmatprep.subr.bf16.mxu0 0
    %2480 = vmatpush1.bf16.msra.mxu0 %v1841
    %2481 = vmatprep.subr.bf16.mxu0 0
    %2482 = vmatpush1.bf16.msra.mxu0 %v1842
    %2483 = vmatprep.subr.bf16.mxu0 0
    %2484 = vmatpush1.bf16.msra.mxu0 %v1843
    %2485 = vmatprep.subr.bf16.mxu0 0
    %2486 = vmatpush1.bf16.msra.mxu0 %v1844
    %2487 = vmatprep.subr.bf16.mxu0 0
    %2488 = vmatpush1.bf16.msra.mxu0 %v1845
    %2489 = vmatprep.subr.bf16.mxu0 0
    %2490 = vmatpush1.bf16.msra.mxu0 %v1846
    %2491 = vmatprep.subr.bf16.mxu0 0
    %2492 = vmatpush1.bf16.msra.mxu0 %v1847
    %2493 = vmatprep.subr.bf16.mxu0 0
    %2494 = vmatpush1.bf16.msra.mxu0 %v1848
    %2495 = vmatprep.subr.bf16.mxu0 0
    %2496 = vmatpush1.bf16.msra.mxu0 %v1849
    %2497 = vmatprep.subr.bf16.mxu0 0
    %2498 = vmatpush1.bf16.msra.mxu0 %v1850
    %2499 = vmatprep.mubr.bf16.mxu0 %v613
    %2500 = vmatmul.mubr.bf16.gmra.mrb[0].mxu0 %v611
    %v2501 = vpop.f32.mrb[0].mxu0
    %v2502 = vadd.f32 %v2462, %v2501
    %v2503 = vpop.f32.mrb[0].mxu0
    %v2504 = vpop.f32.mrb[0].mxu0
    %v2505 = vpop.f32.mrb[0].mxu0
    %2506 = vdwg.mxu0
    %2507 = vmatprep.subr.bf16.mxu0 0
    %2508 = vmatpush1.bf16.msra.mxu0 %v1851
    %2509 = vmatprep.subr.bf16.mxu0 0
    %2510 = vmatpush1.bf16.msra.mxu0 %v1852
    %2511 = vmatprep.subr.bf16.mxu0 0
    %2512 = vmatpush1.bf16.msra.mxu0 %v1853
    %2513 = vmatprep.subr.bf16.mxu0 0
    %2514 = vmatpush1.bf16.msra.mxu0 %v1854
    %2515 = vmatprep.subr.bf16.mxu0 0
    %2516 = vmatpush1.bf16.msra.mxu0 %v1855
    %2517 = vmatprep.subr.bf16.mxu0 0
    %2518 = vmatpush1.bf16.msra.mxu0 %v1856
    %2519 = vmatprep.subr.bf16.mxu0 0
    %2520 = vmatpush1.bf16.msra.mxu0 %v1857
    %2521 = vmatprep.subr.bf16.mxu0 0
    %2522 = vmatpush1.bf16.msra.mxu0 %v1858
    %2523 = vmatprep.subr.bf16.mxu0 0
    %2524 = vmatpush1.bf16.msra.mxu0 %v1859
    %2525 = vmatprep.subr.bf16.mxu0 0
    %2526 = vmatpush1.bf16.msra.mxu0 %v1860
    %2527 = vmatprep.subr.bf16.mxu0 0
    %2528 = vmatpush1.bf16.msra.mxu0 %v1861
    %2529 = vmatprep.subr.bf16.mxu0 0
    %2530 = vmatpush1.bf16.msra.mxu0 %v1862
    %2531 = vmatprep.subr.bf16.mxu0 0
    %2532 = vmatpush1.bf16.msra.mxu0 %v1863
    %2533 = vmatprep.subr.bf16.mxu0 0
    %2534 = vmatpush1.bf16.msra.mxu0 %v1864
    %2535 = vmatprep.subr.bf16.mxu0 0
    %2536 = vmatpush1.bf16.msra.mxu0 %v1865
    %2537 = vmatprep.subr.bf16.mxu0 0
    %2538 = vmatpush1.bf16.msra.mxu0 %v1866
    %2539 = vmatprep.mubr.bf16.mxu0 %v629
    %2540 = vmatmul.mubr.bf16.gmra.mrb[0].mxu0 %v621
    %v2541 = vpop.f32.mrb[0].mxu0
    %v2542 = vadd.f32 %v2502, %v2541
    %v2543 = vpop.f32.mrb[0].mxu0
    %v2544 = vpop.f32.mrb[0].mxu0
    %v2545 = vpop.f32.mrb[0].mxu0
    %2546 = vdwg.mxu0
    %2547 = vmatprep.subr.bf16.mxu0 0
    %2548 = vmatpush1.bf16.msra.mxu0 %v1867
    %2549 = vmatprep.subr.bf16.mxu0 0
    %2550 = vmatpush1.bf16.msra.mxu0 %v1868
    %2551 = vmatprep.subr.bf16.mxu0 0
    %2552 = vmatpush1.bf16.msra.mxu0 %v1869
    %2553 = vmatprep.subr.bf16.mxu0 0
    %2554 = vmatpush1.bf16.msra.mxu0 %v1870
    %2555 = vmatprep.subr.bf16.mxu0 0
    %2556 = vmatpush1.bf16.msra.mxu0 %v1871
    %2557 = vmatprep.subr.bf16.mxu0 0
    %2558 = vmatpush1.bf16.msra.mxu0 %v1872
    %2559 = vmatprep.subr.bf16.mxu0 0
    %2560 = vmatpush1.bf16.msra.mxu0 %v1873
    %2561 = vmatprep.subr.bf16.mxu0 0
    %2562 = vmatpush1.bf16.msra.mxu0 %v1874
    %2563 = vmatprep.subr.bf16.mxu0 0
    %2564 = vmatpush1.bf16.msra.mxu0 %v1875
    %2565 = vmatprep.subr.bf16.mxu0 0
    %2566 = vmatpush1.bf16.msra.mxu0 %v1876
    %2567 = vmatprep.subr.bf16.mxu0 0
    %2568 = vmatpush1.bf16.msra.mxu0 %v1877
    %2569 = vmatprep.subr.bf16.mxu0 0
    %2570 = vmatpush1.bf16.msra.mxu0 %v1878
    %2571 = vmatprep.subr.bf16.mxu0 0
    %2572 = vmatpush1.bf16.msra.mxu0 %v1879
    %2573 = vmatprep.subr.bf16.mxu0 0
    %2574 = vmatpush1.bf16.msra.mxu0 %v1880
    %2575 = vmatprep.subr.bf16.mxu0 0
    %2576 = vmatpush1.bf16.msra.mxu0 %v1881
    %2577 = vmatprep.subr.bf16.mxu0 0
    %2578 = vmatpush1.bf16.msra.mxu0 %v1882
    %2579 = vmatprep.mubr.bf16.mxu0 %v630
    %2580 = vmatmul.mubr.bf16.gmra.mrb[0].mxu0 %v628
    %v2581 = vpop.f32.mrb[0].mxu0
    %v2582 = vadd.f32 %v2542, %v2581
    %v2583 = vpop.f32.mrb[0].mxu0
    %v2584 = vpop.f32.mrb[0].mxu0
    %v2585 = vpop.f32.mrb[0].mxu0
    %2586 = vdwg.mxu0
    %2587 = vmatprep.subr.bf16.mxu0 0
    %2588 = vmatpush1.bf16.msra.mxu0 %v1883
    %2589 = vmatprep.subr.bf16.mxu0 0
    %2590 = vmatpush1.bf16.msra.mxu0 %v1884
    %2591 = vmatprep.subr.bf16.mxu0 0
    %2592 = vmatpush1.bf16.msra.mxu0 %v1885
    %2593 = vmatprep.subr.bf16.mxu0 0
    %2594 = vmatpush1.bf16.msra.mxu0 %v1886
    %2595 = vmatprep.subr.bf16.mxu0 0
    %2596 = vmatpush1.bf16.msra.mxu0 %v1887
    %2597 = vmatprep.subr.bf16.mxu0 0
    %2598 = vmatpush1.bf16.msra.mxu0 %v1888
    %2599 = vmatprep.subr.bf16.mxu0 0
    %2600 = vmatpush1.bf16.msra.mxu0 %v1889
    %2601 = vmatprep.subr.bf16.mxu0 0
    %2602 = vmatpush1.bf16.msra.mxu0 %v1890
    %2603 = vmatprep.subr.bf16.mxu0 0
    %2604 = vmatpush1.bf16.msra.mxu0 %v1891
    %2605 = vmatprep.subr.bf16.mxu0 0
    %2606 = vmatpush1.bf16.msra.mxu0 %v1892
    %2607 = vmatprep.subr.bf16.mxu0 0
    %2608 = vmatpush1.bf16.msra.mxu0 %v1893
    %2609 = vmatprep.subr.bf16.mxu0 0
    %2610 = vmatpush1.bf16.msra.mxu0 %v1894
    %2611 = vmatprep.subr.bf16.mxu0 0
    %2612 = vmatpush1.bf16.msra.mxu0 %v1895
    %2613 = vmatprep.subr.bf16.mxu0 0
    %2614 = vmatpush1.bf16.msra.mxu0 %v1896
    %2615 = vmatprep.subr.bf16.mxu0 0
    %2616 = vmatpush1.bf16.msra.mxu0 %v1897
    %2617 = vmatprep.subr.bf16.mxu0 0
    %2618 = vmatpush1.bf16.msra.mxu0 %v1898
    %2619 = vmatprep.mubr.bf16.mxu0 %v646
    %2620 = vmatmul.mubr.bf16.gmra.mrb[0].mxu0 %v638
    %v2621 = vpop.f32.mrb[0].mxu0
    %v2622 = vadd.f32 %v2582, %v2621
    %v2623 = vpop.f32.mrb[0].mxu0
    %v2624 = vpop.f32.mrb[0].mxu0
    %v2625 = vpop.f32.mrb[0].mxu0
    %2626 = vdwg.mxu0
    %2627 = vmatprep.subr.bf16.mxu0 0
    %2628 = vmatpush1.bf16.msra.mxu0 %v1899
    %2629 = vmatprep.subr.bf16.mxu0 0
    %2630 = vmatpush1.bf16.msra.mxu0 %v1900
    %2631 = vmatprep.subr.bf16.mxu0 0
    %2632 = vmatpush1.bf16.msra.mxu0 %v1901
    %2633 = vmatprep.subr.bf16.mxu0 0
    %2634 = vmatpush1.bf16.msra.mxu0 %v1902
    %2635 = vmatprep.subr.bf16.mxu0 0
    %2636 = vmatpush1.bf16.msra.mxu0 %v1903
    %2637 = vmatprep.subr.bf16.mxu0 0
    %2638 = vmatpush1.bf16.msra.mxu0 %v1904
    %2639 = vmatprep.subr.bf16.mxu0 0
    %2640 = vmatpush1.bf16.msra.mxu0 %v1905
    %2641 = vmatprep.subr.bf16.mxu0 0
    %2642 = vmatpush1.bf16.msra.mxu0 %v1906
    %2643 = vmatprep.subr.bf16.mxu0 0
    %2644 = vmatpush1.bf16.msra.mxu0 %v1907
    %2645 = vmatprep.subr.bf16.mxu0 0
    %2646 = vmatpush1.bf16.msra.mxu0 %v1908
    %2647 = vmatprep.subr.bf16.mxu0 0
    %2648 = vmatpush1.bf16.msra.mxu0 %v1909
    %2649 = vmatprep.subr.bf16.mxu0 0
    %2650 = vmatpush1.bf16.msra.mxu0 %v1910
    %2651 = vmatprep.subr.bf16.mxu0 0
    %2652 = vmatpush1.bf16.msra.mxu0 %v1911
    %2653 = vmatprep.subr.bf16.mxu0 0
    %2654 = vmatpush1.bf16.msra.mxu0 %v1912
    %2655 = vmatprep.subr.bf16.mxu0 0
    %2656 = vmatpush1.bf16.msra.mxu0 %v1913
    %2657 = vmatprep.subr.bf16.mxu0 0
    %2658 = vmatpush1.bf16.msra.mxu0 %v1914
    %2659 = vmatprep.mubr.bf16.mxu0 %v647
    %2660 = vmatmul.mubr.bf16.gmra.mrb[0].mxu0 %v645
    %v2661 = vpop.f32.mrb[0].mxu0
    %v2662 = vadd.f32 %v2622, %v2661
    %v2663 = vpop.f32.mrb[0].mxu0
    %v2664 = vpop.f32.mrb[0].mxu0
    %v2665 = vpop.f32.mrb[0].mxu0
    %2666 = vdwg.mxu0
    %2667 = vmatprep.subr.bf16.mxu0 0
    %2668 = vmatpush1.bf16.msra.mxu0 %v1915
    %2669 = vmatprep.subr.bf16.mxu0 0
    %2670 = vmatpush1.bf16.msra.mxu0 %v1916
    %2671 = vmatprep.subr.bf16.mxu0 0
    %2672 = vmatpush1.bf16.msra.mxu0 %v1917
    %2673 = vmatprep.subr.bf16.mxu0 0
    %2674 = vmatpush1.bf16.msra.mxu0 %v1918
    %2675 = vmatprep.subr.bf16.mxu0 0
    %2676 = vmatpush1.bf16.msra.mxu0 %v1919
    %2677 = vmatprep.subr.bf16.mxu0 0
    %2678 = vmatpush1.bf16.msra.mxu0 %v1920
    %2679 = vmatprep.subr.bf16.mxu0 0
    %2680 = vmatpush1.bf16.msra.mxu0 %v1921
    %2681 = vmatprep.subr.bf16.mxu0 0
    %2682 = vmatpush1.bf16.msra.mxu0 %v1922
    %2683 = vmatprep.subr.bf16.mxu0 0
    %2684 = vmatpush1.bf16.msra.mxu0 %v1923
    %2685 = vmatprep.subr.bf16.mxu0 0
    %2686 = vmatpush1.bf16.msra.mxu0 %v1924
    %2687 = vmatprep.subr.bf16.mxu0 0
    %2688 = vmatpush1.bf16.msra.mxu0 %v1925
    %2689 = vmatprep.subr.bf16.mxu0 0
    %2690 = vmatpush1.bf16.msra.mxu0 %v1926
    %2691 = vmatprep.subr.bf16.mxu0 0
    %2692 = vmatpush1.bf16.msra.mxu0 %v1927
    %2693 = vmatprep.subr.bf16.mxu0 0
    %2694 = vmatpush1.bf16.msra.mxu0 %v1928
    %2695 = vmatprep.subr.bf16.mxu0 0
    %2696 = vmatpush1.bf16.msra.mxu0 %v1929
    %2697 = vmatprep.subr.bf16.mxu0 0
    %2698 = vmatpush1.bf16.msra.mxu0 %v1930
    %2699 = vmatprep.mubr.bf16.mxu0 %v663
    %2700 = vmatmul.mubr.bf16.gmra.mrb[0].mxu0 %v655
    %v2701 = vpop.f32.mrb[0].mxu0
    %v2702 = vadd.f32 %v2662, %v2701
    %v2703 = vpop.f32.mrb[0].mxu0
    %v2704 = vpop.f32.mrb[0].mxu0
    %v2705 = vpop.f32.mrb[0].mxu0
    %2706 = vdwg.mxu0
    %2707 = vmatprep.subr.bf16.mxu0 0
    %2708 = vmatpush1.bf16.msra.mxu0 %v1931
    %2709 = vmatprep.subr.bf16.mxu0 0
    %2710 = vmatpush1.bf16.msra.mxu0 %v1932
    %2711 = vmatprep.subr.bf16.mxu0 0
    %2712 = vmatpush1.bf16.msra.mxu0 %v1933
    %2713 = vmatprep.subr.bf16.mxu0 0
    %2714 = vmatpush1.bf16.msra.mxu0 %v1934
    %2715 = vmatprep.subr.bf16.mxu0 0
    %2716 = vmatpush1.bf16.msra.mxu0 %v1935
    %2717 = vmatprep.subr.bf16.mxu0 0
    %2718 = vmatpush1.bf16.msra.mxu0 %v1936
    %2719 = vmatprep.subr.bf16.mxu0 0
    %2720 = vmatpush1.bf16.msra.mxu0 %v1937
    %2721 = vmatprep.subr.bf16.mxu0 0
    %2722 = vmatpush1.bf16.msra.mxu0 %v1938
    %2723 = vmatprep.subr.bf16.mxu0 0
    %2724 = vmatpush1.bf16.msra.mxu0 %v1939
    %2725 = vmatprep.subr.bf16.mxu0 0
    %2726 = vmatpush1.bf16.msra.mxu0 %v1940
    %2727 = vmatprep.subr.bf16.mxu0 0
    %2728 = vmatpush1.bf16.msra.mxu0 %v1941
    %2729 = vmatprep.subr.bf16.mxu0 0
    %2730 = vmatpush1.bf16.msra.mxu0 %v1942
    %2731 = vmatprep.subr.bf16.mxu0 0
    %2732 = vmatpush1.bf16.msra.mxu0 %v1943
    %2733 = vmatprep.subr.bf16.mxu0 0
    %2734 = vmatpush1.bf16.msra.mxu0 %v1944
    %2735 = vmatprep.subr.bf16.mxu0 0
    %2736 = vmatpush1.bf16.msra.mxu0 %v1945
    %2737 = vmatprep.subr.bf16.mxu0 0
    %2738 = vmatpush1.bf16.msra.mxu0 %v1946
    %2739 = vmatprep.mubr.bf16.mxu0 %v664
    %2740 = vmatmul.mubr.bf16.gmra.mrb[0].mxu0 %v662
    %v2741 = vpop.f32.mrb[0].mxu0
    %v2742 = vadd.f32 %v2702, %v2741
    %v2743 = vpop.f32.mrb[0].mxu0
    %v2744 = vpop.f32.mrb[0].mxu0
    %v2745 = vpop.f32.mrb[0].mxu0
    %2746 = vdwg.mxu0
    %2747 = vmatprep.subr.bf16.mxu0 0
    %2748 = vmatpush1.bf16.msra.mxu0 %v1947
    %2749 = vmatprep.subr.bf16.mxu0 0
    %2750 = vmatpush1.bf16.msra.mxu0 %v1948
    %2751 = vmatprep.subr.bf16.mxu0 0
    %2752 = vmatpush1.bf16.msra.mxu0 %v1949
    %2753 = vmatprep.subr.bf16.mxu0 0
    %2754 = vmatpush1.bf16.msra.mxu0 %v1950
    %2755 = vmatprep.subr.bf16.mxu0 0
    %2756 = vmatpush1.bf16.msra.mxu0 %v1951
    %2757 = vmatprep.subr.bf16.mxu0 0
    %2758 = vmatpush1.bf16.msra.mxu0 %v1952
    %2759 = vmatprep.subr.bf16.mxu0 0
    %2760 = vmatpush1.bf16.msra.mxu0 %v1953
    %2761 = vmatprep.subr.bf16.mxu0 0
    %2762 = vmatpush1.bf16.msra.mxu0 %v1954
    %2763 = vmatprep.subr.bf16.mxu0 0
    %2764 = vmatpush1.bf16.msra.mxu0 %v1955
    %2765 = vmatprep.subr.bf16.mxu0 0
    %2766 = vmatpush1.bf16.msra.mxu0 %v1956
    %2767 = vmatprep.subr.bf16.mxu0 0
    %2768 = vmatpush1.bf16.msra.mxu0 %v1957
    %2769 = vmatprep.subr.bf16.mxu0 0
    %2770 = vmatpush1.bf16.msra.mxu0 %v1958
    %2771 = vmatprep.subr.bf16.mxu0 0
    %2772 = vmatpush1.bf16.msra.mxu0 %v1959
    %2773 = vmatprep.subr.bf16.mxu0 0
    %2774 = vmatpush1.bf16.msra.mxu0 %v1960
    %2775 = vmatprep.subr.bf16.mxu0 0
    %2776 = vmatpush1.bf16.msra.mxu0 %v1961
    %2777 = vmatprep.subr.bf16.mxu0 0
    %2778 = vmatpush1.bf16.msra.mxu0 %v1962
    %2779 = vmatprep.mubr.bf16.mxu0 %v680
    %2780 = vmatmul.mubr.bf16.gmra.mrb[0].mxu0 %v672
    %v2781 = vpop.f32.mrb[0].mxu0
    %v2782 = vadd.f32 %v2742, %v2781
    %v2783 = vpop.f32.mrb[0].mxu0
    %v2784 = vpop.f32.mrb[0].mxu0
    %v2785 = vpop.f32.mrb[0].mxu0
    %2786 = vdwg.mxu0
    %2787 = vmatprep.subr.bf16.mxu0 0
    %2788 = vmatpush1.bf16.msra.mxu0 %v1963
    %2789 = vmatprep.subr.bf16.mxu0 0
    %2790 = vmatpush1.bf16.msra.mxu0 %v1964
    %2791 = vmatprep.subr.bf16.mxu0 0
    %2792 = vmatpush1.bf16.msra.mxu0 %v1965
    %2793 = vmatprep.subr.bf16.mxu0 0
    %2794 = vmatpush1.bf16.msra.mxu0 %v1966
    %2795 = vmatprep.subr.bf16.mxu0 0
    %2796 = vmatpush1.bf16.msra.mxu0 %v1967
    %2797 = vmatprep.subr.bf16.mxu0 0
    %2798 = vmatpush1.bf16.msra.mxu0 %v1968
    %2799 = vmatprep.subr.bf16.mxu0 0
    %2800 = vmatpush1.bf16.msra.mxu0 %v1969
    %2801 = vmatprep.subr.bf16.mxu0 0
    %2802 = vmatpush1.bf16.msra.mxu0 %v1970
    %2803 = vmatprep.subr.bf16.mxu0 0
    %2804 = vmatpush1.bf16.msra.mxu0 %v1971
    %2805 = vmatprep.subr.bf16.mxu0 0
    %2806 = vmatpush1.bf16.msra.mxu0 %v1972
    %2807 = vmatprep.subr.bf16.mxu0 0
    %2808 = vmatpush1.bf16.msra.mxu0 %v1973
    %2809 = vmatprep.subr.bf16.mxu0 0
    %2810 = vmatpush1.bf16.msra.mxu0 %v1974
    %2811 = vmatprep.subr.bf16.mxu0 0
    %2812 = vmatpush1.bf16.msra.mxu0 %v1975
    %2813 = vmatprep.subr.bf16.mxu0 0
    %2814 = vmatpush1.bf16.msra.mxu0 %v1976
    %2815 = vmatprep.subr.bf16.mxu0 0
    %2816 = vmatpush1.bf16.msra.mxu0 %v1977
    %2817 = vmatprep.subr.bf16.mxu0 0
    %2818 = vmatpush1.bf16.msra.mxu0 %v1978
    %2819 = vmatprep.mubr.bf16.mxu0 %v681
    %2820 = vmatmul.mubr.bf16.gmra.mrb[0].mxu0 %v679
    %v2821 = vpop.f32.mrb[0].mxu0
    %v2822 = vadd.f32 %v2782, %v2821
    %v2823 = vpop.f32.mrb[0].mxu0
    %v2824 = vpop.f32.mrb[0].mxu0
    %v2825 = vpop.f32.mrb[0].mxu0
    %2826 = vdwg.mxu0
    %2827 = vmatprep.subr.bf16.mxu0 0
    %2828 = vmatpush1.bf16.msra.mxu0 %v1979
    %2829 = vmatprep.subr.bf16.mxu0 0
    %2830 = vmatpush1.bf16.msra.mxu0 %v1980
    %2831 = vmatprep.subr.bf16.mxu0 0
    %2832 = vmatpush1.bf16.msra.mxu0 %v1981
    %2833 = vmatprep.subr.bf16.mxu0 0
    %2834 = vmatpush1.bf16.msra.mxu0 %v1982
    %2835 = vmatprep.subr.bf16.mxu0 0
    %2836 = vmatpush1.bf16.msra.mxu0 %v1983
    %2837 = vmatprep.subr.bf16.mxu0 0
    %2838 = vmatpush1.bf16.msra.mxu0 %v1984
    %2839 = vmatprep.subr.bf16.mxu0 0
    %2840 = vmatpush1.bf16.msra.mxu0 %v1985
    %2841 = vmatprep.subr.bf16.mxu0 0
    %2842 = vmatpush1.bf16.msra.mxu0 %v1986
    %2843 = vmatprep.subr.bf16.mxu0 0
    %2844 = vmatpush1.bf16.msra.mxu0 %v1987
    %2845 = vmatprep.subr.bf16.mxu0 0
    %2846 = vmatpush1.bf16.msra.mxu0 %v1988
    %2847 = vmatprep.subr.bf16.mxu0 0
    %2848 = vmatpush1.bf16.msra.mxu0 %v1989
    %2849 = vmatprep.subr.bf16.mxu0 0
    %2850 = vmatpush1.bf16.msra.mxu0 %v1990
    %2851 = vmatprep.subr.bf16.mxu0 0
    %2852 = vmatpush1.bf16.msra.mxu0 %v1991
    %2853 = vmatprep.subr.bf16.mxu0 0
    %2854 = vmatpush1.bf16.msra.mxu0 %v1992
    %2855 = vmatprep.subr.bf16.mxu0 0
    %2856 = vmatpush1.bf16.msra.mxu0 %v1993
    %2857 = vmatprep.subr.bf16.mxu0 0
    %2858 = vmatpush1.bf16.msra.mxu0 %v1994
    %2859 = vmatprep.mubr.bf16.mxu0 %v697
    %2860 = vmatmul.mubr.bf16.gmra.mrb[0].mxu0 %v689
    %v2861 = vpop.f32.mrb[0].mxu0
    %v2862 = vadd.f32 %v2822, %v2861
    %v2863 = vpop.f32.mrb[0].mxu0
    %v2864 = vpop.f32.mrb[0].mxu0
    %v2865 = vpop.f32.mrb[0].mxu0
    %2866 = vdwg.mxu0
    %2867 = vmatprep.subr.bf16.mxu0 0
    %2868 = vmatpush1.bf16.msra.mxu0 %v1995
    %2869 = vmatprep.subr.bf16.mxu0 0
    %2870 = vmatpush1.bf16.msra.mxu0 %v1996
    %2871 = vmatprep.subr.bf16.mxu0 0
    %2872 = vmatpush1.bf16.msra.mxu0 %v1997
    %2873 = vmatprep.subr.bf16.mxu0 0
    %2874 = vmatpush1.bf16.msra.mxu0 %v1998
    %2875 = vmatprep.subr.bf16.mxu0 0
    %2876 = vmatpush1.bf16.msra.mxu0 %v1999
    %2877 = vmatprep.subr.bf16.mxu0 0
    %2878 = vmatpush1.bf16.msra.mxu0 %v2000
    %2879 = vmatprep.subr.bf16.mxu0 0
    %2880 = vmatpush1.bf16.msra.mxu0 %v2001
    %2881 = vmatprep.subr.bf16.mxu0 0
    %2882 = vmatpush1.bf16.msra.mxu0 %v2002
    %2883 = vmatprep.subr.bf16.mxu0 0
    %2884 = vmatpush1.bf16.msra.mxu0 %v2003
    %2885 = vmatprep.subr.bf16.mxu0 0
    %2886 = vmatpush1.bf16.msra.mxu0 %v2004
    %2887 = vmatprep.subr.bf16.mxu0 0
    %2888 = vmatpush1.bf16.msra.mxu0 %v2005
    %2889 = vmatprep.subr.bf16.mxu0 0
    %2890 = vmatpush1.bf16.msra.mxu0 %v2006
    %2891 = vmatprep.subr.bf16.mxu0 0
    %2892 = vmatpush1.bf16.msra.mxu0 %v2007
    %2893 = vmatprep.subr.bf16.mxu0 0
    %2894 = vmatpush1.bf16.msra.mxu0 %v2008
    %2895 = vmatprep.subr.bf16.mxu0 0
    %2896 = vmatpush1.bf16.msra.mxu0 %v2009
    %2897 = vmatprep.subr.bf16.mxu0 0
    %2898 = vmatpush1.bf16.msra.mxu0 %v2010
    %2899 = vmatprep.mubr.bf16.mxu0 %v698
    %2900 = vmatmul.mubr.bf16.gmra.mrb[0].mxu0 %v696
    %v2901 = vpop.f32.mrb[0].mxu0
    %v2902 = vadd.f32 %v2862, %v2901
    %v2903 = vpop.f32.mrb[0].mxu0
    %v2904 = vpop.f32.mrb[0].mxu0
    %v2905 = vpop.f32.mrb[0].mxu0
    %2906 = vdwg.mxu0
    %v2907 = vmax.f32 %v2902, 0.0
    %v2908 = vpack.c.bf16 %v2907, %v2907
    %v2909 = vld [vmem:[%s3] sm:$0xf]
    %v2910 = vld [vmem:[%s3 + $0x4] sm:$0xf]
    %v2911 = vld [vmem:[%s3 + $0x8] sm:$0xf]
    %v2912 = vld [vmem:[%s3 + $0xc] sm:$0xf]
    %v2913 = vld [vmem:[%s3 + $0x10] sm:$0xf]
    %v2914 = vld [vmem:[%s3 + $0x14] sm:$0xf]
    %v2915 = vld [vmem:[%s3 + $0x18] sm:$0xf]
    %v2916 = vld [vmem:[%s3 + $0x1c] sm:$0xf]
    %v2917 = vld [vmem:[%s3 + $0x20] sm:$0xf]
    %v2918 = vld [vmem:[%s3 + $0x24] sm:$0xf]
    %v2919 = vld [vmem:[%s3 + $0x28] sm:$0xf]
    %v2920 = vld [vmem:[%s3 + $0x2c] sm:$0xf]
    %v2921 = vld [vmem:[%s3 + $0x30] sm:$0xf]
    %v2922 = vld [vmem:[%s3 + $0x34] sm:$0xf]
    %v2923 = vld [vmem:[%s3 + $0x38] sm:$0xf]
    %v2924 = vld [vmem:[%s3 + $0x3c] sm:$0xf]
    %v2925 = vld [vmem:[%s4] sm:$0x1]
    %v2927 = vlaneseq
    %v2928 = vshrl.u32 %v2927, 7
    %v2929 = vsub.s32 0, %v2928
    %v2930 = vrot.slane %v2925, %v2929
    %v2948 = vunpack.c.l.b16 %v2909
    %v2949 = vunpack.c.l.b16 %v2910
    %v2950 = vunpack.c.l.b16 %v2911
    %v2951 = vunpack.c.l.b16 %v2912
    %v2952 = vunpack.c.l.b16 %v2913
    %v2953 = vunpack.c.l.b16 %v2914
    %v2954 = vunpack.c.l.b16 %v2915
    %v2955 = vunpack.c.l.b16 %v2916
    %v2956 = vunpack.c.l.b16 %v2917
    %v2957 = vunpack.c.l.b16 %v2918
    %v2958 = vunpack.c.l.b16 %v2919
    %v2959 = vunpack.c.l.b16 %v2920
    %v2960 = vunpack.c.l.b16 %v2921
    %v2961 = vunpack.c.l.b16 %v2922
    %v2962 = vunpack.c.l.b16 %v2923
    %v2963 = vunpack.c.l.b16 %v2924
    %v2964 = vpack.c.b16 %v2949, %v2948
    %v2965 = vpack.c.b16 %v2951, %v2950
    %v2966 = vpack.c.b16 %v2953, %v2952
    %v2967 = vpack.c.b16 %v2955, %v2954
    %v2968 = vpack.c.b16 %v2957, %v2956
    %v2969 = vpack.c.b16 %v2959, %v2958
    %v2970 = vpack.c.b16 %v2961, %v2960
    %v2971 = vpack.c.b16 %v2963, %v2962
    %2980 = vmatprep.subr.bf16.mxu0 0
    %2981 = vmatpush1.bf16.msra.mxu0 %v2964
    %2982 = vmatprep.subr.bf16.mxu0 0
    %2983 = vmatpush1.bf16.msra.mxu0 %v2965
    %2984 = vmatprep.subr.bf16.mxu0 0
    %2985 = vmatpush1.bf16.msra.mxu0 %v2966
    %2986 = vmatprep.subr.bf16.mxu0 0
    %2987 = vmatpush1.bf16.msra.mxu0 %v2967
    %2988 = vmatprep.subr.bf16.mxu0 0
    %2989 = vmatpush1.bf16.msra.mxu0 %v2968
    %2990 = vmatprep.subr.bf16.mxu0 0
    %2991 = vmatpush1.bf16.msra.mxu0 %v2969
    %2992 = vmatprep.subr.bf16.mxu0 0
    %2993 = vmatpush1.bf16.msra.mxu0 %v2970
    %2994 = vmatprep.subr.bf16.mxu0 0
    %2995 = vmatpush1.bf16.msra.mxu0 %v2971
    %2996 = vmatprep.subr.bf16.mxu0 0
    %2997 = vmatpush1.bf16.msra.mxu0 0
    %2998 = vmatprep.subr.bf16.mxu0 0
    %2999 = vmatpush1.bf16.msra.mxu0 0
    %3000 = vmatprep.subr.bf16.mxu0 0
    %3001 = vmatpush1.bf16.msra.mxu0 0
    %3002 = vmatprep.subr.bf16.mxu0 0
    %3003 = vmatpush1.bf16.msra.mxu0 0
    %3004 = vmatprep.subr.bf16.mxu0 0
    %3005 = vmatpush1.bf16.msra.mxu0 0
    %3006 = vmatprep.subr.bf16.mxu0 0
    %3007 = vmatpush1.bf16.msra.mxu0 0
    %3008 = vmatprep.subr.bf16.mxu0 0
    %3009 = vmatpush1.bf16.msra.mxu0 0
    %3010 = vmatprep.subr.bf16.mxu0 0
    %3011 = vmatpush1.bf16.msra.mxu0 0
    %3012 = vmatprep.mubr.bf16.mxu0 0
    %3013 = vmatmul.mubr.bf16.gmra.mrb[0].mxu0 %v2908
    %v3014 = vpop.f32.mrb[0].mxu0
    %v3015 = vadd.f32 %v2930, %v3014
    %v3016 = vpop.f32.mrb[0].mxu0
    %v3017 = vpop.f32.mrb[0].mxu0
    %v3018 = vpop.f32.mrb[0].mxu0
    %3019 = vdwg.mxu0
    %v3020 = vmax.f32 %v3015, 0.0
    %v3021 = vpack.c.bf16 %v3020, %v3020
    %v3022 = vld [vmem:[%s5] sm:$0xf]
    %v3023 = vld [vmem:[%s5 + $0x4] sm:$0xf]
    %v3024 = vld [vmem:[%s5 + $0x8] sm:$0xf]
    %v3025 = vld [vmem:[%s5 + $0xc] sm:$0xf]
    %v3026 = vld [vmem:[%s5 + $0x10] sm:$0xf]
    %v3027 = vld [vmem:[%s5 + $0x14] sm:$0xf]
    %v3028 = vld [vmem:[%s5 + $0x18] sm:$0xf]
    %v3029 = vld [vmem:[%s5 + $0x1c] sm:$0xf]
    %v3030 = vld [vmem:[%s5 + $0x20] sm:$0xf]
    %v3031 = vld [vmem:[%s5 + $0x24] sm:$0xf]
    %v3032 = vld [vmem:[%s5 + $0x28] sm:$0xf]
    %v3033 = vld [vmem:[%s5 + $0x2c] sm:$0xf]
    %v3034 = vld [vmem:[%s5 + $0x30] sm:$0xf]
    %v3035 = vld [vmem:[%s5 + $0x34] sm:$0xf]
    %v3036 = vld [vmem:[%s5 + $0x38] sm:$0xf]
    %v3037 = vld [vmem:[%s5 + $0x3c] sm:$0xf]
    %v3038 = vld [vmem:[%s6] sm:$0x1]
    %v3040 = vlaneseq
    %v3041 = vshrl.u32 %v3040, 7
    %v3042 = vsub.s32 0, %v3041
    %v3043 = vrot.slane %v3038, %v3042
    %v3061 = vunpack.c.l.b16 %v3022
    %v3062 = vunpack.c.l.b16 %v3023
    %v3063 = vunpack.c.l.b16 %v3024
    %v3064 = vunpack.c.l.b16 %v3025
    %v3065 = vunpack.c.l.b16 %v3026
    %v3066 = vunpack.c.l.b16 %v3027
    %v3067 = vunpack.c.l.b16 %v3028
    %v3068 = vunpack.c.l.b16 %v3029
    %v3069 = vunpack.c.l.b16 %v3030
    %v3070 = vunpack.c.l.b16 %v3031
    %v3071 = vunpack.c.l.b16 %v3032
    %v3072 = vunpack.c.l.b16 %v3033
    %v3073 = vunpack.c.l.b16 %v3034
    %v3074 = vunpack.c.l.b16 %v3035
    %v3075 = vunpack.c.l.b16 %v3036
    %v3076 = vunpack.c.l.b16 %v3037
    %v3077 = vpack.c.b16 %v3062, %v3061
    %v3078 = vpack.c.b16 %v3064, %v3063
    %v3079 = vpack.c.b16 %v3066, %v3065
    %v3080 = vpack.c.b16 %v3068, %v3067
    %v3081 = vpack.c.b16 %v3070, %v3069
    %v3082 = vpack.c.b16 %v3072, %v3071
    %v3083 = vpack.c.b16 %v3074, %v3073
    %v3084 = vpack.c.b16 %v3076, %v3075
    %3093 = vmatprep.subr.bf16.mxu0 0
    %3094 = vmatpush1.bf16.msra.mxu0 %v3077
    %3095 = vmatprep.subr.bf16.mxu0 0
    %3096 = vmatpush1.bf16.msra.mxu0 %v3078
    %3097 = vmatprep.subr.bf16.mxu0 0
    %3098 = vmatpush1.bf16.msra.mxu0 %v3079
    %3099 = vmatprep.subr.bf16.mxu0 0
    %3100 = vmatpush1.bf16.msra.mxu0 %v3080
    %3101 = vmatprep.subr.bf16.mxu0 0
    %3102 = vmatpush1.bf16.msra.mxu0 %v3081
    %3103 = vmatprep.subr.bf16.mxu0 0
    %3104 = vmatpush1.bf16.msra.mxu0 %v3082
    %3105 = vmatprep.subr.bf16.mxu0 0
    %3106 = vmatpush1.bf16.msra.mxu0 %v3083
    %3107 = vmatprep.subr.bf16.mxu0 0
    %3108 = vmatpush1.bf16.msra.mxu0 %v3084
    %3109 = vmatprep.subr.bf16.mxu0 0
    %3110 = vmatpush1.bf16.msra.mxu0 0
    %3111 = vmatprep.subr.bf16.mxu0 0
    %3112 = vmatpush1.bf16.msra.mxu0 0
    %3113 = vmatprep.subr.bf16.mxu0 0
    %3114 = vmatpush1.bf16.msra.mxu0 0
    %3115 = vmatprep.subr.bf16.mxu0 0
    %3116 = vmatpush1.bf16.msra.mxu0 0
    %3117 = vmatprep.subr.bf16.mxu0 0
    %3118 = vmatpush1.bf16.msra.mxu0 0
    %3119 = vmatprep.subr.bf16.mxu0 0
    %3120 = vmatpush1.bf16.msra.mxu0 0
    %3121 = vmatprep.subr.bf16.mxu0 0
    %3122 = vmatpush1.bf16.msra.mxu0 0
    %3123 = vmatprep.subr.bf16.mxu0 0
    %3124 = vmatpush1.bf16.msra.mxu0 0
    %3125 = vmatprep.mubr.bf16.mxu0 0
    %3126 = vmatmul.mubr.bf16.gmra.mrb[0].mxu0 %v3021
    %v3127 = vpop.f32.mrb[0].mxu0
    %v3128 = vadd.f32 %v3043, %v3127
    %v3129 = vpop.f32.mrb[0].mxu0
    %v3130 = vpop.f32.mrb[0].mxu0
    %v3131 = vpop.f32.mrb[0].mxu0
    %3132 = vdwg.mxu0
    %3133 = vst [vmem:[#allocation2] sm:$0xf] %v3128
    // Predicated region
    $region30: #{net_forward.5} parent=1 // pred_check
      _
    $region31: #{net_forward.5} parent=1 // pred_check_branch
      %3135 = sbr.rel (0) target = $region33
    $region32: #{net_forward.5} parent=1 // pred_region
      %s3137 = ssub.s32 64, 64
      %3138 = vsyncadd [#allocation3], %s3137
      %s3140 = sshll.u32 [#allocation2], 4
      %s3141 = int_to_ptr.vmem [resolvable:$true] %s3140
      %3143 = dma.vmem_to_hbm [thread:$0]  %s3141, 64, %s7, [#allocation3]
    $region33: #{net_forward.5} parent=1 // pred_fallthru
      _
    // Predicated region
    $region34: #{net_forward.5} parent=1 // pred_check
      _
    $region35: #{net_forward.5} parent=1 // pred_check_branch
      %3145 = sbr.rel (0) target = $region37
    $region36: #{net_forward.5} parent=1 // pred_region
      %3146 = dma.done [#allocation3], 64
    $region37: #{net_forward.5} parent=1 // pred_fallthru
      _
    %3147 = vsyncpa [#allocation3], 1

</llo_original>
